<compile_context>
chip_gen: v7x
topology: tpu7x:2x2x1
jax: 0.10.0
libtpu: 0.0.40
codegen_flags: <defaults>
</compile_context>

<pallas_src>
import functools

import jax
import jax.numpy as jnp
import numpy as np
from jax import lax
from jax.experimental import pallas as pl
from jax.experimental.pallas import tpu as pltpu

KSIZE = 3


def _shift_rows(y, d):
    """z[r] = y[r + d] along axis 0 (|d| == 1); border rows are zero-filled.

    Per-sample validity (rows that would read across the H boundary of another
    sample) is handled by the caller with an iota row mask.
    """
    r = y.shape[0]
    pad = jnp.zeros((abs(d),) + y.shape[1:], y.dtype)
    if d > 0:
        return jnp.concatenate([lax.slice_in_dim(y, d, r, axis=0), pad], axis=0)
    return jnp.concatenate([pad, lax.slice_in_dim(y, 0, r + d, axis=0)], axis=0)


def _layer_kernel(x_ref, wb1_ref, b1_ref, wb2_ref, b2_ref, pos_ref,
                  wd_ref, bd_ref, wu_ref, bu_ref, pool_ref, bcast_ref, out_ref):
    Nb, H, WF = x_ref.shape
    R = Nb * H
    C = pos_ref.shape[0]
    F = wd_ref.shape[0]
    W = WF // F

    x = x_ref[...]                                   # (Nb, H, W*F) f32 (residual too)
    x2 = x.reshape(R, WF)                            # rows = (sample, image-row)
    xb = x2.astype(jnp.bfloat16)

    # H-halo validity masks: row r of the (Nb*H, W*F) matrix is image row h.
    h_iota = lax.broadcasted_iota(jnp.int32, (Nb, H, WF), 1).reshape(R, WF)
    keep_up = h_iota > 0                             # tap kh=0 reads image row h-1
    keep_dn = h_iota < (H - 1)                       # tap kh=2 reads image row h+1

    def conv_band(x_bf, wb_ref, b_ref):
        # One MXU matmul per conv: (R, W*F) @ (W*F, 3*W*F) -> (R, 3*W*F) f32.
        y = jnp.dot(x_bf, wb_ref[...], preferred_element_type=jnp.float32)
        y0 = y[:, 0 * WF:1 * WF]                     # kh = 0  (source row h-1)
        y1 = y[:, 1 * WF:2 * WF]                     # kh = 1
        y2 = y[:, 2 * WF:3 * WF]                     # kh = 2  (source row h+1)
        c0 = jnp.where(keep_up, _shift_rows(y0, -1), 0.0)
        c2 = jnp.where(keep_dn, _shift_rows(y2, 1), 0.0)
        return c0 + y1 + c2 + b_ref[...]

    # ---- layer1: conv -> ReLU -> conv (bf16 operands, f32 accumulation) ----
    a1 = jnp.maximum(conv_band(xb, wb1_ref, b1_ref), 0.0)
    a2 = conv_band(a1.astype(jnp.bfloat16), wb2_ref, b2_ref)     # (R, W*F) f32

    # ---- layer2: per-image-channel pos-embed + SE channel attention ----
    pos_nb = jnp.tile(pos_ref[...], (Nb // C, 1))                # (Nb, W*F)
    xp = a2.reshape(Nb, H, WF) + pos_nb[:, None, :]              # (Nb, H, W*F)

    # Global average pool over (H, W): H via a sublane-major sum, W via a tiny
    # stacked-identity matmul that folds the W lane-groups (stays lane-dense).
    sum_h = jnp.sum(xp, axis=1)                                  # (Nb, W*F)
    pooled = jnp.dot(sum_h, pool_ref[...],
                     preferred_element_type=jnp.float32) * (1.0 / (H * W))   # (Nb, F)
    z = jnp.maximum(
        jnp.dot(pooled, wd_ref[...], preferred_element_type=jnp.float32) + bd_ref[...],
        0.0)
    s = jax.nn.sigmoid(
        jnp.dot(z, wu_ref[...], preferred_element_type=jnp.float32) + bu_ref[...])
    s_dense = jnp.dot(s, bcast_ref[...],
                      preferred_element_type=jnp.float32)        # (Nb, W*F)

    out = xp * s_dense[:, None, :] + x                           # scale + residual
    out_ref[...] = out.astype(out_ref.dtype)


def _banded_conv_weights(w, W, F):
    """(9, F, F) tap weights -> (W*F, 3*W*F) block-banded matrix.

    Column group kh holds, for every output position wo, the taps w[kh*3+kw] placed
    at input position wi = wo + kw - 1; taps that would read outside [0, W) are
    absent, which realises the W zero padding inside the matmul.
    """
    groups = []
    for kh in range(KSIZE):
        g = jnp.zeros((W * F, W * F), jnp.float32)
        for kw in range(KSIZE):
            band = jnp.eye(W, k=-(kw - 1), dtype=jnp.float32)    # ones at wi = wo+kw-1
            g = g + jnp.kron(band, w[kh * KSIZE + kw])
        groups.append(g)
    return jnp.concatenate(groups, axis=1)


def _vmem_capacity_bytes():
    try:
        return int(pltpu.get_tpu_info().vmem_capacity_bytes)
    except Exception:
        return 64 << 20   # conservative fallback (v7x per-core VMEM)


def _pick_block_batches(B, C, H, W, F, vmem_budget_bytes):
    """Largest batch-group count Bb whose per-step working set fits the budget,
    preferring >= 4 grid steps (2 per TensorCore on v7x), then >= 2."""
    # Per batch-group of C samples: in + out blocks double-buffered (2x each) plus the
    # f32/bf16 intermediates (bf16 casts, the (R, 3*W*F) matmul output, a1/a2/xp/out,
    # shifted copies) which peak at roughly 10x one block.
    per_group = C * H * W * F * 4 * (2 + 2 + 10)
    fits = [d for d in range(1, B + 1)
            if B % d == 0 and d * per_group <= vmem_budget_bytes]
    if not fits:
        fits = [1]
    for min_steps in (4, 2, 1):
        cand = [d for d in fits if B // d >= min_steps]
        if cand:
            return max(cand)
    return 1


@functools.partial(jax.jit, static_argnames=("mode",))
def layer_forward(x_bcfhw, params, mode="RGB"):
    """Full `Layer.forward` on PyTorch-layout input (B, C, F, H, W)."""
    B, C, F, H, W = x_bcfhw.shape
    N = B * C
    WF = W * F
    Fr = params["wd"].shape[1]

    # Per-sample NHWC, then lane-dense (N, H, W*F): (w, f) folded into the minor dim
    # so every kernel load/store is a full 128-lane vector.
    x_dense = x_bcfhw.reshape(N, F, H, W).transpose(0, 2, 3, 1).reshape(N, H, WF)

    # rgb_mode is a static python flag -> resolved in glue, not in the kernel.
    pos = params["pos_rgb"] if mode == "RGB" else params["pos_raw"]      # (C, F)
    pos_d = jnp.tile(pos, (1, W))                                        # (C, W*F)
    b1_d = jnp.tile(params["b1"], (1, W))                                # (1, W*F)
    b2_d = jnp.tile(params["b2"], (1, W))
    wb1 = _banded_conv_weights(params["w1"], W, F).astype(jnp.bfloat16)  # (W*F, 3*W*F)
    wb2 = _banded_conv_weights(params["w2"], W, F).astype(jnp.bfloat16)
    pool = jnp.tile(jnp.eye(F, dtype=jnp.float32), (W, 1))               # (W*F, F)
    bcast = jnp.tile(jnp.eye(F, dtype=jnp.float32), (1, W))              # (F, W*F)

    vmem_cap = _vmem_capacity_bytes()
    # Grid-invariant weights (double-buffered, bf16 band matrices + pool/bcast) are
    # budgeted separately from the per-step blocks.
    fixed = 2 * 2 * WF * (3 * WF) * 2 + 4 * WF * F * 4
    budget = max(int(0.7 * vmem_cap) - fixed, 2 << 20)
    Bb = _pick_block_batches(B, C, H, W, F, budget)
    Nb = Bb * C
    grid = (N // Nb,)

    out_dense = pl.pallas_call(
        _layer_kernel,
        out_shape=jax.ShapeDtypeStruct((N, H, WF), x_dense.dtype),
        grid=grid,
        in_specs=[
            pl.BlockSpec((Nb, H, WF), lambda g: (g, 0, 0)),       # x (lane-dense)
            pl.BlockSpec((WF, 3 * WF), lambda g: (0, 0)),         # banded w1 (bf16)
            pl.BlockSpec((1, WF), lambda g: (0, 0)),              # b1 (dense)
            pl.BlockSpec((WF, 3 * WF), lambda g: (0, 0)),         # banded w2 (bf16)
            pl.BlockSpec((1, WF), lambda g: (0, 0)),              # b2 (dense)
            pl.BlockSpec((C, WF), lambda g: (0, 0)),              # pos (dense)
            pl.BlockSpec((F, Fr), lambda g: (0, 0)),              # wd
            pl.BlockSpec((1, Fr), lambda g: (0, 0)),              # bd
            pl.BlockSpec((Fr, F), lambda g: (0, 0)),              # wu
            pl.BlockSpec((1, F), lambda g: (0, 0)),               # bu
            pl.BlockSpec((WF, F), lambda g: (0, 0)),              # pool (fold W groups)
            pl.BlockSpec((F, WF), lambda g: (0, 0)),              # bcast (tile s over W)
        ],
        out_specs=pl.BlockSpec((Nb, H, WF), lambda g: (g, 0, 0)),
        compiler_params=pltpu.CompilerParams(
            dimension_semantics=("parallel",),
            vmem_limit_bytes=min(int(0.9 * vmem_cap), 96 << 20)),
        # TODO(synk): input_output_aliases={0: 0} is applicable (1:1 block mapping on a
        # wrapper-local temp) and would drop one HBM buffer; left off pending a perf check.
    )(x_dense, wb1, b1_d, wb2, b2_d, pos_d,
      params["wd"], params["bd"], params["wu"], params["bu"], pool, bcast)

    return out_dense.reshape(N, H, W, F).transpose(0, 3, 1, 2).reshape(B, C, F, H, W)


# ---------------------------- pure-JAX reference ----------------------------
def ref_forward(x_bcfhw, params, mode="RGB"):
    B, C, F, H, W = x_bcfhw.shape
    x = x_bcfhw.reshape(B * C, F, H, W).transpose(0, 2, 3, 1)  # (N, H, W, F)
    hi = jax.lax.Precision.HIGHEST

    def conv3(xin, w, b):
        xp = jnp.pad(xin, ((0, 0), (1, 1), (1, 1), (0, 0)))
        out = jnp.zeros_like(xin)
        for kh in range(KSIZE):
            for kw in range(KSIZE):
                out = out + jnp.einsum("nhwf,fg->nhwg",
                                       xp[:, kh:kh + H, kw:kw + W, :],
                                       w[kh * KSIZE + kw], precision=hi)
        return out + b

    c1 = jax.nn.relu(conv3(x, params["w1"], params["b1"]))
    c2 = conv3(c1, params["w2"], params["b2"])
    pos = params["pos_rgb"] if mode == "RGB" else params["pos_raw"]
    pos_n = jnp.tile(pos, (B, 1))                          # (N, F)
    xp = c2 + pos_n[:, None, None, :]
    y = xp.mean(axis=(1, 2))                               # (N, F)
    z = jax.nn.relu(jnp.dot(y, params["wd"], precision=hi) + params["bd"])
    s = jax.nn.sigmoid(jnp.dot(z, params["wu"], precision=hi) + params["bu"])
    out = xp * s[:, None, None, :] + x
    return out.transpose(0, 3, 1, 2).reshape(B, C, F, H, W)


def init_params(key, channels, n_feats, reduction):
    F, Fr = n_feats, n_feats // reduction
    ks = jax.random.split(key, 10)
    # TODO(synk): the original pos-embeds may be zero-initialized; random init keeps
    # the numerical check non-trivial.
    return {
        "w1": 0.1 * jax.random.normal(ks[0], (KSIZE * KSIZE, F, F), jnp.float32),
        "b1": 0.1 * jax.random.normal(ks[1], (1, F), jnp.float32),
        "w2": 0.1 * jax.random.normal(ks[2], (KSIZE * KSIZE, F, F), jnp.float32),
        "b2": 0.1 * jax.random.normal(ks[3], (1, F), jnp.float32),
        "pos_rgb": 0.1 * jax.random.normal(ks[4], (channels, F), jnp.float32),
        "pos_raw": 0.1 * jax.random.normal(ks[5], (channels, F), jnp.float32),
        "wd": 0.1 * jax.random.normal(ks[6], (F, Fr), jnp.float32),
        "bd": 0.1 * jax.random.normal(ks[7], (1, Fr), jnp.float32),
        "wu": 0.1 * jax.random.normal(ks[8], (Fr, F), jnp.float32),
        "bu": 0.1 * jax.random.normal(ks[9], (1, F), jnp.float32),
    }


if __name__ == "__main__":
    key = jax.random.PRNGKey(0)
    kx, kp = jax.random.split(key)

    B, C, n_feats, H, W = 2, 3, 32, 16, 16
    params = init_params(kp, channels=C, n_feats=n_feats, reduction=4)

    x = jax.random.normal(kx, (B, C, n_feats, H, W), jnp.float32)

    out = layer_forward(x, params, mode="RGB")
    out = jax.block_until_ready(out)

    ref = ref_forward(x, params, mode="RGB")
    # Kernel uses bf16 conv operands (f32 accumulation) vs a HIGHEST-precision f32
    # reference, so tolerance is set for bf16-class error.
    np.testing.assert_allclose(np.asarray(out), np.asarray(ref), atol=3e-2, rtol=3e-2)

    print("KERNEL_OK")
</pallas_src>

<mosaic_0001>
module attributes {stable_mosaic.version = 11 : i64} {
  func.func @_layer_kernel(%arg0: i32, %arg1: memref<3x16x512xf32, #tpu.memory_space<vmem>>, %arg2: memref<512x1536xbf16, #tpu.memory_space<vmem>>, %arg3: memref<1x512xf32, #tpu.memory_space<vmem>>, %arg4: memref<512x1536xbf16, #tpu.memory_space<vmem>>, %arg5: memref<1x512xf32, #tpu.memory_space<vmem>>, %arg6: memref<3x512xf32, #tpu.memory_space<vmem>>, %arg7: memref<32x8xf32, #tpu.memory_space<vmem>>, %arg8: memref<1x8xf32, #tpu.memory_space<vmem>>, %arg9: memref<8x32xf32, #tpu.memory_space<vmem>>, %arg10: memref<1x32xf32, #tpu.memory_space<vmem>>, %arg11: memref<512x32xf32, #tpu.memory_space<vmem>>, %arg12: memref<32x512xf32, #tpu.memory_space<vmem>>, %arg13: memref<3x16x512xf32, #tpu.memory_space<vmem>>) attributes {dimension_semantics = [#tpu.dimension_semantics<parallel>], iteration_bounds = array<i64: 2>, scalar_prefetch = 0 : i64, scratch_operands = 0 : i64, tpu.core_type = #tpu.core_type<tc>, window_params = [{transform_indices = @transform_0, window_bounds = array<i64: 3, 16, 512>}, {pipeline_mode = #tpu.pipeline_mode<synchronous>, transform_indices = @transform_1, window_bounds = array<i64: 512, 1536>}, {pipeline_mode = #tpu.pipeline_mode<synchronous>, transform_indices = @transform_2, window_bounds = array<i64: 1, 512>}, {pipeline_mode = #tpu.pipeline_mode<synchronous>, transform_indices = @transform_3, window_bounds = array<i64: 512, 1536>}, {pipeline_mode = #tpu.pipeline_mode<synchronous>, transform_indices = @transform_4, window_bounds = array<i64: 1, 512>}, {pipeline_mode = #tpu.pipeline_mode<synchronous>, transform_indices = @transform_5, window_bounds = array<i64: 3, 512>}, {pipeline_mode = #tpu.pipeline_mode<synchronous>, transform_indices = @transform_6, window_bounds = array<i64: 32, 8>}, {pipeline_mode = #tpu.pipeline_mode<synchronous>, transform_indices = @transform_7, window_bounds = array<i64: 1, 8>}, {pipeline_mode = #tpu.pipeline_mode<synchronous>, transform_indices = @transform_8, window_bounds = array<i64: 8, 32>}, {pipeline_mode = #tpu.pipeline_mode<synchronous>, transform_indices = @transform_9, window_bounds = array<i64: 1, 32>}, {pipeline_mode = #tpu.pipeline_mode<synchronous>, transform_indices = @transform_10, window_bounds = array<i64: 512, 32>}, {pipeline_mode = #tpu.pipeline_mode<synchronous>, transform_indices = @transform_11, window_bounds = array<i64: 32, 512>}, {transform_indices = @transform_12, window_bounds = array<i64: 3, 16, 512>}]} {
    %c0 = arith.constant 0 : index
    %c0_0 = arith.constant 0 : index
    %c0_1 = arith.constant 0 : index
    %0 = vector.load %arg1[%c0, %c0_0, %c0_1] : memref<3x16x512xf32, #tpu.memory_space<vmem>>, vector<3x16x512xf32>
    %1 = vector.shape_cast %0 : vector<3x16x512xf32> to vector<48x512xf32>
    %2 = arith.truncf %1 : vector<48x512xf32> to vector<48x512xbf16>
    %3 = tpu.iota {dimensions = array<i32: 1>} : vector<3x16x512xi32>
    %4 = vector.shape_cast %3 : vector<3x16x512xi32> to vector<48x512xi32>
    %c0_i32 = arith.constant 0 : i32
    %5 = vector.broadcast %c0_i32 : i32 to vector<48x512xi32>
    %6 = arith.cmpi sgt, %4, %5 : vector<48x512xi32>
    %c15_i32 = arith.constant 15 : i32
    %7 = vector.broadcast %c15_i32 : i32 to vector<48x512xi32>
    %8 = arith.cmpi slt, %4, %7 : vector<48x512xi32>
    %c0_2 = arith.constant 0 : index
    %c0_3 = arith.constant 0 : index
    %9 = vector.load %arg2[%c0_2, %c0_3] : memref<512x1536xbf16, #tpu.memory_space<vmem>>, vector<512x1536xbf16>
    %cst = arith.constant dense<0.000000e+00> : vector<48x1536xf32>
    %10 = tpu.matmul %2, %9, %cst {dimension_numbers = #tpu.dot_dimension_numbers<[1], [0], [0], [1], [0, 0, 1, 1], [], []>} : vector<48x512xbf16>, vector<512x1536xbf16>, vector<48x1536xf32> -> vector<48x1536xf32>
    %11 = vector.extract_strided_slice %10 {offsets = [0, 0], sizes = [48, 512], strides = [1, 1]} : vector<48x1536xf32> to vector<48x512xf32>
    %12 = vector.extract_strided_slice %10 {offsets = [0, 512], sizes = [48, 512], strides = [1, 1]} : vector<48x1536xf32> to vector<48x512xf32>
    %13 = vector.extract_strided_slice %10 {offsets = [0, 1024], sizes = [48, 512], strides = [1, 1]} : vector<48x1536xf32> to vector<48x512xf32>
    %cst_4 = arith.constant 0.000000e+00 : f32
    %14 = vector.broadcast %cst_4 : f32 to vector<1x512xf32>
    %15 = vector.extract_strided_slice %11 {offsets = [0, 0], sizes = [47, 512], strides = [1, 1]} : vector<48x512xf32> to vector<47x512xf32>
    %16 = tpu.concatenate %14, %15 in 0 : vector<1x512xf32>, vector<47x512xf32> -> vector<48x512xf32>
    %cst_5 = arith.constant 0.000000e+00 : f32
    %17 = vector.broadcast %cst_5 : f32 to vector<48x512xf32>
    %18 = arith.select %6, %16, %17 : vector<48x512xi1>, vector<48x512xf32>
    %cst_6 = arith.constant 0.000000e+00 : f32
    %19 = vector.broadcast %cst_6 : f32 to vector<1x512xf32>
    %20 = vector.extract_strided_slice %13 {offsets = [1, 0], sizes = [47, 512], strides = [1, 1]} : vector<48x512xf32> to vector<47x512xf32>
    %21 = tpu.concatenate %20, %19 in 0 : vector<47x512xf32>, vector<1x512xf32> -> vector<48x512xf32>
    %cst_7 = arith.constant 0.000000e+00 : f32
    %22 = vector.broadcast %cst_7 : f32 to vector<48x512xf32>
    %23 = arith.select %8, %21, %22 : vector<48x512xi1>, vector<48x512xf32>
    %24 = arith.addf %18, %12 : vector<48x512xf32>
    %25 = arith.addf %24, %23 : vector<48x512xf32>
    %c0_8 = arith.constant 0 : index
    %c0_9 = arith.constant 0 : index
    %26 = vector.load %arg3[%c0_8, %c0_9] : memref<1x512xf32, #tpu.memory_space<vmem>>, vector<1x512xf32>
    %27 = vector.broadcast %26 : vector<1x512xf32> to vector<48x512xf32>
    %28 = arith.addf %25, %27 : vector<48x512xf32>
    %cst_10 = arith.constant 0.000000e+00 : f32
    %29 = vector.broadcast %cst_10 : f32 to vector<48x512xf32>
    %30 = arith.maximumf %28, %29 : vector<48x512xf32>
    %31 = arith.truncf %30 : vector<48x512xf32> to vector<48x512xbf16>
    %c0_11 = arith.constant 0 : index
    %c0_12 = arith.constant 0 : index
    %32 = vector.load %arg4[%c0_11, %c0_12] : memref<512x1536xbf16, #tpu.memory_space<vmem>>, vector<512x1536xbf16>
    %cst_13 = arith.constant dense<0.000000e+00> : vector<48x1536xf32>
    %33 = tpu.matmul %31, %32, %cst_13 {dimension_numbers = #tpu.dot_dimension_numbers<[1], [0], [0], [1], [0, 0, 1, 1], [], []>} : vector<48x512xbf16>, vector<512x1536xbf16>, vector<48x1536xf32> -> vector<48x1536xf32>
    %34 = vector.extract_strided_slice %33 {offsets = [0, 0], sizes = [48, 512], strides = [1, 1]} : vector<48x1536xf32> to vector<48x512xf32>
    %35 = vector.extract_strided_slice %33 {offsets = [0, 512], sizes = [48, 512], strides = [1, 1]} : vector<48x1536xf32> to vector<48x512xf32>
    %36 = vector.extract_strided_slice %33 {offsets = [0, 1024], sizes = [48, 512], strides = [1, 1]} : vector<48x1536xf32> to vector<48x512xf32>
    %cst_14 = arith.constant 0.000000e+00 : f32
    %37 = vector.broadcast %cst_14 : f32 to vector<1x512xf32>
    %38 = vector.extract_strided_slice %34 {offsets = [0, 0], sizes = [47, 512], strides = [1, 1]} : vector<48x512xf32> to vector<47x512xf32>
    %39 = tpu.concatenate %37, %38 in 0 : vector<1x512xf32>, vector<47x512xf32> -> vector<48x512xf32>
    %cst_15 = arith.constant 0.000000e+00 : f32
    %40 = vector.broadcast %cst_15 : f32 to vector<48x512xf32>
    %41 = arith.select %6, %39, %40 : vector<48x512xi1>, vector<48x512xf32>
    %cst_16 = arith.constant 0.000000e+00 : f32
    %42 = vector.broadcast %cst_16 : f32 to vector<1x512xf32>
    %43 = vector.extract_strided_slice %36 {offsets = [1, 0], sizes = [47, 512], strides = [1, 1]} : vector<48x512xf32> to vector<47x512xf32>
    %44 = tpu.concatenate %43, %42 in 0 : vector<47x512xf32>, vector<1x512xf32> -> vector<48x512xf32>
    %cst_17 = arith.constant 0.000000e+00 : f32
    %45 = vector.broadcast %cst_17 : f32 to vector<48x512xf32>
    %46 = arith.select %8, %44, %45 : vector<48x512xi1>, vector<48x512xf32>
    %47 = arith.addf %41, %35 : vector<48x512xf32>
    %48 = arith.addf %47, %46 : vector<48x512xf32>
    %c0_18 = arith.constant 0 : index
    %c0_19 = arith.constant 0 : index
    %49 = vector.load %arg5[%c0_18, %c0_19] : memref<1x512xf32, #tpu.memory_space<vmem>>, vector<1x512xf32>
    %50 = vector.broadcast %49 : vector<1x512xf32> to vector<48x512xf32>
    %51 = arith.addf %48, %50 : vector<48x512xf32>
    %c0_20 = arith.constant 0 : index
    %c0_21 = arith.constant 0 : index
    %52 = vector.load %arg6[%c0_20, %c0_21] : memref<3x512xf32, #tpu.memory_space<vmem>>, vector<3x512xf32>
    %53 = vector.shape_cast %51 : vector<48x512xf32> to vector<3x16x512xf32>
    %54 = vector.shape_cast %52 : vector<3x512xf32> to vector<3x1x512xf32>
    %55 = vector.broadcast %54 : vector<3x1x512xf32> to vector<3x16x512xf32>
    %56 = arith.addf %53, %55 : vector<3x16x512xf32>
    %cst_22 = arith.constant dense<0.000000e+00> : vector<3x512xf32>
    %57 = vector.multi_reduction <add>, %56, %cst_22 [1] : vector<3x16x512xf32> to vector<3x512xf32>
    %c0_23 = arith.constant 0 : index
    %c0_24 = arith.constant 0 : index
    %58 = vector.load %arg11[%c0_23, %c0_24] : memref<512x32xf32, #tpu.memory_space<vmem>>, vector<512x32xf32>
    %cst_25 = arith.constant dense<0.000000e+00> : vector<3x32xf32>
    %59 = tpu.matmul %57, %58, %cst_25 {dimension_numbers = #tpu.dot_dimension_numbers<[1], [0], [0], [1], [0, 0, 1, 1], [], []>} : vector<3x512xf32>, vector<512x32xf32>, vector<3x32xf32> -> vector<3x32xf32>
    %cst_26 = arith.constant 3.906250e-03 : f32
    %60 = vector.broadcast %cst_26 : f32 to vector<3x32xf32>
    %61 = arith.mulf %59, %60 : vector<3x32xf32>
    %c0_27 = arith.constant 0 : index
    %c0_28 = arith.constant 0 : index
    %62 = vector.load %arg7[%c0_27, %c0_28] : memref<32x8xf32, #tpu.memory_space<vmem>>, vector<32x8xf32>
    %cst_29 = arith.constant dense<0.000000e+00> : vector<3x8xf32>
    %63 = tpu.matmul %61, %62, %cst_29 {dimension_numbers = #tpu.dot_dimension_numbers<[1], [0], [0], [1], [0, 0, 1, 1], [], []>} : vector<3x32xf32>, vector<32x8xf32>, vector<3x8xf32> -> vector<3x8xf32>
    %c0_30 = arith.constant 0 : index
    %c0_31 = arith.constant 0 : index
    %64 = vector.load %arg8[%c0_30, %c0_31] : memref<1x8xf32, #tpu.memory_space<vmem>>, vector<1x8xf32>
    %65 = vector.broadcast %64 : vector<1x8xf32> to vector<3x8xf32>
    %66 = arith.addf %63, %65 : vector<3x8xf32>
    %cst_32 = arith.constant 0.000000e+00 : f32
    %67 = vector.broadcast %cst_32 : f32 to vector<3x8xf32>
    %68 = arith.maximumf %66, %67 : vector<3x8xf32>
    %c0_33 = arith.constant 0 : index
    %c0_34 = arith.constant 0 : index
    %69 = vector.load %arg9[%c0_33, %c0_34] : memref<8x32xf32, #tpu.memory_space<vmem>>, vector<8x32xf32>
    %cst_35 = arith.constant dense<0.000000e+00> : vector<3x32xf32>
    %70 = tpu.matmul %68, %69, %cst_35 {dimension_numbers = #tpu.dot_dimension_numbers<[1], [0], [0], [1], [0, 0, 1, 1], [], []>} : vector<3x8xf32>, vector<8x32xf32>, vector<3x32xf32> -> vector<3x32xf32>
    %c0_36 = arith.constant 0 : index
    %c0_37 = arith.constant 0 : index
    %71 = vector.load %arg10[%c0_36, %c0_37] : memref<1x32xf32, #tpu.memory_space<vmem>>, vector<1x32xf32>
    %72 = vector.broadcast %71 : vector<1x32xf32> to vector<3x32xf32>
    %73 = arith.addf %70, %72 : vector<3x32xf32>
    %74 = arith.negf %73 : vector<3x32xf32>
    %75 = math.exp %74 : vector<3x32xf32>
    %cst_38 = arith.constant 1.000000e+00 : f32
    %76 = vector.broadcast %cst_38 : f32 to vector<3x32xf32>
    %77 = arith.addf %76, %75 : vector<3x32xf32>
    %78 = arith.divf %76, %77 : vector<3x32xf32>
    %c0_39 = arith.constant 0 : index
    %c0_40 = arith.constant 0 : index
    %79 = vector.load %arg12[%c0_39, %c0_40] : memref<32x512xf32, #tpu.memory_space<vmem>>, vector<32x512xf32>
    %cst_41 = arith.constant dense<0.000000e+00> : vector<3x512xf32>
    %80 = tpu.matmul %78, %79, %cst_41 {dimension_numbers = #tpu.dot_dimension_numbers<[1], [0], [0], [1], [0, 0, 1, 1], [], []>} : vector<3x32xf32>, vector<32x512xf32>, vector<3x512xf32> -> vector<3x512xf32>
    %81 = vector.shape_cast %80 : vector<3x512xf32> to vector<3x1x512xf32>
    %82 = vector.broadcast %81 : vector<3x1x512xf32> to vector<3x16x512xf32>
    %83 = arith.mulf %56, %82 : vector<3x16x512xf32>
    %84 = arith.addf %83, %0 : vector<3x16x512xf32>
    %c0_42 = arith.constant 0 : index
    %c0_43 = arith.constant 0 : index
    %c0_44 = arith.constant 0 : index
    %85 = vector.load %arg13[%c0_42, %c0_43, %c0_44] : memref<3x16x512xf32, #tpu.memory_space<vmem>>, vector<3x16x512xf32>
    tpu.vector_store %arg13[%c0_42, %c0_43, %c0_44], %84 {strides = array<i32>} : memref<3x16x512xf32, #tpu.memory_space<vmem>>, vector<3x16x512xf32>,
    return
  }
  func.func @transform_0(%arg0: i32) -> (i32, i32, i32) {
    %c0_i32 = arith.constant 0 : i32
    %c0_i32_0 = arith.constant 0 : i32
    %c0_i32_1 = arith.constant 0 : i32
    return %arg0, %c0_i32, %c0_i32_0 : i32, i32, i32
  }
  func.func @transform_1(%arg0: i32) -> (i32, i32) {
    %c0_i32 = arith.constant 0 : i32
    %c0_i32_0 = arith.constant 0 : i32
    %c0_i32_1 = arith.constant 0 : i32
    return %c0_i32, %c0_i32_0 : i32, i32
  }
  func.func @transform_2(%arg0: i32) -> (i32, i32) {
    %c0_i32 = arith.constant 0 : i32
    %c0_i32_0 = arith.constant 0 : i32
    %c0_i32_1 = arith.constant 0 : i32
    return %c0_i32, %c0_i32_0 : i32, i32
  }
  func.func @transform_3(%arg0: i32) -> (i32, i32) {
    %c0_i32 = arith.constant 0 : i32
    %c0_i32_0 = arith.constant 0 : i32
    %c0_i32_1 = arith.constant 0 : i32
    return %c0_i32, %c0_i32_0 : i32, i32
  }
  func.func @transform_4(%arg0: i32) -> (i32, i32) {
    %c0_i32 = arith.constant 0 : i32
    %c0_i32_0 = arith.constant 0 : i32
    %c0_i32_1 = arith.constant 0 : i32
    return %c0_i32, %c0_i32_0 : i32, i32
  }
  func.func @transform_5(%arg0: i32) -> (i32, i32) {
    %c0_i32 = arith.constant 0 : i32
    %c0_i32_0 = arith.constant 0 : i32
    %c0_i32_1 = arith.constant 0 : i32
    return %c0_i32, %c0_i32_0 : i32, i32
  }
  func.func @transform_6(%arg0: i32) -> (i32, i32) {
    %c0_i32 = arith.constant 0 : i32
    %c0_i32_0 = arith.constant 0 : i32
    %c0_i32_1 = arith.constant 0 : i32
    return %c0_i32, %c0_i32_0 : i32, i32
  }
  func.func @transform_7(%arg0: i32) -> (i32, i32) {
    %c0_i32 = arith.constant 0 : i32
    %c0_i32_0 = arith.constant 0 : i32
    %c0_i32_1 = arith.constant 0 : i32
    return %c0_i32, %c0_i32_0 : i32, i32
  }
  func.func @transform_8(%arg0: i32) -> (i32, i32) {
    %c0_i32 = arith.constant 0 : i32
    %c0_i32_0 = arith.constant 0 : i32
    %c0_i32_1 = arith.constant 0 : i32
    return %c0_i32, %c0_i32_0 : i32, i32
  }
  func.func @transform_9(%arg0: i32) -> (i32, i32) {
    %c0_i32 = arith.constant 0 : i32
    %c0_i32_0 = arith.constant 0 : i32
    %c0_i32_1 = arith.constant 0 : i32
    return %c0_i32, %c0_i32_0 : i32, i32
  }
  func.func @transform_10(%arg0: i32) -> (i32, i32) {
    %c0_i32 = arith.constant 0 : i32
    %c0_i32_0 = arith.constant 0 : i32
    %c0_i32_1 = arith.constant 0 : i32
    return %c0_i32, %c0_i32_0 : i32, i32
  }
  func.func @transform_11(%arg0: i32) -> (i32, i32) {
    %c0_i32 = arith.constant 0 : i32
    %c0_i32_0 = arith.constant 0 : i32
    %c0_i32_1 = arith.constant 0 : i32
    return %c0_i32, %c0_i32_0 : i32, i32
  }
  func.func @transform_12(%arg0: i32) -> (i32, i32, i32) {
    %c0_i32 = arith.constant 0 : i32
    %c0_i32_0 = arith.constant 0 : i32
    %c0_i32_1 = arith.constant 0 : i32
    return %arg0, %c0_i32, %c0_i32_0 : i32, i32, i32
  }
}

</mosaic_0001>

<llo_original>
// kernel: tile.49
$region0: #{tile.49}
  %s0 = inlined_call_operand.vmem [shape: f32[32,16,32], index: 0, kind: input, shape index: {}]
  %s1 = inlined_call_operand.vmem [shape: f32[32,512], index: 1, kind: output, shape index: {}]
  %v2 = vld [vmem:[%s0] ss:$4 sm:$0xff]
  %vm3 = vcmask 261120
  %4 = vst.msk [vmem:[%s1] ss:$8 sm:$0xf] %vm3, %v2
  %s5 = scalar_lea.vmem %s1, 4294967265
  %6 = vst.msk [vmem:[%s5] ss:$8 sm:$0xf0] %vm3, %v2
  %s7 = scalar_lea.vmem %s0, 32
  %v8 = vld [vmem:[%s7] ss:$4 sm:$0xff]
  %vm9 = vcmask 261120
  %s10 = scalar_lea.vmem %s1, 2
  %11 = vst.msk [vmem:[%s10] ss:$8 sm:$0xf] %vm9, %v8
  %s12 = scalar_lea.vmem %s1, 4294967267
  %13 = vst.msk [vmem:[%s12] ss:$8 sm:$0xf0] %vm9, %v8
  %s14 = scalar_lea.vmem %s0, 64
  %v15 = vld [vmem:[%s14] ss:$4 sm:$0xff]
  %vm16 = vcmask 261120
  %s17 = scalar_lea.vmem %s1, 4
  %18 = vst.msk [vmem:[%s17] ss:$8 sm:$0xf] %vm16, %v15
  %s19 = scalar_lea.vmem %s1, 4294967269
  %20 = vst.msk [vmem:[%s19] ss:$8 sm:$0xf0] %vm16, %v15
  %s21 = scalar_lea.vmem %s0, 96
  %v22 = vld [vmem:[%s21] ss:$4 sm:$0xff]
  %vm23 = vcmask 261120
  %s24 = scalar_lea.vmem %s1, 6
  %25 = vst.msk [vmem:[%s24] ss:$8 sm:$0xf] %vm23, %v22
  %s26 = scalar_lea.vmem %s1, 4294967271
  %27 = vst.msk [vmem:[%s26] ss:$8 sm:$0xf0] %vm23, %v22
  %s28 = scalar_lea.vmem %s0, 128
  %v29 = vld [vmem:[%s28] ss:$4 sm:$0xff]
  %vm30 = vcmask 261120
  %s31 = scalar_lea.vmem %s1, 32
  %32 = vst.msk [vmem:[%s31] ss:$8 sm:$0xf] %vm30, %v29
  %s33 = scalar_lea.vmem %s1, 1
  %34 = vst.msk [vmem:[%s33] ss:$8 sm:$0xf0] %vm30, %v29
  %s35 = scalar_lea.vmem %s0, 160
  %v36 = vld [vmem:[%s35] ss:$4 sm:$0xff]
  %vm37 = vcmask 261120
  %s38 = scalar_lea.vmem %s1, 34
  %39 = vst.msk [vmem:[%s38] ss:$8 sm:$0xf] %vm37, %v36
  %s40 = scalar_lea.vmem %s1, 3
  %41 = vst.msk [vmem:[%s40] ss:$8 sm:$0xf0] %vm37, %v36
  %s42 = scalar_lea.vmem %s0, 192
  %v43 = vld [vmem:[%s42] ss:$4 sm:$0xff]
  %vm44 = vcmask 261120
  %s45 = scalar_lea.vmem %s1, 36
  %46 = vst.msk [vmem:[%s45] ss:$8 sm:$0xf] %vm44, %v43
  %s47 = scalar_lea.vmem %s1, 5
  %48 = vst.msk [vmem:[%s47] ss:$8 sm:$0xf0] %vm44, %v43
  %s49 = scalar_lea.vmem %s0, 224
  %v50 = vld [vmem:[%s49] ss:$4 sm:$0xff]
  %vm51 = vcmask 261120
  %s52 = scalar_lea.vmem %s1, 38
  %53 = vst.msk [vmem:[%s52] ss:$8 sm:$0xf] %vm51, %v50
  %s54 = scalar_lea.vmem %s1, 7
  %55 = vst.msk [vmem:[%s54] ss:$8 sm:$0xf0] %vm51, %v50
  %s56 = scalar_lea.vmem %s0, 256
  %v57 = vld [vmem:[%s56] ss:$4 sm:$0xff]
  %vm58 = vcmask 261120
  %s59 = scalar_lea.vmem %s1, 64
  %60 = vst.msk [vmem:[%s59] ss:$8 sm:$0xf] %vm58, %v57
  %s61 = scalar_lea.vmem %s1, 33
  %62 = vst.msk [vmem:[%s61] ss:$8 sm:$0xf0] %vm58, %v57
  %s63 = scalar_lea.vmem %s0, 288
  %v64 = vld [vmem:[%s63] ss:$4 sm:$0xff]
  %vm65 = vcmask 261120
  %s66 = scalar_lea.vmem %s1, 66
  %67 = vst.msk [vmem:[%s66] ss:$8 sm:$0xf] %vm65, %v64
  %s68 = scalar_lea.vmem %s1, 35
  %69 = vst.msk [vmem:[%s68] ss:$8 sm:$0xf0] %vm65, %v64
  %s70 = scalar_lea.vmem %s0, 320
  %v71 = vld [vmem:[%s70] ss:$4 sm:$0xff]
  %vm72 = vcmask 261120
  %s73 = scalar_lea.vmem %s1, 68
  %74 = vst.msk [vmem:[%s73] ss:$8 sm:$0xf] %vm72, %v71
  %s75 = scalar_lea.vmem %s1, 37
  %76 = vst.msk [vmem:[%s75] ss:$8 sm:$0xf0] %vm72, %v71
  %s77 = scalar_lea.vmem %s0, 352
  %v78 = vld [vmem:[%s77] ss:$4 sm:$0xff]
  %vm79 = vcmask 261120
  %s80 = scalar_lea.vmem %s1, 70
  %81 = vst.msk [vmem:[%s80] ss:$8 sm:$0xf] %vm79, %v78
  %s82 = scalar_lea.vmem %s1, 39
  %83 = vst.msk [vmem:[%s82] ss:$8 sm:$0xf0] %vm79, %v78
  %s84 = scalar_lea.vmem %s0, 384
  %v85 = vld [vmem:[%s84] ss:$4 sm:$0xff]
  %vm86 = vcmask 261120
  %s87 = scalar_lea.vmem %s1, 96
  %88 = vst.msk [vmem:[%s87] ss:$8 sm:$0xf] %vm86, %v85
  %s89 = scalar_lea.vmem %s1, 65
  %90 = vst.msk [vmem:[%s89] ss:$8 sm:$0xf0] %vm86, %v85
  %s91 = scalar_lea.vmem %s0, 416
  %v92 = vld [vmem:[%s91] ss:$4 sm:$0xff]
  %vm93 = vcmask 261120
  %s94 = scalar_lea.vmem %s1, 98
  %95 = vst.msk [vmem:[%s94] ss:$8 sm:$0xf] %vm93, %v92
  %s96 = scalar_lea.vmem %s1, 67
  %97 = vst.msk [vmem:[%s96] ss:$8 sm:$0xf0] %vm93, %v92
  %s98 = scalar_lea.vmem %s0, 448
  %v99 = vld [vmem:[%s98] ss:$4 sm:$0xff]
  %vm100 = vcmask 261120
  %s101 = scalar_lea.vmem %s1, 100
  %102 = vst.msk [vmem:[%s101] ss:$8 sm:$0xf] %vm100, %v99
  %s103 = scalar_lea.vmem %s1, 69
  %104 = vst.msk [vmem:[%s103] ss:$8 sm:$0xf0] %vm100, %v99
  %s105 = scalar_lea.vmem %s0, 480
  %v106 = vld [vmem:[%s105] ss:$4 sm:$0xff]
  %vm107 = vcmask 261120
  %s108 = scalar_lea.vmem %s1, 102
  %109 = vst.msk [vmem:[%s108] ss:$8 sm:$0xf] %vm107, %v106
  %s110 = scalar_lea.vmem %s1, 71
  %111 = vst.msk [vmem:[%s110] ss:$8 sm:$0xf0] %vm107, %v106
  %s112 = scalar_lea.vmem %s0, 3
  %s113 = smov 3
  %v114 = vld [vmem:[%s112] ss:$16 sm:%s113]
  %s115 = scalar_lea.vmem %s0, 3
  %s116 = smov 12
  %v117 = vld [vmem:[%s115] ss:$16 sm:%s116]
  %vm118 = vcmask 1043458
  %v119 = vsel %vm118, %v117, %v114
  %s120 = scalar_lea.vmem %s0, 3
  %s121 = smov 48
  %v122 = vld [vmem:[%s120] ss:$16 sm:%s121]
  %vm123 = vcmask 1045508
  %v124 = vsel %vm123, %v122, %v119
  %s125 = scalar_lea.vmem %s0, 3
  %s126 = smov 192
  %v127 = vld [vmem:[%s125] ss:$16 sm:%s126]
  %vm128 = vcmask 1047558
  %v129 = vsel %vm128, %v127, %v124
  %130 = vrot.lane.b32.xlu0 %v129, 96
  %v131 = vpop.permute.xlu0 %130
  %vm132 = vcmask 1048320
  %133 = vst.msk [vmem:[%s1] sm:$0xff] %vm132, %v131
  %s134 = scalar_lea.vmem %s0, 131
  %s135 = smov 3
  %v136 = vld [vmem:[%s134] ss:$16 sm:%s135]
  %s137 = scalar_lea.vmem %s0, 131
  %s138 = smov 12
  %v139 = vld [vmem:[%s137] ss:$16 sm:%s138]
  %vm140 = vcmask 1043458
  %v141 = vsel %vm140, %v139, %v136
  %s142 = scalar_lea.vmem %s0, 131
  %s143 = smov 48
  %v144 = vld [vmem:[%s142] ss:$16 sm:%s143]
  %vm145 = vcmask 1045508
  %v146 = vsel %vm145, %v144, %v141
  %s147 = scalar_lea.vmem %s0, 131
  %s148 = smov 192
  %v149 = vld [vmem:[%s147] ss:$16 sm:%s148]
  %vm150 = vcmask 1047558
  %v151 = vsel %vm150, %v149, %v146
  %152 = vrot.lane.b32.xlu0 %v151, 96
  %v153 = vpop.permute.xlu0 %152
  %vm154 = vcmask 1048320
  %s155 = scalar_lea.vmem %s1, 32
  %156 = vst.msk [vmem:[%s155] sm:$0xff] %vm154, %v153
  %s157 = scalar_lea.vmem %s0, 259
  %s158 = smov 3
  %v159 = vld [vmem:[%s157] ss:$16 sm:%s158]
  %s160 = scalar_lea.vmem %s0, 259
  %s161 = smov 12
  %v162 = vld [vmem:[%s160] ss:$16 sm:%s161]
  %vm163 = vcmask 1043458
  %v164 = vsel %vm163, %v162, %v159
  %s165 = scalar_lea.vmem %s0, 259
  %s166 = smov 48
  %v167 = vld [vmem:[%s165] ss:$16 sm:%s166]
  %vm168 = vcmask 1045508
  %v169 = vsel %vm168, %v167, %v164
  %s170 = scalar_lea.vmem %s0, 259
  %s171 = smov 192
  %v172 = vld [vmem:[%s170] ss:$16 sm:%s171]
  %vm173 = vcmask 1047558
  %v174 = vsel %vm173, %v172, %v169
  %175 = vrot.lane.b32.xlu0 %v174, 96
  %v176 = vpop.permute.xlu0 %175
  %vm177 = vcmask 1048320
  %s178 = scalar_lea.vmem %s1, 64
  %179 = vst.msk [vmem:[%s178] sm:$0xff] %vm177, %v176
  %s180 = scalar_lea.vmem %s0, 387
  %s181 = smov 3
  %v182 = vld [vmem:[%s180] ss:$16 sm:%s181]
  %s183 = scalar_lea.vmem %s0, 387
  %s184 = smov 12
  %v185 = vld [vmem:[%s183] ss:$16 sm:%s184]
  %vm186 = vcmask 1043458
  %v187 = vsel %vm186, %v185, %v182
  %s188 = scalar_lea.vmem %s0, 387
  %s189 = smov 48
  %v190 = vld [vmem:[%s188] ss:$16 sm:%s189]
  %vm191 = vcmask 1045508
  %v192 = vsel %vm191, %v190, %v187
  %s193 = scalar_lea.vmem %s0, 387
  %s194 = smov 192
  %v195 = vld [vmem:[%s193] ss:$16 sm:%s194]
  %vm196 = vcmask 1047558
  %v197 = vsel %vm196, %v195, %v192
  %198 = vrot.lane.b32.xlu0 %v197, 96
  %v199 = vpop.permute.xlu0 %198
  %vm200 = vcmask 1048320
  %s201 = scalar_lea.vmem %s1, 96
  %202 = vst.msk [vmem:[%s201] sm:$0xff] %vm200, %v199
  %s203 = scalar_lea.vmem %s0, 7
  %s204 = smov 3
  %v205 = vld [vmem:[%s203] ss:$16 sm:%s204]
  %s206 = scalar_lea.vmem %s0, 7
  %s207 = smov 12
  %v208 = vld [vmem:[%s206] ss:$16 sm:%s207]
  %vm209 = vcmask 1043458
  %v210 = vsel %vm209, %v208, %v205
  %s211 = scalar_lea.vmem %s0, 7
  %s212 = smov 48
  %v213 = vld [vmem:[%s211] ss:$16 sm:%s212]
  %vm214 = vcmask 1045508
  %v215 = vsel %vm214, %v213, %v210
  %s216 = scalar_lea.vmem %s0, 7
  %s217 = smov 192
  %v218 = vld [vmem:[%s216] ss:$16 sm:%s217]
  %vm219 = vcmask 1047558
  %v220 = vsel %vm219, %v218, %v215
  %221 = vrot.lane.b32.xlu0 %v220, 96
  %v222 = vpop.permute.xlu0 %221
  %vm223 = vcmask 1048320
  %s224 = scalar_lea.vmem %s1, 8
  %225 = vst.msk [vmem:[%s224] sm:$0xff] %vm223, %v222
  %s226 = scalar_lea.vmem %s0, 135
  %s227 = smov 3
  %v228 = vld [vmem:[%s226] ss:$16 sm:%s227]
  %s229 = scalar_lea.vmem %s0, 135
  %s230 = smov 12
  %v231 = vld [vmem:[%s229] ss:$16 sm:%s230]
  %vm232 = vcmask 1043458
  %v233 = vsel %vm232, %v231, %v228
  %s234 = scalar_lea.vmem %s0, 135
  %s235 = smov 48
  %v236 = vld [vmem:[%s234] ss:$16 sm:%s235]
  %vm237 = vcmask 1045508
  %v238 = vsel %vm237, %v236, %v233
  %s239 = scalar_lea.vmem %s0, 135
  %s240 = smov 192
  %v241 = vld [vmem:[%s239] ss:$16 sm:%s240]
  %vm242 = vcmask 1047558
  %v243 = vsel %vm242, %v241, %v238
  %244 = vrot.lane.b32.xlu0 %v243, 96
  %v245 = vpop.permute.xlu0 %244
  %vm246 = vcmask 1048320
  %s247 = scalar_lea.vmem %s1, 40
  %248 = vst.msk [vmem:[%s247] sm:$0xff] %vm246, %v245
  %s249 = scalar_lea.vmem %s0, 263
  %s250 = smov 3
  %v251 = vld [vmem:[%s249] ss:$16 sm:%s250]
  %s252 = scalar_lea.vmem %s0, 263
  %s253 = smov 12
  %v254 = vld [vmem:[%s252] ss:$16 sm:%s253]
  %vm255 = vcmask 1043458
  %v256 = vsel %vm255, %v254, %v251
  %s257 = scalar_lea.vmem %s0, 263
  %s258 = smov 48
  %v259 = vld [vmem:[%s257] ss:$16 sm:%s258]
  %vm260 = vcmask 1045508
  %v261 = vsel %vm260, %v259, %v256
  %s262 = scalar_lea.vmem %s0, 263
  %s263 = smov 192
  %v264 = vld [vmem:[%s262] ss:$16 sm:%s263]
  %vm265 = vcmask 1047558
  %v266 = vsel %vm265, %v264, %v261
  %267 = vrot.lane.b32.xlu0 %v266, 96
  %v268 = vpop.permute.xlu0 %267
  %vm269 = vcmask 1048320
  %s270 = scalar_lea.vmem %s1, 72
  %271 = vst.msk [vmem:[%s270] sm:$0xff] %vm269, %v268
  %s272 = scalar_lea.vmem %s0, 391
  %s273 = smov 3
  %v274 = vld [vmem:[%s272] ss:$16 sm:%s273]
  %s275 = scalar_lea.vmem %s0, 391
  %s276 = smov 12
  %v277 = vld [vmem:[%s275] ss:$16 sm:%s276]
  %vm278 = vcmask 1043458
  %v279 = vsel %vm278, %v277, %v274
  %s280 = scalar_lea.vmem %s0, 391
  %s281 = smov 48
  %v282 = vld [vmem:[%s280] ss:$16 sm:%s281]
  %vm283 = vcmask 1045508
  %v284 = vsel %vm283, %v282, %v279
  %s285 = scalar_lea.vmem %s0, 391
  %s286 = smov 192
  %v287 = vld [vmem:[%s285] ss:$16 sm:%s286]
  %vm288 = vcmask 1047558
  %v289 = vsel %vm288, %v287, %v284
  %290 = vrot.lane.b32.xlu0 %v289, 96
  %v291 = vpop.permute.xlu0 %290
  %vm292 = vcmask 1048320
  %s293 = scalar_lea.vmem %s1, 104
  %294 = vst.msk [vmem:[%s293] sm:$0xff] %vm292, %v291
  %s295 = scalar_lea.vmem %s0, 11
  %s296 = smov 3
  %v297 = vld [vmem:[%s295] ss:$16 sm:%s296]
  %s298 = scalar_lea.vmem %s0, 11
  %s299 = smov 12
  %v300 = vld [vmem:[%s298] ss:$16 sm:%s299]
  %vm301 = vcmask 1043458
  %v302 = vsel %vm301, %v300, %v297
  %s303 = scalar_lea.vmem %s0, 11
  %s304 = smov 48
  %v305 = vld [vmem:[%s303] ss:$16 sm:%s304]
  %vm306 = vcmask 1045508
  %v307 = vsel %vm306, %v305, %v302
  %s308 = scalar_lea.vmem %s0, 11
  %s309 = smov 192
  %v310 = vld [vmem:[%s308] ss:$16 sm:%s309]
  %vm311 = vcmask 1047558
  %v312 = vsel %vm311, %v310, %v307
  %313 = vrot.lane.b32.xlu0 %v312, 96
  %v314 = vpop.permute.xlu0 %313
  %vm315 = vcmask 1048320
  %s316 = scalar_lea.vmem %s1, 16
  %317 = vst.msk [vmem:[%s316] sm:$0xff] %vm315, %v314
  %s318 = scalar_lea.vmem %s0, 139
  %s319 = smov 3
  %v320 = vld [vmem:[%s318] ss:$16 sm:%s319]
  %s321 = scalar_lea.vmem %s0, 139
  %s322 = smov 12
  %v323 = vld [vmem:[%s321] ss:$16 sm:%s322]
  %vm324 = vcmask 1043458
  %v325 = vsel %vm324, %v323, %v320
  %s326 = scalar_lea.vmem %s0, 139
  %s327 = smov 48
  %v328 = vld [vmem:[%s326] ss:$16 sm:%s327]
  %vm329 = vcmask 1045508
  %v330 = vsel %vm329, %v328, %v325
  %s331 = scalar_lea.vmem %s0, 139
  %s332 = smov 192
  %v333 = vld [vmem:[%s331] ss:$16 sm:%s332]
  %vm334 = vcmask 1047558
  %v335 = vsel %vm334, %v333, %v330
  %336 = vrot.lane.b32.xlu0 %v335, 96
  %v337 = vpop.permute.xlu0 %336
  %vm338 = vcmask 1048320
  %s339 = scalar_lea.vmem %s1, 48
  %340 = vst.msk [vmem:[%s339] sm:$0xff] %vm338, %v337
  %s341 = scalar_lea.vmem %s0, 267
  %s342 = smov 3
  %v343 = vld [vmem:[%s341] ss:$16 sm:%s342]
  %s344 = scalar_lea.vmem %s0, 267
  %s345 = smov 12
  %v346 = vld [vmem:[%s344] ss:$16 sm:%s345]
  %vm347 = vcmask 1043458
  %v348 = vsel %vm347, %v346, %v343
  %s349 = scalar_lea.vmem %s0, 267
  %s350 = smov 48
  %v351 = vld [vmem:[%s349] ss:$16 sm:%s350]
  %vm352 = vcmask 1045508
  %v353 = vsel %vm352, %v351, %v348
  %s354 = scalar_lea.vmem %s0, 267
  %s355 = smov 192
  %v356 = vld [vmem:[%s354] ss:$16 sm:%s355]
  %vm357 = vcmask 1047558
  %v358 = vsel %vm357, %v356, %v353
  %359 = vrot.lane.b32.xlu0 %v358, 96
  %v360 = vpop.permute.xlu0 %359
  %vm361 = vcmask 1048320
  %s362 = scalar_lea.vmem %s1, 80
  %363 = vst.msk [vmem:[%s362] sm:$0xff] %vm361, %v360
  %s364 = scalar_lea.vmem %s0, 395
  %s365 = smov 3
  %v366 = vld [vmem:[%s364] ss:$16 sm:%s365]
  %s367 = scalar_lea.vmem %s0, 395
  %s368 = smov 12
  %v369 = vld [vmem:[%s367] ss:$16 sm:%s368]
  %vm370 = vcmask 1043458
  %v371 = vsel %vm370, %v369, %v366
  %s372 = scalar_lea.vmem %s0, 395
  %s373 = smov 48
  %v374 = vld [vmem:[%s372] ss:$16 sm:%s373]
  %vm375 = vcmask 1045508
  %v376 = vsel %vm375, %v374, %v371
  %s377 = scalar_lea.vmem %s0, 395
  %s378 = smov 192
  %v379 = vld [vmem:[%s377] ss:$16 sm:%s378]
  %vm380 = vcmask 1047558
  %v381 = vsel %vm380, %v379, %v376
  %382 = vrot.lane.b32.xlu0 %v381, 96
  %v383 = vpop.permute.xlu0 %382
  %vm384 = vcmask 1048320
  %s385 = scalar_lea.vmem %s1, 112
  %386 = vst.msk [vmem:[%s385] sm:$0xff] %vm384, %v383
  %s387 = scalar_lea.vmem %s0, 15
  %s388 = smov 3
  %v389 = vld [vmem:[%s387] ss:$16 sm:%s388]
  %s390 = scalar_lea.vmem %s0, 15
  %s391 = smov 12
  %v392 = vld [vmem:[%s390] ss:$16 sm:%s391]
  %vm393 = vcmask 1043458
  %v394 = vsel %vm393, %v392, %v389
  %s395 = scalar_lea.vmem %s0, 15
  %s396 = smov 48
  %v397 = vld [vmem:[%s395] ss:$16 sm:%s396]
  %vm398 = vcmask 1045508
  %v399 = vsel %vm398, %v397, %v394
  %s400 = scalar_lea.vmem %s0, 15
  %s401 = smov 192
  %v402 = vld [vmem:[%s400] ss:$16 sm:%s401]
  %vm403 = vcmask 1047558
  %v404 = vsel %vm403, %v402, %v399
  %405 = vrot.lane.b32.xlu0 %v404, 96
  %v406 = vpop.permute.xlu0 %405
  %vm407 = vcmask 1048320
  %s408 = scalar_lea.vmem %s1, 24
  %409 = vst.msk [vmem:[%s408] sm:$0xff] %vm407, %v406
  %s410 = scalar_lea.vmem %s0, 143
  %s411 = smov 3
  %v412 = vld [vmem:[%s410] ss:$16 sm:%s411]
  %s413 = scalar_lea.vmem %s0, 143
  %s414 = smov 12
  %v415 = vld [vmem:[%s413] ss:$16 sm:%s414]
  %vm416 = vcmask 1043458
  %v417 = vsel %vm416, %v415, %v412
  %s418 = scalar_lea.vmem %s0, 143
  %s419 = smov 48
  %v420 = vld [vmem:[%s418] ss:$16 sm:%s419]
  %vm421 = vcmask 1045508
  %v422 = vsel %vm421, %v420, %v417
  %s423 = scalar_lea.vmem %s0, 143
  %s424 = smov 192
  %v425 = vld [vmem:[%s423] ss:$16 sm:%s424]
  %vm426 = vcmask 1047558
  %v427 = vsel %vm426, %v425, %v422
  %428 = vrot.lane.b32.xlu0 %v427, 96
  %v429 = vpop.permute.xlu0 %428
  %vm430 = vcmask 1048320
  %s431 = scalar_lea.vmem %s1, 56
  %432 = vst.msk [vmem:[%s431] sm:$0xff] %vm430, %v429
  %s433 = scalar_lea.vmem %s0, 271
  %s434 = smov 3
  %v435 = vld [vmem:[%s433] ss:$16 sm:%s434]
  %s436 = scalar_lea.vmem %s0, 271
  %s437 = smov 12
  %v438 = vld [vmem:[%s436] ss:$16 sm:%s437]
  %vm439 = vcmask 1043458
  %v440 = vsel %vm439, %v438, %v435
  %s441 = scalar_lea.vmem %s0, 271
  %s442 = smov 48
  %v443 = vld [vmem:[%s441] ss:$16 sm:%s442]
  %vm444 = vcmask 1045508
  %v445 = vsel %vm444, %v443, %v440
  %s446 = scalar_lea.vmem %s0, 271
  %s447 = smov 192
  %v448 = vld [vmem:[%s446] ss:$16 sm:%s447]
  %vm449 = vcmask 1047558
  %v450 = vsel %vm449, %v448, %v445
  %451 = vrot.lane.b32.xlu0 %v450, 96
  %v452 = vpop.permute.xlu0 %451
  %vm453 = vcmask 1048320
  %s454 = scalar_lea.vmem %s1, 88
  %455 = vst.msk [vmem:[%s454] sm:$0xff] %vm453, %v452
  %s456 = scalar_lea.vmem %s0, 399
  %s457 = smov 3
  %v458 = vld [vmem:[%s456] ss:$16 sm:%s457]
  %s459 = scalar_lea.vmem %s0, 399
  %s460 = smov 12
  %v461 = vld [vmem:[%s459] ss:$16 sm:%s460]
  %vm462 = vcmask 1043458
  %v463 = vsel %vm462, %v461, %v458
  %s464 = scalar_lea.vmem %s0, 399
  %s465 = smov 48
  %v466 = vld [vmem:[%s464] ss:$16 sm:%s465]
  %vm467 = vcmask 1045508
  %v468 = vsel %vm467, %v466, %v463
  %s469 = scalar_lea.vmem %s0, 399
  %s470 = smov 192
  %v471 = vld [vmem:[%s469] ss:$16 sm:%s470]
  %vm472 = vcmask 1047558
  %v473 = vsel %vm472, %v471, %v468
  %474 = vrot.lane.b32.xlu0 %v473, 96
  %v475 = vpop.permute.xlu0 %474
  %vm476 = vcmask 1048320
  %s477 = scalar_lea.vmem %s1, 120
  %478 = vst.msk [vmem:[%s477] sm:$0xff] %vm476, %v475
  %s479 = scalar_lea.vmem %s0, 2
  %s480 = smov 3
  %v481 = vld [vmem:[%s479] ss:$16 sm:%s480]
  %s482 = scalar_lea.vmem %s0, 2
  %s483 = smov 12
  %v484 = vld [vmem:[%s482] ss:$16 sm:%s483]
  %vm485 = vcmask 1043458
  %v486 = vsel %vm485, %v484, %v481
  %s487 = scalar_lea.vmem %s0, 2
  %s488 = smov 48
  %v489 = vld [vmem:[%s487] ss:$16 sm:%s488]
  %vm490 = vcmask 1045508
  %v491 = vsel %vm490, %v489, %v486
  %s492 = scalar_lea.vmem %s0, 2
  %s493 = smov 192
  %v494 = vld [vmem:[%s492] ss:$16 sm:%s493]
  %vm495 = vcmask 1047558
  %v496 = vsel %vm495, %v494, %v491
  %497 = vrot.lane.b32.xlu0 %v496, 64
  %v498 = vpop.permute.xlu0 %497
  %vm499 = vcmask 785920
  %500 = vst.msk [vmem:[%s1] sm:$0xff] %vm499, %v498
  %s501 = scalar_lea.vmem %s0, 130
  %s502 = smov 3
  %v503 = vld [vmem:[%s501] ss:$16 sm:%s502]
  %s504 = scalar_lea.vmem %s0, 130
  %s505 = smov 12
  %v506 = vld [vmem:[%s504] ss:$16 sm:%s505]
  %vm507 = vcmask 1043458
  %v508 = vsel %vm507, %v506, %v503
  %s509 = scalar_lea.vmem %s0, 130
  %s510 = smov 48
  %v511 = vld [vmem:[%s509] ss:$16 sm:%s510]
  %vm512 = vcmask 1045508
  %v513 = vsel %vm512, %v511, %v508
  %s514 = scalar_lea.vmem %s0, 130
  %s515 = smov 192
  %v516 = vld [vmem:[%s514] ss:$16 sm:%s515]
  %vm517 = vcmask 1047558
  %v518 = vsel %vm517, %v516, %v513
  %519 = vrot.lane.b32.xlu0 %v518, 64
  %v520 = vpop.permute.xlu0 %519
  %vm521 = vcmask 785920
  %s522 = scalar_lea.vmem %s1, 32
  %523 = vst.msk [vmem:[%s522] sm:$0xff] %vm521, %v520
  %s524 = scalar_lea.vmem %s0, 258
  %s525 = smov 3
  %v526 = vld [vmem:[%s524] ss:$16 sm:%s525]
  %s527 = scalar_lea.vmem %s0, 258
  %s528 = smov 12
  %v529 = vld [vmem:[%s527] ss:$16 sm:%s528]
  %vm530 = vcmask 1043458
  %v531 = vsel %vm530, %v529, %v526
  %s532 = scalar_lea.vmem %s0, 258
  %s533 = smov 48
  %v534 = vld [vmem:[%s532] ss:$16 sm:%s533]
  %vm535 = vcmask 1045508
  %v536 = vsel %vm535, %v534, %v531
  %s537 = scalar_lea.vmem %s0, 258
  %s538 = smov 192
  %v539 = vld [vmem:[%s537] ss:$16 sm:%s538]
  %vm540 = vcmask 1047558
  %v541 = vsel %vm540, %v539, %v536
  %542 = vrot.lane.b32.xlu0 %v541, 64
  %v543 = vpop.permute.xlu0 %542
  %vm544 = vcmask 785920
  %s545 = scalar_lea.vmem %s1, 64
  %546 = vst.msk [vmem:[%s545] sm:$0xff] %vm544, %v543
  %s547 = scalar_lea.vmem %s0, 386
  %s548 = smov 3
  %v549 = vld [vmem:[%s547] ss:$16 sm:%s548]
  %s550 = scalar_lea.vmem %s0, 386
  %s551 = smov 12
  %v552 = vld [vmem:[%s550] ss:$16 sm:%s551]
  %vm553 = vcmask 1043458
  %v554 = vsel %vm553, %v552, %v549
  %s555 = scalar_lea.vmem %s0, 386
  %s556 = smov 48
  %v557 = vld [vmem:[%s555] ss:$16 sm:%s556]
  %vm558 = vcmask 1045508
  %v559 = vsel %vm558, %v557, %v554
  %s560 = scalar_lea.vmem %s0, 386
  %s561 = smov 192
  %v562 = vld [vmem:[%s560] ss:$16 sm:%s561]
  %vm563 = vcmask 1047558
  %v564 = vsel %vm563, %v562, %v559
  %565 = vrot.lane.b32.xlu0 %v564, 64
  %v566 = vpop.permute.xlu0 %565
  %vm567 = vcmask 785920
  %s568 = scalar_lea.vmem %s1, 96
  %569 = vst.msk [vmem:[%s568] sm:$0xff] %vm567, %v566
  %s570 = scalar_lea.vmem %s0, 6
  %s571 = smov 3
  %v572 = vld [vmem:[%s570] ss:$16 sm:%s571]
  %s573 = scalar_lea.vmem %s0, 6
  %s574 = smov 12
  %v575 = vld [vmem:[%s573] ss:$16 sm:%s574]
  %vm576 = vcmask 1043458
  %v577 = vsel %vm576, %v575, %v572
  %s578 = scalar_lea.vmem %s0, 6
  %s579 = smov 48
  %v580 = vld [vmem:[%s578] ss:$16 sm:%s579]
  %vm581 = vcmask 1045508
  %v582 = vsel %vm581, %v580, %v577
  %s583 = scalar_lea.vmem %s0, 6
  %s584 = smov 192
  %v585 = vld [vmem:[%s583] ss:$16 sm:%s584]
  %vm586 = vcmask 1047558
  %v587 = vsel %vm586, %v585, %v582
  %588 = vrot.lane.b32.xlu0 %v587, 64
  %v589 = vpop.permute.xlu0 %588
  %vm590 = vcmask 785920
  %s591 = scalar_lea.vmem %s1, 8
  %592 = vst.msk [vmem:[%s591] sm:$0xff] %vm590, %v589
  %s593 = scalar_lea.vmem %s0, 134
  %s594 = smov 3
  %v595 = vld [vmem:[%s593] ss:$16 sm:%s594]
  %s596 = scalar_lea.vmem %s0, 134
  %s597 = smov 12
  %v598 = vld [vmem:[%s596] ss:$16 sm:%s597]
  %vm599 = vcmask 1043458
  %v600 = vsel %vm599, %v598, %v595
  %s601 = scalar_lea.vmem %s0, 134
  %s602 = smov 48
  %v603 = vld [vmem:[%s601] ss:$16 sm:%s602]
  %vm604 = vcmask 1045508
  %v605 = vsel %vm604, %v603, %v600
  %s606 = scalar_lea.vmem %s0, 134
  %s607 = smov 192
  %v608 = vld [vmem:[%s606] ss:$16 sm:%s607]
  %vm609 = vcmask 1047558
  %v610 = vsel %vm609, %v608, %v605
  %611 = vrot.lane.b32.xlu0 %v610, 64
  %v612 = vpop.permute.xlu0 %611
  %vm613 = vcmask 785920
  %s614 = scalar_lea.vmem %s1, 40
  %615 = vst.msk [vmem:[%s614] sm:$0xff] %vm613, %v612
  %s616 = scalar_lea.vmem %s0, 262
  %s617 = smov 3
  %v618 = vld [vmem:[%s616] ss:$16 sm:%s617]
  %s619 = scalar_lea.vmem %s0, 262
  %s620 = smov 12
  %v621 = vld [vmem:[%s619] ss:$16 sm:%s620]
  %vm622 = vcmask 1043458
  %v623 = vsel %vm622, %v621, %v618
  %s624 = scalar_lea.vmem %s0, 262
  %s625 = smov 48
  %v626 = vld [vmem:[%s624] ss:$16 sm:%s625]
  %vm627 = vcmask 1045508
  %v628 = vsel %vm627, %v626, %v623
  %s629 = scalar_lea.vmem %s0, 262
  %s630 = smov 192
  %v631 = vld [vmem:[%s629] ss:$16 sm:%s630]
  %vm632 = vcmask 1047558
  %v633 = vsel %vm632, %v631, %v628
  %634 = vrot.lane.b32.xlu0 %v633, 64
  %v635 = vpop.permute.xlu0 %634
  %vm636 = vcmask 785920
  %s637 = scalar_lea.vmem %s1, 72
  %638 = vst.msk [vmem:[%s637] sm:$0xff] %vm636, %v635
  %s639 = scalar_lea.vmem %s0, 390
  %s640 = smov 3
  %v641 = vld [vmem:[%s639] ss:$16 sm:%s640]
  %s642 = scalar_lea.vmem %s0, 390
  %s643 = smov 12
  %v644 = vld [vmem:[%s642] ss:$16 sm:%s643]
  %vm645 = vcmask 1043458
  %v646 = vsel %vm645, %v644, %v641
  %s647 = scalar_lea.vmem %s0, 390
  %s648 = smov 48
  %v649 = vld [vmem:[%s647] ss:$16 sm:%s648]
  %vm650 = vcmask 1045508
  %v651 = vsel %vm650, %v649, %v646
  %s652 = scalar_lea.vmem %s0, 390
  %s653 = smov 192
  %v654 = vld [vmem:[%s652] ss:$16 sm:%s653]
  %vm655 = vcmask 1047558
  %v656 = vsel %vm655, %v654, %v651
  %657 = vrot.lane.b32.xlu0 %v656, 64
  %v658 = vpop.permute.xlu0 %657
  %vm659 = vcmask 785920
  %s660 = scalar_lea.vmem %s1, 104
  %661 = vst.msk [vmem:[%s660] sm:$0xff] %vm659, %v658
  %s662 = scalar_lea.vmem %s0, 10
  %s663 = smov 3
  %v664 = vld [vmem:[%s662] ss:$16 sm:%s663]
  %s665 = scalar_lea.vmem %s0, 10
  %s666 = smov 12
  %v667 = vld [vmem:[%s665] ss:$16 sm:%s666]
  %vm668 = vcmask 1043458
  %v669 = vsel %vm668, %v667, %v664
  %s670 = scalar_lea.vmem %s0, 10
  %s671 = smov 48
  %v672 = vld [vmem:[%s670] ss:$16 sm:%s671]
  %vm673 = vcmask 1045508
  %v674 = vsel %vm673, %v672, %v669
  %s675 = scalar_lea.vmem %s0, 10
  %s676 = smov 192
  %v677 = vld [vmem:[%s675] ss:$16 sm:%s676]
  %vm678 = vcmask 1047558
  %v679 = vsel %vm678, %v677, %v674
  %680 = vrot.lane.b32.xlu0 %v679, 64
  %v681 = vpop.permute.xlu0 %680
  %vm682 = vcmask 785920
  %s683 = scalar_lea.vmem %s1, 16
  %684 = vst.msk [vmem:[%s683] sm:$0xff] %vm682, %v681
  %s685 = scalar_lea.vmem %s0, 138
  %s686 = smov 3
  %v687 = vld [vmem:[%s685] ss:$16 sm:%s686]
  %s688 = scalar_lea.vmem %s0, 138
  %s689 = smov 12
  %v690 = vld [vmem:[%s688] ss:$16 sm:%s689]
  %vm691 = vcmask 1043458
  %v692 = vsel %vm691, %v690, %v687
  %s693 = scalar_lea.vmem %s0, 138
  %s694 = smov 48
  %v695 = vld [vmem:[%s693] ss:$16 sm:%s694]
  %vm696 = vcmask 1045508
  %v697 = vsel %vm696, %v695, %v692
  %s698 = scalar_lea.vmem %s0, 138
  %s699 = smov 192
  %v700 = vld [vmem:[%s698] ss:$16 sm:%s699]
  %vm701 = vcmask 1047558
  %v702 = vsel %vm701, %v700, %v697
  %703 = vrot.lane.b32.xlu0 %v702, 64
  %v704 = vpop.permute.xlu0 %703
  %vm705 = vcmask 785920
  %s706 = scalar_lea.vmem %s1, 48
  %707 = vst.msk [vmem:[%s706] sm:$0xff] %vm705, %v704
  %s708 = scalar_lea.vmem %s0, 266
  %s709 = smov 3
  %v710 = vld [vmem:[%s708] ss:$16 sm:%s709]
  %s711 = scalar_lea.vmem %s0, 266
  %s712 = smov 12
  %v713 = vld [vmem:[%s711] ss:$16 sm:%s712]
  %vm714 = vcmask 1043458
  %v715 = vsel %vm714, %v713, %v710
  %s716 = scalar_lea.vmem %s0, 266
  %s717 = smov 48
  %v718 = vld [vmem:[%s716] ss:$16 sm:%s717]
  %vm719 = vcmask 1045508
  %v720 = vsel %vm719, %v718, %v715
  %s721 = scalar_lea.vmem %s0, 266
  %s722 = smov 192
  %v723 = vld [vmem:[%s721] ss:$16 sm:%s722]
  %vm724 = vcmask 1047558
  %v725 = vsel %vm724, %v723, %v720
  %726 = vrot.lane.b32.xlu0 %v725, 64
  %v727 = vpop.permute.xlu0 %726
  %vm728 = vcmask 785920
  %s729 = scalar_lea.vmem %s1, 80
  %730 = vst.msk [vmem:[%s729] sm:$0xff] %vm728, %v727
  %s731 = scalar_lea.vmem %s0, 394
  %s732 = smov 3
  %v733 = vld [vmem:[%s731] ss:$16 sm:%s732]
  %s734 = scalar_lea.vmem %s0, 394
  %s735 = smov 12
  %v736 = vld [vmem:[%s734] ss:$16 sm:%s735]
  %vm737 = vcmask 1043458
  %v738 = vsel %vm737, %v736, %v733
  %s739 = scalar_lea.vmem %s0, 394
  %s740 = smov 48
  %v741 = vld [vmem:[%s739] ss:$16 sm:%s740]
  %vm742 = vcmask 1045508
  %v743 = vsel %vm742, %v741, %v738
  %s744 = scalar_lea.vmem %s0, 394
  %s745 = smov 192
  %v746 = vld [vmem:[%s744] ss:$16 sm:%s745]
  %vm747 = vcmask 1047558
  %v748 = vsel %vm747, %v746, %v743
  %749 = vrot.lane.b32.xlu0 %v748, 64
  %v750 = vpop.permute.xlu0 %749
  %vm751 = vcmask 785920
  %s752 = scalar_lea.vmem %s1, 112
  %753 = vst.msk [vmem:[%s752] sm:$0xff] %vm751, %v750
  %s754 = scalar_lea.vmem %s0, 14
  %s755 = smov 3
  %v756 = vld [vmem:[%s754] ss:$16 sm:%s755]
  %s757 = scalar_lea.vmem %s0, 14
  %s758 = smov 12
  %v759 = vld [vmem:[%s757] ss:$16 sm:%s758]
  %vm760 = vcmask 1043458
  %v761 = vsel %vm760, %v759, %v756
  %s762 = scalar_lea.vmem %s0, 14
  %s763 = smov 48
  %v764 = vld [vmem:[%s762] ss:$16 sm:%s763]
  %vm765 = vcmask 1045508
  %v766 = vsel %vm765, %v764, %v761
  %s767 = scalar_lea.vmem %s0, 14
  %s768 = smov 192
  %v769 = vld [vmem:[%s767] ss:$16 sm:%s768]
  %vm770 = vcmask 1047558
  %v771 = vsel %vm770, %v769, %v766
  %772 = vrot.lane.b32.xlu0 %v771, 64
  %v773 = vpop.permute.xlu0 %772
  %vm774 = vcmask 785920
  %s775 = scalar_lea.vmem %s1, 24
  %776 = vst.msk [vmem:[%s775] sm:$0xff] %vm774, %v773
  %s777 = scalar_lea.vmem %s0, 142
  %s778 = smov 3
  %v779 = vld [vmem:[%s777] ss:$16 sm:%s778]
  %s780 = scalar_lea.vmem %s0, 142
  %s781 = smov 12
  %v782 = vld [vmem:[%s780] ss:$16 sm:%s781]
  %vm783 = vcmask 1043458
  %v784 = vsel %vm783, %v782, %v779
  %s785 = scalar_lea.vmem %s0, 142
  %s786 = smov 48
  %v787 = vld [vmem:[%s785] ss:$16 sm:%s786]
  %vm788 = vcmask 1045508
  %v789 = vsel %vm788, %v787, %v784
  %s790 = scalar_lea.vmem %s0, 142
  %s791 = smov 192
  %v792 = vld [vmem:[%s790] ss:$16 sm:%s791]
  %vm793 = vcmask 1047558
  %v794 = vsel %vm793, %v792, %v789
  %795 = vrot.lane.b32.xlu0 %v794, 64
  %v796 = vpop.permute.xlu0 %795
  %vm797 = vcmask 785920
  %s798 = scalar_lea.vmem %s1, 56
  %799 = vst.msk [vmem:[%s798] sm:$0xff] %vm797, %v796
  %s800 = scalar_lea.vmem %s0, 270
  %s801 = smov 3
  %v802 = vld [vmem:[%s800] ss:$16 sm:%s801]
  %s803 = scalar_lea.vmem %s0, 270
  %s804 = smov 12
  %v805 = vld [vmem:[%s803] ss:$16 sm:%s804]
  %vm806 = vcmask 1043458
  %v807 = vsel %vm806, %v805, %v802
  %s808 = scalar_lea.vmem %s0, 270
  %s809 = smov 48
  %v810 = vld [vmem:[%s808] ss:$16 sm:%s809]
  %vm811 = vcmask 1045508
  %v812 = vsel %vm811, %v810, %v807
  %s813 = scalar_lea.vmem %s0, 270
  %s814 = smov 192
  %v815 = vld [vmem:[%s813] ss:$16 sm:%s814]
  %vm816 = vcmask 1047558
  %v817 = vsel %vm816, %v815, %v812
  %818 = vrot.lane.b32.xlu0 %v817, 64
  %v819 = vpop.permute.xlu0 %818
  %vm820 = vcmask 785920
  %s821 = scalar_lea.vmem %s1, 88
  %822 = vst.msk [vmem:[%s821] sm:$0xff] %vm820, %v819
  %s823 = scalar_lea.vmem %s0, 398
  %s824 = smov 3
  %v825 = vld [vmem:[%s823] ss:$16 sm:%s824]
  %s826 = scalar_lea.vmem %s0, 398
  %s827 = smov 12
  %v828 = vld [vmem:[%s826] ss:$16 sm:%s827]
  %vm829 = vcmask 1043458
  %v830 = vsel %vm829, %v828, %v825
  %s831 = scalar_lea.vmem %s0, 398
  %s832 = smov 48
  %v833 = vld [vmem:[%s831] ss:$16 sm:%s832]
  %vm834 = vcmask 1045508
  %v835 = vsel %vm834, %v833, %v830
  %s836 = scalar_lea.vmem %s0, 398
  %s837 = smov 192
  %v838 = vld [vmem:[%s836] ss:$16 sm:%s837]
  %vm839 = vcmask 1047558
  %v840 = vsel %vm839, %v838, %v835
  %841 = vrot.lane.b32.xlu0 %v840, 64
  %v842 = vpop.permute.xlu0 %841
  %vm843 = vcmask 785920
  %s844 = scalar_lea.vmem %s1, 120
  %845 = vst.msk [vmem:[%s844] sm:$0xff] %vm843, %v842
  %s846 = scalar_lea.vmem %s0, 1
  %s847 = smov 3
  %v848 = vld [vmem:[%s846] ss:$16 sm:%s847]
  %s849 = scalar_lea.vmem %s0, 1
  %s850 = smov 12
  %v851 = vld [vmem:[%s849] ss:$16 sm:%s850]
  %vm852 = vcmask 1043458
  %v853 = vsel %vm852, %v851, %v848
  %s854 = scalar_lea.vmem %s0, 1
  %s855 = smov 48
  %v856 = vld [vmem:[%s854] ss:$16 sm:%s855]
  %vm857 = vcmask 1045508
  %v858 = vsel %vm857, %v856, %v853
  %s859 = scalar_lea.vmem %s0, 1
  %s860 = smov 192
  %v861 = vld [vmem:[%s859] ss:$16 sm:%s860]
  %vm862 = vcmask 1047558
  %v863 = vsel %vm862, %v861, %v858
  %864 = vrot.lane.b32.xlu0 %v863, 32
  %v865 = vpop.permute.xlu0 %864
  %vm866 = vcmask 523520
  %867 = vst.msk [vmem:[%s1] sm:$0xff] %vm866, %v865
  %s868 = scalar_lea.vmem %s0, 129
  %s869 = smov 3
  %v870 = vld [vmem:[%s868] ss:$16 sm:%s869]
  %s871 = scalar_lea.vmem %s0, 129
  %s872 = smov 12
  %v873 = vld [vmem:[%s871] ss:$16 sm:%s872]
  %vm874 = vcmask 1043458
  %v875 = vsel %vm874, %v873, %v870
  %s876 = scalar_lea.vmem %s0, 129
  %s877 = smov 48
  %v878 = vld [vmem:[%s876] ss:$16 sm:%s877]
  %vm879 = vcmask 1045508
  %v880 = vsel %vm879, %v878, %v875
  %s881 = scalar_lea.vmem %s0, 129
  %s882 = smov 192
  %v883 = vld [vmem:[%s881] ss:$16 sm:%s882]
  %vm884 = vcmask 1047558
  %v885 = vsel %vm884, %v883, %v880
  %886 = vrot.lane.b32.xlu0 %v885, 32
  %v887 = vpop.permute.xlu0 %886
  %vm888 = vcmask 523520
  %s889 = scalar_lea.vmem %s1, 32
  %890 = vst.msk [vmem:[%s889] sm:$0xff] %vm888, %v887
  %s891 = scalar_lea.vmem %s0, 257
  %s892 = smov 3
  %v893 = vld [vmem:[%s891] ss:$16 sm:%s892]
  %s894 = scalar_lea.vmem %s0, 257
  %s895 = smov 12
  %v896 = vld [vmem:[%s894] ss:$16 sm:%s895]
  %vm897 = vcmask 1043458
  %v898 = vsel %vm897, %v896, %v893
  %s899 = scalar_lea.vmem %s0, 257
  %s900 = smov 48
  %v901 = vld [vmem:[%s899] ss:$16 sm:%s900]
  %vm902 = vcmask 1045508
  %v903 = vsel %vm902, %v901, %v898
  %s904 = scalar_lea.vmem %s0, 257
  %s905 = smov 192
  %v906 = vld [vmem:[%s904] ss:$16 sm:%s905]
  %vm907 = vcmask 1047558
  %v908 = vsel %vm907, %v906, %v903
  %909 = vrot.lane.b32.xlu0 %v908, 32
  %v910 = vpop.permute.xlu0 %909
  %vm911 = vcmask 523520
  %s912 = scalar_lea.vmem %s1, 64
  %913 = vst.msk [vmem:[%s912] sm:$0xff] %vm911, %v910
  %s914 = scalar_lea.vmem %s0, 385
  %s915 = smov 3
  %v916 = vld [vmem:[%s914] ss:$16 sm:%s915]
  %s917 = scalar_lea.vmem %s0, 385
  %s918 = smov 12
  %v919 = vld [vmem:[%s917] ss:$16 sm:%s918]
  %vm920 = vcmask 1043458
  %v921 = vsel %vm920, %v919, %v916
  %s922 = scalar_lea.vmem %s0, 385
  %s923 = smov 48
  %v924 = vld [vmem:[%s922] ss:$16 sm:%s923]
  %vm925 = vcmask 1045508
  %v926 = vsel %vm925, %v924, %v921
  %s927 = scalar_lea.vmem %s0, 385
  %s928 = smov 192
  %v929 = vld [vmem:[%s927] ss:$16 sm:%s928]
  %vm930 = vcmask 1047558
  %v931 = vsel %vm930, %v929, %v926
  %932 = vrot.lane.b32.xlu0 %v931, 32
  %v933 = vpop.permute.xlu0 %932
  %vm934 = vcmask 523520
  %s935 = scalar_lea.vmem %s1, 96
  %936 = vst.msk [vmem:[%s935] sm:$0xff] %vm934, %v933
  %s937 = scalar_lea.vmem %s0, 5
  %s938 = smov 3
  %v939 = vld [vmem:[%s937] ss:$16 sm:%s938]
  %s940 = scalar_lea.vmem %s0, 5
  %s941 = smov 12
  %v942 = vld [vmem:[%s940] ss:$16 sm:%s941]
  %vm943 = vcmask 1043458
  %v944 = vsel %vm943, %v942, %v939
  %s945 = scalar_lea.vmem %s0, 5
  %s946 = smov 48
  %v947 = vld [vmem:[%s945] ss:$16 sm:%s946]
  %vm948 = vcmask 1045508
  %v949 = vsel %vm948, %v947, %v944
  %s950 = scalar_lea.vmem %s0, 5
  %s951 = smov 192
  %v952 = vld [vmem:[%s950] ss:$16 sm:%s951]
  %vm953 = vcmask 1047558
  %v954 = vsel %vm953, %v952, %v949
  %955 = vrot.lane.b32.xlu0 %v954, 32
  %v956 = vpop.permute.xlu0 %955
  %vm957 = vcmask 523520
  %s958 = scalar_lea.vmem %s1, 8
  %959 = vst.msk [vmem:[%s958] sm:$0xff] %vm957, %v956
  %s960 = scalar_lea.vmem %s0, 133
  %s961 = smov 3
  %v962 = vld [vmem:[%s960] ss:$16 sm:%s961]
  %s963 = scalar_lea.vmem %s0, 133
  %s964 = smov 12
  %v965 = vld [vmem:[%s963] ss:$16 sm:%s964]
  %vm966 = vcmask 1043458
  %v967 = vsel %vm966, %v965, %v962
  %s968 = scalar_lea.vmem %s0, 133
  %s969 = smov 48
  %v970 = vld [vmem:[%s968] ss:$16 sm:%s969]
  %vm971 = vcmask 1045508
  %v972 = vsel %vm971, %v970, %v967
  %s973 = scalar_lea.vmem %s0, 133
  %s974 = smov 192
  %v975 = vld [vmem:[%s973] ss:$16 sm:%s974]
  %vm976 = vcmask 1047558
  %v977 = vsel %vm976, %v975, %v972
  %978 = vrot.lane.b32.xlu0 %v977, 32
  %v979 = vpop.permute.xlu0 %978
  %vm980 = vcmask 523520
  %s981 = scalar_lea.vmem %s1, 40
  %982 = vst.msk [vmem:[%s981] sm:$0xff] %vm980, %v979
  %s983 = scalar_lea.vmem %s0, 261
  %s984 = smov 3
  %v985 = vld [vmem:[%s983] ss:$16 sm:%s984]
  %s986 = scalar_lea.vmem %s0, 261
  %s987 = smov 12
  %v988 = vld [vmem:[%s986] ss:$16 sm:%s987]
  %vm989 = vcmask 1043458
  %v990 = vsel %vm989, %v988, %v985
  %s991 = scalar_lea.vmem %s0, 261
  %s992 = smov 48
  %v993 = vld [vmem:[%s991] ss:$16 sm:%s992]
  %vm994 = vcmask 1045508
  %v995 = vsel %vm994, %v993, %v990
  %s996 = scalar_lea.vmem %s0, 261
  %s997 = smov 192
  %v998 = vld [vmem:[%s996] ss:$16 sm:%s997]
  %vm999 = vcmask 1047558
  %v1000 = vsel %vm999, %v998, %v995
  %1001 = vrot.lane.b32.xlu0 %v1000, 32
  %v1002 = vpop.permute.xlu0 %1001
  %vm1003 = vcmask 523520
  %s1004 = scalar_lea.vmem %s1, 72
  %1005 = vst.msk [vmem:[%s1004] sm:$0xff] %vm1003, %v1002
  %s1006 = scalar_lea.vmem %s0, 389
  %s1007 = smov 3
  %v1008 = vld [vmem:[%s1006] ss:$16 sm:%s1007]
  %s1009 = scalar_lea.vmem %s0, 389
  %s1010 = smov 12
  %v1011 = vld [vmem:[%s1009] ss:$16 sm:%s1010]
  %vm1012 = vcmask 1043458
  %v1013 = vsel %vm1012, %v1011, %v1008
  %s1014 = scalar_lea.vmem %s0, 389
  %s1015 = smov 48
  %v1016 = vld [vmem:[%s1014] ss:$16 sm:%s1015]
  %vm1017 = vcmask 1045508
  %v1018 = vsel %vm1017, %v1016, %v1013
  %s1019 = scalar_lea.vmem %s0, 389
  %s1020 = smov 192
  %v1021 = vld [vmem:[%s1019] ss:$16 sm:%s1020]
  %vm1022 = vcmask 1047558
  %v1023 = vsel %vm1022, %v1021, %v1018
  %1024 = vrot.lane.b32.xlu0 %v1023, 32
  %v1025 = vpop.permute.xlu0 %1024
  %vm1026 = vcmask 523520
  %s1027 = scalar_lea.vmem %s1, 104
  %1028 = vst.msk [vmem:[%s1027] sm:$0xff] %vm1026, %v1025
  %s1029 = scalar_lea.vmem %s0, 9
  %s1030 = smov 3
  %v1031 = vld [vmem:[%s1029] ss:$16 sm:%s1030]
  %s1032 = scalar_lea.vmem %s0, 9
  %s1033 = smov 12
  %v1034 = vld [vmem:[%s1032] ss:$16 sm:%s1033]
  %vm1035 = vcmask 1043458
  %v1036 = vsel %vm1035, %v1034, %v1031
  %s1037 = scalar_lea.vmem %s0, 9
  %s1038 = smov 48
  %v1039 = vld [vmem:[%s1037] ss:$16 sm:%s1038]
  %vm1040 = vcmask 1045508
  %v1041 = vsel %vm1040, %v1039, %v1036
  %s1042 = scalar_lea.vmem %s0, 9
  %s1043 = smov 192
  %v1044 = vld [vmem:[%s1042] ss:$16 sm:%s1043]
  %vm1045 = vcmask 1047558
  %v1046 = vsel %vm1045, %v1044, %v1041
  %1047 = vrot.lane.b32.xlu0 %v1046, 32
  %v1048 = vpop.permute.xlu0 %1047
  %vm1049 = vcmask 523520
  %s1050 = scalar_lea.vmem %s1, 16
  %1051 = vst.msk [vmem:[%s1050] sm:$0xff] %vm1049, %v1048
  %s1052 = scalar_lea.vmem %s0, 137
  %s1053 = smov 3
  %v1054 = vld [vmem:[%s1052] ss:$16 sm:%s1053]
  %s1055 = scalar_lea.vmem %s0, 137
  %s1056 = smov 12
  %v1057 = vld [vmem:[%s1055] ss:$16 sm:%s1056]
  %vm1058 = vcmask 1043458
  %v1059 = vsel %vm1058, %v1057, %v1054
  %s1060 = scalar_lea.vmem %s0, 137
  %s1061 = smov 48
  %v1062 = vld [vmem:[%s1060] ss:$16 sm:%s1061]
  %vm1063 = vcmask 1045508
  %v1064 = vsel %vm1063, %v1062, %v1059
  %s1065 = scalar_lea.vmem %s0, 137
  %s1066 = smov 192
  %v1067 = vld [vmem:[%s1065] ss:$16 sm:%s1066]
  %vm1068 = vcmask 1047558
  %v1069 = vsel %vm1068, %v1067, %v1064
  %1070 = vrot.lane.b32.xlu0 %v1069, 32
  %v1071 = vpop.permute.xlu0 %1070
  %vm1072 = vcmask 523520
  %s1073 = scalar_lea.vmem %s1, 48
  %1074 = vst.msk [vmem:[%s1073] sm:$0xff] %vm1072, %v1071
  %s1075 = scalar_lea.vmem %s0, 265
  %s1076 = smov 3
  %v1077 = vld [vmem:[%s1075] ss:$16 sm:%s1076]
  %s1078 = scalar_lea.vmem %s0, 265
  %s1079 = smov 12
  %v1080 = vld [vmem:[%s1078] ss:$16 sm:%s1079]
  %vm1081 = vcmask 1043458
  %v1082 = vsel %vm1081, %v1080, %v1077
  %s1083 = scalar_lea.vmem %s0, 265
  %s1084 = smov 48
  %v1085 = vld [vmem:[%s1083] ss:$16 sm:%s1084]
  %vm1086 = vcmask 1045508
  %v1087 = vsel %vm1086, %v1085, %v1082
  %s1088 = scalar_lea.vmem %s0, 265
  %s1089 = smov 192
  %v1090 = vld [vmem:[%s1088] ss:$16 sm:%s1089]
  %vm1091 = vcmask 1047558
  %v1092 = vsel %vm1091, %v1090, %v1087
  %1093 = vrot.lane.b32.xlu0 %v1092, 32
  %v1094 = vpop.permute.xlu0 %1093
  %vm1095 = vcmask 523520
  %s1096 = scalar_lea.vmem %s1, 80
  %1097 = vst.msk [vmem:[%s1096] sm:$0xff] %vm1095, %v1094
  %s1098 = scalar_lea.vmem %s0, 393
  %s1099 = smov 3
  %v1100 = vld [vmem:[%s1098] ss:$16 sm:%s1099]
  %s1101 = scalar_lea.vmem %s0, 393
  %s1102 = smov 12
  %v1103 = vld [vmem:[%s1101] ss:$16 sm:%s1102]
  %vm1104 = vcmask 1043458
  %v1105 = vsel %vm1104, %v1103, %v1100
  %s1106 = scalar_lea.vmem %s0, 393
  %s1107 = smov 48
  %v1108 = vld [vmem:[%s1106] ss:$16 sm:%s1107]
  %vm1109 = vcmask 1045508
  %v1110 = vsel %vm1109, %v1108, %v1105
  %s1111 = scalar_lea.vmem %s0, 393
  %s1112 = smov 192
  %v1113 = vld [vmem:[%s1111] ss:$16 sm:%s1112]
  %vm1114 = vcmask 1047558
  %v1115 = vsel %vm1114, %v1113, %v1110
  %1116 = vrot.lane.b32.xlu0 %v1115, 32
  %v1117 = vpop.permute.xlu0 %1116
  %vm1118 = vcmask 523520
  %s1119 = scalar_lea.vmem %s1, 112
  %1120 = vst.msk [vmem:[%s1119] sm:$0xff] %vm1118, %v1117
  %s1121 = scalar_lea.vmem %s0, 13
  %s1122 = smov 3
  %v1123 = vld [vmem:[%s1121] ss:$16 sm:%s1122]
  %s1124 = scalar_lea.vmem %s0, 13
  %s1125 = smov 12
  %v1126 = vld [vmem:[%s1124] ss:$16 sm:%s1125]
  %vm1127 = vcmask 1043458
  %v1128 = vsel %vm1127, %v1126, %v1123
  %s1129 = scalar_lea.vmem %s0, 13
  %s1130 = smov 48
  %v1131 = vld [vmem:[%s1129] ss:$16 sm:%s1130]
  %vm1132 = vcmask 1045508
  %v1133 = vsel %vm1132, %v1131, %v1128
  %s1134 = scalar_lea.vmem %s0, 13
  %s1135 = smov 192
  %v1136 = vld [vmem:[%s1134] ss:$16 sm:%s1135]
  %vm1137 = vcmask 1047558
  %v1138 = vsel %vm1137, %v1136, %v1133
  %1139 = vrot.lane.b32.xlu0 %v1138, 32
  %v1140 = vpop.permute.xlu0 %1139
  %vm1141 = vcmask 523520
  %s1142 = scalar_lea.vmem %s1, 24
  %1143 = vst.msk [vmem:[%s1142] sm:$0xff] %vm1141, %v1140
  %s1144 = scalar_lea.vmem %s0, 141
  %s1145 = smov 3
  %v1146 = vld [vmem:[%s1144] ss:$16 sm:%s1145]
  %s1147 = scalar_lea.vmem %s0, 141
  %s1148 = smov 12
  %v1149 = vld [vmem:[%s1147] ss:$16 sm:%s1148]
  %vm1150 = vcmask 1043458
  %v1151 = vsel %vm1150, %v1149, %v1146
  %s1152 = scalar_lea.vmem %s0, 141
  %s1153 = smov 48
  %v1154 = vld [vmem:[%s1152] ss:$16 sm:%s1153]
  %vm1155 = vcmask 1045508
  %v1156 = vsel %vm1155, %v1154, %v1151
  %s1157 = scalar_lea.vmem %s0, 141
  %s1158 = smov 192
  %v1159 = vld [vmem:[%s1157] ss:$16 sm:%s1158]
  %vm1160 = vcmask 1047558
  %v1161 = vsel %vm1160, %v1159, %v1156
  %1162 = vrot.lane.b32.xlu0 %v1161, 32
  %v1163 = vpop.permute.xlu0 %1162
  %vm1164 = vcmask 523520
  %s1165 = scalar_lea.vmem %s1, 56
  %1166 = vst.msk [vmem:[%s1165] sm:$0xff] %vm1164, %v1163
  %s1167 = scalar_lea.vmem %s0, 269
  %s1168 = smov 3
  %v1169 = vld [vmem:[%s1167] ss:$16 sm:%s1168]
  %s1170 = scalar_lea.vmem %s0, 269
  %s1171 = smov 12
  %v1172 = vld [vmem:[%s1170] ss:$16 sm:%s1171]
  %vm1173 = vcmask 1043458
  %v1174 = vsel %vm1173, %v1172, %v1169
  %s1175 = scalar_lea.vmem %s0, 269
  %s1176 = smov 48
  %v1177 = vld [vmem:[%s1175] ss:$16 sm:%s1176]
  %vm1178 = vcmask 1045508
  %v1179 = vsel %vm1178, %v1177, %v1174
  %s1180 = scalar_lea.vmem %s0, 269
  %s1181 = smov 192
  %v1182 = vld [vmem:[%s1180] ss:$16 sm:%s1181]
  %vm1183 = vcmask 1047558
  %v1184 = vsel %vm1183, %v1182, %v1179
  %1185 = vrot.lane.b32.xlu0 %v1184, 32
  %v1186 = vpop.permute.xlu0 %1185
  %vm1187 = vcmask 523520
  %s1188 = scalar_lea.vmem %s1, 88
  %1189 = vst.msk [vmem:[%s1188] sm:$0xff] %vm1187, %v1186
  %s1190 = scalar_lea.vmem %s0, 397
  %s1191 = smov 3
  %v1192 = vld [vmem:[%s1190] ss:$16 sm:%s1191]
  %s1193 = scalar_lea.vmem %s0, 397
  %s1194 = smov 12
  %v1195 = vld [vmem:[%s1193] ss:$16 sm:%s1194]
  %vm1196 = vcmask 1043458
  %v1197 = vsel %vm1196, %v1195, %v1192
  %s1198 = scalar_lea.vmem %s0, 397
  %s1199 = smov 48
  %v1200 = vld [vmem:[%s1198] ss:$16 sm:%s1199]
  %vm1201 = vcmask 1045508
  %v1202 = vsel %vm1201, %v1200, %v1197
  %s1203 = scalar_lea.vmem %s0, 397
  %s1204 = smov 192
  %v1205 = vld [vmem:[%s1203] ss:$16 sm:%s1204]
  %vm1206 = vcmask 1047558
  %v1207 = vsel %vm1206, %v1205, %v1202
  %1208 = vrot.lane.b32.xlu0 %v1207, 32
  %v1209 = vpop.permute.xlu0 %1208
  %vm1210 = vcmask 523520
  %s1211 = scalar_lea.vmem %s1, 120
  %1212 = vst.msk [vmem:[%s1211] sm:$0xff] %vm1210, %v1209

// kernel: tile.29
$region0: #{tile.29}
  %s0 = inlined_call_operand.vmem [shape: f32[3,16,32], index: 0, kind: input, shape index: {}]
  %s1 = inlined_call_operand.vmem [shape: f32[3,512], index: 1, kind: output, shape index: {}]
  $region1: #{tile.29} parent=0
    #allocation0 [shape = 'u8[16384]{0}', space=vmem, size = 0x4000, scoped, tag = 'scoped mem for output reshape']
    %v2 = vld [vmem:[%s0] ss:$4 sm:$0xff]
    %vm3 = vcmask 261120
    %4 = vst.msk [vmem:[#allocation0] ss:$8 sm:$0xf] %vm3, %v2
    %s5 = scalar_lea.vmem [#allocation0], 4294967265
    %6 = vst.msk [vmem:[%s5] ss:$8 sm:$0xf0] %vm3, %v2
    %s7 = scalar_lea.vmem %s0, 32
    %v8 = vld [vmem:[%s7] ss:$4 sm:$0xf]
    %vm9 = vcmask 261120
    %s10 = scalar_lea.vmem [#allocation0], 2
    %11 = vst.msk [vmem:[%s10] ss:$8 sm:$0xf] %vm9, %v8
    %s12 = scalar_lea.vmem %s0, 3
    %s13 = smov 3
    %v14 = vld [vmem:[%s12] ss:$16 sm:%s13]
    %s15 = scalar_lea.vmem %s0, 91
    %s16 = smov 12
    %v17 = vld [vmem:[%s15] ss:$-28 sm:%s16]
    %vm18 = vcmask 1043458
    %v19 = vsel %vm18, %v17, %v14
    %s20 = scalar_lea.vmem %s0, 4294967255
    %s21 = smov 48
    %v22 = vld [vmem:[%s20] ss:$16 sm:%s21]
    %vm23 = vcmask 1045508
    %v24 = vsel %vm23, %v22, %v19
    %s25 = scalar_lea.vmem %s0, 4294967211
    %s26 = smov 192
    %v27 = vld [vmem:[%s25] ss:$16 sm:%s26]
    %vm28 = vcmask 1047558
    %v29 = vsel %vm28, %v27, %v24
    %30 = vrot.lane.b32.xlu0 %v29, 96
    %v31 = vpop.permute.xlu0 %30
    %vm32 = vcmask 1048320
    %33 = vst.msk [vmem:[#allocation0] sm:$0x7] %vm32, %v31
    %s34 = scalar_lea.vmem [#allocation0], 5
    %35 = vst.msk [vmem:[%s34] sm:$0x38] %vm32, %v31
    %s36 = scalar_lea.vmem [#allocation0], 10
    %37 = vst.msk [vmem:[%s36] sm:$0xc0] %vm32, %v31
    %s38 = scalar_lea.vmem %s0, 43
    %s39 = smov 3
    %v40 = vld [vmem:[%s38] ss:$-28 sm:%s39]
    %s41 = scalar_lea.vmem %s0, 4294967295
    %s42 = smov 12
    %v43 = vld [vmem:[%s41] ss:$16 sm:%s42]
    %vm44 = vcmask 1043458
    %v45 = vsel %vm44, %v43, %v40
    %46 = vrot.lane.b32.xlu0 %v45, 96
    %v47 = vpop.permute.xlu0 %46
    %vm48 = vcmask 1048320
    %s49 = scalar_lea.vmem [#allocation0], 18
    %50 = vst.msk [vmem:[%s49] ss:$6 sm:$0x3] %vm48, %v47
    %s51 = scalar_lea.vmem [#allocation0], 23
    %52 = vst.msk [vmem:[%s51] sm:$0xc] %vm48, %v47
    %s53 = scalar_lea.vmem %s0, 2
    %s54 = smov 3
    %v55 = vld [vmem:[%s53] ss:$16 sm:%s54]
    %s56 = scalar_lea.vmem %s0, 90
    %s57 = smov 12
    %v58 = vld [vmem:[%s56] ss:$-28 sm:%s57]
    %vm59 = vcmask 1043458
    %v60 = vsel %vm59, %v58, %v55
    %s61 = scalar_lea.vmem %s0, 4294967254
    %s62 = smov 48
    %v63 = vld [vmem:[%s61] ss:$16 sm:%s62]
    %vm64 = vcmask 1045508
    %v65 = vsel %vm64, %v63, %v60
    %s66 = scalar_lea.vmem %s0, 4294967210
    %s67 = smov 192
    %v68 = vld [vmem:[%s66] ss:$16 sm:%s67]
    %vm69 = vcmask 1047558
    %v70 = vsel %vm69, %v68, %v65
    %71 = vrot.lane.b32.xlu0 %v70, 64
    %v72 = vpop.permute.xlu0 %71
    %vm73 = vcmask 785920
    %74 = vst.msk [vmem:[#allocation0] sm:$0x7] %vm73, %v72
    %s75 = scalar_lea.vmem [#allocation0], 5
    %76 = vst.msk [vmem:[%s75] sm:$0x38] %vm73, %v72
    %s77 = scalar_lea.vmem [#allocation0], 10
    %78 = vst.msk [vmem:[%s77] sm:$0xc0] %vm73, %v72
    %s79 = scalar_lea.vmem %s0, 42
    %s80 = smov 3
    %v81 = vld [vmem:[%s79] ss:$-28 sm:%s80]
    %s82 = scalar_lea.vmem %s0, 4294967294
    %s83 = smov 12
    %v84 = vld [vmem:[%s82] ss:$16 sm:%s83]
    %vm85 = vcmask 1043458
    %v86 = vsel %vm85, %v84, %v81
    %87 = vrot.lane.b32.xlu0 %v86, 64
    %v88 = vpop.permute.xlu0 %87
    %vm89 = vcmask 785920
    %s90 = scalar_lea.vmem [#allocation0], 18
    %91 = vst.msk [vmem:[%s90] ss:$6 sm:$0x3] %vm89, %v88
    %s92 = scalar_lea.vmem [#allocation0], 23
    %93 = vst.msk [vmem:[%s92] sm:$0xc] %vm89, %v88
    %s94 = scalar_lea.vmem %s0, 1
    %s95 = smov 3
    %v96 = vld [vmem:[%s94] ss:$16 sm:%s95]
    %s97 = scalar_lea.vmem %s0, 89
    %s98 = smov 12
    %v99 = vld [vmem:[%s97] ss:$-28 sm:%s98]
    %vm100 = vcmask 1043458
    %v101 = vsel %vm100, %v99, %v96
    %s102 = scalar_lea.vmem %s0, 4294967253
    %s103 = smov 48
    %v104 = vld [vmem:[%s102] ss:$16 sm:%s103]
    %vm105 = vcmask 1045508
    %v106 = vsel %vm105, %v104, %v101
    %s107 = scalar_lea.vmem %s0, 4294967209
    %s108 = smov 192
    %v109 = vld [vmem:[%s107] ss:$16 sm:%s108]
    %vm110 = vcmask 1047558
    %v111 = vsel %vm110, %v109, %v106
    %112 = vrot.lane.b32.xlu0 %v111, 32
    %v113 = vpop.permute.xlu0 %112
    %vm114 = vcmask 523520
    %115 = vst.msk [vmem:[#allocation0] sm:$0x7] %vm114, %v113
    %s116 = scalar_lea.vmem [#allocation0], 5
    %117 = vst.msk [vmem:[%s116] sm:$0x38] %vm114, %v113
    %s118 = scalar_lea.vmem [#allocation0], 10
    %119 = vst.msk [vmem:[%s118] sm:$0xc0] %vm114, %v113
    %s120 = scalar_lea.vmem %s0, 41
    %s121 = smov 3
    %v122 = vld [vmem:[%s120] ss:$-28 sm:%s121]
    %s123 = scalar_lea.vmem %s0, 4294967293
    %s124 = smov 12
    %v125 = vld [vmem:[%s123] ss:$16 sm:%s124]
    %vm126 = vcmask 1043458
    %v127 = vsel %vm126, %v125, %v122
    %128 = vrot.lane.b32.xlu0 %v127, 32
    %v129 = vpop.permute.xlu0 %128
    %vm130 = vcmask 523520
    %s131 = scalar_lea.vmem [#allocation0], 18
    %132 = vst.msk [vmem:[%s131] ss:$6 sm:$0x3] %vm130, %v129
    %s133 = scalar_lea.vmem [#allocation0], 23
    %134 = vst.msk [vmem:[%s133] sm:$0xc] %vm130, %v129
    %s136 = sshllo.u32 0, 4
    %v138 = vld [vmem:[#allocation0] sm:%s136]
    %s139 = sshllo.u32 0, 4
    %140 = vst [vmem:[%s1] sm:%s139] %v138
    %s141 = scalar_lea.vmem [#allocation0], 8
    %v142 = vld [vmem:[%s141] sm:%s136]
    %s143 = sshllo.u32 0, 4
    %s144 = scalar_lea.vmem %s1, 4
    %145 = vst [vmem:[%s144] sm:%s143] %v142
    %s146 = scalar_lea.vmem [#allocation0], 16
    %v147 = vld [vmem:[%s146] sm:%s136]
    %s148 = sshllo.u32 0, 4
    %s149 = smul.addr 4, 2
    %s150 = scalar_lea.vmem %s1, %s149
    %151 = vst [vmem:[%s150] sm:%s148] %v147
    %s152 = scalar_lea.vmem [#allocation0], 24
    %v153 = vld [vmem:[%s152] sm:%s136]
    %s154 = sshllo.u32 0, 4
    %s155 = smul.addr 4, 3
    %s156 = scalar_lea.vmem %s1, %s155
    %157 = vst [vmem:[%s156] sm:%s154] %v153

// kernel: layer_forward.1
$region0: #{layer_forward.1}
  #allocation0 [shape = 'u32[]', space=smem, size = 0x4, offset = 0x4, fixed_abs, tag = 'smem constant byte address 0x4 - core index']
  #allocation1 [shape = 'u32[144,128]{1,0:T(1,128)}', space=vmem, size = 0x12000, scoped, tag = 'internal scratch']
  %s0 = inlined_call_operand.vmem [shape: f32[6,16,512], index: 0, kind: input, shape index: {}]
  %s1 = inlined_call_operand.vmem [shape: bf16[512,1536], index: 1, kind: input, shape index: {}]
  %s2 = inlined_call_operand.vmem [shape: f32[1,512], index: 2, kind: input, shape index: {}]
  %s3 = inlined_call_operand.vmem [shape: bf16[512,1536], index: 3, kind: input, shape index: {}]
  %s4 = inlined_call_operand.vmem [shape: f32[1,512], index: 4, kind: input, shape index: {}]
  %s5 = inlined_call_operand.vmem [shape: f32[3,512], index: 5, kind: input, shape index: {}]
  %s6 = inlined_call_operand.vmem [shape: f32[32,8], index: 6, kind: input, shape index: {}]
  %s7 = inlined_call_operand.vmem [shape: f32[1,8], index: 7, kind: input, shape index: {}]
  %s8 = inlined_call_operand.vmem [shape: f32[8,32], index: 8, kind: input, shape index: {}]
  %s9 = inlined_call_operand.vmem [shape: f32[1,32], index: 9, kind: input, shape index: {}]
  %s10 = inlined_call_operand.vmem [shape: f32[512,32], index: 10, kind: input, shape index: {}]
  %s11 = inlined_call_operand.vmem [shape: f32[32,512], index: 11, kind: input, shape index: {}]
  %s12 = inlined_call_operand.vmem [shape: f32[6,16,512], index: 12, kind: output, shape index: {}]
  %s13 = sld [smem:[#allocation0]]
  $region81: #{layer_forward.1} parent=0
    _
  %s15 = ssub.s32 1, %s13
  %s16 = scalar_select 0, %s15, %s13
  loop: start=0, step=1, limit=4
  $region2: #{layer_forward.1} parent=0 // loop_pre_header
    _
  $region3: #{layer_forward.1} parent=0 // loop_header
    %s18 = sphi 0, %s22
    %p19 = scmp.ge.s32.totalorder %s18, 4
    %s28 = sphi 0, %s30
    %s31 = sphi 0, %s28
    %s32 = sphi 0, %s31
    %s48 = sphi 0, %s32
    %s52 = sphi 0, %s52
    %s54 = sphi 0, %s52
    %s55 = sphi 0, %s54
    %s69 = sphi 0, %s55
    %s73 = sphi 0, %s73
    %s75 = sphi 0, %s73
    %s76 = sphi 0, %s75
    %s90 = sphi 0, %s76
    %s94 = sphi 0, %s94
    %s96 = sphi 0, %s94
    %s97 = sphi 0, %s96
    %s111 = sphi 0, %s97
    %s115 = sphi 0, %s115
    %s117 = sphi 0, %s115
    %s118 = sphi 0, %s117
    %s132 = sphi 0, %s118
    %s136 = sphi 0, %s136
    %s138 = sphi 0, %s136
    %s139 = sphi 0, %s138
    %s153 = sphi 0, %s139
    %s157 = sphi 0, %s157
    %s159 = sphi 0, %s157
    %s160 = sphi 0, %s159
    %s174 = sphi 0, %s160
    %s178 = sphi 0, %s178
    %s180 = sphi 0, %s178
    %s181 = sphi 0, %s180
    %s195 = sphi 0, %s181
    %s199 = sphi 0, %s199
    %s201 = sphi 0, %s199
    %s202 = sphi 0, %s201
    %s216 = sphi 0, %s202
    %s220 = sphi 0, %s220
    %s222 = sphi 0, %s220
    %s223 = sphi 0, %s222
    %s237 = sphi 0, %s223
    %s241 = sphi 0, %s241
    %s243 = sphi 0, %s241
    %s244 = sphi 0, %s243
    %s258 = sphi 0, %s244
    %s262 = sphi 0, %s262
    %s264 = sphi 0, %s262
    %s265 = sphi 0, %s264
    %s279 = sphi 0, %s265
    %s285 = sphi 0, %s287
    %s288 = sphi 0, %s285
    %s289 = sphi 0, %s288
    %s305 = sphi 0, %s289
  $region4: #{layer_forward.1} parent=0 // loop_header_branch
    %21 = sbr.rel (%p19) target = $region8
  $region5: #{layer_forward.1} parent=0 // loop_body
    %s23 = ssub.s32 %s18, 1
    %s24 = ssub.s32 %s18, 2
    %s25 = sadd.s32 %s18, 1
    %s26 = ssub.s32 %s18, %s25
    %p27 = scmp.eq.s32.totalorder %s26, 0
    %s29 = sadd.s32 %s28, 1
    %s30 = scalar_select %p27, %s28, %s29
    %p33 = pneg %p27
    %p34 = scmp.eq.s32.totalorder %s18, 1
    %p35 = por %p33, %p34
    %p36 = scmp.ne.s32.totalorder %s28, %s31
    %p37 = scmp.eq.s32.totalorder %s18, 0
    %p38 = por %p36, %p37
    %p39 = scmp.ne.s32.totalorder %s28, %s31
    %p40 = scmp.eq.s32.totalorder %s23, 1
    %p41 = por %p39, %p40
    %p42 = scmp.ne.s32.totalorder %s31, %s32
    %p43 = scmp.eq.s32.totalorder %s23, 0
    %p44 = por %p42, %p43
    %p45 = scmp.ne.s32.totalorder %s31, %s32
    %p46 = scmp.eq.s32.totalorder %s24, 1
    %p47 = por %p45, %p46
    %p49 = scmp.ne.s32.totalorder %s32, %s48
    %p50 = scmp.eq.s32.totalorder %s24, 0
    %p51 = por %p49, %p50
    %s53 = sadd.s32 %s52, 1
    %p56 = scmp.eq.s32.totalorder %s18, 1
    %p57 = scmp.ne.s32.totalorder %s52, %s54
    %p58 = scmp.eq.s32.totalorder %s18, 0
    %p59 = por %p57, %p58
    %p60 = scmp.ne.s32.totalorder %s52, %s54
    %p61 = scmp.eq.s32.totalorder %s23, 1
    %p62 = por %p60, %p61
    %p63 = scmp.ne.s32.totalorder %s54, %s55
    %p64 = scmp.eq.s32.totalorder %s23, 0
    %p65 = por %p63, %p64
    %p66 = scmp.ne.s32.totalorder %s54, %s55
    %p67 = scmp.eq.s32.totalorder %s24, 1
    %p68 = por %p66, %p67
    %p70 = scmp.ne.s32.totalorder %s55, %s69
    %p71 = scmp.eq.s32.totalorder %s24, 0
    %p72 = por %p70, %p71
    %s74 = sadd.s32 %s73, 1
    %p77 = scmp.eq.s32.totalorder %s18, 1
    %p78 = scmp.ne.s32.totalorder %s73, %s75
    %p79 = scmp.eq.s32.totalorder %s18, 0
    %p80 = por %p78, %p79
    %p81 = scmp.ne.s32.totalorder %s73, %s75
    %p82 = scmp.eq.s32.totalorder %s23, 1
    %p83 = por %p81, %p82
    %p84 = scmp.ne.s32.totalorder %s75, %s76
    %p85 = scmp.eq.s32.totalorder %s23, 0
    %p86 = por %p84, %p85
    %p87 = scmp.ne.s32.totalorder %s75, %s76
    %p88 = scmp.eq.s32.totalorder %s24, 1
    %p89 = por %p87, %p88
    %p91 = scmp.ne.s32.totalorder %s76, %s90
    %p92 = scmp.eq.s32.totalorder %s24, 0
    %p93 = por %p91, %p92
    %s95 = sadd.s32 %s94, 1
    %p98 = scmp.eq.s32.totalorder %s18, 1
    %p99 = scmp.ne.s32.totalorder %s94, %s96
    %p100 = scmp.eq.s32.totalorder %s18, 0
    %p101 = por %p99, %p100
    %p102 = scmp.ne.s32.totalorder %s94, %s96
    %p103 = scmp.eq.s32.totalorder %s23, 1
    %p104 = por %p102, %p103
    %p105 = scmp.ne.s32.totalorder %s96, %s97
    %p106 = scmp.eq.s32.totalorder %s23, 0
    %p107 = por %p105, %p106
    %p108 = scmp.ne.s32.totalorder %s96, %s97
    %p109 = scmp.eq.s32.totalorder %s24, 1
    %p110 = por %p108, %p109
    %p112 = scmp.ne.s32.totalorder %s97, %s111
    %p113 = scmp.eq.s32.totalorder %s24, 0
    %p114 = por %p112, %p113
    %s116 = sadd.s32 %s115, 1
    %p119 = scmp.eq.s32.totalorder %s18, 1
    %p120 = scmp.ne.s32.totalorder %s115, %s117
    %p121 = scmp.eq.s32.totalorder %s18, 0
    %p122 = por %p120, %p121
    %p123 = scmp.ne.s32.totalorder %s115, %s117
    %p124 = scmp.eq.s32.totalorder %s23, 1
    %p125 = por %p123, %p124
    %p126 = scmp.ne.s32.totalorder %s117, %s118
    %p127 = scmp.eq.s32.totalorder %s23, 0
    %p128 = por %p126, %p127
    %p129 = scmp.ne.s32.totalorder %s117, %s118
    %p130 = scmp.eq.s32.totalorder %s24, 1
    %p131 = por %p129, %p130
    %p133 = scmp.ne.s32.totalorder %s118, %s132
    %p134 = scmp.eq.s32.totalorder %s24, 0
    %p135 = por %p133, %p134
    %s137 = sadd.s32 %s136, 1
    %p140 = scmp.eq.s32.totalorder %s18, 1
    %p141 = scmp.ne.s32.totalorder %s136, %s138
    %p142 = scmp.eq.s32.totalorder %s18, 0
    %p143 = por %p141, %p142
    %p144 = scmp.ne.s32.totalorder %s136, %s138
    %p145 = scmp.eq.s32.totalorder %s23, 1
    %p146 = por %p144, %p145
    %p147 = scmp.ne.s32.totalorder %s138, %s139
    %p148 = scmp.eq.s32.totalorder %s23, 0
    %p149 = por %p147, %p148
    %p150 = scmp.ne.s32.totalorder %s138, %s139
    %p151 = scmp.eq.s32.totalorder %s24, 1
    %p152 = por %p150, %p151
    %p154 = scmp.ne.s32.totalorder %s139, %s153
    %p155 = scmp.eq.s32.totalorder %s24, 0
    %p156 = por %p154, %p155
    %s158 = sadd.s32 %s157, 1
    %p161 = scmp.eq.s32.totalorder %s18, 1
    %p162 = scmp.ne.s32.totalorder %s157, %s159
    %p163 = scmp.eq.s32.totalorder %s18, 0
    %p164 = por %p162, %p163
    %p165 = scmp.ne.s32.totalorder %s157, %s159
    %p166 = scmp.eq.s32.totalorder %s23, 1
    %p167 = por %p165, %p166
    %p168 = scmp.ne.s32.totalorder %s159, %s160
    %p169 = scmp.eq.s32.totalorder %s23, 0
    %p170 = por %p168, %p169
    %p171 = scmp.ne.s32.totalorder %s159, %s160
    %p172 = scmp.eq.s32.totalorder %s24, 1
    %p173 = por %p171, %p172
    %p175 = scmp.ne.s32.totalorder %s160, %s174
    %p176 = scmp.eq.s32.totalorder %s24, 0
    %p177 = por %p175, %p176
    %s179 = sadd.s32 %s178, 1
    %p182 = scmp.eq.s32.totalorder %s18, 1
    %p183 = scmp.ne.s32.totalorder %s178, %s180
    %p184 = scmp.eq.s32.totalorder %s18, 0
    %p185 = por %p183, %p184
    %p186 = scmp.ne.s32.totalorder %s178, %s180
    %p187 = scmp.eq.s32.totalorder %s23, 1
    %p188 = por %p186, %p187
    %p189 = scmp.ne.s32.totalorder %s180, %s181
    %p190 = scmp.eq.s32.totalorder %s23, 0
    %p191 = por %p189, %p190
    %p192 = scmp.ne.s32.totalorder %s180, %s181
    %p193 = scmp.eq.s32.totalorder %s24, 1
    %p194 = por %p192, %p193
    %p196 = scmp.ne.s32.totalorder %s181, %s195
    %p197 = scmp.eq.s32.totalorder %s24, 0
    %p198 = por %p196, %p197
    %s200 = sadd.s32 %s199, 1
    %p203 = scmp.eq.s32.totalorder %s18, 1
    %p204 = scmp.ne.s32.totalorder %s199, %s201
    %p205 = scmp.eq.s32.totalorder %s18, 0
    %p206 = por %p204, %p205
    %p207 = scmp.ne.s32.totalorder %s199, %s201
    %p208 = scmp.eq.s32.totalorder %s23, 1
    %p209 = por %p207, %p208
    %p210 = scmp.ne.s32.totalorder %s201, %s202
    %p211 = scmp.eq.s32.totalorder %s23, 0
    %p212 = por %p210, %p211
    %p213 = scmp.ne.s32.totalorder %s201, %s202
    %p214 = scmp.eq.s32.totalorder %s24, 1
    %p215 = por %p213, %p214
    %p217 = scmp.ne.s32.totalorder %s202, %s216
    %p218 = scmp.eq.s32.totalorder %s24, 0
    %p219 = por %p217, %p218
    %s221 = sadd.s32 %s220, 1
    %p224 = scmp.eq.s32.totalorder %s18, 1
    %p225 = scmp.ne.s32.totalorder %s220, %s222
    %p226 = scmp.eq.s32.totalorder %s18, 0
    %p227 = por %p225, %p226
    %p228 = scmp.ne.s32.totalorder %s220, %s222
    %p229 = scmp.eq.s32.totalorder %s23, 1
    %p230 = por %p228, %p229
    %p231 = scmp.ne.s32.totalorder %s222, %s223
    %p232 = scmp.eq.s32.totalorder %s23, 0
    %p233 = por %p231, %p232
    %p234 = scmp.ne.s32.totalorder %s222, %s223
    %p235 = scmp.eq.s32.totalorder %s24, 1
    %p236 = por %p234, %p235
    %p238 = scmp.ne.s32.totalorder %s223, %s237
    %p239 = scmp.eq.s32.totalorder %s24, 0
    %p240 = por %p238, %p239
    %s242 = sadd.s32 %s241, 1
    %p245 = scmp.eq.s32.totalorder %s18, 1
    %p246 = scmp.ne.s32.totalorder %s241, %s243
    %p247 = scmp.eq.s32.totalorder %s18, 0
    %p248 = por %p246, %p247
    %p249 = scmp.ne.s32.totalorder %s241, %s243
    %p250 = scmp.eq.s32.totalorder %s23, 1
    %p251 = por %p249, %p250
    %p252 = scmp.ne.s32.totalorder %s243, %s244
    %p253 = scmp.eq.s32.totalorder %s23, 0
    %p254 = por %p252, %p253
    %p255 = scmp.ne.s32.totalorder %s243, %s244
    %p256 = scmp.eq.s32.totalorder %s24, 1
    %p257 = por %p255, %p256
    %p259 = scmp.ne.s32.totalorder %s244, %s258
    %p260 = scmp.eq.s32.totalorder %s24, 0
    %p261 = por %p259, %p260
    %s263 = sadd.s32 %s262, 1
    %p266 = scmp.eq.s32.totalorder %s18, 1
    %p267 = scmp.ne.s32.totalorder %s262, %s264
    %p268 = scmp.eq.s32.totalorder %s18, 0
    %p269 = por %p267, %p268
    %p270 = scmp.ne.s32.totalorder %s262, %s264
    %p271 = scmp.eq.s32.totalorder %s23, 1
    %p272 = por %p270, %p271
    %p273 = scmp.ne.s32.totalorder %s264, %s265
    %p274 = scmp.eq.s32.totalorder %s23, 0
    %p275 = por %p273, %p274
    %p276 = scmp.ne.s32.totalorder %s264, %s265
    %p277 = scmp.eq.s32.totalorder %s24, 1
    %p278 = por %p276, %p277
    %p280 = scmp.ne.s32.totalorder %s265, %s279
    %p281 = scmp.eq.s32.totalorder %s24, 0
    %p282 = por %p280, %p281
    %s283 = ssub.s32 %s18, %s25
    %p284 = scmp.eq.s32.totalorder %s283, 0
    %s286 = sadd.s32 %s285, 1
    %s287 = scalar_select %p284, %s285, %s286
    %p290 = pneg %p284
    %p291 = scmp.eq.s32.totalorder %s18, 1
    %p292 = por %p290, %p291
    %p293 = scmp.ne.s32.totalorder %s285, %s288
    %p294 = scmp.eq.s32.totalorder %s18, 0
    %p295 = por %p293, %p294
    %p296 = scmp.ne.s32.totalorder %s285, %s288
    %p297 = scmp.eq.s32.totalorder %s23, 1
    %p298 = por %p296, %p297
    %p299 = scmp.ne.s32.totalorder %s288, %s289
    %p300 = scmp.eq.s32.totalorder %s23, 0
    %p301 = por %p299, %p300
    %p302 = scmp.ne.s32.totalorder %s288, %s289
    %p303 = scmp.eq.s32.totalorder %s24, 1
    %p304 = por %p302, %p303
    %p306 = scmp.ne.s32.totalorder %s289, %s305
    %p307 = scmp.eq.s32.totalorder %s24, 0
    %p308 = por %p306, %p307
    %p309 = scmp.le.s32.totalorder 1, %s18
    %p310 = scmp.lt.s32.totalorder %s18, 3
    %p311 = pnand %p309, %p310
    %p312 = pneg %p311
    // Predicated region
    $region9: #{layer_forward.1} parent=5 // pred_check
      _
    $region10: #{layer_forward.1} parent=5 // pred_check_branch
      %314 = sbr.rel (%p311) target = $region12
    $region11: #{layer_forward.1} parent=5 // pred_region
      %s315 = ssub.s32 %s18, 1
      // Predicated region
      $region13: #{layer_forward.1} parent=11 // pred_check
        %p316 = pneg %p65
      $region14: #{layer_forward.1} parent=11 // pred_check_branch
        %318 = sbr.rel (%p316) target = $region16
      $region15: #{layer_forward.1} parent=11 // pred_region
        _
      $region16: #{layer_forward.1} parent=11 // pred_fallthru
        _
      // Predicated region
      $region17: #{layer_forward.1} parent=11 // pred_check
        %p319 = pneg %p86
      $region18: #{layer_forward.1} parent=11 // pred_check_branch
        %321 = sbr.rel (%p319) target = $region20
      $region19: #{layer_forward.1} parent=11 // pred_region
        _
      $region20: #{layer_forward.1} parent=11 // pred_fallthru
        _
      // Predicated region
      $region21: #{layer_forward.1} parent=11 // pred_check
        %p322 = pneg %p107
      $region22: #{layer_forward.1} parent=11 // pred_check_branch
        %324 = sbr.rel (%p322) target = $region24
      $region23: #{layer_forward.1} parent=11 // pred_region
        _
      $region24: #{layer_forward.1} parent=11 // pred_fallthru
        _
      // Predicated region
      $region25: #{layer_forward.1} parent=11 // pred_check
        %p325 = pneg %p128
      $region26: #{layer_forward.1} parent=11 // pred_check_branch
        %327 = sbr.rel (%p325) target = $region28
      $region27: #{layer_forward.1} parent=11 // pred_region
        _
      $region28: #{layer_forward.1} parent=11 // pred_fallthru
        _
      // Predicated region
      $region29: #{layer_forward.1} parent=11 // pred_check
        %p328 = pneg %p149
      $region30: #{layer_forward.1} parent=11 // pred_check_branch
        %330 = sbr.rel (%p328) target = $region32
      $region31: #{layer_forward.1} parent=11 // pred_region
        _
      $region32: #{layer_forward.1} parent=11 // pred_fallthru
        _
      // Predicated region
      $region33: #{layer_forward.1} parent=11 // pred_check
        %p331 = pneg %p170
      $region34: #{layer_forward.1} parent=11 // pred_check_branch
        %333 = sbr.rel (%p331) target = $region36
      $region35: #{layer_forward.1} parent=11 // pred_region
        _
      $region36: #{layer_forward.1} parent=11 // pred_fallthru
        _
      // Predicated region
      $region37: #{layer_forward.1} parent=11 // pred_check
        %p334 = pneg %p191
      $region38: #{layer_forward.1} parent=11 // pred_check_branch
        %336 = sbr.rel (%p334) target = $region40
      $region39: #{layer_forward.1} parent=11 // pred_region
        _
      $region40: #{layer_forward.1} parent=11 // pred_fallthru
        _
      // Predicated region
      $region41: #{layer_forward.1} parent=11 // pred_check
        %p337 = pneg %p212
      $region42: #{layer_forward.1} parent=11 // pred_check_branch
        %339 = sbr.rel (%p337) target = $region44
      $region43: #{layer_forward.1} parent=11 // pred_region
        _
      $region44: #{layer_forward.1} parent=11 // pred_fallthru
        _
      // Predicated region
      $region45: #{layer_forward.1} parent=11 // pred_check
        %p340 = pneg %p233
      $region46: #{layer_forward.1} parent=11 // pred_check_branch
        %342 = sbr.rel (%p340) target = $region48
      $region47: #{layer_forward.1} parent=11 // pred_region
        _
      $region48: #{layer_forward.1} parent=11 // pred_fallthru
        _
      // Predicated region
      $region49: #{layer_forward.1} parent=11 // pred_check
        %p343 = pneg %p254
      $region50: #{layer_forward.1} parent=11 // pred_check_branch
        %345 = sbr.rel (%p343) target = $region52
      $region51: #{layer_forward.1} parent=11 // pred_region
        _
      $region52: #{layer_forward.1} parent=11 // pred_fallthru
        _
      // Predicated region
      $region53: #{layer_forward.1} parent=11 // pred_check
        %p346 = pneg %p275
      $region54: #{layer_forward.1} parent=11 // pred_check_branch
        %348 = sbr.rel (%p346) target = $region56
      $region55: #{layer_forward.1} parent=11 // pred_region
        _
      $region56: #{layer_forward.1} parent=11 // pred_fallthru
        _
    $region12: #{layer_forward.1} parent=5 // pred_fallthru
      _
    %p349 = scmp.lt.s32.totalorder %s18, 2
    // Predicated region
    $region57: #{layer_forward.1} parent=5 // pred_check
      %p350 = pneg %p349
    $region58: #{layer_forward.1} parent=5 // pred_check_branch
      %352 = sbr.rel (%p350) target = $region60
    $region59: #{layer_forward.1} parent=5 // pred_region
      // Predicated region
      $region61: #{layer_forward.1} parent=59 // pred_check
        %p353 = pneg %p38
      $region62: #{layer_forward.1} parent=59 // pred_check_branch
        %355 = sbr.rel (%p353) target = $region64
      $region63: #{layer_forward.1} parent=59 // pred_region
        %s356 = smul.u32 3, %s18
        %p357 = scmp.lt.s32.totalorder %s356, 5
        %s358 = scalar_select %p357, %s356, 5
        %s359 = smul.addr %s358, 8
        %s360 = smul.addr %s359, 8
        %s361 = scalar_lea.vmem %s0, %s360
        %s362 = smul.u32 3, %s18
      $region64: #{layer_forward.1} parent=59 // pred_fallthru
        _
    $region60: #{layer_forward.1} parent=5 // pred_fallthru
      _
    %p363 = scmp.le.s32.totalorder 1, %s18
    %p364 = scmp.lt.s32.totalorder %s18, 3
    %p365 = pnand %p363, %p364
    %p366 = pneg %p365
    // Predicated region
    $region65: #{layer_forward.1} parent=5 // pred_check
      _
    $region66: #{layer_forward.1} parent=5 // pred_check_branch
      %368 = sbr.rel (%p365) target = $region68
    $region67: #{layer_forward.1} parent=5 // pred_region
      %s369 = ssub.s32 %s18, 1
      %s370 = smul.u32 3, %s23
      %p371 = scmp.lt.s32.totalorder %s370, 5
      %s372 = scalar_select %p371, %s370, 5
      %s373 = smul.addr %s372, 8
      %s374 = smul.addr %s373, 8
      %s375 = scalar_lea.vmem %s0, %s374
      %p376 = pneg %p44
      %p377 = pneg %p41
      %p378 = pneg %p65
      %p379 = pneg %p62
      %p380 = pneg %p86
      %p381 = pneg %p83
      %p382 = pneg %p107
      %p383 = pneg %p104
      %p384 = pneg %p128
      %p385 = pneg %p125
      %p386 = pneg %p149
      %p387 = pneg %p146
      %p388 = pneg %p170
      %p389 = pneg %p167
      %p390 = pneg %p191
      %p391 = pneg %p188
      %p392 = pneg %p212
      %p393 = pneg %p209
      %p394 = pneg %p233
      %p395 = pneg %p230
      %p396 = pneg %p254
      %p397 = pneg %p251
      %p398 = pneg %p275
      %p399 = pneg %p272
      %p400 = pneg %p301
      %p401 = pneg %p298
      %s402 = smul.u32 3, %s23
      %p403 = scmp.lt.s32.totalorder %s402, 5
      %s404 = scalar_select %p403, %s402, 5
      %s405 = smul.addr %s404, 8
      %s406 = smul.addr %s405, 8
      %s407 = scalar_lea.vmem %s12, %s406
      %s408 = smul.u32 3, %s23
      %p409 = scmp.lt.s32.totalorder %s408, 5
      %s410 = scalar_select %p409, %s408, 5
      %s411 = smul.addr %s410, 8
      %s412 = smul.addr %s411, 8
      %s413 = scalar_lea.vmem %s0, %s412
      %s414 = smul.u32 3, %s23
      %s415 = smul.u32 3, %s23
      %p416 = scmp.lt.s32.totalorder %s415, 5
      %s417 = scalar_select %p416, %s415, 5
      %s418 = smul.addr %s417, 8
      %s419 = smul.addr %s418, 8
      %s420 = scalar_lea.vmem %s12, %s419
      %s421 = smul.u32 3, %s23
      %v422 = vld [vmem:[%s413] sm:$0xff]
      %v423 = vld [vmem:[%s413 + $0x8] sm:$0xff]
      %v424 = vld [vmem:[%s413 + $0x10] sm:$0xff]
      %v425 = vld [vmem:[%s413 + $0x18] sm:$0xff]
      %v426 = vld [vmem:[%s413 + $0x20] sm:$0xff]
      %v427 = vld [vmem:[%s413 + $0x28] sm:$0xff]
      %v428 = vld [vmem:[%s413 + $0x30] sm:$0xff]
      %v429 = vld [vmem:[%s413 + $0x38] sm:$0xff]
      %v430 = vld [vmem:[%s413 + $0x40] sm:$0xff]
      %v431 = vld [vmem:[%s413 + $0x48] sm:$0xff]
      %v432 = vld [vmem:[%s413 + $0x50] sm:$0xff]
      %v433 = vld [vmem:[%s413 + $0x58] sm:$0xff]
      %v434 = vld [vmem:[%s413 + $0x60] sm:$0xff]
      %v435 = vld [vmem:[%s413 + $0x68] sm:$0xff]
      %v436 = vld [vmem:[%s413 + $0x70] sm:$0xff]
      %v437 = vld [vmem:[%s413 + $0x78] sm:$0xff]
      %v438 = vld [vmem:[%s413 + $0x80] sm:$0xff]
      %v439 = vld [vmem:[%s413 + $0x88] sm:$0xff]
      %v440 = vld [vmem:[%s413 + $0x90] sm:$0xff]
      %v441 = vld [vmem:[%s413 + $0x98] sm:$0xff]
      %v442 = vld [vmem:[%s413 + $0xa0] sm:$0xff]
      %v443 = vld [vmem:[%s413 + $0xa8] sm:$0xff]
      %v444 = vld [vmem:[%s413 + $0xb0] sm:$0xff]
      %v445 = vld [vmem:[%s413 + $0xb8] sm:$0xff]
      %v446 = vpack.c.bf16 %v426, %v422
      %v447 = vpack.c.bf16 %v427, %v423
      %v448 = vpack.c.bf16 %v428, %v424
      %v449 = vpack.c.bf16 %v429, %v425
      %v450 = vpack.c.bf16 %v434, %v430
      %v451 = vpack.c.bf16 %v435, %v431
      %v452 = vpack.c.bf16 %v436, %v432
      %v453 = vpack.c.bf16 %v437, %v433
      %v454 = vpack.c.bf16 %v442, %v438
      %v455 = vpack.c.bf16 %v443, %v439
      %v456 = vpack.c.bf16 %v444, %v440
      %v457 = vpack.c.bf16 %v445, %v441
      %v458 = vlaneseq
      %v459 = vshrl.u32 %v458, 7
      %v460 = vadd.s32 %v459, 8
      %vm461 = vcmp.gt.s32.totalorder %v459, 0
      %vm462 = vcmp.gt.s32.totalorder %v460, 0
      %vm463 = vcmp.lt.s32.totalorder %v459, 15
      %vm464 = vcmp.lt.s32.totalorder %v460, 15
      %v465 = vld [vmem:[%s1] sm:$0xff]
      %v466 = vld [vmem:[%s1 + $0x8] sm:$0xff]
      %v467 = vld [vmem:[%s1 + $0x10] sm:$0xff]
      %v468 = vld [vmem:[%s1 + $0x18] sm:$0xff]
      %v469 = vld [vmem:[%s1 + $0x20] sm:$0xff]
      %v470 = vld [vmem:[%s1 + $0x28] sm:$0xff]
      %v471 = vld [vmem:[%s1 + $0x30] sm:$0xff]
      %v472 = vld [vmem:[%s1 + $0x38] sm:$0xff]
      %v473 = vld [vmem:[%s1 + $0x40] sm:$0xff]
      %v474 = vld [vmem:[%s1 + $0x48] sm:$0xff]
      %v475 = vld [vmem:[%s1 + $0x50] sm:$0xff]
      %v476 = vld [vmem:[%s1 + $0x58] sm:$0xff]
      %v477 = vld [vmem:[%s1 + $0x60] sm:$0xff]
      %v478 = vld [vmem:[%s1 + $0x68] sm:$0xff]
      %v479 = vld [vmem:[%s1 + $0x70] sm:$0xff]
      %v480 = vld [vmem:[%s1 + $0x78] sm:$0xff]
      %v481 = vld [vmem:[%s1 + $0x80] sm:$0xff]
      %v482 = vld [vmem:[%s1 + $0x88] sm:$0xff]
      %v483 = vld [vmem:[%s1 + $0x90] sm:$0xff]
      %v484 = vld [vmem:[%s1 + $0x98] sm:$0xff]
      %v485 = vld [vmem:[%s1 + $0xa0] sm:$0xff]
      %v486 = vld [vmem:[%s1 + $0xa8] sm:$0xff]
      %v487 = vld [vmem:[%s1 + $0xb0] sm:$0xff]
      %v488 = vld [vmem:[%s1 + $0xb8] sm:$0xff]
      %v489 = vld [vmem:[%s1 + $0xc0] sm:$0xff]
      %v490 = vld [vmem:[%s1 + $0xc8] sm:$0xff]
      %v491 = vld [vmem:[%s1 + $0xd0] sm:$0xff]
      %v492 = vld [vmem:[%s1 + $0xd8] sm:$0xff]
      %v493 = vld [vmem:[%s1 + $0xe0] sm:$0xff]
      %v494 = vld [vmem:[%s1 + $0xe8] sm:$0xff]
      %v495 = vld [vmem:[%s1 + $0xf0] sm:$0xff]
      %v496 = vld [vmem:[%s1 + $0xf8] sm:$0xff]
      %v497 = vld [vmem:[%s1 + $0x100] sm:$0xff]
      %v498 = vld [vmem:[%s1 + $0x108] sm:$0xff]
      %v499 = vld [vmem:[%s1 + $0x110] sm:$0xff]
      %v500 = vld [vmem:[%s1 + $0x118] sm:$0xff]
      %v501 = vld [vmem:[%s1 + $0x120] sm:$0xff]
      %v502 = vld [vmem:[%s1 + $0x128] sm:$0xff]
      %v503 = vld [vmem:[%s1 + $0x130] sm:$0xff]
      %v504 = vld [vmem:[%s1 + $0x138] sm:$0xff]
      %v505 = vld [vmem:[%s1 + $0x140] sm:$0xff]
      %v506 = vld [vmem:[%s1 + $0x148] sm:$0xff]
      %v507 = vld [vmem:[%s1 + $0x150] sm:$0xff]
      %v508 = vld [vmem:[%s1 + $0x158] sm:$0xff]
      %v509 = vld [vmem:[%s1 + $0x160] sm:$0xff]
      %v510 = vld [vmem:[%s1 + $0x168] sm:$0xff]
      %v511 = vld [vmem:[%s1 + $0x170] sm:$0xff]
      %v512 = vld [vmem:[%s1 + $0x178] sm:$0xff]
      %v513 = vld [vmem:[%s1 + $0x180] sm:$0xff]
      %v514 = vld [vmem:[%s1 + $0x188] sm:$0xff]
      %v515 = vld [vmem:[%s1 + $0x190] sm:$0xff]
      %v516 = vld [vmem:[%s1 + $0x198] sm:$0xff]
      %v517 = vld [vmem:[%s1 + $0x1a0] sm:$0xff]
      %v518 = vld [vmem:[%s1 + $0x1a8] sm:$0xff]
      %v519 = vld [vmem:[%s1 + $0x1b0] sm:$0xff]
      %v520 = vld [vmem:[%s1 + $0x1b8] sm:$0xff]
      %v521 = vld [vmem:[%s1 + $0x1c0] sm:$0xff]
      %v522 = vld [vmem:[%s1 + $0x1c8] sm:$0xff]
      %v523 = vld [vmem:[%s1 + $0x1d0] sm:$0xff]
      %v524 = vld [vmem:[%s1 + $0x1d8] sm:$0xff]
      %v525 = vld [vmem:[%s1 + $0x1e0] sm:$0xff]
      %v526 = vld [vmem:[%s1 + $0x1e8] sm:$0xff]
      %v527 = vld [vmem:[%s1 + $0x1f0] sm:$0xff]
      %v528 = vld [vmem:[%s1 + $0x1f8] sm:$0xff]
      %v529 = vld [vmem:[%s1 + $0x200] sm:$0xff]
      %v530 = vld [vmem:[%s1 + $0x208] sm:$0xff]
      %v531 = vld [vmem:[%s1 + $0x210] sm:$0xff]
      %v532 = vld [vmem:[%s1 + $0x218] sm:$0xff]
      %v533 = vld [vmem:[%s1 + $0x220] sm:$0xff]
      %v534 = vld [vmem:[%s1 + $0x228] sm:$0xff]
      %v535 = vld [vmem:[%s1 + $0x230] sm:$0xff]
      %v536 = vld [vmem:[%s1 + $0x238] sm:$0xff]
      %v537 = vld [vmem:[%s1 + $0x240] sm:$0xff]
      %v538 = vld [vmem:[%s1 + $0x248] sm:$0xff]
      %v539 = vld [vmem:[%s1 + $0x250] sm:$0xff]
      %v540 = vld [vmem:[%s1 + $0x258] sm:$0xff]
      %v541 = vld [vmem:[%s1 + $0x260] sm:$0xff]
      %v542 = vld [vmem:[%s1 + $0x268] sm:$0xff]
      %v543 = vld [vmem:[%s1 + $0x270] sm:$0xff]
      %v544 = vld [vmem:[%s1 + $0x278] sm:$0xff]
      %v545 = vld [vmem:[%s1 + $0x280] sm:$0xff]
      %v546 = vld [vmem:[%s1 + $0x288] sm:$0xff]
      %v547 = vld [vmem:[%s1 + $0x290] sm:$0xff]
      %v548 = vld [vmem:[%s1 + $0x298] sm:$0xff]
      %v549 = vld [vmem:[%s1 + $0x2a0] sm:$0xff]
      %v550 = vld [vmem:[%s1 + $0x2a8] sm:$0xff]
      %v551 = vld [vmem:[%s1 + $0x2b0] sm:$0xff]
      %v552 = vld [vmem:[%s1 + $0x2b8] sm:$0xff]
      %v553 = vld [vmem:[%s1 + $0x2c0] sm:$0xff]
      %v554 = vld [vmem:[%s1 + $0x2c8] sm:$0xff]
      %v555 = vld [vmem:[%s1 + $0x2d0] sm:$0xff]
      %v556 = vld [vmem:[%s1 + $0x2d8] sm:$0xff]
      %v557 = vld [vmem:[%s1 + $0x2e0] sm:$0xff]
      %v558 = vld [vmem:[%s1 + $0x2e8] sm:$0xff]
      %v559 = vld [vmem:[%s1 + $0x2f0] sm:$0xff]
      %v560 = vld [vmem:[%s1 + $0x2f8] sm:$0xff]
      %v561 = vld [vmem:[%s1 + $0x300] sm:$0xff]
      %v562 = vld [vmem:[%s1 + $0x308] sm:$0xff]
      %v563 = vld [vmem:[%s1 + $0x310] sm:$0xff]
      %v564 = vld [vmem:[%s1 + $0x318] sm:$0xff]
      %v565 = vld [vmem:[%s1 + $0x320] sm:$0xff]
      %v566 = vld [vmem:[%s1 + $0x328] sm:$0xff]
      %v567 = vld [vmem:[%s1 + $0x330] sm:$0xff]
      %v568 = vld [vmem:[%s1 + $0x338] sm:$0xff]
      %v569 = vld [vmem:[%s1 + $0x340] sm:$0xff]
      %v570 = vld [vmem:[%s1 + $0x348] sm:$0xff]
      %v571 = vld [vmem:[%s1 + $0x350] sm:$0xff]
      %v572 = vld [vmem:[%s1 + $0x358] sm:$0xff]
      %v573 = vld [vmem:[%s1 + $0x360] sm:$0xff]
      %v574 = vld [vmem:[%s1 + $0x368] sm:$0xff]
      %v575 = vld [vmem:[%s1 + $0x370] sm:$0xff]
      %v576 = vld [vmem:[%s1 + $0x378] sm:$0xff]
      %v577 = vld [vmem:[%s1 + $0x380] sm:$0xff]
      %v578 = vld [vmem:[%s1 + $0x388] sm:$0xff]
      %v579 = vld [vmem:[%s1 + $0x390] sm:$0xff]
      %v580 = vld [vmem:[%s1 + $0x398] sm:$0xff]
      %v581 = vld [vmem:[%s1 + $0x3a0] sm:$0xff]
      %v582 = vld [vmem:[%s1 + $0x3a8] sm:$0xff]
      %v583 = vld [vmem:[%s1 + $0x3b0] sm:$0xff]
      %v584 = vld [vmem:[%s1 + $0x3b8] sm:$0xff]
      %v585 = vld [vmem:[%s1 + $0x3c0] sm:$0xff]
      %v586 = vld [vmem:[%s1 + $0x3c8] sm:$0xff]
      %v587 = vld [vmem:[%s1 + $0x3d0] sm:$0xff]
      %v588 = vld [vmem:[%s1 + $0x3d8] sm:$0xff]
      %v589 = vld [vmem:[%s1 + $0x3e0] sm:$0xff]
      %v590 = vld [vmem:[%s1 + $0x3e8] sm:$0xff]
      %v591 = vld [vmem:[%s1 + $0x3f0] sm:$0xff]
      %v592 = vld [vmem:[%s1 + $0x3f8] sm:$0xff]
      %v593 = vld [vmem:[%s1 + $0x400] sm:$0xff]
      %v594 = vld [vmem:[%s1 + $0x408] sm:$0xff]
      %v595 = vld [vmem:[%s1 + $0x410] sm:$0xff]
      %v596 = vld [vmem:[%s1 + $0x418] sm:$0xff]
      %v597 = vld [vmem:[%s1 + $0x420] sm:$0xff]
      %v598 = vld [vmem:[%s1 + $0x428] sm:$0xff]
      %v599 = vld [vmem:[%s1 + $0x430] sm:$0xff]
      %v600 = vld [vmem:[%s1 + $0x438] sm:$0xff]
      %v601 = vld [vmem:[%s1 + $0x440] sm:$0xff]
      %v602 = vld [vmem:[%s1 + $0x448] sm:$0xff]
      %v603 = vld [vmem:[%s1 + $0x450] sm:$0xff]
      %v604 = vld [vmem:[%s1 + $0x458] sm:$0xff]
      %v605 = vld [vmem:[%s1 + $0x460] sm:$0xff]
      %v606 = vld [vmem:[%s1 + $0x468] sm:$0xff]
      %v607 = vld [vmem:[%s1 + $0x470] sm:$0xff]
      %v608 = vld [vmem:[%s1 + $0x478] sm:$0xff]
      %v609 = vld [vmem:[%s1 + $0x480] sm:$0xff]
      %v610 = vld [vmem:[%s1 + $0x488] sm:$0xff]
      %v611 = vld [vmem:[%s1 + $0x490] sm:$0xff]
      %v612 = vld [vmem:[%s1 + $0x498] sm:$0xff]
      %v613 = vld [vmem:[%s1 + $0x4a0] sm:$0xff]
      %v614 = vld [vmem:[%s1 + $0x4a8] sm:$0xff]
      %v615 = vld [vmem:[%s1 + $0x4b0] sm:$0xff]
      %v616 = vld [vmem:[%s1 + $0x4b8] sm:$0xff]
      %v617 = vld [vmem:[%s1 + $0x4c0] sm:$0xff]
      %v618 = vld [vmem:[%s1 + $0x4c8] sm:$0xff]
      %v619 = vld [vmem:[%s1 + $0x4d0] sm:$0xff]
      %v620 = vld [vmem:[%s1 + $0x4d8] sm:$0xff]
      %v621 = vld [vmem:[%s1 + $0x4e0] sm:$0xff]
      %v622 = vld [vmem:[%s1 + $0x4e8] sm:$0xff]
      %v623 = vld [vmem:[%s1 + $0x4f0] sm:$0xff]
      %v624 = vld [vmem:[%s1 + $0x4f8] sm:$0xff]
      %v625 = vld [vmem:[%s1 + $0x500] sm:$0xff]
      %v626 = vld [vmem:[%s1 + $0x508] sm:$0xff]
      %v627 = vld [vmem:[%s1 + $0x510] sm:$0xff]
      %v628 = vld [vmem:[%s1 + $0x518] sm:$0xff]
      %v629 = vld [vmem:[%s1 + $0x520] sm:$0xff]
      %v630 = vld [vmem:[%s1 + $0x528] sm:$0xff]
      %v631 = vld [vmem:[%s1 + $0x530] sm:$0xff]
      %v632 = vld [vmem:[%s1 + $0x538] sm:$0xff]
      %v633 = vld [vmem:[%s1 + $0x540] sm:$0xff]
      %v634 = vld [vmem:[%s1 + $0x548] sm:$0xff]
      %v635 = vld [vmem:[%s1 + $0x550] sm:$0xff]
      %v636 = vld [vmem:[%s1 + $0x558] sm:$0xff]
      %v637 = vld [vmem:[%s1 + $0x560] sm:$0xff]
      %v638 = vld [vmem:[%s1 + $0x568] sm:$0xff]
      %v639 = vld [vmem:[%s1 + $0x570] sm:$0xff]
      %v640 = vld [vmem:[%s1 + $0x578] sm:$0xff]
      %v641 = vld [vmem:[%s1 + $0x580] sm:$0xff]
      %v642 = vld [vmem:[%s1 + $0x588] sm:$0xff]
      %v643 = vld [vmem:[%s1 + $0x590] sm:$0xff]
      %v644 = vld [vmem:[%s1 + $0x598] sm:$0xff]
      %v645 = vld [vmem:[%s1 + $0x5a0] sm:$0xff]
      %v646 = vld [vmem:[%s1 + $0x5a8] sm:$0xff]
      %v647 = vld [vmem:[%s1 + $0x5b0] sm:$0xff]
      %v648 = vld [vmem:[%s1 + $0x5b8] sm:$0xff]
      %v649 = vld [vmem:[%s1 + $0x5c0] sm:$0xff]
      %v650 = vld [vmem:[%s1 + $0x5c8] sm:$0xff]
      %v651 = vld [vmem:[%s1 + $0x5d0] sm:$0xff]
      %v652 = vld [vmem:[%s1 + $0x5d8] sm:$0xff]
      %v653 = vld [vmem:[%s1 + $0x5e0] sm:$0xff]
      %v654 = vld [vmem:[%s1 + $0x5e8] sm:$0xff]
      %v655 = vld [vmem:[%s1 + $0x5f0] sm:$0xff]
      %v656 = vld [vmem:[%s1 + $0x5f8] sm:$0xff]
      %v657 = vld [vmem:[%s1 + $0x600] sm:$0xff]
      %v658 = vld [vmem:[%s1 + $0x608] sm:$0xff]
      %v659 = vld [vmem:[%s1 + $0x610] sm:$0xff]
      %v660 = vld [vmem:[%s1 + $0x618] sm:$0xff]
      %v661 = vld [vmem:[%s1 + $0x620] sm:$0xff]
      %v662 = vld [vmem:[%s1 + $0x628] sm:$0xff]
      %v663 = vld [vmem:[%s1 + $0x630] sm:$0xff]
      %v664 = vld [vmem:[%s1 + $0x638] sm:$0xff]
      %v665 = vld [vmem:[%s1 + $0x640] sm:$0xff]
      %v666 = vld [vmem:[%s1 + $0x648] sm:$0xff]
      %v667 = vld [vmem:[%s1 + $0x650] sm:$0xff]
      %v668 = vld [vmem:[%s1 + $0x658] sm:$0xff]
      %v669 = vld [vmem:[%s1 + $0x660] sm:$0xff]
      %v670 = vld [vmem:[%s1 + $0x668] sm:$0xff]
      %v671 = vld [vmem:[%s1 + $0x670] sm:$0xff]
      %v672 = vld [vmem:[%s1 + $0x678] sm:$0xff]
      %v673 = vld [vmem:[%s1 + $0x680] sm:$0xff]
      %v674 = vld [vmem:[%s1 + $0x688] sm:$0xff]
      %v675 = vld [vmem:[%s1 + $0x690] sm:$0xff]
      %v676 = vld [vmem:[%s1 + $0x698] sm:$0xff]
      %v677 = vld [vmem:[%s1 + $0x6a0] sm:$0xff]
      %v678 = vld [vmem:[%s1 + $0x6a8] sm:$0xff]
      %v679 = vld [vmem:[%s1 + $0x6b0] sm:$0xff]
      %v680 = vld [vmem:[%s1 + $0x6b8] sm:$0xff]
      %v681 = vld [vmem:[%s1 + $0x6c0] sm:$0xff]
      %v682 = vld [vmem:[%s1 + $0x6c8] sm:$0xff]
      %v683 = vld [vmem:[%s1 + $0x6d0] sm:$0xff]
      %v684 = vld [vmem:[%s1 + $0x6d8] sm:$0xff]
      %v685 = vld [vmem:[%s1 + $0x6e0] sm:$0xff]
      %v686 = vld [vmem:[%s1 + $0x6e8] sm:$0xff]
      %v687 = vld [vmem:[%s1 + $0x6f0] sm:$0xff]
      %v688 = vld [vmem:[%s1 + $0x6f8] sm:$0xff]
      %v689 = vld [vmem:[%s1 + $0x700] sm:$0xff]
      %v690 = vld [vmem:[%s1 + $0x708] sm:$0xff]
      %v691 = vld [vmem:[%s1 + $0x710] sm:$0xff]
      %v692 = vld [vmem:[%s1 + $0x718] sm:$0xff]
      %v693 = vld [vmem:[%s1 + $0x720] sm:$0xff]
      %v694 = vld [vmem:[%s1 + $0x728] sm:$0xff]
      %v695 = vld [vmem:[%s1 + $0x730] sm:$0xff]
      %v696 = vld [vmem:[%s1 + $0x738] sm:$0xff]
      %v697 = vld [vmem:[%s1 + $0x740] sm:$0xff]
      %v698 = vld [vmem:[%s1 + $0x748] sm:$0xff]
      %v699 = vld [vmem:[%s1 + $0x750] sm:$0xff]
      %v700 = vld [vmem:[%s1 + $0x758] sm:$0xff]
      %v701 = vld [vmem:[%s1 + $0x760] sm:$0xff]
      %v702 = vld [vmem:[%s1 + $0x768] sm:$0xff]
      %v703 = vld [vmem:[%s1 + $0x770] sm:$0xff]
      %v704 = vld [vmem:[%s1 + $0x778] sm:$0xff]
      %v705 = vld [vmem:[%s1 + $0x780] sm:$0xff]
      %v706 = vld [vmem:[%s1 + $0x788] sm:$0xff]
      %v707 = vld [vmem:[%s1 + $0x790] sm:$0xff]
      %v708 = vld [vmem:[%s1 + $0x798] sm:$0xff]
      %v709 = vld [vmem:[%s1 + $0x7a0] sm:$0xff]
      %v710 = vld [vmem:[%s1 + $0x7a8] sm:$0xff]
      %v711 = vld [vmem:[%s1 + $0x7b0] sm:$0xff]
      %v712 = vld [vmem:[%s1 + $0x7b8] sm:$0xff]
      %v713 = vld [vmem:[%s1 + $0x7c0] sm:$0xff]
      %v714 = vld [vmem:[%s1 + $0x7c8] sm:$0xff]
      %v715 = vld [vmem:[%s1 + $0x7d0] sm:$0xff]
      %v716 = vld [vmem:[%s1 + $0x7d8] sm:$0xff]
      %v717 = vld [vmem:[%s1 + $0x7e0] sm:$0xff]
      %v718 = vld [vmem:[%s1 + $0x7e8] sm:$0xff]
      %v719 = vld [vmem:[%s1 + $0x7f0] sm:$0xff]
      %v720 = vld [vmem:[%s1 + $0x7f8] sm:$0xff]
      %v721 = vld [vmem:[%s1 + $0x800] sm:$0xff]
      %v722 = vld [vmem:[%s1 + $0x808] sm:$0xff]
      %v723 = vld [vmem:[%s1 + $0x810] sm:$0xff]
      %v724 = vld [vmem:[%s1 + $0x818] sm:$0xff]
      %v725 = vld [vmem:[%s1 + $0x820] sm:$0xff]
      %v726 = vld [vmem:[%s1 + $0x828] sm:$0xff]
      %v727 = vld [vmem:[%s1 + $0x830] sm:$0xff]
      %v728 = vld [vmem:[%s1 + $0x838] sm:$0xff]
      %v729 = vld [vmem:[%s1 + $0x840] sm:$0xff]
      %v730 = vld [vmem:[%s1 + $0x848] sm:$0xff]
      %v731 = vld [vmem:[%s1 + $0x850] sm:$0xff]
      %v732 = vld [vmem:[%s1 + $0x858] sm:$0xff]
      %v733 = vld [vmem:[%s1 + $0x860] sm:$0xff]
      %v734 = vld [vmem:[%s1 + $0x868] sm:$0xff]
      %v735 = vld [vmem:[%s1 + $0x870] sm:$0xff]
      %v736 = vld [vmem:[%s1 + $0x878] sm:$0xff]
      %v737 = vld [vmem:[%s1 + $0x880] sm:$0xff]
      %v738 = vld [vmem:[%s1 + $0x888] sm:$0xff]
      %v739 = vld [vmem:[%s1 + $0x890] sm:$0xff]
      %v740 = vld [vmem:[%s1 + $0x898] sm:$0xff]
      %v741 = vld [vmem:[%s1 + $0x8a0] sm:$0xff]
      %v742 = vld [vmem:[%s1 + $0x8a8] sm:$0xff]
      %v743 = vld [vmem:[%s1 + $0x8b0] sm:$0xff]
      %v744 = vld [vmem:[%s1 + $0x8b8] sm:$0xff]
      %v745 = vld [vmem:[%s1 + $0x8c0] sm:$0xff]
      %v746 = vld [vmem:[%s1 + $0x8c8] sm:$0xff]
      %v747 = vld [vmem:[%s1 + $0x8d0] sm:$0xff]
      %v748 = vld [vmem:[%s1 + $0x8d8] sm:$0xff]
      %v749 = vld [vmem:[%s1 + $0x8e0] sm:$0xff]
      %v750 = vld [vmem:[%s1 + $0x8e8] sm:$0xff]
      %v751 = vld [vmem:[%s1 + $0x8f0] sm:$0xff]
      %v752 = vld [vmem:[%s1 + $0x8f8] sm:$0xff]
      %v753 = vld [vmem:[%s1 + $0x900] sm:$0xff]
      %v754 = vld [vmem:[%s1 + $0x908] sm:$0xff]
      %v755 = vld [vmem:[%s1 + $0x910] sm:$0xff]
      %v756 = vld [vmem:[%s1 + $0x918] sm:$0xff]
      %v757 = vld [vmem:[%s1 + $0x920] sm:$0xff]
      %v758 = vld [vmem:[%s1 + $0x928] sm:$0xff]
      %v759 = vld [vmem:[%s1 + $0x930] sm:$0xff]
      %v760 = vld [vmem:[%s1 + $0x938] sm:$0xff]
      %v761 = vld [vmem:[%s1 + $0x940] sm:$0xff]
      %v762 = vld [vmem:[%s1 + $0x948] sm:$0xff]
      %v763 = vld [vmem:[%s1 + $0x950] sm:$0xff]
      %v764 = vld [vmem:[%s1 + $0x958] sm:$0xff]
      %v765 = vld [vmem:[%s1 + $0x960] sm:$0xff]
      %v766 = vld [vmem:[%s1 + $0x968] sm:$0xff]
      %v767 = vld [vmem:[%s1 + $0x970] sm:$0xff]
      %v768 = vld [vmem:[%s1 + $0x978] sm:$0xff]
      %v769 = vld [vmem:[%s1 + $0x980] sm:$0xff]
      %v770 = vld [vmem:[%s1 + $0x988] sm:$0xff]
      %v771 = vld [vmem:[%s1 + $0x990] sm:$0xff]
      %v772 = vld [vmem:[%s1 + $0x998] sm:$0xff]
      %v773 = vld [vmem:[%s1 + $0x9a0] sm:$0xff]
      %v774 = vld [vmem:[%s1 + $0x9a8] sm:$0xff]
      %v775 = vld [vmem:[%s1 + $0x9b0] sm:$0xff]
      %v776 = vld [vmem:[%s1 + $0x9b8] sm:$0xff]
      %v777 = vld [vmem:[%s1 + $0x9c0] sm:$0xff]
      %v778 = vld [vmem:[%s1 + $0x9c8] sm:$0xff]
      %v779 = vld [vmem:[%s1 + $0x9d0] sm:$0xff]
      %v780 = vld [vmem:[%s1 + $0x9d8] sm:$0xff]
      %v781 = vld [vmem:[%s1 + $0x9e0] sm:$0xff]
      %v782 = vld [vmem:[%s1 + $0x9e8] sm:$0xff]
      %v783 = vld [vmem:[%s1 + $0x9f0] sm:$0xff]
      %v784 = vld [vmem:[%s1 + $0x9f8] sm:$0xff]
      %v785 = vld [vmem:[%s1 + $0xa00] sm:$0xff]
      %v786 = vld [vmem:[%s1 + $0xa08] sm:$0xff]
      %v787 = vld [vmem:[%s1 + $0xa10] sm:$0xff]
      %v788 = vld [vmem:[%s1 + $0xa18] sm:$0xff]
      %v789 = vld [vmem:[%s1 + $0xa20] sm:$0xff]
      %v790 = vld [vmem:[%s1 + $0xa28] sm:$0xff]
      %v791 = vld [vmem:[%s1 + $0xa30] sm:$0xff]
      %v792 = vld [vmem:[%s1 + $0xa38] sm:$0xff]
      %v793 = vld [vmem:[%s1 + $0xa40] sm:$0xff]
      %v794 = vld [vmem:[%s1 + $0xa48] sm:$0xff]
      %v795 = vld [vmem:[%s1 + $0xa50] sm:$0xff]
      %v796 = vld [vmem:[%s1 + $0xa58] sm:$0xff]
      %v797 = vld [vmem:[%s1 + $0xa60] sm:$0xff]
      %v798 = vld [vmem:[%s1 + $0xa68] sm:$0xff]
      %v799 = vld [vmem:[%s1 + $0xa70] sm:$0xff]
      %v800 = vld [vmem:[%s1 + $0xa78] sm:$0xff]
      %v801 = vld [vmem:[%s1 + $0xa80] sm:$0xff]
      %v802 = vld [vmem:[%s1 + $0xa88] sm:$0xff]
      %v803 = vld [vmem:[%s1 + $0xa90] sm:$0xff]
      %v804 = vld [vmem:[%s1 + $0xa98] sm:$0xff]
      %v805 = vld [vmem:[%s1 + $0xaa0] sm:$0xff]
      %v806 = vld [vmem:[%s1 + $0xaa8] sm:$0xff]
      %v807 = vld [vmem:[%s1 + $0xab0] sm:$0xff]
      %v808 = vld [vmem:[%s1 + $0xab8] sm:$0xff]
      %v809 = vld [vmem:[%s1 + $0xac0] sm:$0xff]
      %v810 = vld [vmem:[%s1 + $0xac8] sm:$0xff]
      %v811 = vld [vmem:[%s1 + $0xad0] sm:$0xff]
      %v812 = vld [vmem:[%s1 + $0xad8] sm:$0xff]
      %v813 = vld [vmem:[%s1 + $0xae0] sm:$0xff]
      %v814 = vld [vmem:[%s1 + $0xae8] sm:$0xff]
      %v815 = vld [vmem:[%s1 + $0xaf0] sm:$0xff]
      %v816 = vld [vmem:[%s1 + $0xaf8] sm:$0xff]
      %v817 = vld [vmem:[%s1 + $0xb00] sm:$0xff]
      %v818 = vld [vmem:[%s1 + $0xb08] sm:$0xff]
      %v819 = vld [vmem:[%s1 + $0xb10] sm:$0xff]
      %v820 = vld [vmem:[%s1 + $0xb18] sm:$0xff]
      %v821 = vld [vmem:[%s1 + $0xb20] sm:$0xff]
      %v822 = vld [vmem:[%s1 + $0xb28] sm:$0xff]
      %v823 = vld [vmem:[%s1 + $0xb30] sm:$0xff]
      %v824 = vld [vmem:[%s1 + $0xb38] sm:$0xff]
      %v825 = vld [vmem:[%s1 + $0xb40] sm:$0xff]
      %v826 = vld [vmem:[%s1 + $0xb48] sm:$0xff]
      %v827 = vld [vmem:[%s1 + $0xb50] sm:$0xff]
      %v828 = vld [vmem:[%s1 + $0xb58] sm:$0xff]
      %v829 = vld [vmem:[%s1 + $0xb60] sm:$0xff]
      %v830 = vld [vmem:[%s1 + $0xb68] sm:$0xff]
      %v831 = vld [vmem:[%s1 + $0xb70] sm:$0xff]
      %v832 = vld [vmem:[%s1 + $0xb78] sm:$0xff]
      %v833 = vld [vmem:[%s1 + $0xb80] sm:$0xff]
      %v834 = vld [vmem:[%s1 + $0xb88] sm:$0xff]
      %v835 = vld [vmem:[%s1 + $0xb90] sm:$0xff]
      %v836 = vld [vmem:[%s1 + $0xb98] sm:$0xff]
      %v837 = vld [vmem:[%s1 + $0xba0] sm:$0xff]
      %v838 = vld [vmem:[%s1 + $0xba8] sm:$0xff]
      %v839 = vld [vmem:[%s1 + $0xbb0] sm:$0xff]
      %v840 = vld [vmem:[%s1 + $0xbb8] sm:$0xff]
      %v841 = vld [vmem:[%s1 + $0xbc0] sm:$0xff]
      %v842 = vld [vmem:[%s1 + $0xbc8] sm:$0xff]
      %v843 = vld [vmem:[%s1 + $0xbd0] sm:$0xff]
      %v844 = vld [vmem:[%s1 + $0xbd8] sm:$0xff]
      %v845 = vld [vmem:[%s1 + $0xbe0] sm:$0xff]
      %v846 = vld [vmem:[%s1 + $0xbe8] sm:$0xff]
      %v847 = vld [vmem:[%s1 + $0xbf0] sm:$0xff]
      %v848 = vld [vmem:[%s1 + $0xbf8] sm:$0xff]
      %v1233 = vunpack.c.l.b16 %v465
      %v1234 = vunpack.c.h.b16 %v465
      %v1235 = vunpack.c.l.b16 %v466
      %v1236 = vunpack.c.h.b16 %v466
      %v1237 = vunpack.c.l.b16 %v467
      %v1238 = vunpack.c.h.b16 %v467
      %v1239 = vunpack.c.l.b16 %v468
      %v1240 = vunpack.c.h.b16 %v468
      %v1241 = vunpack.c.l.b16 %v469
      %v1242 = vunpack.c.h.b16 %v469
      %v1243 = vunpack.c.l.b16 %v470
      %v1244 = vunpack.c.h.b16 %v470
      %v1245 = vunpack.c.l.b16 %v471
      %v1246 = vunpack.c.h.b16 %v471
      %v1247 = vunpack.c.l.b16 %v472
      %v1248 = vunpack.c.h.b16 %v472
      %v1249 = vunpack.c.l.b16 %v473
      %v1250 = vunpack.c.h.b16 %v473
      %v1251 = vunpack.c.l.b16 %v474
      %v1252 = vunpack.c.h.b16 %v474
      %v1253 = vunpack.c.l.b16 %v475
      %v1254 = vunpack.c.h.b16 %v475
      %v1255 = vunpack.c.l.b16 %v476
      %v1256 = vunpack.c.h.b16 %v476
      %v1257 = vunpack.c.l.b16 %v477
      %v1258 = vunpack.c.h.b16 %v477
      %v1259 = vunpack.c.l.b16 %v478
      %v1260 = vunpack.c.h.b16 %v478
      %v1261 = vunpack.c.l.b16 %v479
      %v1262 = vunpack.c.h.b16 %v479
      %v1263 = vunpack.c.l.b16 %v480
      %v1264 = vunpack.c.h.b16 %v480
      %v1265 = vunpack.c.l.b16 %v481
      %v1266 = vunpack.c.h.b16 %v481
      %v1267 = vunpack.c.l.b16 %v482
      %v1268 = vunpack.c.h.b16 %v482
      %v1269 = vunpack.c.l.b16 %v483
      %v1270 = vunpack.c.h.b16 %v483
      %v1271 = vunpack.c.l.b16 %v484
      %v1272 = vunpack.c.h.b16 %v484
      %v1273 = vunpack.c.l.b16 %v485
      %v1274 = vunpack.c.h.b16 %v485
      %v1275 = vunpack.c.l.b16 %v486
      %v1276 = vunpack.c.h.b16 %v486
      %v1277 = vunpack.c.l.b16 %v487
      %v1278 = vunpack.c.h.b16 %v487
      %v1279 = vunpack.c.l.b16 %v488
      %v1280 = vunpack.c.h.b16 %v488
      %v1281 = vunpack.c.l.b16 %v489
      %v1282 = vunpack.c.h.b16 %v489
      %v1283 = vunpack.c.l.b16 %v490
      %v1284 = vunpack.c.h.b16 %v490
      %v1285 = vunpack.c.l.b16 %v491
      %v1286 = vunpack.c.h.b16 %v491
      %v1287 = vunpack.c.l.b16 %v492
      %v1288 = vunpack.c.h.b16 %v492
      %v1289 = vunpack.c.l.b16 %v493
      %v1290 = vunpack.c.h.b16 %v493
      %v1291 = vunpack.c.l.b16 %v494
      %v1292 = vunpack.c.h.b16 %v494
      %v1293 = vunpack.c.l.b16 %v495
      %v1294 = vunpack.c.h.b16 %v495
      %v1295 = vunpack.c.l.b16 %v496
      %v1296 = vunpack.c.h.b16 %v496
      %v1297 = vunpack.c.l.b16 %v497
      %v1298 = vunpack.c.h.b16 %v497
      %v1299 = vunpack.c.l.b16 %v498
      %v1300 = vunpack.c.h.b16 %v498
      %v1301 = vunpack.c.l.b16 %v499
      %v1302 = vunpack.c.h.b16 %v499
      %v1303 = vunpack.c.l.b16 %v500
      %v1304 = vunpack.c.h.b16 %v500
      %v1305 = vunpack.c.l.b16 %v501
      %v1306 = vunpack.c.h.b16 %v501
      %v1307 = vunpack.c.l.b16 %v502
      %v1308 = vunpack.c.h.b16 %v502
      %v1309 = vunpack.c.l.b16 %v503
      %v1310 = vunpack.c.h.b16 %v503
      %v1311 = vunpack.c.l.b16 %v504
      %v1312 = vunpack.c.h.b16 %v504
      %v1313 = vunpack.c.l.b16 %v505
      %v1314 = vunpack.c.h.b16 %v505
      %v1315 = vunpack.c.l.b16 %v506
      %v1316 = vunpack.c.h.b16 %v506
      %v1317 = vunpack.c.l.b16 %v507
      %v1318 = vunpack.c.h.b16 %v507
      %v1319 = vunpack.c.l.b16 %v508
      %v1320 = vunpack.c.h.b16 %v508
      %v1321 = vunpack.c.l.b16 %v509
      %v1322 = vunpack.c.h.b16 %v509
      %v1323 = vunpack.c.l.b16 %v510
      %v1324 = vunpack.c.h.b16 %v510
      %v1325 = vunpack.c.l.b16 %v511
      %v1326 = vunpack.c.h.b16 %v511
      %v1327 = vunpack.c.l.b16 %v512
      %v1328 = vunpack.c.h.b16 %v512
      %v1329 = vunpack.c.l.b16 %v513
      %v1330 = vunpack.c.h.b16 %v513
      %v1331 = vunpack.c.l.b16 %v514
      %v1332 = vunpack.c.h.b16 %v514
      %v1333 = vunpack.c.l.b16 %v515
      %v1334 = vunpack.c.h.b16 %v515
      %v1335 = vunpack.c.l.b16 %v516
      %v1336 = vunpack.c.h.b16 %v516
      %v1337 = vunpack.c.l.b16 %v517
      %v1338 = vunpack.c.h.b16 %v517
      %v1339 = vunpack.c.l.b16 %v518
      %v1340 = vunpack.c.h.b16 %v518
      %v1341 = vunpack.c.l.b16 %v519
      %v1342 = vunpack.c.h.b16 %v519
      %v1343 = vunpack.c.l.b16 %v520
      %v1344 = vunpack.c.h.b16 %v520
      %v1345 = vunpack.c.l.b16 %v521
      %v1346 = vunpack.c.h.b16 %v521
      %v1347 = vunpack.c.l.b16 %v522
      %v1348 = vunpack.c.h.b16 %v522
      %v1349 = vunpack.c.l.b16 %v523
      %v1350 = vunpack.c.h.b16 %v523
      %v1351 = vunpack.c.l.b16 %v524
      %v1352 = vunpack.c.h.b16 %v524
      %v1353 = vunpack.c.l.b16 %v525
      %v1354 = vunpack.c.h.b16 %v525
      %v1355 = vunpack.c.l.b16 %v526
      %v1356 = vunpack.c.h.b16 %v526
      %v1357 = vunpack.c.l.b16 %v527
      %v1358 = vunpack.c.h.b16 %v527
      %v1359 = vunpack.c.l.b16 %v528
      %v1360 = vunpack.c.h.b16 %v528
      %v1361 = vunpack.c.l.b16 %v529
      %v1362 = vunpack.c.h.b16 %v529
      %v1363 = vunpack.c.l.b16 %v530
      %v1364 = vunpack.c.h.b16 %v530
      %v1365 = vunpack.c.l.b16 %v531
      %v1366 = vunpack.c.h.b16 %v531
      %v1367 = vunpack.c.l.b16 %v532
      %v1368 = vunpack.c.h.b16 %v532
      %v1369 = vunpack.c.l.b16 %v533
      %v1370 = vunpack.c.h.b16 %v533
      %v1371 = vunpack.c.l.b16 %v534
      %v1372 = vunpack.c.h.b16 %v534
      %v1373 = vunpack.c.l.b16 %v535
      %v1374 = vunpack.c.h.b16 %v535
      %v1375 = vunpack.c.l.b16 %v536
      %v1376 = vunpack.c.h.b16 %v536
      %v1377 = vunpack.c.l.b16 %v537
      %v1378 = vunpack.c.h.b16 %v537
      %v1379 = vunpack.c.l.b16 %v538
      %v1380 = vunpack.c.h.b16 %v538
      %v1381 = vunpack.c.l.b16 %v539
      %v1382 = vunpack.c.h.b16 %v539
      %v1383 = vunpack.c.l.b16 %v540
      %v1384 = vunpack.c.h.b16 %v540
      %v1385 = vunpack.c.l.b16 %v541
      %v1386 = vunpack.c.h.b16 %v541
      %v1387 = vunpack.c.l.b16 %v542
      %v1388 = vunpack.c.h.b16 %v542
      %v1389 = vunpack.c.l.b16 %v543
      %v1390 = vunpack.c.h.b16 %v543
      %v1391 = vunpack.c.l.b16 %v544
      %v1392 = vunpack.c.h.b16 %v544
      %v1393 = vunpack.c.l.b16 %v545
      %v1394 = vunpack.c.h.b16 %v545
      %v1395 = vunpack.c.l.b16 %v546
      %v1396 = vunpack.c.h.b16 %v546
      %v1397 = vunpack.c.l.b16 %v547
      %v1398 = vunpack.c.h.b16 %v547
      %v1399 = vunpack.c.l.b16 %v548
      %v1400 = vunpack.c.h.b16 %v548
      %v1401 = vunpack.c.l.b16 %v549
      %v1402 = vunpack.c.h.b16 %v549
      %v1403 = vunpack.c.l.b16 %v550
      %v1404 = vunpack.c.h.b16 %v550
      %v1405 = vunpack.c.l.b16 %v551
      %v1406 = vunpack.c.h.b16 %v551
      %v1407 = vunpack.c.l.b16 %v552
      %v1408 = vunpack.c.h.b16 %v552
      %v1409 = vunpack.c.l.b16 %v553
      %v1410 = vunpack.c.h.b16 %v553
      %v1411 = vunpack.c.l.b16 %v554
      %v1412 = vunpack.c.h.b16 %v554
      %v1413 = vunpack.c.l.b16 %v555
      %v1414 = vunpack.c.h.b16 %v555
      %v1415 = vunpack.c.l.b16 %v556
      %v1416 = vunpack.c.h.b16 %v556
      %v1417 = vunpack.c.l.b16 %v557
      %v1418 = vunpack.c.h.b16 %v557
      %v1419 = vunpack.c.l.b16 %v558
      %v1420 = vunpack.c.h.b16 %v558
      %v1421 = vunpack.c.l.b16 %v559
      %v1422 = vunpack.c.h.b16 %v559
      %v1423 = vunpack.c.l.b16 %v560
      %v1424 = vunpack.c.h.b16 %v560
      %v1425 = vunpack.c.l.b16 %v561
      %v1426 = vunpack.c.h.b16 %v561
      %v1427 = vunpack.c.l.b16 %v562
      %v1428 = vunpack.c.h.b16 %v562
      %v1429 = vunpack.c.l.b16 %v563
      %v1430 = vunpack.c.h.b16 %v563
      %v1431 = vunpack.c.l.b16 %v564
      %v1432 = vunpack.c.h.b16 %v564
      %v1433 = vunpack.c.l.b16 %v565
      %v1434 = vunpack.c.h.b16 %v565
      %v1435 = vunpack.c.l.b16 %v566
      %v1436 = vunpack.c.h.b16 %v566
      %v1437 = vunpack.c.l.b16 %v567
      %v1438 = vunpack.c.h.b16 %v567
      %v1439 = vunpack.c.l.b16 %v568
      %v1440 = vunpack.c.h.b16 %v568
      %v1441 = vunpack.c.l.b16 %v569
      %v1442 = vunpack.c.h.b16 %v569
      %v1443 = vunpack.c.l.b16 %v570
      %v1444 = vunpack.c.h.b16 %v570
      %v1445 = vunpack.c.l.b16 %v571
      %v1446 = vunpack.c.h.b16 %v571
      %v1447 = vunpack.c.l.b16 %v572
      %v1448 = vunpack.c.h.b16 %v572
      %v1449 = vunpack.c.l.b16 %v573
      %v1450 = vunpack.c.h.b16 %v573
      %v1451 = vunpack.c.l.b16 %v574
      %v1452 = vunpack.c.h.b16 %v574
      %v1453 = vunpack.c.l.b16 %v575
      %v1454 = vunpack.c.h.b16 %v575
      %v1455 = vunpack.c.l.b16 %v576
      %v1456 = vunpack.c.h.b16 %v576
      %v1457 = vunpack.c.l.b16 %v577
      %v1458 = vunpack.c.h.b16 %v577
      %v1459 = vunpack.c.l.b16 %v578
      %v1460 = vunpack.c.h.b16 %v578
      %v1461 = vunpack.c.l.b16 %v579
      %v1462 = vunpack.c.h.b16 %v579
      %v1463 = vunpack.c.l.b16 %v580
      %v1464 = vunpack.c.h.b16 %v580
      %v1465 = vunpack.c.l.b16 %v581
      %v1466 = vunpack.c.h.b16 %v581
      %v1467 = vunpack.c.l.b16 %v582
      %v1468 = vunpack.c.h.b16 %v582
      %v1469 = vunpack.c.l.b16 %v583
      %v1470 = vunpack.c.h.b16 %v583
      %v1471 = vunpack.c.l.b16 %v584
      %v1472 = vunpack.c.h.b16 %v584
      %v1473 = vunpack.c.l.b16 %v585
      %v1474 = vunpack.c.h.b16 %v585
      %v1475 = vunpack.c.l.b16 %v586
      %v1476 = vunpack.c.h.b16 %v586
      %v1477 = vunpack.c.l.b16 %v587
      %v1478 = vunpack.c.h.b16 %v587
      %v1479 = vunpack.c.l.b16 %v588
      %v1480 = vunpack.c.h.b16 %v588
      %v1481 = vunpack.c.l.b16 %v589
      %v1482 = vunpack.c.h.b16 %v589
      %v1483 = vunpack.c.l.b16 %v590
      %v1484 = vunpack.c.h.b16 %v590
      %v1485 = vunpack.c.l.b16 %v591
      %v1486 = vunpack.c.h.b16 %v591
      %v1487 = vunpack.c.l.b16 %v592
      %v1488 = vunpack.c.h.b16 %v592
      %v1489 = vunpack.c.l.b16 %v593
      %v1490 = vunpack.c.h.b16 %v593
      %v1491 = vunpack.c.l.b16 %v594
      %v1492 = vunpack.c.h.b16 %v594
      %v1493 = vunpack.c.l.b16 %v595
      %v1494 = vunpack.c.h.b16 %v595
      %v1495 = vunpack.c.l.b16 %v596
      %v1496 = vunpack.c.h.b16 %v596
      %v1497 = vunpack.c.l.b16 %v597
      %v1498 = vunpack.c.h.b16 %v597
      %v1499 = vunpack.c.l.b16 %v598
      %v1500 = vunpack.c.h.b16 %v598
      %v1501 = vunpack.c.l.b16 %v599
      %v1502 = vunpack.c.h.b16 %v599
      %v1503 = vunpack.c.l.b16 %v600
      %v1504 = vunpack.c.h.b16 %v600
      %v1505 = vunpack.c.l.b16 %v601
      %v1506 = vunpack.c.h.b16 %v601
      %v1507 = vunpack.c.l.b16 %v602
      %v1508 = vunpack.c.h.b16 %v602
      %v1509 = vunpack.c.l.b16 %v603
      %v1510 = vunpack.c.h.b16 %v603
      %v1511 = vunpack.c.l.b16 %v604
      %v1512 = vunpack.c.h.b16 %v604
      %v1513 = vunpack.c.l.b16 %v605
      %v1514 = vunpack.c.h.b16 %v605
      %v1515 = vunpack.c.l.b16 %v606
      %v1516 = vunpack.c.h.b16 %v606
      %v1517 = vunpack.c.l.b16 %v607
      %v1518 = vunpack.c.h.b16 %v607
      %v1519 = vunpack.c.l.b16 %v608
      %v1520 = vunpack.c.h.b16 %v608
      %v1521 = vunpack.c.l.b16 %v609
      %v1522 = vunpack.c.h.b16 %v609
      %v1523 = vunpack.c.l.b16 %v610
      %v1524 = vunpack.c.h.b16 %v610
      %v1525 = vunpack.c.l.b16 %v611
      %v1526 = vunpack.c.h.b16 %v611
      %v1527 = vunpack.c.l.b16 %v612
      %v1528 = vunpack.c.h.b16 %v612
      %v1529 = vunpack.c.l.b16 %v613
      %v1530 = vunpack.c.h.b16 %v613
      %v1531 = vunpack.c.l.b16 %v614
      %v1532 = vunpack.c.h.b16 %v614
      %v1533 = vunpack.c.l.b16 %v615
      %v1534 = vunpack.c.h.b16 %v615
      %v1535 = vunpack.c.l.b16 %v616
      %v1536 = vunpack.c.h.b16 %v616
      %v1537 = vunpack.c.l.b16 %v617
      %v1538 = vunpack.c.h.b16 %v617
      %v1539 = vunpack.c.l.b16 %v618
      %v1540 = vunpack.c.h.b16 %v618
      %v1541 = vunpack.c.l.b16 %v619
      %v1542 = vunpack.c.h.b16 %v619
      %v1543 = vunpack.c.l.b16 %v620
      %v1544 = vunpack.c.h.b16 %v620
      %v1545 = vunpack.c.l.b16 %v621
      %v1546 = vunpack.c.h.b16 %v621
      %v1547 = vunpack.c.l.b16 %v622
      %v1548 = vunpack.c.h.b16 %v622
      %v1549 = vunpack.c.l.b16 %v623
      %v1550 = vunpack.c.h.b16 %v623
      %v1551 = vunpack.c.l.b16 %v624
      %v1552 = vunpack.c.h.b16 %v624
      %v1553 = vunpack.c.l.b16 %v625
      %v1554 = vunpack.c.h.b16 %v625
      %v1555 = vunpack.c.l.b16 %v626
      %v1556 = vunpack.c.h.b16 %v626
      %v1557 = vunpack.c.l.b16 %v627
      %v1558 = vunpack.c.h.b16 %v627
      %v1559 = vunpack.c.l.b16 %v628
      %v1560 = vunpack.c.h.b16 %v628
      %v1561 = vunpack.c.l.b16 %v629
      %v1562 = vunpack.c.h.b16 %v629
      %v1563 = vunpack.c.l.b16 %v630
      %v1564 = vunpack.c.h.b16 %v630
      %v1565 = vunpack.c.l.b16 %v631
      %v1566 = vunpack.c.h.b16 %v631
      %v1567 = vunpack.c.l.b16 %v632
      %v1568 = vunpack.c.h.b16 %v632
      %v1569 = vunpack.c.l.b16 %v633
      %v1570 = vunpack.c.h.b16 %v633
      %v1571 = vunpack.c.l.b16 %v634
      %v1572 = vunpack.c.h.b16 %v634
      %v1573 = vunpack.c.l.b16 %v635
      %v1574 = vunpack.c.h.b16 %v635
      %v1575 = vunpack.c.l.b16 %v636
      %v1576 = vunpack.c.h.b16 %v636
      %v1577 = vunpack.c.l.b16 %v637
      %v1578 = vunpack.c.h.b16 %v637
      %v1579 = vunpack.c.l.b16 %v638
      %v1580 = vunpack.c.h.b16 %v638
      %v1581 = vunpack.c.l.b16 %v639
      %v1582 = vunpack.c.h.b16 %v639
      %v1583 = vunpack.c.l.b16 %v640
      %v1584 = vunpack.c.h.b16 %v640
      %v1585 = vunpack.c.l.b16 %v641
      %v1586 = vunpack.c.h.b16 %v641
      %v1587 = vunpack.c.l.b16 %v642
      %v1588 = vunpack.c.h.b16 %v642
      %v1589 = vunpack.c.l.b16 %v643
      %v1590 = vunpack.c.h.b16 %v643
      %v1591 = vunpack.c.l.b16 %v644
      %v1592 = vunpack.c.h.b16 %v644
      %v1593 = vunpack.c.l.b16 %v645
      %v1594 = vunpack.c.h.b16 %v645
      %v1595 = vunpack.c.l.b16 %v646
      %v1596 = vunpack.c.h.b16 %v646
      %v1597 = vunpack.c.l.b16 %v647
      %v1598 = vunpack.c.h.b16 %v647
      %v1599 = vunpack.c.l.b16 %v648
      %v1600 = vunpack.c.h.b16 %v648
      %v1601 = vunpack.c.l.b16 %v649
      %v1602 = vunpack.c.h.b16 %v649
      %v1603 = vunpack.c.l.b16 %v650
      %v1604 = vunpack.c.h.b16 %v650
      %v1605 = vunpack.c.l.b16 %v651
      %v1606 = vunpack.c.h.b16 %v651
      %v1607 = vunpack.c.l.b16 %v652
      %v1608 = vunpack.c.h.b16 %v652
      %v1609 = vunpack.c.l.b16 %v653
      %v1610 = vunpack.c.h.b16 %v653
      %v1611 = vunpack.c.l.b16 %v654
      %v1612 = vunpack.c.h.b16 %v654
      %v1613 = vunpack.c.l.b16 %v655
      %v1614 = vunpack.c.h.b16 %v655
      %v1615 = vunpack.c.l.b16 %v656
      %v1616 = vunpack.c.h.b16 %v656
      %v1617 = vunpack.c.l.b16 %v657
      %v1618 = vunpack.c.h.b16 %v657
      %v1619 = vunpack.c.l.b16 %v658
      %v1620 = vunpack.c.h.b16 %v658
      %v1621 = vunpack.c.l.b16 %v659
      %v1622 = vunpack.c.h.b16 %v659
      %v1623 = vunpack.c.l.b16 %v660
      %v1624 = vunpack.c.h.b16 %v660
      %v1625 = vunpack.c.l.b16 %v661
      %v1626 = vunpack.c.h.b16 %v661
      %v1627 = vunpack.c.l.b16 %v662
      %v1628 = vunpack.c.h.b16 %v662
      %v1629 = vunpack.c.l.b16 %v663
      %v1630 = vunpack.c.h.b16 %v663
      %v1631 = vunpack.c.l.b16 %v664
      %v1632 = vunpack.c.h.b16 %v664
      %v1633 = vunpack.c.l.b16 %v665
      %v1634 = vunpack.c.h.b16 %v665
      %v1635 = vunpack.c.l.b16 %v666
      %v1636 = vunpack.c.h.b16 %v666
      %v1637 = vunpack.c.l.b16 %v667
      %v1638 = vunpack.c.h.b16 %v667
      %v1639 = vunpack.c.l.b16 %v668
      %v1640 = vunpack.c.h.b16 %v668
      %v1641 = vunpack.c.l.b16 %v669
      %v1642 = vunpack.c.h.b16 %v669
      %v1643 = vunpack.c.l.b16 %v670
      %v1644 = vunpack.c.h.b16 %v670
      %v1645 = vunpack.c.l.b16 %v671
      %v1646 = vunpack.c.h.b16 %v671
      %v1647 = vunpack.c.l.b16 %v672
      %v1648 = vunpack.c.h.b16 %v672
      %v1649 = vunpack.c.l.b16 %v673
      %v1650 = vunpack.c.h.b16 %v673
      %v1651 = vunpack.c.l.b16 %v674
      %v1652 = vunpack.c.h.b16 %v674
      %v1653 = vunpack.c.l.b16 %v675
      %v1654 = vunpack.c.h.b16 %v675
      %v1655 = vunpack.c.l.b16 %v676
      %v1656 = vunpack.c.h.b16 %v676
      %v1657 = vunpack.c.l.b16 %v677
      %v1658 = vunpack.c.h.b16 %v677
      %v1659 = vunpack.c.l.b16 %v678
      %v1660 = vunpack.c.h.b16 %v678
      %v1661 = vunpack.c.l.b16 %v679
      %v1662 = vunpack.c.h.b16 %v679
      %v1663 = vunpack.c.l.b16 %v680
      %v1664 = vunpack.c.h.b16 %v680
      %v1665 = vunpack.c.l.b16 %v681
      %v1666 = vunpack.c.h.b16 %v681
      %v1667 = vunpack.c.l.b16 %v682
      %v1668 = vunpack.c.h.b16 %v682
      %v1669 = vunpack.c.l.b16 %v683
      %v1670 = vunpack.c.h.b16 %v683
      %v1671 = vunpack.c.l.b16 %v684
      %v1672 = vunpack.c.h.b16 %v684
      %v1673 = vunpack.c.l.b16 %v685
      %v1674 = vunpack.c.h.b16 %v685
      %v1675 = vunpack.c.l.b16 %v686
      %v1676 = vunpack.c.h.b16 %v686
      %v1677 = vunpack.c.l.b16 %v687
      %v1678 = vunpack.c.h.b16 %v687
      %v1679 = vunpack.c.l.b16 %v688
      %v1680 = vunpack.c.h.b16 %v688
      %v1681 = vunpack.c.l.b16 %v689
      %v1682 = vunpack.c.h.b16 %v689
      %v1683 = vunpack.c.l.b16 %v690
      %v1684 = vunpack.c.h.b16 %v690
      %v1685 = vunpack.c.l.b16 %v691
      %v1686 = vunpack.c.h.b16 %v691
      %v1687 = vunpack.c.l.b16 %v692
      %v1688 = vunpack.c.h.b16 %v692
      %v1689 = vunpack.c.l.b16 %v693
      %v1690 = vunpack.c.h.b16 %v693
      %v1691 = vunpack.c.l.b16 %v694
      %v1692 = vunpack.c.h.b16 %v694
      %v1693 = vunpack.c.l.b16 %v695
      %v1694 = vunpack.c.h.b16 %v695
      %v1695 = vunpack.c.l.b16 %v696
      %v1696 = vunpack.c.h.b16 %v696
      %v1697 = vunpack.c.l.b16 %v697
      %v1698 = vunpack.c.h.b16 %v697
      %v1699 = vunpack.c.l.b16 %v698
      %v1700 = vunpack.c.h.b16 %v698
      %v1701 = vunpack.c.l.b16 %v699
      %v1702 = vunpack.c.h.b16 %v699
      %v1703 = vunpack.c.l.b16 %v700
      %v1704 = vunpack.c.h.b16 %v700
      %v1705 = vunpack.c.l.b16 %v701
      %v1706 = vunpack.c.h.b16 %v701
      %v1707 = vunpack.c.l.b16 %v702
      %v1708 = vunpack.c.h.b16 %v702
      %v1709 = vunpack.c.l.b16 %v703
      %v1710 = vunpack.c.h.b16 %v703
      %v1711 = vunpack.c.l.b16 %v704
      %v1712 = vunpack.c.h.b16 %v704
      %v1713 = vunpack.c.l.b16 %v705
      %v1714 = vunpack.c.h.b16 %v705
      %v1715 = vunpack.c.l.b16 %v706
      %v1716 = vunpack.c.h.b16 %v706
      %v1717 = vunpack.c.l.b16 %v707
      %v1718 = vunpack.c.h.b16 %v707
      %v1719 = vunpack.c.l.b16 %v708
      %v1720 = vunpack.c.h.b16 %v708
      %v1721 = vunpack.c.l.b16 %v709
      %v1722 = vunpack.c.h.b16 %v709
      %v1723 = vunpack.c.l.b16 %v710
      %v1724 = vunpack.c.h.b16 %v710
      %v1725 = vunpack.c.l.b16 %v711
      %v1726 = vunpack.c.h.b16 %v711
      %v1727 = vunpack.c.l.b16 %v712
      %v1728 = vunpack.c.h.b16 %v712
      %v1729 = vunpack.c.l.b16 %v713
      %v1730 = vunpack.c.h.b16 %v713
      %v1731 = vunpack.c.l.b16 %v714
      %v1732 = vunpack.c.h.b16 %v714
      %v1733 = vunpack.c.l.b16 %v715
      %v1734 = vunpack.c.h.b16 %v715
      %v1735 = vunpack.c.l.b16 %v716
      %v1736 = vunpack.c.h.b16 %v716
      %v1737 = vunpack.c.l.b16 %v717
      %v1738 = vunpack.c.h.b16 %v717
      %v1739 = vunpack.c.l.b16 %v718
      %v1740 = vunpack.c.h.b16 %v718
      %v1741 = vunpack.c.l.b16 %v719
      %v1742 = vunpack.c.h.b16 %v719
      %v1743 = vunpack.c.l.b16 %v720
      %v1744 = vunpack.c.h.b16 %v720
      %v1745 = vunpack.c.l.b16 %v721
      %v1746 = vunpack.c.h.b16 %v721
      %v1747 = vunpack.c.l.b16 %v722
      %v1748 = vunpack.c.h.b16 %v722
      %v1749 = vunpack.c.l.b16 %v723
      %v1750 = vunpack.c.h.b16 %v723
      %v1751 = vunpack.c.l.b16 %v724
      %v1752 = vunpack.c.h.b16 %v724
      %v1753 = vunpack.c.l.b16 %v725
      %v1754 = vunpack.c.h.b16 %v725
      %v1755 = vunpack.c.l.b16 %v726
      %v1756 = vunpack.c.h.b16 %v726
      %v1757 = vunpack.c.l.b16 %v727
      %v1758 = vunpack.c.h.b16 %v727
      %v1759 = vunpack.c.l.b16 %v728
      %v1760 = vunpack.c.h.b16 %v728
      %v1761 = vunpack.c.l.b16 %v729
      %v1762 = vunpack.c.h.b16 %v729
      %v1763 = vunpack.c.l.b16 %v730
      %v1764 = vunpack.c.h.b16 %v730
      %v1765 = vunpack.c.l.b16 %v731
      %v1766 = vunpack.c.h.b16 %v731
      %v1767 = vunpack.c.l.b16 %v732
      %v1768 = vunpack.c.h.b16 %v732
      %v1769 = vunpack.c.l.b16 %v733
      %v1770 = vunpack.c.h.b16 %v733
      %v1771 = vunpack.c.l.b16 %v734
      %v1772 = vunpack.c.h.b16 %v734
      %v1773 = vunpack.c.l.b16 %v735
      %v1774 = vunpack.c.h.b16 %v735
      %v1775 = vunpack.c.l.b16 %v736
      %v1776 = vunpack.c.h.b16 %v736
      %v1777 = vunpack.c.l.b16 %v737
      %v1778 = vunpack.c.h.b16 %v737
      %v1779 = vunpack.c.l.b16 %v738
      %v1780 = vunpack.c.h.b16 %v738
      %v1781 = vunpack.c.l.b16 %v739
      %v1782 = vunpack.c.h.b16 %v739
      %v1783 = vunpack.c.l.b16 %v740
      %v1784 = vunpack.c.h.b16 %v740
      %v1785 = vunpack.c.l.b16 %v741
      %v1786 = vunpack.c.h.b16 %v741
      %v1787 = vunpack.c.l.b16 %v742
      %v1788 = vunpack.c.h.b16 %v742
      %v1789 = vunpack.c.l.b16 %v743
      %v1790 = vunpack.c.h.b16 %v743
      %v1791 = vunpack.c.l.b16 %v744
      %v1792 = vunpack.c.h.b16 %v744
      %v1793 = vunpack.c.l.b16 %v745
      %v1794 = vunpack.c.h.b16 %v745
      %v1795 = vunpack.c.l.b16 %v746
      %v1796 = vunpack.c.h.b16 %v746
      %v1797 = vunpack.c.l.b16 %v747
      %v1798 = vunpack.c.h.b16 %v747
      %v1799 = vunpack.c.l.b16 %v748
      %v1800 = vunpack.c.h.b16 %v748
      %v1801 = vunpack.c.l.b16 %v749
      %v1802 = vunpack.c.h.b16 %v749
      %v1803 = vunpack.c.l.b16 %v750
      %v1804 = vunpack.c.h.b16 %v750
      %v1805 = vunpack.c.l.b16 %v751
      %v1806 = vunpack.c.h.b16 %v751
      %v1807 = vunpack.c.l.b16 %v752
      %v1808 = vunpack.c.h.b16 %v752
      %v1809 = vunpack.c.l.b16 %v753
      %v1810 = vunpack.c.h.b16 %v753
      %v1811 = vunpack.c.l.b16 %v754
      %v1812 = vunpack.c.h.b16 %v754
      %v1813 = vunpack.c.l.b16 %v755
      %v1814 = vunpack.c.h.b16 %v755
      %v1815 = vunpack.c.l.b16 %v756
      %v1816 = vunpack.c.h.b16 %v756
      %v1817 = vunpack.c.l.b16 %v757
      %v1818 = vunpack.c.h.b16 %v757
      %v1819 = vunpack.c.l.b16 %v758
      %v1820 = vunpack.c.h.b16 %v758
      %v1821 = vunpack.c.l.b16 %v759
      %v1822 = vunpack.c.h.b16 %v759
      %v1823 = vunpack.c.l.b16 %v760
      %v1824 = vunpack.c.h.b16 %v760
      %v1825 = vunpack.c.l.b16 %v761
      %v1826 = vunpack.c.h.b16 %v761
      %v1827 = vunpack.c.l.b16 %v762
      %v1828 = vunpack.c.h.b16 %v762
      %v1829 = vunpack.c.l.b16 %v763
      %v1830 = vunpack.c.h.b16 %v763
      %v1831 = vunpack.c.l.b16 %v764
      %v1832 = vunpack.c.h.b16 %v764
      %v1833 = vunpack.c.l.b16 %v765
      %v1834 = vunpack.c.h.b16 %v765
      %v1835 = vunpack.c.l.b16 %v766
      %v1836 = vunpack.c.h.b16 %v766
      %v1837 = vunpack.c.l.b16 %v767
      %v1838 = vunpack.c.h.b16 %v767
      %v1839 = vunpack.c.l.b16 %v768
      %v1840 = vunpack.c.h.b16 %v768
      %v1841 = vunpack.c.l.b16 %v769
      %v1842 = vunpack.c.h.b16 %v769
      %v1843 = vunpack.c.l.b16 %v770
      %v1844 = vunpack.c.h.b16 %v770
      %v1845 = vunpack.c.l.b16 %v771
      %v1846 = vunpack.c.h.b16 %v771
      %v1847 = vunpack.c.l.b16 %v772
      %v1848 = vunpack.c.h.b16 %v772
      %v1849 = vunpack.c.l.b16 %v773
      %v1850 = vunpack.c.h.b16 %v773
      %v1851 = vunpack.c.l.b16 %v774
      %v1852 = vunpack.c.h.b16 %v774
      %v1853 = vunpack.c.l.b16 %v775
      %v1854 = vunpack.c.h.b16 %v775
      %v1855 = vunpack.c.l.b16 %v776
      %v1856 = vunpack.c.h.b16 %v776
      %v1857 = vunpack.c.l.b16 %v777
      %v1858 = vunpack.c.h.b16 %v777
      %v1859 = vunpack.c.l.b16 %v778
      %v1860 = vunpack.c.h.b16 %v778
      %v1861 = vunpack.c.l.b16 %v779
      %v1862 = vunpack.c.h.b16 %v779
      %v1863 = vunpack.c.l.b16 %v780
      %v1864 = vunpack.c.h.b16 %v780
      %v1865 = vunpack.c.l.b16 %v781
      %v1866 = vunpack.c.h.b16 %v781
      %v1867 = vunpack.c.l.b16 %v782
      %v1868 = vunpack.c.h.b16 %v782
      %v1869 = vunpack.c.l.b16 %v783
      %v1870 = vunpack.c.h.b16 %v783
      %v1871 = vunpack.c.l.b16 %v784
      %v1872 = vunpack.c.h.b16 %v784
      %v1873 = vunpack.c.l.b16 %v785
      %v1874 = vunpack.c.h.b16 %v785
      %v1875 = vunpack.c.l.b16 %v786
      %v1876 = vunpack.c.h.b16 %v786
      %v1877 = vunpack.c.l.b16 %v787
      %v1878 = vunpack.c.h.b16 %v787
      %v1879 = vunpack.c.l.b16 %v788
      %v1880 = vunpack.c.h.b16 %v788
      %v1881 = vunpack.c.l.b16 %v789
      %v1882 = vunpack.c.h.b16 %v789
      %v1883 = vunpack.c.l.b16 %v790
      %v1884 = vunpack.c.h.b16 %v790
      %v1885 = vunpack.c.l.b16 %v791
      %v1886 = vunpack.c.h.b16 %v791
      %v1887 = vunpack.c.l.b16 %v792
      %v1888 = vunpack.c.h.b16 %v792
      %v1889 = vunpack.c.l.b16 %v793
      %v1890 = vunpack.c.h.b16 %v793
      %v1891 = vunpack.c.l.b16 %v794
      %v1892 = vunpack.c.h.b16 %v794
      %v1893 = vunpack.c.l.b16 %v795
      %v1894 = vunpack.c.h.b16 %v795
      %v1895 = vunpack.c.l.b16 %v796
      %v1896 = vunpack.c.h.b16 %v796
      %v1897 = vunpack.c.l.b16 %v797
      %v1898 = vunpack.c.h.b16 %v797
      %v1899 = vunpack.c.l.b16 %v798
      %v1900 = vunpack.c.h.b16 %v798
      %v1901 = vunpack.c.l.b16 %v799
      %v1902 = vunpack.c.h.b16 %v799
      %v1903 = vunpack.c.l.b16 %v800
      %v1904 = vunpack.c.h.b16 %v800
      %v1905 = vunpack.c.l.b16 %v801
      %v1906 = vunpack.c.h.b16 %v801
      %v1907 = vunpack.c.l.b16 %v802
      %v1908 = vunpack.c.h.b16 %v802
      %v1909 = vunpack.c.l.b16 %v803
      %v1910 = vunpack.c.h.b16 %v803
      %v1911 = vunpack.c.l.b16 %v804
      %v1912 = vunpack.c.h.b16 %v804
      %v1913 = vunpack.c.l.b16 %v805
      %v1914 = vunpack.c.h.b16 %v805
      %v1915 = vunpack.c.l.b16 %v806
      %v1916 = vunpack.c.h.b16 %v806
      %v1917 = vunpack.c.l.b16 %v807
      %v1918 = vunpack.c.h.b16 %v807
      %v1919 = vunpack.c.l.b16 %v808
      %v1920 = vunpack.c.h.b16 %v808
      %v1921 = vunpack.c.l.b16 %v809
      %v1922 = vunpack.c.h.b16 %v809
      %v1923 = vunpack.c.l.b16 %v810
      %v1924 = vunpack.c.h.b16 %v810
      %v1925 = vunpack.c.l.b16 %v811
      %v1926 = vunpack.c.h.b16 %v811
      %v1927 = vunpack.c.l.b16 %v812
      %v1928 = vunpack.c.h.b16 %v812
      %v1929 = vunpack.c.l.b16 %v813
      %v1930 = vunpack.c.h.b16 %v813
      %v1931 = vunpack.c.l.b16 %v814
      %v1932 = vunpack.c.h.b16 %v814
      %v1933 = vunpack.c.l.b16 %v815
      %v1934 = vunpack.c.h.b16 %v815
      %v1935 = vunpack.c.l.b16 %v816
      %v1936 = vunpack.c.h.b16 %v816
      %v1937 = vunpack.c.l.b16 %v817
      %v1938 = vunpack.c.h.b16 %v817
      %v1939 = vunpack.c.l.b16 %v818
      %v1940 = vunpack.c.h.b16 %v818
      %v1941 = vunpack.c.l.b16 %v819
      %v1942 = vunpack.c.h.b16 %v819
      %v1943 = vunpack.c.l.b16 %v820
      %v1944 = vunpack.c.h.b16 %v820
      %v1945 = vunpack.c.l.b16 %v821
      %v1946 = vunpack.c.h.b16 %v821
      %v1947 = vunpack.c.l.b16 %v822
      %v1948 = vunpack.c.h.b16 %v822
      %v1949 = vunpack.c.l.b16 %v823
      %v1950 = vunpack.c.h.b16 %v823
      %v1951 = vunpack.c.l.b16 %v824
      %v1952 = vunpack.c.h.b16 %v824
      %v1953 = vunpack.c.l.b16 %v825
      %v1954 = vunpack.c.h.b16 %v825
      %v1955 = vunpack.c.l.b16 %v826
      %v1956 = vunpack.c.h.b16 %v826
      %v1957 = vunpack.c.l.b16 %v827
      %v1958 = vunpack.c.h.b16 %v827
      %v1959 = vunpack.c.l.b16 %v828
      %v1960 = vunpack.c.h.b16 %v828
      %v1961 = vunpack.c.l.b16 %v829
      %v1962 = vunpack.c.h.b16 %v829
      %v1963 = vunpack.c.l.b16 %v830
      %v1964 = vunpack.c.h.b16 %v830
      %v1965 = vunpack.c.l.b16 %v831
      %v1966 = vunpack.c.h.b16 %v831
      %v1967 = vunpack.c.l.b16 %v832
      %v1968 = vunpack.c.h.b16 %v832
      %v1969 = vunpack.c.l.b16 %v833
      %v1970 = vunpack.c.h.b16 %v833
      %v1971 = vunpack.c.l.b16 %v834
      %v1972 = vunpack.c.h.b16 %v834
      %v1973 = vunpack.c.l.b16 %v835
      %v1974 = vunpack.c.h.b16 %v835
      %v1975 = vunpack.c.l.b16 %v836
      %v1976 = vunpack.c.h.b16 %v836
      %v1977 = vunpack.c.l.b16 %v837
      %v1978 = vunpack.c.h.b16 %v837
      %v1979 = vunpack.c.l.b16 %v838
      %v1980 = vunpack.c.h.b16 %v838
      %v1981 = vunpack.c.l.b16 %v839
      %v1982 = vunpack.c.h.b16 %v839
      %v1983 = vunpack.c.l.b16 %v840
      %v1984 = vunpack.c.h.b16 %v840
      %v1985 = vunpack.c.l.b16 %v841
      %v1986 = vunpack.c.h.b16 %v841
      %v1987 = vunpack.c.l.b16 %v842
      %v1988 = vunpack.c.h.b16 %v842
      %v1989 = vunpack.c.l.b16 %v843
      %v1990 = vunpack.c.h.b16 %v843
      %v1991 = vunpack.c.l.b16 %v844
      %v1992 = vunpack.c.h.b16 %v844
      %v1993 = vunpack.c.l.b16 %v845
      %v1994 = vunpack.c.h.b16 %v845
      %v1995 = vunpack.c.l.b16 %v846
      %v1996 = vunpack.c.h.b16 %v846
      %v1997 = vunpack.c.l.b16 %v847
      %v1998 = vunpack.c.h.b16 %v847
      %v1999 = vunpack.c.l.b16 %v848
      %v2000 = vunpack.c.h.b16 %v848
      %v2001 = vpack.c.b16 %v1245, %v1233
      %v2002 = vpack.c.b16 %v1246, %v1234
      %v2003 = vpack.c.b16 %v1247, %v1235
      %v2004 = vpack.c.b16 %v1248, %v1236
      %v2005 = vpack.c.b16 %v1249, %v1237
      %v2006 = vpack.c.b16 %v1250, %v1238
      %v2007 = vpack.c.b16 %v1251, %v1239
      %v2008 = vpack.c.b16 %v1252, %v1240
      %v2009 = vpack.c.b16 %v1253, %v1241
      %v2010 = vpack.c.b16 %v1254, %v1242
      %v2011 = vpack.c.b16 %v1255, %v1243
      %v2012 = vpack.c.b16 %v1256, %v1244
      %v2013 = vpack.c.b16 %v1269, %v1257
      %v2014 = vpack.c.b16 %v1270, %v1258
      %v2015 = vpack.c.b16 %v1271, %v1259
      %v2016 = vpack.c.b16 %v1272, %v1260
      %v2017 = vpack.c.b16 %v1273, %v1261
      %v2018 = vpack.c.b16 %v1274, %v1262
      %v2019 = vpack.c.b16 %v1275, %v1263
      %v2020 = vpack.c.b16 %v1276, %v1264
      %v2021 = vpack.c.b16 %v1277, %v1265
      %v2022 = vpack.c.b16 %v1278, %v1266
      %v2023 = vpack.c.b16 %v1279, %v1267
      %v2024 = vpack.c.b16 %v1280, %v1268
      %v2025 = vpack.c.b16 %v1293, %v1281
      %v2026 = vpack.c.b16 %v1294, %v1282
      %v2027 = vpack.c.b16 %v1295, %v1283
      %v2028 = vpack.c.b16 %v1296, %v1284
      %v2029 = vpack.c.b16 %v1297, %v1285
      %v2030 = vpack.c.b16 %v1298, %v1286
      %v2031 = vpack.c.b16 %v1299, %v1287
      %v2032 = vpack.c.b16 %v1300, %v1288
      %v2033 = vpack.c.b16 %v1301, %v1289
      %v2034 = vpack.c.b16 %v1302, %v1290
      %v2035 = vpack.c.b16 %v1303, %v1291
      %v2036 = vpack.c.b16 %v1304, %v1292
      %v2037 = vpack.c.b16 %v1317, %v1305
      %v2038 = vpack.c.b16 %v1318, %v1306
      %v2039 = vpack.c.b16 %v1319, %v1307
      %v2040 = vpack.c.b16 %v1320, %v1308
      %v2041 = vpack.c.b16 %v1321, %v1309
      %v2042 = vpack.c.b16 %v1322, %v1310
      %v2043 = vpack.c.b16 %v1323, %v1311
      %v2044 = vpack.c.b16 %v1324, %v1312
      %v2045 = vpack.c.b16 %v1325, %v1313
      %v2046 = vpack.c.b16 %v1326, %v1314
      %v2047 = vpack.c.b16 %v1327, %v1315
      %v2048 = vpack.c.b16 %v1328, %v1316
      %v2049 = vpack.c.b16 %v1341, %v1329
      %v2050 = vpack.c.b16 %v1342, %v1330
      %v2051 = vpack.c.b16 %v1343, %v1331
      %v2052 = vpack.c.b16 %v1344, %v1332
      %v2053 = vpack.c.b16 %v1345, %v1333
      %v2054 = vpack.c.b16 %v1346, %v1334
      %v2055 = vpack.c.b16 %v1347, %v1335
      %v2056 = vpack.c.b16 %v1348, %v1336
      %v2057 = vpack.c.b16 %v1349, %v1337
      %v2058 = vpack.c.b16 %v1350, %v1338
      %v2059 = vpack.c.b16 %v1351, %v1339
      %v2060 = vpack.c.b16 %v1352, %v1340
      %v2061 = vpack.c.b16 %v1365, %v1353
      %v2062 = vpack.c.b16 %v1366, %v1354
      %v2063 = vpack.c.b16 %v1367, %v1355
      %v2064 = vpack.c.b16 %v1368, %v1356
      %v2065 = vpack.c.b16 %v1369, %v1357
      %v2066 = vpack.c.b16 %v1370, %v1358
      %v2067 = vpack.c.b16 %v1371, %v1359
      %v2068 = vpack.c.b16 %v1372, %v1360
      %v2069 = vpack.c.b16 %v1373, %v1361
      %v2070 = vpack.c.b16 %v1374, %v1362
      %v2071 = vpack.c.b16 %v1375, %v1363
      %v2072 = vpack.c.b16 %v1376, %v1364
      %v2073 = vpack.c.b16 %v1389, %v1377
      %v2074 = vpack.c.b16 %v1390, %v1378
      %v2075 = vpack.c.b16 %v1391, %v1379
      %v2076 = vpack.c.b16 %v1392, %v1380
      %v2077 = vpack.c.b16 %v1393, %v1381
      %v2078 = vpack.c.b16 %v1394, %v1382
      %v2079 = vpack.c.b16 %v1395, %v1383
      %v2080 = vpack.c.b16 %v1396, %v1384
      %v2081 = vpack.c.b16 %v1397, %v1385
      %v2082 = vpack.c.b16 %v1398, %v1386
      %v2083 = vpack.c.b16 %v1399, %v1387
      %v2084 = vpack.c.b16 %v1400, %v1388
      %v2085 = vpack.c.b16 %v1413, %v1401
      %v2086 = vpack.c.b16 %v1414, %v1402
      %v2087 = vpack.c.b16 %v1415, %v1403
      %v2088 = vpack.c.b16 %v1416, %v1404
      %v2089 = vpack.c.b16 %v1417, %v1405
      %v2090 = vpack.c.b16 %v1418, %v1406
      %v2091 = vpack.c.b16 %v1419, %v1407
      %v2092 = vpack.c.b16 %v1420, %v1408
      %v2093 = vpack.c.b16 %v1421, %v1409
      %v2094 = vpack.c.b16 %v1422, %v1410
      %v2095 = vpack.c.b16 %v1423, %v1411
      %v2096 = vpack.c.b16 %v1424, %v1412
      %v2097 = vpack.c.b16 %v1437, %v1425
      %v2098 = vpack.c.b16 %v1438, %v1426
      %v2099 = vpack.c.b16 %v1439, %v1427
      %v2100 = vpack.c.b16 %v1440, %v1428
      %v2101 = vpack.c.b16 %v1441, %v1429
      %v2102 = vpack.c.b16 %v1442, %v1430
      %v2103 = vpack.c.b16 %v1443, %v1431
      %v2104 = vpack.c.b16 %v1444, %v1432
      %v2105 = vpack.c.b16 %v1445, %v1433
      %v2106 = vpack.c.b16 %v1446, %v1434
      %v2107 = vpack.c.b16 %v1447, %v1435
      %v2108 = vpack.c.b16 %v1448, %v1436
      %v2109 = vpack.c.b16 %v1461, %v1449
      %v2110 = vpack.c.b16 %v1462, %v1450
      %v2111 = vpack.c.b16 %v1463, %v1451
      %v2112 = vpack.c.b16 %v1464, %v1452
      %v2113 = vpack.c.b16 %v1465, %v1453
      %v2114 = vpack.c.b16 %v1466, %v1454
      %v2115 = vpack.c.b16 %v1467, %v1455
      %v2116 = vpack.c.b16 %v1468, %v1456
      %v2117 = vpack.c.b16 %v1469, %v1457
      %v2118 = vpack.c.b16 %v1470, %v1458
      %v2119 = vpack.c.b16 %v1471, %v1459
      %v2120 = vpack.c.b16 %v1472, %v1460
      %v2121 = vpack.c.b16 %v1485, %v1473
      %v2122 = vpack.c.b16 %v1486, %v1474
      %v2123 = vpack.c.b16 %v1487, %v1475
      %v2124 = vpack.c.b16 %v1488, %v1476
      %v2125 = vpack.c.b16 %v1489, %v1477
      %v2126 = vpack.c.b16 %v1490, %v1478
      %v2127 = vpack.c.b16 %v1491, %v1479
      %v2128 = vpack.c.b16 %v1492, %v1480
      %v2129 = vpack.c.b16 %v1493, %v1481
      %v2130 = vpack.c.b16 %v1494, %v1482
      %v2131 = vpack.c.b16 %v1495, %v1483
      %v2132 = vpack.c.b16 %v1496, %v1484
      %v2133 = vpack.c.b16 %v1509, %v1497
      %v2134 = vpack.c.b16 %v1510, %v1498
      %v2135 = vpack.c.b16 %v1511, %v1499
      %v2136 = vpack.c.b16 %v1512, %v1500
      %v2137 = vpack.c.b16 %v1513, %v1501
      %v2138 = vpack.c.b16 %v1514, %v1502
      %v2139 = vpack.c.b16 %v1515, %v1503
      %v2140 = vpack.c.b16 %v1516, %v1504
      %v2141 = vpack.c.b16 %v1517, %v1505
      %v2142 = vpack.c.b16 %v1518, %v1506
      %v2143 = vpack.c.b16 %v1519, %v1507
      %v2144 = vpack.c.b16 %v1520, %v1508
      %v2145 = vpack.c.b16 %v1533, %v1521
      %v2146 = vpack.c.b16 %v1534, %v1522
      %v2147 = vpack.c.b16 %v1535, %v1523
      %v2148 = vpack.c.b16 %v1536, %v1524
      %v2149 = vpack.c.b16 %v1537, %v1525
      %v2150 = vpack.c.b16 %v1538, %v1526
      %v2151 = vpack.c.b16 %v1539, %v1527
      %v2152 = vpack.c.b16 %v1540, %v1528
      %v2153 = vpack.c.b16 %v1541, %v1529
      %v2154 = vpack.c.b16 %v1542, %v1530
      %v2155 = vpack.c.b16 %v1543, %v1531
      %v2156 = vpack.c.b16 %v1544, %v1532
      %v2157 = vpack.c.b16 %v1557, %v1545
      %v2158 = vpack.c.b16 %v1558, %v1546
      %v2159 = vpack.c.b16 %v1559, %v1547
      %v2160 = vpack.c.b16 %v1560, %v1548
      %v2161 = vpack.c.b16 %v1561, %v1549
      %v2162 = vpack.c.b16 %v1562, %v1550
      %v2163 = vpack.c.b16 %v1563, %v1551
      %v2164 = vpack.c.b16 %v1564, %v1552
      %v2165 = vpack.c.b16 %v1565, %v1553
      %v2166 = vpack.c.b16 %v1566, %v1554
      %v2167 = vpack.c.b16 %v1567, %v1555
      %v2168 = vpack.c.b16 %v1568, %v1556
      %v2169 = vpack.c.b16 %v1581, %v1569
      %v2170 = vpack.c.b16 %v1582, %v1570
      %v2171 = vpack.c.b16 %v1583, %v1571
      %v2172 = vpack.c.b16 %v1584, %v1572
      %v2173 = vpack.c.b16 %v1585, %v1573
      %v2174 = vpack.c.b16 %v1586, %v1574
      %v2175 = vpack.c.b16 %v1587, %v1575
      %v2176 = vpack.c.b16 %v1588, %v1576
      %v2177 = vpack.c.b16 %v1589, %v1577
      %v2178 = vpack.c.b16 %v1590, %v1578
      %v2179 = vpack.c.b16 %v1591, %v1579
      %v2180 = vpack.c.b16 %v1592, %v1580
      %v2181 = vpack.c.b16 %v1605, %v1593
      %v2182 = vpack.c.b16 %v1606, %v1594
      %v2183 = vpack.c.b16 %v1607, %v1595
      %v2184 = vpack.c.b16 %v1608, %v1596
      %v2185 = vpack.c.b16 %v1609, %v1597
      %v2186 = vpack.c.b16 %v1610, %v1598
      %v2187 = vpack.c.b16 %v1611, %v1599
      %v2188 = vpack.c.b16 %v1612, %v1600
      %v2189 = vpack.c.b16 %v1613, %v1601
      %v2190 = vpack.c.b16 %v1614, %v1602
      %v2191 = vpack.c.b16 %v1615, %v1603
      %v2192 = vpack.c.b16 %v1616, %v1604
      %v2193 = vpack.c.b16 %v1629, %v1617
      %v2194 = vpack.c.b16 %v1630, %v1618
      %v2195 = vpack.c.b16 %v1631, %v1619
      %v2196 = vpack.c.b16 %v1632, %v1620
      %v2197 = vpack.c.b16 %v1633, %v1621
      %v2198 = vpack.c.b16 %v1634, %v1622
      %v2199 = vpack.c.b16 %v1635, %v1623
      %v2200 = vpack.c.b16 %v1636, %v1624
      %v2201 = vpack.c.b16 %v1637, %v1625
      %v2202 = vpack.c.b16 %v1638, %v1626
      %v2203 = vpack.c.b16 %v1639, %v1627
      %v2204 = vpack.c.b16 %v1640, %v1628
      %v2205 = vpack.c.b16 %v1653, %v1641
      %v2206 = vpack.c.b16 %v1654, %v1642
      %v2207 = vpack.c.b16 %v1655, %v1643
      %v2208 = vpack.c.b16 %v1656, %v1644
      %v2209 = vpack.c.b16 %v1657, %v1645
      %v2210 = vpack.c.b16 %v1658, %v1646
      %v2211 = vpack.c.b16 %v1659, %v1647
      %v2212 = vpack.c.b16 %v1660, %v1648
      %v2213 = vpack.c.b16 %v1661, %v1649
      %v2214 = vpack.c.b16 %v1662, %v1650
      %v2215 = vpack.c.b16 %v1663, %v1651
      %v2216 = vpack.c.b16 %v1664, %v1652
      %v2217 = vpack.c.b16 %v1677, %v1665
      %v2218 = vpack.c.b16 %v1678, %v1666
      %v2219 = vpack.c.b16 %v1679, %v1667
      %v2220 = vpack.c.b16 %v1680, %v1668
      %v2221 = vpack.c.b16 %v1681, %v1669
      %v2222 = vpack.c.b16 %v1682, %v1670
      %v2223 = vpack.c.b16 %v1683, %v1671
      %v2224 = vpack.c.b16 %v1684, %v1672
      %v2225 = vpack.c.b16 %v1685, %v1673
      %v2226 = vpack.c.b16 %v1686, %v1674
      %v2227 = vpack.c.b16 %v1687, %v1675
      %v2228 = vpack.c.b16 %v1688, %v1676
      %v2229 = vpack.c.b16 %v1701, %v1689
      %v2230 = vpack.c.b16 %v1702, %v1690
      %v2231 = vpack.c.b16 %v1703, %v1691
      %v2232 = vpack.c.b16 %v1704, %v1692
      %v2233 = vpack.c.b16 %v1705, %v1693
      %v2234 = vpack.c.b16 %v1706, %v1694
      %v2235 = vpack.c.b16 %v1707, %v1695
      %v2236 = vpack.c.b16 %v1708, %v1696
      %v2237 = vpack.c.b16 %v1709, %v1697
      %v2238 = vpack.c.b16 %v1710, %v1698
      %v2239 = vpack.c.b16 %v1711, %v1699
      %v2240 = vpack.c.b16 %v1712, %v1700
      %v2241 = vpack.c.b16 %v1725, %v1713
      %v2242 = vpack.c.b16 %v1726, %v1714
      %v2243 = vpack.c.b16 %v1727, %v1715
      %v2244 = vpack.c.b16 %v1728, %v1716
      %v2245 = vpack.c.b16 %v1729, %v1717
      %v2246 = vpack.c.b16 %v1730, %v1718
      %v2247 = vpack.c.b16 %v1731, %v1719
      %v2248 = vpack.c.b16 %v1732, %v1720
      %v2249 = vpack.c.b16 %v1733, %v1721
      %v2250 = vpack.c.b16 %v1734, %v1722
      %v2251 = vpack.c.b16 %v1735, %v1723
      %v2252 = vpack.c.b16 %v1736, %v1724
      %v2253 = vpack.c.b16 %v1749, %v1737
      %v2254 = vpack.c.b16 %v1750, %v1738
      %v2255 = vpack.c.b16 %v1751, %v1739
      %v2256 = vpack.c.b16 %v1752, %v1740
      %v2257 = vpack.c.b16 %v1753, %v1741
      %v2258 = vpack.c.b16 %v1754, %v1742
      %v2259 = vpack.c.b16 %v1755, %v1743
      %v2260 = vpack.c.b16 %v1756, %v1744
      %v2261 = vpack.c.b16 %v1757, %v1745
      %v2262 = vpack.c.b16 %v1758, %v1746
      %v2263 = vpack.c.b16 %v1759, %v1747
      %v2264 = vpack.c.b16 %v1760, %v1748
      %v2265 = vpack.c.b16 %v1773, %v1761
      %v2266 = vpack.c.b16 %v1774, %v1762
      %v2267 = vpack.c.b16 %v1775, %v1763
      %v2268 = vpack.c.b16 %v1776, %v1764
      %v2269 = vpack.c.b16 %v1777, %v1765
      %v2270 = vpack.c.b16 %v1778, %v1766
      %v2271 = vpack.c.b16 %v1779, %v1767
      %v2272 = vpack.c.b16 %v1780, %v1768
      %v2273 = vpack.c.b16 %v1781, %v1769
      %v2274 = vpack.c.b16 %v1782, %v1770
      %v2275 = vpack.c.b16 %v1783, %v1771
      %v2276 = vpack.c.b16 %v1784, %v1772
      %v2277 = vpack.c.b16 %v1797, %v1785
      %v2278 = vpack.c.b16 %v1798, %v1786
      %v2279 = vpack.c.b16 %v1799, %v1787
      %v2280 = vpack.c.b16 %v1800, %v1788
      %v2281 = vpack.c.b16 %v1801, %v1789
      %v2282 = vpack.c.b16 %v1802, %v1790
      %v2283 = vpack.c.b16 %v1803, %v1791
      %v2284 = vpack.c.b16 %v1804, %v1792
      %v2285 = vpack.c.b16 %v1805, %v1793
      %v2286 = vpack.c.b16 %v1806, %v1794
      %v2287 = vpack.c.b16 %v1807, %v1795
      %v2288 = vpack.c.b16 %v1808, %v1796
      %v2289 = vpack.c.b16 %v1821, %v1809
      %v2290 = vpack.c.b16 %v1822, %v1810
      %v2291 = vpack.c.b16 %v1823, %v1811
      %v2292 = vpack.c.b16 %v1824, %v1812
      %v2293 = vpack.c.b16 %v1825, %v1813
      %v2294 = vpack.c.b16 %v1826, %v1814
      %v2295 = vpack.c.b16 %v1827, %v1815
      %v2296 = vpack.c.b16 %v1828, %v1816
      %v2297 = vpack.c.b16 %v1829, %v1817
      %v2298 = vpack.c.b16 %v1830, %v1818
      %v2299 = vpack.c.b16 %v1831, %v1819
      %v2300 = vpack.c.b16 %v1832, %v1820
      %v2301 = vpack.c.b16 %v1845, %v1833
      %v2302 = vpack.c.b16 %v1846, %v1834
      %v2303 = vpack.c.b16 %v1847, %v1835
      %v2304 = vpack.c.b16 %v1848, %v1836
      %v2305 = vpack.c.b16 %v1849, %v1837
      %v2306 = vpack.c.b16 %v1850, %v1838
      %v2307 = vpack.c.b16 %v1851, %v1839
      %v2308 = vpack.c.b16 %v1852, %v1840
      %v2309 = vpack.c.b16 %v1853, %v1841
      %v2310 = vpack.c.b16 %v1854, %v1842
      %v2311 = vpack.c.b16 %v1855, %v1843
      %v2312 = vpack.c.b16 %v1856, %v1844
      %v2313 = vpack.c.b16 %v1869, %v1857
      %v2314 = vpack.c.b16 %v1870, %v1858
      %v2315 = vpack.c.b16 %v1871, %v1859
      %v2316 = vpack.c.b16 %v1872, %v1860
      %v2317 = vpack.c.b16 %v1873, %v1861
      %v2318 = vpack.c.b16 %v1874, %v1862
      %v2319 = vpack.c.b16 %v1875, %v1863
      %v2320 = vpack.c.b16 %v1876, %v1864
      %v2321 = vpack.c.b16 %v1877, %v1865
      %v2322 = vpack.c.b16 %v1878, %v1866
      %v2323 = vpack.c.b16 %v1879, %v1867
      %v2324 = vpack.c.b16 %v1880, %v1868
      %v2325 = vpack.c.b16 %v1893, %v1881
      %v2326 = vpack.c.b16 %v1894, %v1882
      %v2327 = vpack.c.b16 %v1895, %v1883
      %v2328 = vpack.c.b16 %v1896, %v1884
      %v2329 = vpack.c.b16 %v1897, %v1885
      %v2330 = vpack.c.b16 %v1898, %v1886
      %v2331 = vpack.c.b16 %v1899, %v1887
      %v2332 = vpack.c.b16 %v1900, %v1888
      %v2333 = vpack.c.b16 %v1901, %v1889
      %v2334 = vpack.c.b16 %v1902, %v1890
      %v2335 = vpack.c.b16 %v1903, %v1891
      %v2336 = vpack.c.b16 %v1904, %v1892
      %v2337 = vpack.c.b16 %v1917, %v1905
      %v2338 = vpack.c.b16 %v1918, %v1906
      %v2339 = vpack.c.b16 %v1919, %v1907
      %v2340 = vpack.c.b16 %v1920, %v1908
      %v2341 = vpack.c.b16 %v1921, %v1909
      %v2342 = vpack.c.b16 %v1922, %v1910
      %v2343 = vpack.c.b16 %v1923, %v1911
      %v2344 = vpack.c.b16 %v1924, %v1912
      %v2345 = vpack.c.b16 %v1925, %v1913
      %v2346 = vpack.c.b16 %v1926, %v1914
      %v2347 = vpack.c.b16 %v1927, %v1915
      %v2348 = vpack.c.b16 %v1928, %v1916
      %v2349 = vpack.c.b16 %v1941, %v1929
      %v2350 = vpack.c.b16 %v1942, %v1930
      %v2351 = vpack.c.b16 %v1943, %v1931
      %v2352 = vpack.c.b16 %v1944, %v1932
      %v2353 = vpack.c.b16 %v1945, %v1933
      %v2354 = vpack.c.b16 %v1946, %v1934
      %v2355 = vpack.c.b16 %v1947, %v1935
      %v2356 = vpack.c.b16 %v1948, %v1936
      %v2357 = vpack.c.b16 %v1949, %v1937
      %v2358 = vpack.c.b16 %v1950, %v1938
      %v2359 = vpack.c.b16 %v1951, %v1939
      %v2360 = vpack.c.b16 %v1952, %v1940
      %v2361 = vpack.c.b16 %v1965, %v1953
      %v2362 = vpack.c.b16 %v1966, %v1954
      %v2363 = vpack.c.b16 %v1967, %v1955
      %v2364 = vpack.c.b16 %v1968, %v1956
      %v2365 = vpack.c.b16 %v1969, %v1957
      %v2366 = vpack.c.b16 %v1970, %v1958
      %v2367 = vpack.c.b16 %v1971, %v1959
      %v2368 = vpack.c.b16 %v1972, %v1960
      %v2369 = vpack.c.b16 %v1973, %v1961
      %v2370 = vpack.c.b16 %v1974, %v1962
      %v2371 = vpack.c.b16 %v1975, %v1963
      %v2372 = vpack.c.b16 %v1976, %v1964
      %v2373 = vpack.c.b16 %v1989, %v1977
      %v2374 = vpack.c.b16 %v1990, %v1978
      %v2375 = vpack.c.b16 %v1991, %v1979
      %v2376 = vpack.c.b16 %v1992, %v1980
      %v2377 = vpack.c.b16 %v1993, %v1981
      %v2378 = vpack.c.b16 %v1994, %v1982
      %v2379 = vpack.c.b16 %v1995, %v1983
      %v2380 = vpack.c.b16 %v1996, %v1984
      %v2381 = vpack.c.b16 %v1997, %v1985
      %v2382 = vpack.c.b16 %v1998, %v1986
      %v2383 = vpack.c.b16 %v1999, %v1987
      %v2384 = vpack.c.b16 %v2000, %v1988
      %2769 = vmatprep.subr.bf16.mxu0 %v2002
      %2770 = vmatpush1.bf16.msra.mxu0 %v2001
      %2771 = vmatprep.subr.bf16.mxu0 %v2014
      %2772 = vmatpush1.bf16.msra.mxu0 %v2013
      %2773 = vmatprep.subr.bf16.mxu0 %v2026
      %2774 = vmatpush1.bf16.msra.mxu0 %v2025
      %2775 = vmatprep.subr.bf16.mxu0 %v2038
      %2776 = vmatpush1.bf16.msra.mxu0 %v2037
      %2777 = vmatprep.subr.bf16.mxu0 %v2050
      %2778 = vmatpush1.bf16.msra.mxu0 %v2049
      %2779 = vmatprep.subr.bf16.mxu0 %v2062
      %2780 = vmatpush1.bf16.msra.mxu0 %v2061
      %2781 = vmatprep.subr.bf16.mxu0 %v2074
      %2782 = vmatpush1.bf16.msra.mxu0 %v2073
      %2783 = vmatprep.subr.bf16.mxu0 %v2086
      %2784 = vmatpush1.bf16.msra.mxu0 %v2085
      %2785 = vmatprep.subr.bf16.mxu0 %v2098
      %2786 = vmatpush1.bf16.msra.mxu0 %v2097
      %2787 = vmatprep.subr.bf16.mxu0 %v2110
      %2788 = vmatpush1.bf16.msra.mxu0 %v2109
      %2789 = vmatprep.subr.bf16.mxu0 %v2122
      %2790 = vmatpush1.bf16.msra.mxu0 %v2121
      %2791 = vmatprep.subr.bf16.mxu0 %v2134
      %2792 = vmatpush1.bf16.msra.mxu0 %v2133
      %2793 = vmatprep.subr.bf16.mxu0 %v2146
      %2794 = vmatpush1.bf16.msra.mxu0 %v2145
      %2795 = vmatprep.subr.bf16.mxu0 %v2158
      %2796 = vmatpush1.bf16.msra.mxu0 %v2157
      %2797 = vmatprep.subr.bf16.mxu0 %v2170
      %2798 = vmatpush1.bf16.msra.mxu0 %v2169
      %2799 = vmatprep.subr.bf16.mxu0 %v2182
      %2800 = vmatpush1.bf16.msra.mxu0 %v2181
      %2801 = vmatprep.mubr.bf16.mxu0 %v447
      %2802 = vmatmul.mubr.bf16.gmra.mrb[0].mxu0 %v446
      %v2803 = vpop.f32.mrb[0].mxu0
      %v2804 = vadd.f32 0.0, %v2803
      %v2805 = vpop.f32.mrb[0].mxu0
      %v2806 = vadd.f32 0.0, %v2805
      %v2807 = vpop.f32.mrb[0].mxu0
      %v2808 = vadd.f32 0.0, %v2807
      %v2809 = vpop.f32.mrb[0].mxu0
      %v2810 = vadd.f32 0.0, %v2809
      %2811 = vmatprep.mubr.bf16.mxu0 %v451
      %2812 = vmatmul.mubr.bf16.gmra.mrb[0].mxu0 %v450
      %v2813 = vpop.f32.mrb[0].mxu0
      %v2814 = vadd.f32 0.0, %v2813
      %v2815 = vpop.f32.mrb[0].mxu0
      %v2816 = vadd.f32 0.0, %v2815
      %v2817 = vpop.f32.mrb[0].mxu0
      %v2818 = vadd.f32 0.0, %v2817
      %v2819 = vpop.f32.mrb[0].mxu0
      %v2820 = vadd.f32 0.0, %v2819
      %2821 = vmatprep.mubr.bf16.mxu0 %v455
      %2822 = vmatmul.mubr.bf16.gmra.mrb[0].mxu0 %v454
      %v2823 = vpop.f32.mrb[0].mxu0
      %v2824 = vadd.f32 0.0, %v2823
      %v2825 = vpop.f32.mrb[0].mxu0
      %v2826 = vadd.f32 0.0, %v2825
      %v2827 = vpop.f32.mrb[0].mxu0
      %v2828 = vadd.f32 0.0, %v2827
      %v2829 = vpop.f32.mrb[0].mxu0
      %v2830 = vadd.f32 0.0, %v2829
      %2831 = vdwg.mxu0
      %2832 = vmatprep.subr.bf16.mxu0 %v2194
      %2833 = vmatpush1.bf16.msra.mxu0 %v2193
      %2834 = vmatprep.subr.bf16.mxu0 %v2206
      %2835 = vmatpush1.bf16.msra.mxu0 %v2205
      %2836 = vmatprep.subr.bf16.mxu0 %v2218
      %2837 = vmatpush1.bf16.msra.mxu0 %v2217
      %2838 = vmatprep.subr.bf16.mxu0 %v2230
      %2839 = vmatpush1.bf16.msra.mxu0 %v2229
      %2840 = vmatprep.subr.bf16.mxu0 %v2242
      %2841 = vmatpush1.bf16.msra.mxu0 %v2241
      %2842 = vmatprep.subr.bf16.mxu0 %v2254
      %2843 = vmatpush1.bf16.msra.mxu0 %v2253
      %2844 = vmatprep.subr.bf16.mxu0 %v2266
      %2845 = vmatpush1.bf16.msra.mxu0 %v2265
      %2846 = vmatprep.subr.bf16.mxu0 %v2278
      %2847 = vmatpush1.bf16.msra.mxu0 %v2277
      %2848 = vmatprep.subr.bf16.mxu0 %v2290
      %2849 = vmatpush1.bf16.msra.mxu0 %v2289
      %2850 = vmatprep.subr.bf16.mxu0 %v2302
      %2851 = vmatpush1.bf16.msra.mxu0 %v2301
      %2852 = vmatprep.subr.bf16.mxu0 %v2314
      %2853 = vmatpush1.bf16.msra.mxu0 %v2313
      %2854 = vmatprep.subr.bf16.mxu0 %v2326
      %2855 = vmatpush1.bf16.msra.mxu0 %v2325
      %2856 = vmatprep.subr.bf16.mxu0 %v2338
      %2857 = vmatpush1.bf16.msra.mxu0 %v2337
      %2858 = vmatprep.subr.bf16.mxu0 %v2350
      %2859 = vmatpush1.bf16.msra.mxu0 %v2349
      %2860 = vmatprep.subr.bf16.mxu0 %v2362
      %2861 = vmatpush1.bf16.msra.mxu0 %v2361
      %2862 = vmatprep.subr.bf16.mxu0 %v2374
      %2863 = vmatpush1.bf16.msra.mxu0 %v2373
      %2864 = vmatprep.mubr.bf16.mxu0 %v449
      %2865 = vmatmul.mubr.bf16.gmra.mrb[0].mxu0 %v448
      %v2866 = vpop.f32.mrb[0].mxu0
      %v2867 = vadd.f32 %v2804, %v2866
      %v2868 = vpop.f32.mrb[0].mxu0
      %v2869 = vadd.f32 %v2806, %v2868
      %v2870 = vpop.f32.mrb[0].mxu0
      %v2871 = vadd.f32 %v2808, %v2870
      %v2872 = vpop.f32.mrb[0].mxu0
      %v2873 = vadd.f32 %v2810, %v2872
      %2874 = vmatprep.mubr.bf16.mxu0 %v453
      %2875 = vmatmul.mubr.bf16.gmra.mrb[0].mxu0 %v452
      %v2876 = vpop.f32.mrb[0].mxu0
      %v2877 = vadd.f32 %v2814, %v2876
      %v2878 = vpop.f32.mrb[0].mxu0
      %v2879 = vadd.f32 %v2816, %v2878
      %v2880 = vpop.f32.mrb[0].mxu0
      %v2881 = vadd.f32 %v2818, %v2880
      %v2882 = vpop.f32.mrb[0].mxu0
      %v2883 = vadd.f32 %v2820, %v2882
      %2884 = vmatprep.mubr.bf16.mxu0 %v457
      %2885 = vmatmul.mubr.bf16.gmra.mrb[0].mxu0 %v456
      %v2886 = vpop.f32.mrb[0].mxu0
      %v2887 = vadd.f32 %v2824, %v2886
      %v2888 = vpop.f32.mrb[0].mxu0
      %v2889 = vadd.f32 %v2826, %v2888
      %v2890 = vpop.f32.mrb[0].mxu0
      %v2891 = vadd.f32 %v2828, %v2890
      %v2892 = vpop.f32.mrb[0].mxu0
      %v2893 = vadd.f32 %v2830, %v2892
      %2894 = vdwg.mxu0
      %2895 = vmatprep.subr.bf16.mxu0 %v2004
      %2896 = vmatpush1.bf16.msra.mxu0 %v2003
      %2897 = vmatprep.subr.bf16.mxu0 %v2016
      %2898 = vmatpush1.bf16.msra.mxu0 %v2015
      %2899 = vmatprep.subr.bf16.mxu0 %v2028
      %2900 = vmatpush1.bf16.msra.mxu0 %v2027
      %2901 = vmatprep.subr.bf16.mxu0 %v2040
      %2902 = vmatpush1.bf16.msra.mxu0 %v2039
      %2903 = vmatprep.subr.bf16.mxu0 %v2052
      %2904 = vmatpush1.bf16.msra.mxu0 %v2051
      %2905 = vmatprep.subr.bf16.mxu0 %v2064
      %2906 = vmatpush1.bf16.msra.mxu0 %v2063
      %2907 = vmatprep.subr.bf16.mxu0 %v2076
      %2908 = vmatpush1.bf16.msra.mxu0 %v2075
      %2909 = vmatprep.subr.bf16.mxu0 %v2088
      %2910 = vmatpush1.bf16.msra.mxu0 %v2087
      %2911 = vmatprep.subr.bf16.mxu0 %v2100
      %2912 = vmatpush1.bf16.msra.mxu0 %v2099
      %2913 = vmatprep.subr.bf16.mxu0 %v2112
      %2914 = vmatpush1.bf16.msra.mxu0 %v2111
      %2915 = vmatprep.subr.bf16.mxu0 %v2124
      %2916 = vmatpush1.bf16.msra.mxu0 %v2123
      %2917 = vmatprep.subr.bf16.mxu0 %v2136
      %2918 = vmatpush1.bf16.msra.mxu0 %v2135
      %2919 = vmatprep.subr.bf16.mxu0 %v2148
      %2920 = vmatpush1.bf16.msra.mxu0 %v2147
      %2921 = vmatprep.subr.bf16.mxu0 %v2160
      %2922 = vmatpush1.bf16.msra.mxu0 %v2159
      %2923 = vmatprep.subr.bf16.mxu0 %v2172
      %2924 = vmatpush1.bf16.msra.mxu0 %v2171
      %2925 = vmatprep.subr.bf16.mxu0 %v2184
      %2926 = vmatpush1.bf16.msra.mxu0 %v2183
      %2927 = vmatprep.mubr.bf16.mxu0 %v447
      %2928 = vmatmul.mubr.bf16.gmra.mrb[0].mxu0 %v446
      %v2929 = vpop.f32.mrb[0].mxu0
      %v2930 = vadd.f32 0.0, %v2929
      %v2931 = vpop.f32.mrb[0].mxu0
      %v2932 = vadd.f32 0.0, %v2931
      %v2933 = vpop.f32.mrb[0].mxu0
      %v2934 = vadd.f32 0.0, %v2933
      %v2935 = vpop.f32.mrb[0].mxu0
      %v2936 = vadd.f32 0.0, %v2935
      %2937 = vmatprep.mubr.bf16.mxu0 %v451
      %2938 = vmatmul.mubr.bf16.gmra.mrb[0].mxu0 %v450
      %v2939 = vpop.f32.mrb[0].mxu0
      %v2940 = vadd.f32 0.0, %v2939
      %v2941 = vpop.f32.mrb[0].mxu0
      %v2942 = vadd.f32 0.0, %v2941
      %v2943 = vpop.f32.mrb[0].mxu0
      %v2944 = vadd.f32 0.0, %v2943
      %v2945 = vpop.f32.mrb[0].mxu0
      %v2946 = vadd.f32 0.0, %v2945
      %2947 = vmatprep.mubr.bf16.mxu0 %v455
      %2948 = vmatmul.mubr.bf16.gmra.mrb[0].mxu0 %v454
      %v2949 = vpop.f32.mrb[0].mxu0
      %v2950 = vadd.f32 0.0, %v2949
      %v2951 = vpop.f32.mrb[0].mxu0
      %v2952 = vadd.f32 0.0, %v2951
      %v2953 = vpop.f32.mrb[0].mxu0
      %v2954 = vadd.f32 0.0, %v2953
      %v2955 = vpop.f32.mrb[0].mxu0
      %v2956 = vadd.f32 0.0, %v2955
      %2957 = vdwg.mxu0
      %2958 = vmatprep.subr.bf16.mxu0 %v2196
      %2959 = vmatpush1.bf16.msra.mxu0 %v2195
      %2960 = vmatprep.subr.bf16.mxu0 %v2208
      %2961 = vmatpush1.bf16.msra.mxu0 %v2207
      %2962 = vmatprep.subr.bf16.mxu0 %v2220
      %2963 = vmatpush1.bf16.msra.mxu0 %v2219
      %2964 = vmatprep.subr.bf16.mxu0 %v2232
      %2965 = vmatpush1.bf16.msra.mxu0 %v2231
      %2966 = vmatprep.subr.bf16.mxu0 %v2244
      %2967 = vmatpush1.bf16.msra.mxu0 %v2243
      %2968 = vmatprep.subr.bf16.mxu0 %v2256
      %2969 = vmatpush1.bf16.msra.mxu0 %v2255
      %2970 = vmatprep.subr.bf16.mxu0 %v2268
      %2971 = vmatpush1.bf16.msra.mxu0 %v2267
      %2972 = vmatprep.subr.bf16.mxu0 %v2280
      %2973 = vmatpush1.bf16.msra.mxu0 %v2279
      %2974 = vmatprep.subr.bf16.mxu0 %v2292
      %2975 = vmatpush1.bf16.msra.mxu0 %v2291
      %2976 = vmatprep.subr.bf16.mxu0 %v2304
      %2977 = vmatpush1.bf16.msra.mxu0 %v2303
      %2978 = vmatprep.subr.bf16.mxu0 %v2316
      %2979 = vmatpush1.bf16.msra.mxu0 %v2315
      %2980 = vmatprep.subr.bf16.mxu0 %v2328
      %2981 = vmatpush1.bf16.msra.mxu0 %v2327
      %2982 = vmatprep.subr.bf16.mxu0 %v2340
      %2983 = vmatpush1.bf16.msra.mxu0 %v2339
      %2984 = vmatprep.subr.bf16.mxu0 %v2352
      %2985 = vmatpush1.bf16.msra.mxu0 %v2351
      %2986 = vmatprep.subr.bf16.mxu0 %v2364
      %2987 = vmatpush1.bf16.msra.mxu0 %v2363
      %2988 = vmatprep.subr.bf16.mxu0 %v2376
      %2989 = vmatpush1.bf16.msra.mxu0 %v2375
      %2990 = vmatprep.mubr.bf16.mxu0 %v449
      %2991 = vmatmul.mubr.bf16.gmra.mrb[0].mxu0 %v448
      %v2992 = vpop.f32.mrb[0].mxu0
      %v2993 = vadd.f32 %v2930, %v2992
      %v2994 = vpop.f32.mrb[0].mxu0
      %v2995 = vadd.f32 %v2932, %v2994
      %v2996 = vpop.f32.mrb[0].mxu0
      %v2997 = vadd.f32 %v2934, %v2996
      %v2998 = vpop.f32.mrb[0].mxu0
      %v2999 = vadd.f32 %v2936, %v2998
      %3000 = vmatprep.mubr.bf16.mxu0 %v453
      %3001 = vmatmul.mubr.bf16.gmra.mrb[0].mxu0 %v452
      %v3002 = vpop.f32.mrb[0].mxu0
      %v3003 = vadd.f32 %v2940, %v3002
      %v3004 = vpop.f32.mrb[0].mxu0
      %v3005 = vadd.f32 %v2942, %v3004
      %v3006 = vpop.f32.mrb[0].mxu0
      %v3007 = vadd.f32 %v2944, %v3006
      %v3008 = vpop.f32.mrb[0].mxu0
      %v3009 = vadd.f32 %v2946, %v3008
      %3010 = vmatprep.mubr.bf16.mxu0 %v457
      %3011 = vmatmul.mubr.bf16.gmra.mrb[0].mxu0 %v456
      %v3012 = vpop.f32.mrb[0].mxu0
      %v3013 = vadd.f32 %v2950, %v3012
      %v3014 = vpop.f32.mrb[0].mxu0
      %v3015 = vadd.f32 %v2952, %v3014
      %v3016 = vpop.f32.mrb[0].mxu0
      %v3017 = vadd.f32 %v2954, %v3016
      %v3018 = vpop.f32.mrb[0].mxu0
      %v3019 = vadd.f32 %v2956, %v3018
      %3020 = vdwg.mxu0
      %3021 = vmatprep.subr.bf16.mxu0 %v2006
      %3022 = vmatpush1.bf16.msra.mxu0 %v2005
      %3023 = vmatprep.subr.bf16.mxu0 %v2018
      %3024 = vmatpush1.bf16.msra.mxu0 %v2017
      %3025 = vmatprep.subr.bf16.mxu0 %v2030
      %3026 = vmatpush1.bf16.msra.mxu0 %v2029
      %3027 = vmatprep.subr.bf16.mxu0 %v2042
      %3028 = vmatpush1.bf16.msra.mxu0 %v2041
      %3029 = vmatprep.subr.bf16.mxu0 %v2054
      %3030 = vmatpush1.bf16.msra.mxu0 %v2053
      %3031 = vmatprep.subr.bf16.mxu0 %v2066
      %3032 = vmatpush1.bf16.msra.mxu0 %v2065
      %3033 = vmatprep.subr.bf16.mxu0 %v2078
      %3034 = vmatpush1.bf16.msra.mxu0 %v2077
      %3035 = vmatprep.subr.bf16.mxu0 %v2090
      %3036 = vmatpush1.bf16.msra.mxu0 %v2089
      %3037 = vmatprep.subr.bf16.mxu0 %v2102
      %3038 = vmatpush1.bf16.msra.mxu0 %v2101
      %3039 = vmatprep.subr.bf16.mxu0 %v2114
      %3040 = vmatpush1.bf16.msra.mxu0 %v2113
      %3041 = vmatprep.subr.bf16.mxu0 %v2126
      %3042 = vmatpush1.bf16.msra.mxu0 %v2125
      %3043 = vmatprep.subr.bf16.mxu0 %v2138
      %3044 = vmatpush1.bf16.msra.mxu0 %v2137
      %3045 = vmatprep.subr.bf16.mxu0 %v2150
      %3046 = vmatpush1.bf16.msra.mxu0 %v2149
      %3047 = vmatprep.subr.bf16.mxu0 %v2162
      %3048 = vmatpush1.bf16.msra.mxu0 %v2161
      %3049 = vmatprep.subr.bf16.mxu0 %v2174
      %3050 = vmatpush1.bf16.msra.mxu0 %v2173
      %3051 = vmatprep.subr.bf16.mxu0 %v2186
      %3052 = vmatpush1.bf16.msra.mxu0 %v2185
      %3053 = vmatprep.mubr.bf16.mxu0 %v447
      %3054 = vmatmul.mubr.bf16.gmra.mrb[0].mxu0 %v446
      %v3055 = vpop.f32.mrb[0].mxu0
      %v3056 = vadd.f32 0.0, %v3055
      %v3057 = vpop.f32.mrb[0].mxu0
      %v3058 = vadd.f32 0.0, %v3057
      %v3059 = vpop.f32.mrb[0].mxu0
      %v3060 = vadd.f32 0.0, %v3059
      %v3061 = vpop.f32.mrb[0].mxu0
      %v3062 = vadd.f32 0.0, %v3061
      %3063 = vmatprep.mubr.bf16.mxu0 %v451
      %3064 = vmatmul.mubr.bf16.gmra.mrb[0].mxu0 %v450
      %v3065 = vpop.f32.mrb[0].mxu0
      %v3066 = vadd.f32 0.0, %v3065
      %v3067 = vpop.f32.mrb[0].mxu0
      %v3068 = vadd.f32 0.0, %v3067
      %v3069 = vpop.f32.mrb[0].mxu0
      %v3070 = vadd.f32 0.0, %v3069
      %v3071 = vpop.f32.mrb[0].mxu0
      %v3072 = vadd.f32 0.0, %v3071
      %3073 = vmatprep.mubr.bf16.mxu0 %v455
      %3074 = vmatmul.mubr.bf16.gmra.mrb[0].mxu0 %v454
      %v3075 = vpop.f32.mrb[0].mxu0
      %v3076 = vadd.f32 0.0, %v3075
      %v3077 = vpop.f32.mrb[0].mxu0
      %v3078 = vadd.f32 0.0, %v3077
      %v3079 = vpop.f32.mrb[0].mxu0
      %v3080 = vadd.f32 0.0, %v3079
      %v3081 = vpop.f32.mrb[0].mxu0
      %v3082 = vadd.f32 0.0, %v3081
      %3083 = vdwg.mxu0
      %3084 = vmatprep.subr.bf16.mxu0 %v2198
      %3085 = vmatpush1.bf16.msra.mxu0 %v2197
      %3086 = vmatprep.subr.bf16.mxu0 %v2210
      %3087 = vmatpush1.bf16.msra.mxu0 %v2209
      %3088 = vmatprep.subr.bf16.mxu0 %v2222
      %3089 = vmatpush1.bf16.msra.mxu0 %v2221
      %3090 = vmatprep.subr.bf16.mxu0 %v2234
      %3091 = vmatpush1.bf16.msra.mxu0 %v2233
      %3092 = vmatprep.subr.bf16.mxu0 %v2246
      %3093 = vmatpush1.bf16.msra.mxu0 %v2245
      %3094 = vmatprep.subr.bf16.mxu0 %v2258
      %3095 = vmatpush1.bf16.msra.mxu0 %v2257
      %3096 = vmatprep.subr.bf16.mxu0 %v2270
      %3097 = vmatpush1.bf16.msra.mxu0 %v2269
      %3098 = vmatprep.subr.bf16.mxu0 %v2282
      %3099 = vmatpush1.bf16.msra.mxu0 %v2281
      %3100 = vmatprep.subr.bf16.mxu0 %v2294
      %3101 = vmatpush1.bf16.msra.mxu0 %v2293
      %3102 = vmatprep.subr.bf16.mxu0 %v2306
      %3103 = vmatpush1.bf16.msra.mxu0 %v2305
      %3104 = vmatprep.subr.bf16.mxu0 %v2318
      %3105 = vmatpush1.bf16.msra.mxu0 %v2317
      %3106 = vmatprep.subr.bf16.mxu0 %v2330
      %3107 = vmatpush1.bf16.msra.mxu0 %v2329
      %3108 = vmatprep.subr.bf16.mxu0 %v2342
      %3109 = vmatpush1.bf16.msra.mxu0 %v2341
      %3110 = vmatprep.subr.bf16.mxu0 %v2354
      %3111 = vmatpush1.bf16.msra.mxu0 %v2353
      %3112 = vmatprep.subr.bf16.mxu0 %v2366
      %3113 = vmatpush1.bf16.msra.mxu0 %v2365
      %3114 = vmatprep.subr.bf16.mxu0 %v2378
      %3115 = vmatpush1.bf16.msra.mxu0 %v2377
      %3116 = vmatprep.mubr.bf16.mxu0 %v449
      %3117 = vmatmul.mubr.bf16.gmra.mrb[0].mxu0 %v448
      %v3118 = vpop.f32.mrb[0].mxu0
      %v3119 = vadd.f32 %v3056, %v3118
      %v3120 = vpop.f32.mrb[0].mxu0
      %v3121 = vadd.f32 %v3058, %v3120
      %v3122 = vpop.f32.mrb[0].mxu0
      %v3123 = vadd.f32 %v3060, %v3122
      %v3124 = vpop.f32.mrb[0].mxu0
      %v3125 = vadd.f32 %v3062, %v3124
      %3126 = vmatprep.mubr.bf16.mxu0 %v453
      %3127 = vmatmul.mubr.bf16.gmra.mrb[0].mxu0 %v452
      %v3128 = vpop.f32.mrb[0].mxu0
      %v3129 = vadd.f32 %v3066, %v3128
      %v3130 = vpop.f32.mrb[0].mxu0
      %v3131 = vadd.f32 %v3068, %v3130
      %v3132 = vpop.f32.mrb[0].mxu0
      %v3133 = vadd.f32 %v3070, %v3132
      %v3134 = vpop.f32.mrb[0].mxu0
      %v3135 = vadd.f32 %v3072, %v3134
      %3136 = vmatprep.mubr.bf16.mxu0 %v457
      %3137 = vmatmul.mubr.bf16.gmra.mrb[0].mxu0 %v456
      %v3138 = vpop.f32.mrb[0].mxu0
      %v3139 = vadd.f32 %v3076, %v3138
      %v3140 = vpop.f32.mrb[0].mxu0
      %v3141 = vadd.f32 %v3078, %v3140
      %v3142 = vpop.f32.mrb[0].mxu0
      %v3143 = vadd.f32 %v3080, %v3142
      %v3144 = vpop.f32.mrb[0].mxu0
      %v3145 = vadd.f32 %v3082, %v3144
      %3146 = vdwg.mxu0
      %3147 = vmatprep.subr.bf16.mxu0 %v2008
      %3148 = vmatpush1.bf16.msra.mxu0 %v2007
      %3149 = vmatprep.subr.bf16.mxu0 %v2020
      %3150 = vmatpush1.bf16.msra.mxu0 %v2019
      %3151 = vmatprep.subr.bf16.mxu0 %v2032
      %3152 = vmatpush1.bf16.msra.mxu0 %v2031
      %3153 = vmatprep.subr.bf16.mxu0 %v2044
      %3154 = vmatpush1.bf16.msra.mxu0 %v2043
      %3155 = vmatprep.subr.bf16.mxu0 %v2056
      %3156 = vmatpush1.bf16.msra.mxu0 %v2055
      %3157 = vmatprep.subr.bf16.mxu0 %v2068
      %3158 = vmatpush1.bf16.msra.mxu0 %v2067
      %3159 = vmatprep.subr.bf16.mxu0 %v2080
      %3160 = vmatpush1.bf16.msra.mxu0 %v2079
      %3161 = vmatprep.subr.bf16.mxu0 %v2092
      %3162 = vmatpush1.bf16.msra.mxu0 %v2091
      %3163 = vmatprep.subr.bf16.mxu0 %v2104
      %3164 = vmatpush1.bf16.msra.mxu0 %v2103
      %3165 = vmatprep.subr.bf16.mxu0 %v2116
      %3166 = vmatpush1.bf16.msra.mxu0 %v2115
      %3167 = vmatprep.subr.bf16.mxu0 %v2128
      %3168 = vmatpush1.bf16.msra.mxu0 %v2127
      %3169 = vmatprep.subr.bf16.mxu0 %v2140
      %3170 = vmatpush1.bf16.msra.mxu0 %v2139
      %3171 = vmatprep.subr.bf16.mxu0 %v2152
      %3172 = vmatpush1.bf16.msra.mxu0 %v2151
      %3173 = vmatprep.subr.bf16.mxu0 %v2164
      %3174 = vmatpush1.bf16.msra.mxu0 %v2163
      %3175 = vmatprep.subr.bf16.mxu0 %v2176
      %3176 = vmatpush1.bf16.msra.mxu0 %v2175
      %3177 = vmatprep.subr.bf16.mxu0 %v2188
      %3178 = vmatpush1.bf16.msra.mxu0 %v2187
      %3179 = vmatprep.mubr.bf16.mxu0 %v447
      %3180 = vmatmul.mubr.bf16.gmra.mrb[0].mxu0 %v446
      %v3181 = vpop.f32.mrb[0].mxu0
      %v3182 = vadd.f32 0.0, %v3181
      %v3183 = vpop.f32.mrb[0].mxu0
      %v3184 = vadd.f32 0.0, %v3183
      %v3185 = vpop.f32.mrb[0].mxu0
      %v3186 = vadd.f32 0.0, %v3185
      %v3187 = vpop.f32.mrb[0].mxu0
      %v3188 = vadd.f32 0.0, %v3187
      %3189 = vmatprep.mubr.bf16.mxu0 %v451
      %3190 = vmatmul.mubr.bf16.gmra.mrb[0].mxu0 %v450
      %v3191 = vpop.f32.mrb[0].mxu0
      %v3192 = vadd.f32 0.0, %v3191
      %v3193 = vpop.f32.mrb[0].mxu0
      %v3194 = vadd.f32 0.0, %v3193
      %v3195 = vpop.f32.mrb[0].mxu0
      %v3196 = vadd.f32 0.0, %v3195
      %v3197 = vpop.f32.mrb[0].mxu0
      %v3198 = vadd.f32 0.0, %v3197
      %3199 = vmatprep.mubr.bf16.mxu0 %v455
      %3200 = vmatmul.mubr.bf16.gmra.mrb[0].mxu0 %v454
      %v3201 = vpop.f32.mrb[0].mxu0
      %v3202 = vadd.f32 0.0, %v3201
      %v3203 = vpop.f32.mrb[0].mxu0
      %v3204 = vadd.f32 0.0, %v3203
      %v3205 = vpop.f32.mrb[0].mxu0
      %v3206 = vadd.f32 0.0, %v3205
      %v3207 = vpop.f32.mrb[0].mxu0
      %v3208 = vadd.f32 0.0, %v3207
      %3209 = vdwg.mxu0
      %3210 = vmatprep.subr.bf16.mxu0 %v2200
      %3211 = vmatpush1.bf16.msra.mxu0 %v2199
      %3212 = vmatprep.subr.bf16.mxu0 %v2212
      %3213 = vmatpush1.bf16.msra.mxu0 %v2211
      %3214 = vmatprep.subr.bf16.mxu0 %v2224
      %3215 = vmatpush1.bf16.msra.mxu0 %v2223
      %3216 = vmatprep.subr.bf16.mxu0 %v2236
      %3217 = vmatpush1.bf16.msra.mxu0 %v2235
      %3218 = vmatprep.subr.bf16.mxu0 %v2248
      %3219 = vmatpush1.bf16.msra.mxu0 %v2247
      %3220 = vmatprep.subr.bf16.mxu0 %v2260
      %3221 = vmatpush1.bf16.msra.mxu0 %v2259
      %3222 = vmatprep.subr.bf16.mxu0 %v2272
      %3223 = vmatpush1.bf16.msra.mxu0 %v2271
      %3224 = vmatprep.subr.bf16.mxu0 %v2284
      %3225 = vmatpush1.bf16.msra.mxu0 %v2283
      %3226 = vmatprep.subr.bf16.mxu0 %v2296
      %3227 = vmatpush1.bf16.msra.mxu0 %v2295
      %3228 = vmatprep.subr.bf16.mxu0 %v2308
      %3229 = vmatpush1.bf16.msra.mxu0 %v2307
      %3230 = vmatprep.subr.bf16.mxu0 %v2320
      %3231 = vmatpush1.bf16.msra.mxu0 %v2319
      %3232 = vmatprep.subr.bf16.mxu0 %v2332
      %3233 = vmatpush1.bf16.msra.mxu0 %v2331
      %3234 = vmatprep.subr.bf16.mxu0 %v2344
      %3235 = vmatpush1.bf16.msra.mxu0 %v2343
      %3236 = vmatprep.subr.bf16.mxu0 %v2356
      %3237 = vmatpush1.bf16.msra.mxu0 %v2355
      %3238 = vmatprep.subr.bf16.mxu0 %v2368
      %3239 = vmatpush1.bf16.msra.mxu0 %v2367
      %3240 = vmatprep.subr.bf16.mxu0 %v2380
      %3241 = vmatpush1.bf16.msra.mxu0 %v2379
      %3242 = vmatprep.mubr.bf16.mxu0 %v449
      %3243 = vmatmul.mubr.bf16.gmra.mrb[0].mxu0 %v448
      %v3244 = vpop.f32.mrb[0].mxu0
      %v3245 = vadd.f32 %v3182, %v3244
      %v3246 = vpop.f32.mrb[0].mxu0
      %v3247 = vadd.f32 %v3184, %v3246
      %v3248 = vpop.f32.mrb[0].mxu0
      %v3249 = vadd.f32 %v3186, %v3248
      %v3250 = vpop.f32.mrb[0].mxu0
      %v3251 = vadd.f32 %v3188, %v3250
      %3252 = vmatprep.mubr.bf16.mxu0 %v453
      %3253 = vmatmul.mubr.bf16.gmra.mrb[0].mxu0 %v452
      %v3254 = vpop.f32.mrb[0].mxu0
      %v3255 = vadd.f32 %v3192, %v3254
      %v3256 = vpop.f32.mrb[0].mxu0
      %v3257 = vadd.f32 %v3194, %v3256
      %v3258 = vpop.f32.mrb[0].mxu0
      %v3259 = vadd.f32 %v3196, %v3258
      %v3260 = vpop.f32.mrb[0].mxu0
      %v3261 = vadd.f32 %v3198, %v3260
      %3262 = vmatprep.mubr.bf16.mxu0 %v457
      %3263 = vmatmul.mubr.bf16.gmra.mrb[0].mxu0 %v456
      %v3264 = vpop.f32.mrb[0].mxu0
      %v3265 = vadd.f32 %v3202, %v3264
      %v3266 = vpop.f32.mrb[0].mxu0
      %v3267 = vadd.f32 %v3204, %v3266
      %v3268 = vpop.f32.mrb[0].mxu0
      %v3269 = vadd.f32 %v3206, %v3268
      %v3270 = vpop.f32.mrb[0].mxu0
      %v3271 = vadd.f32 %v3208, %v3270
      %3272 = vdwg.mxu0
      %3273 = vmatprep.subr.bf16.mxu0 %v2010
      %3274 = vmatpush1.bf16.msra.mxu0 %v2009
      %3275 = vmatprep.subr.bf16.mxu0 %v2022
      %3276 = vmatpush1.bf16.msra.mxu0 %v2021
      %3277 = vmatprep.subr.bf16.mxu0 %v2034
      %3278 = vmatpush1.bf16.msra.mxu0 %v2033
      %3279 = vmatprep.subr.bf16.mxu0 %v2046
      %3280 = vmatpush1.bf16.msra.mxu0 %v2045
      %3281 = vmatprep.subr.bf16.mxu0 %v2058
      %3282 = vmatpush1.bf16.msra.mxu0 %v2057
      %3283 = vmatprep.subr.bf16.mxu0 %v2070
      %3284 = vmatpush1.bf16.msra.mxu0 %v2069
      %3285 = vmatprep.subr.bf16.mxu0 %v2082
      %3286 = vmatpush1.bf16.msra.mxu0 %v2081
      %3287 = vmatprep.subr.bf16.mxu0 %v2094
      %3288 = vmatpush1.bf16.msra.mxu0 %v2093
      %3289 = vmatprep.subr.bf16.mxu0 %v2106
      %3290 = vmatpush1.bf16.msra.mxu0 %v2105
      %3291 = vmatprep.subr.bf16.mxu0 %v2118
      %3292 = vmatpush1.bf16.msra.mxu0 %v2117
      %3293 = vmatprep.subr.bf16.mxu0 %v2130
      %3294 = vmatpush1.bf16.msra.mxu0 %v2129
      %3295 = vmatprep.subr.bf16.mxu0 %v2142
      %3296 = vmatpush1.bf16.msra.mxu0 %v2141
      %3297 = vmatprep.subr.bf16.mxu0 %v2154
      %3298 = vmatpush1.bf16.msra.mxu0 %v2153
      %3299 = vmatprep.subr.bf16.mxu0 %v2166
      %3300 = vmatpush1.bf16.msra.mxu0 %v2165
      %3301 = vmatprep.subr.bf16.mxu0 %v2178
      %3302 = vmatpush1.bf16.msra.mxu0 %v2177
      %3303 = vmatprep.subr.bf16.mxu0 %v2190
      %3304 = vmatpush1.bf16.msra.mxu0 %v2189
      %3305 = vmatprep.mubr.bf16.mxu0 %v447
      %3306 = vmatmul.mubr.bf16.gmra.mrb[0].mxu0 %v446
      %v3307 = vpop.f32.mrb[0].mxu0
      %v3308 = vadd.f32 0.0, %v3307
      %v3309 = vpop.f32.mrb[0].mxu0
      %v3310 = vadd.f32 0.0, %v3309
      %v3311 = vpop.f32.mrb[0].mxu0
      %v3312 = vadd.f32 0.0, %v3311
      %v3313 = vpop.f32.mrb[0].mxu0
      %v3314 = vadd.f32 0.0, %v3313
      %3315 = vmatprep.mubr.bf16.mxu0 %v451
      %3316 = vmatmul.mubr.bf16.gmra.mrb[0].mxu0 %v450
      %v3317 = vpop.f32.mrb[0].mxu0
      %v3318 = vadd.f32 0.0, %v3317
      %v3319 = vpop.f32.mrb[0].mxu0
      %v3320 = vadd.f32 0.0, %v3319
      %v3321 = vpop.f32.mrb[0].mxu0
      %v3322 = vadd.f32 0.0, %v3321
      %v3323 = vpop.f32.mrb[0].mxu0
      %v3324 = vadd.f32 0.0, %v3323
      %3325 = vmatprep.mubr.bf16.mxu0 %v455
      %3326 = vmatmul.mubr.bf16.gmra.mrb[0].mxu0 %v454
      %v3327 = vpop.f32.mrb[0].mxu0
      %v3328 = vadd.f32 0.0, %v3327
      %v3329 = vpop.f32.mrb[0].mxu0
      %v3330 = vadd.f32 0.0, %v3329
      %v3331 = vpop.f32.mrb[0].mxu0
      %v3332 = vadd.f32 0.0, %v3331
      %v3333 = vpop.f32.mrb[0].mxu0
      %v3334 = vadd.f32 0.0, %v3333
      %3335 = vdwg.mxu0
      %3336 = vmatprep.subr.bf16.mxu0 %v2202
      %3337 = vmatpush1.bf16.msra.mxu0 %v2201
      %3338 = vmatprep.subr.bf16.mxu0 %v2214
      %3339 = vmatpush1.bf16.msra.mxu0 %v2213
      %3340 = vmatprep.subr.bf16.mxu0 %v2226
      %3341 = vmatpush1.bf16.msra.mxu0 %v2225
      %3342 = vmatprep.subr.bf16.mxu0 %v2238
      %3343 = vmatpush1.bf16.msra.mxu0 %v2237
      %3344 = vmatprep.subr.bf16.mxu0 %v2250
      %3345 = vmatpush1.bf16.msra.mxu0 %v2249
      %3346 = vmatprep.subr.bf16.mxu0 %v2262
      %3347 = vmatpush1.bf16.msra.mxu0 %v2261
      %3348 = vmatprep.subr.bf16.mxu0 %v2274
      %3349 = vmatpush1.bf16.msra.mxu0 %v2273
      %3350 = vmatprep.subr.bf16.mxu0 %v2286
      %3351 = vmatpush1.bf16.msra.mxu0 %v2285
      %3352 = vmatprep.subr.bf16.mxu0 %v2298
      %3353 = vmatpush1.bf16.msra.mxu0 %v2297
      %3354 = vmatprep.subr.bf16.mxu0 %v2310
      %3355 = vmatpush1.bf16.msra.mxu0 %v2309
      %3356 = vmatprep.subr.bf16.mxu0 %v2322
      %3357 = vmatpush1.bf16.msra.mxu0 %v2321
      %3358 = vmatprep.subr.bf16.mxu0 %v2334
      %3359 = vmatpush1.bf16.msra.mxu0 %v2333
      %3360 = vmatprep.subr.bf16.mxu0 %v2346
      %3361 = vmatpush1.bf16.msra.mxu0 %v2345
      %3362 = vmatprep.subr.bf16.mxu0 %v2358
      %3363 = vmatpush1.bf16.msra.mxu0 %v2357
      %3364 = vmatprep.subr.bf16.mxu0 %v2370
      %3365 = vmatpush1.bf16.msra.mxu0 %v2369
      %3366 = vmatprep.subr.bf16.mxu0 %v2382
      %3367 = vmatpush1.bf16.msra.mxu0 %v2381
      %3368 = vmatprep.mubr.bf16.mxu0 %v449
      %3369 = vmatmul.mubr.bf16.gmra.mrb[0].mxu0 %v448
      %v3370 = vpop.f32.mrb[0].mxu0
      %v3371 = vadd.f32 %v3308, %v3370
      %v3372 = vpop.f32.mrb[0].mxu0
      %v3373 = vadd.f32 %v3310, %v3372
      %v3374 = vpop.f32.mrb[0].mxu0
      %v3375 = vadd.f32 %v3312, %v3374
      %v3376 = vpop.f32.mrb[0].mxu0
      %v3377 = vadd.f32 %v3314, %v3376
      %3378 = vmatprep.mubr.bf16.mxu0 %v453
      %3379 = vmatmul.mubr.bf16.gmra.mrb[0].mxu0 %v452
      %v3380 = vpop.f32.mrb[0].mxu0
      %v3381 = vadd.f32 %v3318, %v3380
      %v3382 = vpop.f32.mrb[0].mxu0
      %v3383 = vadd.f32 %v3320, %v3382
      %v3384 = vpop.f32.mrb[0].mxu0
      %v3385 = vadd.f32 %v3322, %v3384
      %v3386 = vpop.f32.mrb[0].mxu0
      %v3387 = vadd.f32 %v3324, %v3386
      %3388 = vmatprep.mubr.bf16.mxu0 %v457
      %3389 = vmatmul.mubr.bf16.gmra.mrb[0].mxu0 %v456
      %v3390 = vpop.f32.mrb[0].mxu0
      %v3391 = vadd.f32 %v3328, %v3390
      %v3392 = vpop.f32.mrb[0].mxu0
      %v3393 = vadd.f32 %v3330, %v3392
      %v3394 = vpop.f32.mrb[0].mxu0
      %v3395 = vadd.f32 %v3332, %v3394
      %v3396 = vpop.f32.mrb[0].mxu0
      %v3397 = vadd.f32 %v3334, %v3396
      %3398 = vdwg.mxu0
      %3399 = vmatprep.subr.bf16.mxu0 %v2012
      %3400 = vmatpush1.bf16.msra.mxu0 %v2011
      %3401 = vmatprep.subr.bf16.mxu0 %v2024
      %3402 = vmatpush1.bf16.msra.mxu0 %v2023
      %3403 = vmatprep.subr.bf16.mxu0 %v2036
      %3404 = vmatpush1.bf16.msra.mxu0 %v2035
      %3405 = vmatprep.subr.bf16.mxu0 %v2048
      %3406 = vmatpush1.bf16.msra.mxu0 %v2047
      %3407 = vmatprep.subr.bf16.mxu0 %v2060
      %3408 = vmatpush1.bf16.msra.mxu0 %v2059
      %3409 = vmatprep.subr.bf16.mxu0 %v2072
      %3410 = vmatpush1.bf16.msra.mxu0 %v2071
      %3411 = vmatprep.subr.bf16.mxu0 %v2084
      %3412 = vmatpush1.bf16.msra.mxu0 %v2083
      %3413 = vmatprep.subr.bf16.mxu0 %v2096
      %3414 = vmatpush1.bf16.msra.mxu0 %v2095
      %3415 = vmatprep.subr.bf16.mxu0 %v2108
      %3416 = vmatpush1.bf16.msra.mxu0 %v2107
      %3417 = vmatprep.subr.bf16.mxu0 %v2120
      %3418 = vmatpush1.bf16.msra.mxu0 %v2119
      %3419 = vmatprep.subr.bf16.mxu0 %v2132
      %3420 = vmatpush1.bf16.msra.mxu0 %v2131
      %3421 = vmatprep.subr.bf16.mxu0 %v2144
      %3422 = vmatpush1.bf16.msra.mxu0 %v2143
      %3423 = vmatprep.subr.bf16.mxu0 %v2156
      %3424 = vmatpush1.bf16.msra.mxu0 %v2155
      %3425 = vmatprep.subr.bf16.mxu0 %v2168
      %3426 = vmatpush1.bf16.msra.mxu0 %v2167
      %3427 = vmatprep.subr.bf16.mxu0 %v2180
      %3428 = vmatpush1.bf16.msra.mxu0 %v2179
      %3429 = vmatprep.subr.bf16.mxu0 %v2192
      %3430 = vmatpush1.bf16.msra.mxu0 %v2191
      %3431 = vmatprep.mubr.bf16.mxu0 %v447
      %3432 = vmatmul.mubr.bf16.gmra.mrb[0].mxu0 %v446
      %v3433 = vpop.f32.mrb[0].mxu0
      %v3434 = vadd.f32 0.0, %v3433
      %v3435 = vpop.f32.mrb[0].mxu0
      %v3436 = vadd.f32 0.0, %v3435
      %v3437 = vpop.f32.mrb[0].mxu0
      %v3438 = vadd.f32 0.0, %v3437
      %v3439 = vpop.f32.mrb[0].mxu0
      %v3440 = vadd.f32 0.0, %v3439
      %3441 = vmatprep.mubr.bf16.mxu0 %v451
      %3442 = vmatmul.mubr.bf16.gmra.mrb[0].mxu0 %v450
      %v3443 = vpop.f32.mrb[0].mxu0
      %v3444 = vadd.f32 0.0, %v3443
      %v3445 = vpop.f32.mrb[0].mxu0
      %v3446 = vadd.f32 0.0, %v3445
      %v3447 = vpop.f32.mrb[0].mxu0
      %v3448 = vadd.f32 0.0, %v3447
      %v3449 = vpop.f32.mrb[0].mxu0
      %v3450 = vadd.f32 0.0, %v3449
      %3451 = vmatprep.mubr.bf16.mxu0 %v455
      %3452 = vmatmul.mubr.bf16.gmra.mrb[0].mxu0 %v454
      %v3453 = vpop.f32.mrb[0].mxu0
      %v3454 = vadd.f32 0.0, %v3453
      %v3455 = vpop.f32.mrb[0].mxu0
      %v3456 = vadd.f32 0.0, %v3455
      %v3457 = vpop.f32.mrb[0].mxu0
      %v3458 = vadd.f32 0.0, %v3457
      %v3459 = vpop.f32.mrb[0].mxu0
      %v3460 = vadd.f32 0.0, %v3459
      %3461 = vdwg.mxu0
      %3462 = vmatprep.subr.bf16.mxu0 %v2204
      %3463 = vmatpush1.bf16.msra.mxu0 %v2203
      %3464 = vmatprep.subr.bf16.mxu0 %v2216
      %3465 = vmatpush1.bf16.msra.mxu0 %v2215
      %3466 = vmatprep.subr.bf16.mxu0 %v2228
      %3467 = vmatpush1.bf16.msra.mxu0 %v2227
      %3468 = vmatprep.subr.bf16.mxu0 %v2240
      %3469 = vmatpush1.bf16.msra.mxu0 %v2239
      %3470 = vmatprep.subr.bf16.mxu0 %v2252
      %3471 = vmatpush1.bf16.msra.mxu0 %v2251
      %3472 = vmatprep.subr.bf16.mxu0 %v2264
      %3473 = vmatpush1.bf16.msra.mxu0 %v2263
      %3474 = vmatprep.subr.bf16.mxu0 %v2276
      %3475 = vmatpush1.bf16.msra.mxu0 %v2275
      %3476 = vmatprep.subr.bf16.mxu0 %v2288
      %3477 = vmatpush1.bf16.msra.mxu0 %v2287
      %3478 = vmatprep.subr.bf16.mxu0 %v2300
      %3479 = vmatpush1.bf16.msra.mxu0 %v2299
      %3480 = vmatprep.subr.bf16.mxu0 %v2312
      %3481 = vmatpush1.bf16.msra.mxu0 %v2311
      %3482 = vmatprep.subr.bf16.mxu0 %v2324
      %3483 = vmatpush1.bf16.msra.mxu0 %v2323
      %3484 = vmatprep.subr.bf16.mxu0 %v2336
      %3485 = vmatpush1.bf16.msra.mxu0 %v2335
      %3486 = vmatprep.subr.bf16.mxu0 %v2348
      %3487 = vmatpush1.bf16.msra.mxu0 %v2347
      %3488 = vmatprep.subr.bf16.mxu0 %v2360
      %3489 = vmatpush1.bf16.msra.mxu0 %v2359
      %3490 = vmatprep.subr.bf16.mxu0 %v2372
      %3491 = vmatpush1.bf16.msra.mxu0 %v2371
      %3492 = vmatprep.subr.bf16.mxu0 %v2384
      %3493 = vmatpush1.bf16.msra.mxu0 %v2383
      %3494 = vmatprep.mubr.bf16.mxu0 %v449
      %3495 = vmatmul.mubr.bf16.gmra.mrb[0].mxu0 %v448
      %v3496 = vpop.f32.mrb[0].mxu0
      %v3497 = vadd.f32 %v3434, %v3496
      %v3498 = vpop.f32.mrb[0].mxu0
      %v3499 = vadd.f32 %v3436, %v3498
      %v3500 = vpop.f32.mrb[0].mxu0
      %v3501 = vadd.f32 %v3438, %v3500
      %v3502 = vpop.f32.mrb[0].mxu0
      %v3503 = vadd.f32 %v3440, %v3502
      %3504 = vmatprep.mubr.bf16.mxu0 %v453
      %3505 = vmatmul.mubr.bf16.gmra.mrb[0].mxu0 %v452
      %v3506 = vpop.f32.mrb[0].mxu0
      %v3507 = vadd.f32 %v3444, %v3506
      %v3508 = vpop.f32.mrb[0].mxu0
      %v3509 = vadd.f32 %v3446, %v3508
      %v3510 = vpop.f32.mrb[0].mxu0
      %v3511 = vadd.f32 %v3448, %v3510
      %v3512 = vpop.f32.mrb[0].mxu0
      %v3513 = vadd.f32 %v3450, %v3512
      %3514 = vmatprep.mubr.bf16.mxu0 %v457
      %3515 = vmatmul.mubr.bf16.gmra.mrb[0].mxu0 %v456
      %v3516 = vpop.f32.mrb[0].mxu0
      %v3517 = vadd.f32 %v3454, %v3516
      %v3518 = vpop.f32.mrb[0].mxu0
      %v3519 = vadd.f32 %v3456, %v3518
      %v3520 = vpop.f32.mrb[0].mxu0
      %v3521 = vadd.f32 %v3458, %v3520
      %v3522 = vpop.f32.mrb[0].mxu0
      %v3523 = vadd.f32 %v3460, %v3522
      %3524 = vdwg.mxu0
      %vm3549 = vcmask 1040384
      %v3550 = vrot.slane %v2867, 7
      %v3551 = vrot.slane %v2869, 7
      %v3552 = vrot.slane %v2993, 7
      %v3553 = vrot.slane %v2995, 7
      %v3554 = vrot.slane %v2871, 7
      %v3555 = vsel %vm3549, %v3550, %v3554
      %v3556 = vrot.slane %v2873, 7
      %v3557 = vsel %vm3549, %v3551, %v3556
      %v3558 = vrot.slane %v2997, 7
      %v3559 = vsel %vm3549, %v3552, %v3558
      %v3560 = vrot.slane %v2999, 7
      %v3561 = vsel %vm3549, %v3553, %v3560
      %v3562 = vrot.slane %v2877, 7
      %v3563 = vsel %vm3549, %v3554, %v3562
      %v3564 = vrot.slane %v2879, 7
      %v3565 = vsel %vm3549, %v3556, %v3564
      %v3566 = vrot.slane %v3003, 7
      %v3567 = vsel %vm3549, %v3558, %v3566
      %v3568 = vrot.slane %v3005, 7
      %v3569 = vsel %vm3549, %v3560, %v3568
      %v3570 = vrot.slane %v2881, 7
      %v3571 = vsel %vm3549, %v3562, %v3570
      %v3572 = vrot.slane %v2883, 7
      %v3573 = vsel %vm3549, %v3564, %v3572
      %v3574 = vrot.slane %v3007, 7
      %v3575 = vsel %vm3549, %v3566, %v3574
      %v3576 = vrot.slane %v3009, 7
      %v3577 = vsel %vm3549, %v3568, %v3576
      %v3578 = vrot.slane %v2887, 7
      %v3579 = vsel %vm3549, %v3570, %v3578
      %v3580 = vrot.slane %v2889, 7
      %v3581 = vsel %vm3549, %v3572, %v3580
      %v3582 = vrot.slane %v3013, 7
      %v3583 = vsel %vm3549, %v3574, %v3582
      %v3584 = vrot.slane %v3015, 7
      %v3585 = vsel %vm3549, %v3576, %v3584
      %v3586 = vrot.slane %v2891, 7
      %v3587 = vsel %vm3549, %v3578, %v3586
      %v3588 = vrot.slane %v2893, 7
      %v3589 = vsel %vm3549, %v3580, %v3588
      %v3590 = vrot.slane %v3017, 7
      %v3591 = vsel %vm3549, %v3582, %v3590
      %v3592 = vrot.slane %v3019, 7
      %v3593 = vsel %vm3549, %v3584, %v3592
      %v3618 = vsel %vm3549, 0.0, %v3550
      %v3619 = vsel %vm3549, 0.0, %v3551
      %v3620 = vsel %vm3549, 0.0, %v3552
      %v3621 = vsel %vm3549, 0.0, %v3553
      %v3622 = vsel %vm461, %v3618, 0.0
      %v3623 = vsel %vm461, %v3619, 0.0
      %v3624 = vsel %vm461, %v3620, 0.0
      %v3625 = vsel %vm461, %v3621, 0.0
      %v3626 = vsel %vm462, %v3555, 0.0
      %v3627 = vsel %vm462, %v3557, 0.0
      %v3628 = vsel %vm462, %v3559, 0.0
      %v3629 = vsel %vm462, %v3561, 0.0
      %v3630 = vsel %vm461, %v3563, 0.0
      %v3631 = vsel %vm461, %v3565, 0.0
      %v3632 = vsel %vm461, %v3567, 0.0
      %v3633 = vsel %vm461, %v3569, 0.0
      %v3634 = vsel %vm462, %v3571, 0.0
      %v3635 = vsel %vm462, %v3573, 0.0
      %v3636 = vsel %vm462, %v3575, 0.0
      %v3637 = vsel %vm462, %v3577, 0.0
      %v3638 = vsel %vm461, %v3579, 0.0
      %v3639 = vsel %vm461, %v3581, 0.0
      %v3640 = vsel %vm461, %v3583, 0.0
      %v3641 = vsel %vm461, %v3585, 0.0
      %v3642 = vsel %vm462, %v3587, 0.0
      %v3643 = vsel %vm462, %v3589, 0.0
      %v3644 = vsel %vm462, %v3591, 0.0
      %v3645 = vsel %vm462, %v3593, 0.0
      %vm3670 = vcmask 1046528
      %v3671 = vrot.slane %v3371, 1
      %v3672 = vrot.slane %v3375, 1
      %v3673 = vsel %vm3670, %v3671, %v3672
      %v3674 = vrot.slane %v3373, 1
      %v3675 = vrot.slane %v3377, 1
      %v3676 = vsel %vm3670, %v3674, %v3675
      %v3677 = vrot.slane %v3497, 1
      %v3678 = vrot.slane %v3501, 1
      %v3679 = vsel %vm3670, %v3677, %v3678
      %v3680 = vrot.slane %v3499, 1
      %v3681 = vrot.slane %v3503, 1
      %v3682 = vsel %vm3670, %v3680, %v3681
      %v3683 = vrot.slane %v3381, 1
      %v3684 = vsel %vm3670, %v3672, %v3683
      %v3685 = vrot.slane %v3383, 1
      %v3686 = vsel %vm3670, %v3675, %v3685
      %v3687 = vrot.slane %v3507, 1
      %v3688 = vsel %vm3670, %v3678, %v3687
      %v3689 = vrot.slane %v3509, 1
      %v3690 = vsel %vm3670, %v3681, %v3689
      %v3691 = vrot.slane %v3385, 1
      %v3692 = vsel %vm3670, %v3683, %v3691
      %v3693 = vrot.slane %v3387, 1
      %v3694 = vsel %vm3670, %v3685, %v3693
      %v3695 = vrot.slane %v3511, 1
      %v3696 = vsel %vm3670, %v3687, %v3695
      %v3697 = vrot.slane %v3513, 1
      %v3698 = vsel %vm3670, %v3689, %v3697
      %v3699 = vrot.slane %v3391, 1
      %v3700 = vsel %vm3670, %v3691, %v3699
      %v3701 = vrot.slane %v3393, 1
      %v3702 = vsel %vm3670, %v3693, %v3701
      %v3703 = vrot.slane %v3517, 1
      %v3704 = vsel %vm3670, %v3695, %v3703
      %v3705 = vrot.slane %v3519, 1
      %v3706 = vsel %vm3670, %v3697, %v3705
      %v3707 = vrot.slane %v3395, 1
      %v3708 = vsel %vm3670, %v3699, %v3707
      %v3709 = vrot.slane %v3397, 1
      %v3710 = vsel %vm3670, %v3701, %v3709
      %v3711 = vrot.slane %v3521, 1
      %v3712 = vsel %vm3670, %v3703, %v3711
      %v3713 = vrot.slane %v3523, 1
      %v3714 = vsel %vm3670, %v3705, %v3713
      %v3739 = vsel %vm3670, %v3707, 0.0
      %v3740 = vsel %vm3670, %v3709, 0.0
      %v3741 = vsel %vm3670, %v3711, 0.0
      %v3742 = vsel %vm3670, %v3713, 0.0
      %v3743 = vsel %vm463, %v3673, 0.0
      %v3744 = vsel %vm463, %v3676, 0.0
      %v3745 = vsel %vm463, %v3679, 0.0
      %v3746 = vsel %vm463, %v3682, 0.0
      %v3747 = vsel %vm464, %v3684, 0.0
      %v3748 = vsel %vm464, %v3686, 0.0
      %v3749 = vsel %vm464, %v3688, 0.0
      %v3750 = vsel %vm464, %v3690, 0.0
      %v3751 = vsel %vm463, %v3692, 0.0
      %v3752 = vsel %vm463, %v3694, 0.0
      %v3753 = vsel %vm463, %v3696, 0.0
      %v3754 = vsel %vm463, %v3698, 0.0
      %v3755 = vsel %vm464, %v3700, 0.0
      %v3756 = vsel %vm464, %v3702, 0.0
      %v3757 = vsel %vm464, %v3704, 0.0
      %v3758 = vsel %vm464, %v3706, 0.0
      %v3759 = vsel %vm463, %v3708, 0.0
      %v3760 = vsel %vm463, %v3710, 0.0
      %v3761 = vsel %vm463, %v3712, 0.0
      %v3762 = vsel %vm463, %v3714, 0.0
      %v3763 = vsel %vm464, %v3739, 0.0
      %v3764 = vsel %vm464, %v3740, 0.0
      %v3765 = vsel %vm464, %v3741, 0.0
      %v3766 = vsel %vm464, %v3742, 0.0
      %v3767 = vadd.f32 %v3622, %v3119
      %v3768 = vadd.f32 %v3623, %v3121
      %v3769 = vadd.f32 %v3624, %v3245
      %v3770 = vadd.f32 %v3625, %v3247
      %v3771 = vadd.f32 %v3626, %v3123
      %v3772 = vadd.f32 %v3627, %v3125
      %v3773 = vadd.f32 %v3628, %v3249
      %v3774 = vadd.f32 %v3629, %v3251
      %v3775 = vadd.f32 %v3630, %v3129
      %v3776 = vadd.f32 %v3631, %v3131
      %v3777 = vadd.f32 %v3632, %v3255
      %v3778 = vadd.f32 %v3633, %v3257
      %v3779 = vadd.f32 %v3634, %v3133
      %v3780 = vadd.f32 %v3635, %v3135
      %v3781 = vadd.f32 %v3636, %v3259
      %v3782 = vadd.f32 %v3637, %v3261
      %v3783 = vadd.f32 %v3638, %v3139
      %v3784 = vadd.f32 %v3639, %v3141
      %v3785 = vadd.f32 %v3640, %v3265
      %v3786 = vadd.f32 %v3641, %v3267
      %v3787 = vadd.f32 %v3642, %v3143
      %v3788 = vadd.f32 %v3643, %v3145
      %v3789 = vadd.f32 %v3644, %v3269
      %v3790 = vadd.f32 %v3645, %v3271
      %v3791 = vadd.f32 %v3767, %v3743
      %v3792 = vadd.f32 %v3768, %v3744
      %v3793 = vadd.f32 %v3769, %v3745
      %v3794 = vadd.f32 %v3770, %v3746
      %v3795 = vadd.f32 %v3771, %v3747
      %v3796 = vadd.f32 %v3772, %v3748
      %v3797 = vadd.f32 %v3773, %v3749
      %v3798 = vadd.f32 %v3774, %v3750
      %v3799 = vadd.f32 %v3775, %v3751
      %v3800 = vadd.f32 %v3776, %v3752
      %v3801 = vadd.f32 %v3777, %v3753
      %v3802 = vadd.f32 %v3778, %v3754
      %v3803 = vadd.f32 %v3779, %v3755
      %v3804 = vadd.f32 %v3780, %v3756
      %v3805 = vadd.f32 %v3781, %v3757
      %v3806 = vadd.f32 %v3782, %v3758
      %v3807 = vadd.f32 %v3783, %v3759
      %v3808 = vadd.f32 %v3784, %v3760
      %v3809 = vadd.f32 %v3785, %v3761
      %v3810 = vadd.f32 %v3786, %v3762
      %v3811 = vadd.f32 %v3787, %v3763
      %v3812 = vadd.f32 %v3788, %v3764
      %v3813 = vadd.f32 %v3789, %v3765
      %v3814 = vadd.f32 %v3790, %v3766
      %v3815 = vld [vmem:[%s2] sm:$0xf]
      %v3817 = vlaneseq
      %v3818 = vshrl.u32 %v3817, 7
      %v3819 = vsub.s32 0, %v3818
      %v3820 = vrot.slane %v3815, %v3819
      %v3821 = vlaneseq
      %v3822 = vshrl.u32 %v3821, 7
      %v3823 = vsub.s32 1, %v3822
      %v3824 = vrot.slane %v3815, %v3823
      %v3825 = vlaneseq
      %v3826 = vshrl.u32 %v3825, 7
      %v3827 = vsub.s32 2, %v3826
      %v3828 = vrot.slane %v3815, %v3827
      %v3829 = vlaneseq
      %v3830 = vshrl.u32 %v3829, 7
      %v3831 = vsub.s32 3, %v3830
      %v3832 = vrot.slane %v3815, %v3831
      %v3837 = vadd.f32 %v3791, %v3820
      %v3838 = vadd.f32 %v3792, %v3824
      %v3839 = vadd.f32 %v3793, %v3828
      %v3840 = vadd.f32 %v3794, %v3832
      %v3841 = vadd.f32 %v3795, %v3820
      %v3842 = vadd.f32 %v3796, %v3824
      %v3843 = vadd.f32 %v3797, %v3828
      %v3844 = vadd.f32 %v3798, %v3832
      %v3845 = vadd.f32 %v3799, %v3820
      %v3846 = vadd.f32 %v3800, %v3824
      %v3847 = vadd.f32 %v3801, %v3828
      %v3848 = vadd.f32 %v3802, %v3832
      %v3849 = vadd.f32 %v3803, %v3820
      %v3850 = vadd.f32 %v3804, %v3824
      %v3851 = vadd.f32 %v3805, %v3828
      %v3852 = vadd.f32 %v3806, %v3832
      %v3853 = vadd.f32 %v3807, %v3820
      %v3854 = vadd.f32 %v3808, %v3824
      %v3855 = vadd.f32 %v3809, %v3828
      %v3856 = vadd.f32 %v3810, %v3832
      %v3857 = vadd.f32 %v3811, %v3820
      %v3858 = vadd.f32 %v3812, %v3824
      %v3859 = vadd.f32 %v3813, %v3828
      %v3860 = vadd.f32 %v3814, %v3832
      %v3861 = vmax.f32 %v3837, 0.0
      %v3862 = vmax.f32 %v3838, 0.0
      %v3863 = vmax.f32 %v3839, 0.0
      %v3864 = vmax.f32 %v3840, 0.0
      %v3865 = vmax.f32 %v3841, 0.0
      %v3866 = vmax.f32 %v3842, 0.0
      %v3867 = vmax.f32 %v3843, 0.0
      %v3868 = vmax.f32 %v3844, 0.0
      %v3869 = vmax.f32 %v3845, 0.0
      %v3870 = vmax.f32 %v3846, 0.0
      %v3871 = vmax.f32 %v3847, 0.0
      %v3872 = vmax.f32 %v3848, 0.0
      %v3873 = vmax.f32 %v3849, 0.0
      %v3874 = vmax.f32 %v3850, 0.0
      %v3875 = vmax.f32 %v3851, 0.0
      %v3876 = vmax.f32 %v3852, 0.0
      %v3877 = vmax.f32 %v3853, 0.0
      %v3878 = vmax.f32 %v3854, 0.0
      %v3879 = vmax.f32 %v3855, 0.0
      %v3880 = vmax.f32 %v3856, 0.0
      %v3881 = vmax.f32 %v3857, 0.0
      %v3882 = vmax.f32 %v3858, 0.0
      %v3883 = vmax.f32 %v3859, 0.0
      %v3884 = vmax.f32 %v3860, 0.0
      %v3885 = vpack.c.bf16 %v3865, %v3861
      %v3886 = vpack.c.bf16 %v3866, %v3862
      %v3887 = vpack.c.bf16 %v3867, %v3863
      %v3888 = vpack.c.bf16 %v3868, %v3864
      %v3889 = vpack.c.bf16 %v3873, %v3869
      %v3890 = vpack.c.bf16 %v3874, %v3870
      %v3891 = vpack.c.bf16 %v3875, %v3871
      %v3892 = vpack.c.bf16 %v3876, %v3872
      %v3893 = vpack.c.bf16 %v3881, %v3877
      %v3894 = vpack.c.bf16 %v3882, %v3878
      %v3895 = vpack.c.bf16 %v3883, %v3879
      %v3896 = vpack.c.bf16 %v3884, %v3880
      %v3897 = vld [vmem:[%s3] sm:$0xff]
      %v3898 = vld [vmem:[%s3 + $0x8] sm:$0xff]
      %v3899 = vld [vmem:[%s3 + $0x10] sm:$0xff]
      %v3900 = vld [vmem:[%s3 + $0x18] sm:$0xff]
      %v3901 = vld [vmem:[%s3 + $0x20] sm:$0xff]
      %v3902 = vld [vmem:[%s3 + $0x28] sm:$0xff]
      %v3903 = vld [vmem:[%s3 + $0x30] sm:$0xff]
      %v3904 = vld [vmem:[%s3 + $0x38] sm:$0xff]
      %v3905 = vld [vmem:[%s3 + $0x40] sm:$0xff]
      %v3906 = vld [vmem:[%s3 + $0x48] sm:$0xff]
      %v3907 = vld [vmem:[%s3 + $0x50] sm:$0xff]
      %v3908 = vld [vmem:[%s3 + $0x58] sm:$0xff]
      %v3909 = vld [vmem:[%s3 + $0x60] sm:$0xff]
      %v3910 = vld [vmem:[%s3 + $0x68] sm:$0xff]
      %v3911 = vld [vmem:[%s3 + $0x70] sm:$0xff]
      %v3912 = vld [vmem:[%s3 + $0x78] sm:$0xff]
      %v3913 = vld [vmem:[%s3 + $0x80] sm:$0xff]
      %v3914 = vld [vmem:[%s3 + $0x88] sm:$0xff]
      %v3915 = vld [vmem:[%s3 + $0x90] sm:$0xff]
      %v3916 = vld [vmem:[%s3 + $0x98] sm:$0xff]
      %v3917 = vld [vmem:[%s3 + $0xa0] sm:$0xff]
      %v3918 = vld [vmem:[%s3 + $0xa8] sm:$0xff]
      %v3919 = vld [vmem:[%s3 + $0xb0] sm:$0xff]
      %v3920 = vld [vmem:[%s3 + $0xb8] sm:$0xff]
      %v3921 = vld [vmem:[%s3 + $0xc0] sm:$0xff]
      %v3922 = vld [vmem:[%s3 + $0xc8] sm:$0xff]
      %v3923 = vld [vmem:[%s3 + $0xd0] sm:$0xff]
      %v3924 = vld [vmem:[%s3 + $0xd8] sm:$0xff]
      %v3925 = vld [vmem:[%s3 + $0xe0] sm:$0xff]
      %v3926 = vld [vmem:[%s3 + $0xe8] sm:$0xff]
      %v3927 = vld [vmem:[%s3 + $0xf0] sm:$0xff]
      %v3928 = vld [vmem:[%s3 + $0xf8] sm:$0xff]
      %v3929 = vld [vmem:[%s3 + $0x100] sm:$0xff]
      %v3930 = vld [vmem:[%s3 + $0x108] sm:$0xff]
      %v3931 = vld [vmem:[%s3 + $0x110] sm:$0xff]
      %v3932 = vld [vmem:[%s3 + $0x118] sm:$0xff]
      %v3933 = vld [vmem:[%s3 + $0x120] sm:$0xff]
      %v3934 = vld [vmem:[%s3 + $0x128] sm:$0xff]
      %v3935 = vld [vmem:[%s3 + $0x130] sm:$0xff]
      %v3936 = vld [vmem:[%s3 + $0x138] sm:$0xff]
      %v3937 = vld [vmem:[%s3 + $0x140] sm:$0xff]
      %v3938 = vld [vmem:[%s3 + $0x148] sm:$0xff]
      %v3939 = vld [vmem:[%s3 + $0x150] sm:$0xff]
      %v3940 = vld [vmem:[%s3 + $0x158] sm:$0xff]
      %v3941 = vld [vmem:[%s3 + $0x160] sm:$0xff]
      %v3942 = vld [vmem:[%s3 + $0x168] sm:$0xff]
      %v3943 = vld [vmem:[%s3 + $0x170] sm:$0xff]
      %v3944 = vld [vmem:[%s3 + $0x178] sm:$0xff]
      %v3945 = vld [vmem:[%s3 + $0x180] sm:$0xff]
      %v3946 = vld [vmem:[%s3 + $0x188] sm:$0xff]
      %v3947 = vld [vmem:[%s3 + $0x190] sm:$0xff]
      %v3948 = vld [vmem:[%s3 + $0x198] sm:$0xff]
      %v3949 = vld [vmem:[%s3 + $0x1a0] sm:$0xff]
      %v3950 = vld [vmem:[%s3 + $0x1a8] sm:$0xff]
      %v3951 = vld [vmem:[%s3 + $0x1b0] sm:$0xff]
      %v3952 = vld [vmem:[%s3 + $0x1b8] sm:$0xff]
      %v3953 = vld [vmem:[%s3 + $0x1c0] sm:$0xff]
      %v3954 = vld [vmem:[%s3 + $0x1c8] sm:$0xff]
      %v3955 = vld [vmem:[%s3 + $0x1d0] sm:$0xff]
      %v3956 = vld [vmem:[%s3 + $0x1d8] sm:$0xff]
      %v3957 = vld [vmem:[%s3 + $0x1e0] sm:$0xff]
      %v3958 = vld [vmem:[%s3 + $0x1e8] sm:$0xff]
      %v3959 = vld [vmem:[%s3 + $0x1f0] sm:$0xff]
      %v3960 = vld [vmem:[%s3 + $0x1f8] sm:$0xff]
      %v3961 = vld [vmem:[%s3 + $0x200] sm:$0xff]
      %v3962 = vld [vmem:[%s3 + $0x208] sm:$0xff]
      %v3963 = vld [vmem:[%s3 + $0x210] sm:$0xff]
      %v3964 = vld [vmem:[%s3 + $0x218] sm:$0xff]
      %v3965 = vld [vmem:[%s3 + $0x220] sm:$0xff]
      %v3966 = vld [vmem:[%s3 + $0x228] sm:$0xff]
      %v3967 = vld [vmem:[%s3 + $0x230] sm:$0xff]
      %v3968 = vld [vmem:[%s3 + $0x238] sm:$0xff]
      %v3969 = vld [vmem:[%s3 + $0x240] sm:$0xff]
      %v3970 = vld [vmem:[%s3 + $0x248] sm:$0xff]
      %v3971 = vld [vmem:[%s3 + $0x250] sm:$0xff]
      %v3972 = vld [vmem:[%s3 + $0x258] sm:$0xff]
      %v3973 = vld [vmem:[%s3 + $0x260] sm:$0xff]
      %v3974 = vld [vmem:[%s3 + $0x268] sm:$0xff]
      %v3975 = vld [vmem:[%s3 + $0x270] sm:$0xff]
      %v3976 = vld [vmem:[%s3 + $0x278] sm:$0xff]
      %v3977 = vld [vmem:[%s3 + $0x280] sm:$0xff]
      %v3978 = vld [vmem:[%s3 + $0x288] sm:$0xff]
      %v3979 = vld [vmem:[%s3 + $0x290] sm:$0xff]
      %v3980 = vld [vmem:[%s3 + $0x298] sm:$0xff]
      %v3981 = vld [vmem:[%s3 + $0x2a0] sm:$0xff]
      %v3982 = vld [vmem:[%s3 + $0x2a8] sm:$0xff]
      %v3983 = vld [vmem:[%s3 + $0x2b0] sm:$0xff]
      %v3984 = vld [vmem:[%s3 + $0x2b8] sm:$0xff]
      %v3985 = vld [vmem:[%s3 + $0x2c0] sm:$0xff]
      %v3986 = vld [vmem:[%s3 + $0x2c8] sm:$0xff]
      %v3987 = vld [vmem:[%s3 + $0x2d0] sm:$0xff]
      %v3988 = vld [vmem:[%s3 + $0x2d8] sm:$0xff]
      %v3989 = vld [vmem:[%s3 + $0x2e0] sm:$0xff]
      %v3990 = vld [vmem:[%s3 + $0x2e8] sm:$0xff]
      %v3991 = vld [vmem:[%s3 + $0x2f0] sm:$0xff]
      %v3992 = vld [vmem:[%s3 + $0x2f8] sm:$0xff]
      %v3993 = vld [vmem:[%s3 + $0x300] sm:$0xff]
      %v3994 = vld [vmem:[%s3 + $0x308] sm:$0xff]
      %v3995 = vld [vmem:[%s3 + $0x310] sm:$0xff]
      %v3996 = vld [vmem:[%s3 + $0x318] sm:$0xff]
      %v3997 = vld [vmem:[%s3 + $0x320] sm:$0xff]
      %v3998 = vld [vmem:[%s3 + $0x328] sm:$0xff]
      %v3999 = vld [vmem:[%s3 + $0x330] sm:$0xff]
      %v4000 = vld [vmem:[%s3 + $0x338] sm:$0xff]
      %v4001 = vld [vmem:[%s3 + $0x340] sm:$0xff]
      %v4002 = vld [vmem:[%s3 + $0x348] sm:$0xff]
      %v4003 = vld [vmem:[%s3 + $0x350] sm:$0xff]
      %v4004 = vld [vmem:[%s3 + $0x358] sm:$0xff]
      %v4005 = vld [vmem:[%s3 + $0x360] sm:$0xff]
      %v4006 = vld [vmem:[%s3 + $0x368] sm:$0xff]
      %v4007 = vld [vmem:[%s3 + $0x370] sm:$0xff]
      %v4008 = vld [vmem:[%s3 + $0x378] sm:$0xff]
      %v4009 = vld [vmem:[%s3 + $0x380] sm:$0xff]
      %v4010 = vld [vmem:[%s3 + $0x388] sm:$0xff]
      %v4011 = vld [vmem:[%s3 + $0x390] sm:$0xff]
      %v4012 = vld [vmem:[%s3 + $0x398] sm:$0xff]
      %v4013 = vld [vmem:[%s3 + $0x3a0] sm:$0xff]
      %v4014 = vld [vmem:[%s3 + $0x3a8] sm:$0xff]
      %v4015 = vld [vmem:[%s3 + $0x3b0] sm:$0xff]
      %v4016 = vld [vmem:[%s3 + $0x3b8] sm:$0xff]
      %v4017 = vld [vmem:[%s3 + $0x3c0] sm:$0xff]
      %v4018 = vld [vmem:[%s3 + $0x3c8] sm:$0xff]
      %v4019 = vld [vmem:[%s3 + $0x3d0] sm:$0xff]
      %v4020 = vld [vmem:[%s3 + $0x3d8] sm:$0xff]
      %v4021 = vld [vmem:[%s3 + $0x3e0] sm:$0xff]
      %v4022 = vld [vmem:[%s3 + $0x3e8] sm:$0xff]
      %v4023 = vld [vmem:[%s3 + $0x3f0] sm:$0xff]
      %v4024 = vld [vmem:[%s3 + $0x3f8] sm:$0xff]
      %v4025 = vld [vmem:[%s3 + $0x400] sm:$0xff]
      %v4026 = vld [vmem:[%s3 + $0x408] sm:$0xff]
      %v4027 = vld [vmem:[%s3 + $0x410] sm:$0xff]
      %v4028 = vld [vmem:[%s3 + $0x418] sm:$0xff]
      %v4029 = vld [vmem:[%s3 + $0x420] sm:$0xff]
      %v4030 = vld [vmem:[%s3 + $0x428] sm:$0xff]
      %v4031 = vld [vmem:[%s3 + $0x430] sm:$0xff]
      %v4032 = vld [vmem:[%s3 + $0x438] sm:$0xff]
      %v4033 = vld [vmem:[%s3 + $0x440] sm:$0xff]
      %v4034 = vld [vmem:[%s3 + $0x448] sm:$0xff]
      %v4035 = vld [vmem:[%s3 + $0x450] sm:$0xff]
      %v4036 = vld [vmem:[%s3 + $0x458] sm:$0xff]
      %v4037 = vld [vmem:[%s3 + $0x460] sm:$0xff]
      %v4038 = vld [vmem:[%s3 + $0x468] sm:$0xff]
      %v4039 = vld [vmem:[%s3 + $0x470] sm:$0xff]
      %v4040 = vld [vmem:[%s3 + $0x478] sm:$0xff]
      %v4041 = vld [vmem:[%s3 + $0x480] sm:$0xff]
      %v4042 = vld [vmem:[%s3 + $0x488] sm:$0xff]
      %v4043 = vld [vmem:[%s3 + $0x490] sm:$0xff]
      %v4044 = vld [vmem:[%s3 + $0x498] sm:$0xff]
      %v4045 = vld [vmem:[%s3 + $0x4a0] sm:$0xff]
      %v4046 = vld [vmem:[%s3 + $0x4a8] sm:$0xff]
      %v4047 = vld [vmem:[%s3 + $0x4b0] sm:$0xff]
      %v4048 = vld [vmem:[%s3 + $0x4b8] sm:$0xff]
      %v4049 = vld [vmem:[%s3 + $0x4c0] sm:$0xff]
      %v4050 = vld [vmem:[%s3 + $0x4c8] sm:$0xff]
      %v4051 = vld [vmem:[%s3 + $0x4d0] sm:$0xff]
      %v4052 = vld [vmem:[%s3 + $0x4d8] sm:$0xff]
      %v4053 = vld [vmem:[%s3 + $0x4e0] sm:$0xff]
      %v4054 = vld [vmem:[%s3 + $0x4e8] sm:$0xff]
      %v4055 = vld [vmem:[%s3 + $0x4f0] sm:$0xff]
      %v4056 = vld [vmem:[%s3 + $0x4f8] sm:$0xff]
      %v4057 = vld [vmem:[%s3 + $0x500] sm:$0xff]
      %v4058 = vld [vmem:[%s3 + $0x508] sm:$0xff]
      %v4059 = vld [vmem:[%s3 + $0x510] sm:$0xff]
      %v4060 = vld [vmem:[%s3 + $0x518] sm:$0xff]
      %v4061 = vld [vmem:[%s3 + $0x520] sm:$0xff]
      %v4062 = vld [vmem:[%s3 + $0x528] sm:$0xff]
      %v4063 = vld [vmem:[%s3 + $0x530] sm:$0xff]
      %v4064 = vld [vmem:[%s3 + $0x538] sm:$0xff]
      %v4065 = vld [vmem:[%s3 + $0x540] sm:$0xff]
      %v4066 = vld [vmem:[%s3 + $0x548] sm:$0xff]
      %v4067 = vld [vmem:[%s3 + $0x550] sm:$0xff]
      %v4068 = vld [vmem:[%s3 + $0x558] sm:$0xff]
      %v4069 = vld [vmem:[%s3 + $0x560] sm:$0xff]
      %v4070 = vld [vmem:[%s3 + $0x568] sm:$0xff]
      %v4071 = vld [vmem:[%s3 + $0x570] sm:$0xff]
      %v4072 = vld [vmem:[%s3 + $0x578] sm:$0xff]
      %v4073 = vld [vmem:[%s3 + $0x580] sm:$0xff]
      %v4074 = vld [vmem:[%s3 + $0x588] sm:$0xff]
      %v4075 = vld [vmem:[%s3 + $0x590] sm:$0xff]
      %v4076 = vld [vmem:[%s3 + $0x598] sm:$0xff]
      %v4077 = vld [vmem:[%s3 + $0x5a0] sm:$0xff]
      %v4078 = vld [vmem:[%s3 + $0x5a8] sm:$0xff]
      %v4079 = vld [vmem:[%s3 + $0x5b0] sm:$0xff]
      %v4080 = vld [vmem:[%s3 + $0x5b8] sm:$0xff]
      %v4081 = vld [vmem:[%s3 + $0x5c0] sm:$0xff]
      %v4082 = vld [vmem:[%s3 + $0x5c8] sm:$0xff]
      %v4083 = vld [vmem:[%s3 + $0x5d0] sm:$0xff]
      %v4084 = vld [vmem:[%s3 + $0x5d8] sm:$0xff]
      %v4085 = vld [vmem:[%s3 + $0x5e0] sm:$0xff]
      %v4086 = vld [vmem:[%s3 + $0x5e8] sm:$0xff]
      %v4087 = vld [vmem:[%s3 + $0x5f0] sm:$0xff]
      %v4088 = vld [vmem:[%s3 + $0x5f8] sm:$0xff]
      %v4089 = vld [vmem:[%s3 + $0x600] sm:$0xff]
      %v4090 = vld [vmem:[%s3 + $0x608] sm:$0xff]
      %v4091 = vld [vmem:[%s3 + $0x610] sm:$0xff]
      %v4092 = vld [vmem:[%s3 + $0x618] sm:$0xff]
      %v4093 = vld [vmem:[%s3 + $0x620] sm:$0xff]
      %v4094 = vld [vmem:[%s3 + $0x628] sm:$0xff]
      %v4095 = vld [vmem:[%s3 + $0x630] sm:$0xff]
      %v4096 = vld [vmem:[%s3 + $0x638] sm:$0xff]
      %v4097 = vld [vmem:[%s3 + $0x640] sm:$0xff]
      %v4098 = vld [vmem:[%s3 + $0x648] sm:$0xff]
      %v4099 = vld [vmem:[%s3 + $0x650] sm:$0xff]
      %v4100 = vld [vmem:[%s3 + $0x658] sm:$0xff]
      %v4101 = vld [vmem:[%s3 + $0x660] sm:$0xff]
      %v4102 = vld [vmem:[%s3 + $0x668] sm:$0xff]
      %v4103 = vld [vmem:[%s3 + $0x670] sm:$0xff]
      %v4104 = vld [vmem:[%s3 + $0x678] sm:$0xff]
      %v4105 = vld [vmem:[%s3 + $0x680] sm:$0xff]
      %v4106 = vld [vmem:[%s3 + $0x688] sm:$0xff]
      %v4107 = vld [vmem:[%s3 + $0x690] sm:$0xff]
      %v4108 = vld [vmem:[%s3 + $0x698] sm:$0xff]
      %v4109 = vld [vmem:[%s3 + $0x6a0] sm:$0xff]
      %v4110 = vld [vmem:[%s3 + $0x6a8] sm:$0xff]
      %v4111 = vld [vmem:[%s3 + $0x6b0] sm:$0xff]
      %v4112 = vld [vmem:[%s3 + $0x6b8] sm:$0xff]
      %v4113 = vld [vmem:[%s3 + $0x6c0] sm:$0xff]
      %v4114 = vld [vmem:[%s3 + $0x6c8] sm:$0xff]
      %v4115 = vld [vmem:[%s3 + $0x6d0] sm:$0xff]
      %v4116 = vld [vmem:[%s3 + $0x6d8] sm:$0xff]
      %v4117 = vld [vmem:[%s3 + $0x6e0] sm:$0xff]
      %v4118 = vld [vmem:[%s3 + $0x6e8] sm:$0xff]
      %v4119 = vld [vmem:[%s3 + $0x6f0] sm:$0xff]
      %v4120 = vld [vmem:[%s3 + $0x6f8] sm:$0xff]
      %v4121 = vld [vmem:[%s3 + $0x700] sm:$0xff]
      %v4122 = vld [vmem:[%s3 + $0x708] sm:$0xff]
      %v4123 = vld [vmem:[%s3 + $0x710] sm:$0xff]
      %v4124 = vld [vmem:[%s3 + $0x718] sm:$0xff]
      %v4125 = vld [vmem:[%s3 + $0x720] sm:$0xff]
      %v4126 = vld [vmem:[%s3 + $0x728] sm:$0xff]
      %v4127 = vld [vmem:[%s3 + $0x730] sm:$0xff]
      %v4128 = vld [vmem:[%s3 + $0x738] sm:$0xff]
      %v4129 = vld [vmem:[%s3 + $0x740] sm:$0xff]
      %v4130 = vld [vmem:[%s3 + $0x748] sm:$0xff]
      %v4131 = vld [vmem:[%s3 + $0x750] sm:$0xff]
      %v4132 = vld [vmem:[%s3 + $0x758] sm:$0xff]
      %v4133 = vld [vmem:[%s3 + $0x760] sm:$0xff]
      %v4134 = vld [vmem:[%s3 + $0x768] sm:$0xff]
      %v4135 = vld [vmem:[%s3 + $0x770] sm:$0xff]
      %v4136 = vld [vmem:[%s3 + $0x778] sm:$0xff]
      %v4137 = vld [vmem:[%s3 + $0x780] sm:$0xff]
      %v4138 = vld [vmem:[%s3 + $0x788] sm:$0xff]
      %v4139 = vld [vmem:[%s3 + $0x790] sm:$0xff]
      %v4140 = vld [vmem:[%s3 + $0x798] sm:$0xff]
      %v4141 = vld [vmem:[%s3 + $0x7a0] sm:$0xff]
      %v4142 = vld [vmem:[%s3 + $0x7a8] sm:$0xff]
      %v4143 = vld [vmem:[%s3 + $0x7b0] sm:$0xff]
      %v4144 = vld [vmem:[%s3 + $0x7b8] sm:$0xff]
      %v4145 = vld [vmem:[%s3 + $0x7c0] sm:$0xff]
      %v4146 = vld [vmem:[%s3 + $0x7c8] sm:$0xff]
      %v4147 = vld [vmem:[%s3 + $0x7d0] sm:$0xff]
      %v4148 = vld [vmem:[%s3 + $0x7d8] sm:$0xff]
      %v4149 = vld [vmem:[%s3 + $0x7e0] sm:$0xff]
      %v4150 = vld [vmem:[%s3 + $0x7e8] sm:$0xff]
      %v4151 = vld [vmem:[%s3 + $0x7f0] sm:$0xff]
      %v4152 = vld [vmem:[%s3 + $0x7f8] sm:$0xff]
      %v4153 = vld [vmem:[%s3 + $0x800] sm:$0xff]
      %v4154 = vld [vmem:[%s3 + $0x808] sm:$0xff]
      %v4155 = vld [vmem:[%s3 + $0x810] sm:$0xff]
      %v4156 = vld [vmem:[%s3 + $0x818] sm:$0xff]
      %v4157 = vld [vmem:[%s3 + $0x820] sm:$0xff]
      %v4158 = vld [vmem:[%s3 + $0x828] sm:$0xff]
      %v4159 = vld [vmem:[%s3 + $0x830] sm:$0xff]
      %v4160 = vld [vmem:[%s3 + $0x838] sm:$0xff]
      %v4161 = vld [vmem:[%s3 + $0x840] sm:$0xff]
      %v4162 = vld [vmem:[%s3 + $0x848] sm:$0xff]
      %v4163 = vld [vmem:[%s3 + $0x850] sm:$0xff]
      %v4164 = vld [vmem:[%s3 + $0x858] sm:$0xff]
      %v4165 = vld [vmem:[%s3 + $0x860] sm:$0xff]
      %v4166 = vld [vmem:[%s3 + $0x868] sm:$0xff]
      %v4167 = vld [vmem:[%s3 + $0x870] sm:$0xff]
      %v4168 = vld [vmem:[%s3 + $0x878] sm:$0xff]
      %v4169 = vld [vmem:[%s3 + $0x880] sm:$0xff]
      %v4170 = vld [vmem:[%s3 + $0x888] sm:$0xff]
      %v4171 = vld [vmem:[%s3 + $0x890] sm:$0xff]
      %v4172 = vld [vmem:[%s3 + $0x898] sm:$0xff]
      %v4173 = vld [vmem:[%s3 + $0x8a0] sm:$0xff]
      %v4174 = vld [vmem:[%s3 + $0x8a8] sm:$0xff]
      %v4175 = vld [vmem:[%s3 + $0x8b0] sm:$0xff]
      %v4176 = vld [vmem:[%s3 + $0x8b8] sm:$0xff]
      %v4177 = vld [vmem:[%s3 + $0x8c0] sm:$0xff]
      %v4178 = vld [vmem:[%s3 + $0x8c8] sm:$0xff]
      %v4179 = vld [vmem:[%s3 + $0x8d0] sm:$0xff]
      %v4180 = vld [vmem:[%s3 + $0x8d8] sm:$0xff]
      %v4181 = vld [vmem:[%s3 + $0x8e0] sm:$0xff]
      %v4182 = vld [vmem:[%s3 + $0x8e8] sm:$0xff]
      %v4183 = vld [vmem:[%s3 + $0x8f0] sm:$0xff]
      %v4184 = vld [vmem:[%s3 + $0x8f8] sm:$0xff]
      %v4185 = vld [vmem:[%s3 + $0x900] sm:$0xff]
      %v4186 = vld [vmem:[%s3 + $0x908] sm:$0xff]
      %v4187 = vld [vmem:[%s3 + $0x910] sm:$0xff]
      %v4188 = vld [vmem:[%s3 + $0x918] sm:$0xff]
      %v4189 = vld [vmem:[%s3 + $0x920] sm:$0xff]
      %v4190 = vld [vmem:[%s3 + $0x928] sm:$0xff]
      %v4191 = vld [vmem:[%s3 + $0x930] sm:$0xff]
      %v4192 = vld [vmem:[%s3 + $0x938] sm:$0xff]
      %v4193 = vld [vmem:[%s3 + $0x940] sm:$0xff]
      %v4194 = vld [vmem:[%s3 + $0x948] sm:$0xff]
      %v4195 = vld [vmem:[%s3 + $0x950] sm:$0xff]
      %v4196 = vld [vmem:[%s3 + $0x958] sm:$0xff]
      %v4197 = vld [vmem:[%s3 + $0x960] sm:$0xff]
      %v4198 = vld [vmem:[%s3 + $0x968] sm:$0xff]
      %v4199 = vld [vmem:[%s3 + $0x970] sm:$0xff]
      %v4200 = vld [vmem:[%s3 + $0x978] sm:$0xff]
      %v4201 = vld [vmem:[%s3 + $0x980] sm:$0xff]
      %v4202 = vld [vmem:[%s3 + $0x988] sm:$0xff]
      %v4203 = vld [vmem:[%s3 + $0x990] sm:$0xff]
      %v4204 = vld [vmem:[%s3 + $0x998] sm:$0xff]
      %v4205 = vld [vmem:[%s3 + $0x9a0] sm:$0xff]
      %v4206 = vld [vmem:[%s3 + $0x9a8] sm:$0xff]
      %v4207 = vld [vmem:[%s3 + $0x9b0] sm:$0xff]
      %v4208 = vld [vmem:[%s3 + $0x9b8] sm:$0xff]
      %v4209 = vld [vmem:[%s3 + $0x9c0] sm:$0xff]
      %v4210 = vld [vmem:[%s3 + $0x9c8] sm:$0xff]
      %v4211 = vld [vmem:[%s3 + $0x9d0] sm:$0xff]
      %v4212 = vld [vmem:[%s3 + $0x9d8] sm:$0xff]
      %v4213 = vld [vmem:[%s3 + $0x9e0] sm:$0xff]
      %v4214 = vld [vmem:[%s3 + $0x9e8] sm:$0xff]
      %v4215 = vld [vmem:[%s3 + $0x9f0] sm:$0xff]
      %v4216 = vld [vmem:[%s3 + $0x9f8] sm:$0xff]
      %v4217 = vld [vmem:[%s3 + $0xa00] sm:$0xff]
      %v4218 = vld [vmem:[%s3 + $0xa08] sm:$0xff]
      %v4219 = vld [vmem:[%s3 + $0xa10] sm:$0xff]
      %v4220 = vld [vmem:[%s3 + $0xa18] sm:$0xff]
      %v4221 = vld [vmem:[%s3 + $0xa20] sm:$0xff]
      %v4222 = vld [vmem:[%s3 + $0xa28] sm:$0xff]
      %v4223 = vld [vmem:[%s3 + $0xa30] sm:$0xff]
      %v4224 = vld [vmem:[%s3 + $0xa38] sm:$0xff]
      %v4225 = vld [vmem:[%s3 + $0xa40] sm:$0xff]
      %v4226 = vld [vmem:[%s3 + $0xa48] sm:$0xff]
      %v4227 = vld [vmem:[%s3 + $0xa50] sm:$0xff]
      %v4228 = vld [vmem:[%s3 + $0xa58] sm:$0xff]
      %v4229 = vld [vmem:[%s3 + $0xa60] sm:$0xff]
      %v4230 = vld [vmem:[%s3 + $0xa68] sm:$0xff]
      %v4231 = vld [vmem:[%s3 + $0xa70] sm:$0xff]
      %v4232 = vld [vmem:[%s3 + $0xa78] sm:$0xff]
      %v4233 = vld [vmem:[%s3 + $0xa80] sm:$0xff]
      %v4234 = vld [vmem:[%s3 + $0xa88] sm:$0xff]
      %v4235 = vld [vmem:[%s3 + $0xa90] sm:$0xff]
      %v4236 = vld [vmem:[%s3 + $0xa98] sm:$0xff]
      %v4237 = vld [vmem:[%s3 + $0xaa0] sm:$0xff]
      %v4238 = vld [vmem:[%s3 + $0xaa8] sm:$0xff]
      %v4239 = vld [vmem:[%s3 + $0xab0] sm:$0xff]
      %v4240 = vld [vmem:[%s3 + $0xab8] sm:$0xff]
      %v4241 = vld [vmem:[%s3 + $0xac0] sm:$0xff]
      %v4242 = vld [vmem:[%s3 + $0xac8] sm:$0xff]
      %v4243 = vld [vmem:[%s3 + $0xad0] sm:$0xff]
      %v4244 = vld [vmem:[%s3 + $0xad8] sm:$0xff]
      %v4245 = vld [vmem:[%s3 + $0xae0] sm:$0xff]
      %v4246 = vld [vmem:[%s3 + $0xae8] sm:$0xff]
      %v4247 = vld [vmem:[%s3 + $0xaf0] sm:$0xff]
      %v4248 = vld [vmem:[%s3 + $0xaf8] sm:$0xff]
      %v4249 = vld [vmem:[%s3 + $0xb00] sm:$0xff]
      %v4250 = vld [vmem:[%s3 + $0xb08] sm:$0xff]
      %v4251 = vld [vmem:[%s3 + $0xb10] sm:$0xff]
      %v4252 = vld [vmem:[%s3 + $0xb18] sm:$0xff]
      %v4253 = vld [vmem:[%s3 + $0xb20] sm:$0xff]
      %v4254 = vld [vmem:[%s3 + $0xb28] sm:$0xff]
      %v4255 = vld [vmem:[%s3 + $0xb30] sm:$0xff]
      %v4256 = vld [vmem:[%s3 + $0xb38] sm:$0xff]
      %v4257 = vld [vmem:[%s3 + $0xb40] sm:$0xff]
      %v4258 = vld [vmem:[%s3 + $0xb48] sm:$0xff]
      %v4259 = vld [vmem:[%s3 + $0xb50] sm:$0xff]
      %v4260 = vld [vmem:[%s3 + $0xb58] sm:$0xff]
      %v4261 = vld [vmem:[%s3 + $0xb60] sm:$0xff]
      %v4262 = vld [vmem:[%s3 + $0xb68] sm:$0xff]
      %v4263 = vld [vmem:[%s3 + $0xb70] sm:$0xff]
      %v4264 = vld [vmem:[%s3 + $0xb78] sm:$0xff]
      %v4265 = vld [vmem:[%s3 + $0xb80] sm:$0xff]
      %v4266 = vld [vmem:[%s3 + $0xb88] sm:$0xff]
      %v4267 = vld [vmem:[%s3 + $0xb90] sm:$0xff]
      %v4268 = vld [vmem:[%s3 + $0xb98] sm:$0xff]
      %v4269 = vld [vmem:[%s3 + $0xba0] sm:$0xff]
      %v4270 = vld [vmem:[%s3 + $0xba8] sm:$0xff]
      %v4271 = vld [vmem:[%s3 + $0xbb0] sm:$0xff]
      %v4272 = vld [vmem:[%s3 + $0xbb8] sm:$0xff]
      %v4273 = vld [vmem:[%s3 + $0xbc0] sm:$0xff]
      %v4274 = vld [vmem:[%s3 + $0xbc8] sm:$0xff]
      %v4275 = vld [vmem:[%s3 + $0xbd0] sm:$0xff]
      %v4276 = vld [vmem:[%s3 + $0xbd8] sm:$0xff]
      %v4277 = vld [vmem:[%s3 + $0xbe0] sm:$0xff]
      %v4278 = vld [vmem:[%s3 + $0xbe8] sm:$0xff]
      %v4279 = vld [vmem:[%s3 + $0xbf0] sm:$0xff]
      %v4280 = vld [vmem:[%s3 + $0xbf8] sm:$0xff]
      %v4665 = vunpack.c.l.b16 %v3897
      %v4666 = vunpack.c.h.b16 %v3897
      %v4667 = vunpack.c.l.b16 %v3898
      %v4668 = vunpack.c.h.b16 %v3898
      %v4669 = vunpack.c.l.b16 %v3899
      %v4670 = vunpack.c.h.b16 %v3899
      %v4671 = vunpack.c.l.b16 %v3900
      %v4672 = vunpack.c.h.b16 %v3900
      %v4673 = vunpack.c.l.b16 %v3901
      %v4674 = vunpack.c.h.b16 %v3901
      %v4675 = vunpack.c.l.b16 %v3902
      %v4676 = vunpack.c.h.b16 %v3902
      %v4677 = vunpack.c.l.b16 %v3903
      %v4678 = vunpack.c.h.b16 %v3903
      %v4679 = vunpack.c.l.b16 %v3904
      %v4680 = vunpack.c.h.b16 %v3904
      %v4681 = vunpack.c.l.b16 %v3905
      %v4682 = vunpack.c.h.b16 %v3905
      %v4683 = vunpack.c.l.b16 %v3906
      %v4684 = vunpack.c.h.b16 %v3906
      %v4685 = vunpack.c.l.b16 %v3907
      %v4686 = vunpack.c.h.b16 %v3907
      %v4687 = vunpack.c.l.b16 %v3908
      %v4688 = vunpack.c.h.b16 %v3908
      %v4689 = vunpack.c.l.b16 %v3909
      %v4690 = vunpack.c.h.b16 %v3909
      %v4691 = vunpack.c.l.b16 %v3910
      %v4692 = vunpack.c.h.b16 %v3910
      %v4693 = vunpack.c.l.b16 %v3911
      %v4694 = vunpack.c.h.b16 %v3911
      %v4695 = vunpack.c.l.b16 %v3912
      %v4696 = vunpack.c.h.b16 %v3912
      %v4697 = vunpack.c.l.b16 %v3913
      %v4698 = vunpack.c.h.b16 %v3913
      %v4699 = vunpack.c.l.b16 %v3914
      %v4700 = vunpack.c.h.b16 %v3914
      %v4701 = vunpack.c.l.b16 %v3915
      %v4702 = vunpack.c.h.b16 %v3915
      %v4703 = vunpack.c.l.b16 %v3916
      %v4704 = vunpack.c.h.b16 %v3916
      %v4705 = vunpack.c.l.b16 %v3917
      %v4706 = vunpack.c.h.b16 %v3917
      %v4707 = vunpack.c.l.b16 %v3918
      %v4708 = vunpack.c.h.b16 %v3918
      %v4709 = vunpack.c.l.b16 %v3919
      %v4710 = vunpack.c.h.b16 %v3919
      %v4711 = vunpack.c.l.b16 %v3920
      %v4712 = vunpack.c.h.b16 %v3920
      %v4713 = vunpack.c.l.b16 %v3921
      %v4714 = vunpack.c.h.b16 %v3921
      %v4715 = vunpack.c.l.b16 %v3922
      %v4716 = vunpack.c.h.b16 %v3922
      %v4717 = vunpack.c.l.b16 %v3923
      %v4718 = vunpack.c.h.b16 %v3923
      %v4719 = vunpack.c.l.b16 %v3924
      %v4720 = vunpack.c.h.b16 %v3924
      %v4721 = vunpack.c.l.b16 %v3925
      %v4722 = vunpack.c.h.b16 %v3925
      %v4723 = vunpack.c.l.b16 %v3926
      %v4724 = vunpack.c.h.b16 %v3926
      %v4725 = vunpack.c.l.b16 %v3927
      %v4726 = vunpack.c.h.b16 %v3927
      %v4727 = vunpack.c.l.b16 %v3928
      %v4728 = vunpack.c.h.b16 %v3928
      %v4729 = vunpack.c.l.b16 %v3929
      %v4730 = vunpack.c.h.b16 %v3929
      %v4731 = vunpack.c.l.b16 %v3930
      %v4732 = vunpack.c.h.b16 %v3930
      %v4733 = vunpack.c.l.b16 %v3931
      %v4734 = vunpack.c.h.b16 %v3931
      %v4735 = vunpack.c.l.b16 %v3932
      %v4736 = vunpack.c.h.b16 %v3932
      %v4737 = vunpack.c.l.b16 %v3933
      %v4738 = vunpack.c.h.b16 %v3933
      %v4739 = vunpack.c.l.b16 %v3934
      %v4740 = vunpack.c.h.b16 %v3934
      %v4741 = vunpack.c.l.b16 %v3935
      %v4742 = vunpack.c.h.b16 %v3935
      %v4743 = vunpack.c.l.b16 %v3936
      %v4744 = vunpack.c.h.b16 %v3936
      %v4745 = vunpack.c.l.b16 %v3937
      %v4746 = vunpack.c.h.b16 %v3937
      %v4747 = vunpack.c.l.b16 %v3938
      %v4748 = vunpack.c.h.b16 %v3938
      %v4749 = vunpack.c.l.b16 %v3939
      %v4750 = vunpack.c.h.b16 %v3939
      %v4751 = vunpack.c.l.b16 %v3940
      %v4752 = vunpack.c.h.b16 %v3940
      %v4753 = vunpack.c.l.b16 %v3941
      %v4754 = vunpack.c.h.b16 %v3941
      %v4755 = vunpack.c.l.b16 %v3942
      %v4756 = vunpack.c.h.b16 %v3942
      %v4757 = vunpack.c.l.b16 %v3943
      %v4758 = vunpack.c.h.b16 %v3943
      %v4759 = vunpack.c.l.b16 %v3944
      %v4760 = vunpack.c.h.b16 %v3944
      %v4761 = vunpack.c.l.b16 %v3945
      %v4762 = vunpack.c.h.b16 %v3945
      %v4763 = vunpack.c.l.b16 %v3946
      %v4764 = vunpack.c.h.b16 %v3946
      %v4765 = vunpack.c.l.b16 %v3947
      %v4766 = vunpack.c.h.b16 %v3947
      %v4767 = vunpack.c.l.b16 %v3948
      %v4768 = vunpack.c.h.b16 %v3948
      %v4769 = vunpack.c.l.b16 %v3949
      %v4770 = vunpack.c.h.b16 %v3949
      %v4771 = vunpack.c.l.b16 %v3950
      %v4772 = vunpack.c.h.b16 %v3950
      %v4773 = vunpack.c.l.b16 %v3951
      %v4774 = vunpack.c.h.b16 %v3951
      %v4775 = vunpack.c.l.b16 %v3952
      %v4776 = vunpack.c.h.b16 %v3952
      %v4777 = vunpack.c.l.b16 %v3953
      %v4778 = vunpack.c.h.b16 %v3953
      %v4779 = vunpack.c.l.b16 %v3954
      %v4780 = vunpack.c.h.b16 %v3954
      %v4781 = vunpack.c.l.b16 %v3955
      %v4782 = vunpack.c.h.b16 %v3955
      %v4783 = vunpack.c.l.b16 %v3956
      %v4784 = vunpack.c.h.b16 %v3956
      %v4785 = vunpack.c.l.b16 %v3957
      %v4786 = vunpack.c.h.b16 %v3957
      %v4787 = vunpack.c.l.b16 %v3958
      %v4788 = vunpack.c.h.b16 %v3958
      %v4789 = vunpack.c.l.b16 %v3959
      %v4790 = vunpack.c.h.b16 %v3959
      %v4791 = vunpack.c.l.b16 %v3960
      %v4792 = vunpack.c.h.b16 %v3960
      %v4793 = vunpack.c.l.b16 %v3961
      %v4794 = vunpack.c.h.b16 %v3961
      %v4795 = vunpack.c.l.b16 %v3962
      %v4796 = vunpack.c.h.b16 %v3962
      %v4797 = vunpack.c.l.b16 %v3963
      %v4798 = vunpack.c.h.b16 %v3963
      %v4799 = vunpack.c.l.b16 %v3964
      %v4800 = vunpack.c.h.b16 %v3964
      %v4801 = vunpack.c.l.b16 %v3965
      %v4802 = vunpack.c.h.b16 %v3965
      %v4803 = vunpack.c.l.b16 %v3966
      %v4804 = vunpack.c.h.b16 %v3966
      %v4805 = vunpack.c.l.b16 %v3967
      %v4806 = vunpack.c.h.b16 %v3967
      %v4807 = vunpack.c.l.b16 %v3968
      %v4808 = vunpack.c.h.b16 %v3968
      %v4809 = vunpack.c.l.b16 %v3969
      %v4810 = vunpack.c.h.b16 %v3969
      %v4811 = vunpack.c.l.b16 %v3970
      %v4812 = vunpack.c.h.b16 %v3970
      %v4813 = vunpack.c.l.b16 %v3971
      %v4814 = vunpack.c.h.b16 %v3971
      %v4815 = vunpack.c.l.b16 %v3972
      %v4816 = vunpack.c.h.b16 %v3972
      %v4817 = vunpack.c.l.b16 %v3973
      %v4818 = vunpack.c.h.b16 %v3973
      %v4819 = vunpack.c.l.b16 %v3974
      %v4820 = vunpack.c.h.b16 %v3974
      %v4821 = vunpack.c.l.b16 %v3975
      %v4822 = vunpack.c.h.b16 %v3975
      %v4823 = vunpack.c.l.b16 %v3976
      %v4824 = vunpack.c.h.b16 %v3976
      %v4825 = vunpack.c.l.b16 %v3977
      %v4826 = vunpack.c.h.b16 %v3977
      %v4827 = vunpack.c.l.b16 %v3978
      %v4828 = vunpack.c.h.b16 %v3978
      %v4829 = vunpack.c.l.b16 %v3979
      %v4830 = vunpack.c.h.b16 %v3979
      %v4831 = vunpack.c.l.b16 %v3980
      %v4832 = vunpack.c.h.b16 %v3980
      %v4833 = vunpack.c.l.b16 %v3981
      %v4834 = vunpack.c.h.b16 %v3981
      %v4835 = vunpack.c.l.b16 %v3982
      %v4836 = vunpack.c.h.b16 %v3982
      %v4837 = vunpack.c.l.b16 %v3983
      %v4838 = vunpack.c.h.b16 %v3983
      %v4839 = vunpack.c.l.b16 %v3984
      %v4840 = vunpack.c.h.b16 %v3984
      %v4841 = vunpack.c.l.b16 %v3985
      %v4842 = vunpack.c.h.b16 %v3985
      %v4843 = vunpack.c.l.b16 %v3986
      %v4844 = vunpack.c.h.b16 %v3986
      %v4845 = vunpack.c.l.b16 %v3987
      %v4846 = vunpack.c.h.b16 %v3987
      %v4847 = vunpack.c.l.b16 %v3988
      %v4848 = vunpack.c.h.b16 %v3988
      %v4849 = vunpack.c.l.b16 %v3989
      %v4850 = vunpack.c.h.b16 %v3989
      %v4851 = vunpack.c.l.b16 %v3990
      %v4852 = vunpack.c.h.b16 %v3990
      %v4853 = vunpack.c.l.b16 %v3991
      %v4854 = vunpack.c.h.b16 %v3991
      %v4855 = vunpack.c.l.b16 %v3992
      %v4856 = vunpack.c.h.b16 %v3992
      %v4857 = vunpack.c.l.b16 %v3993
      %v4858 = vunpack.c.h.b16 %v3993
      %v4859 = vunpack.c.l.b16 %v3994
      %v4860 = vunpack.c.h.b16 %v3994
      %v4861 = vunpack.c.l.b16 %v3995
      %v4862 = vunpack.c.h.b16 %v3995
      %v4863 = vunpack.c.l.b16 %v3996
      %v4864 = vunpack.c.h.b16 %v3996
      %v4865 = vunpack.c.l.b16 %v3997
      %v4866 = vunpack.c.h.b16 %v3997
      %v4867 = vunpack.c.l.b16 %v3998
      %v4868 = vunpack.c.h.b16 %v3998
      %v4869 = vunpack.c.l.b16 %v3999
      %v4870 = vunpack.c.h.b16 %v3999
      %v4871 = vunpack.c.l.b16 %v4000
      %v4872 = vunpack.c.h.b16 %v4000
      %v4873 = vunpack.c.l.b16 %v4001
      %v4874 = vunpack.c.h.b16 %v4001
      %v4875 = vunpack.c.l.b16 %v4002
      %v4876 = vunpack.c.h.b16 %v4002
      %v4877 = vunpack.c.l.b16 %v4003
      %v4878 = vunpack.c.h.b16 %v4003
      %v4879 = vunpack.c.l.b16 %v4004
      %v4880 = vunpack.c.h.b16 %v4004
      %v4881 = vunpack.c.l.b16 %v4005
      %v4882 = vunpack.c.h.b16 %v4005
      %v4883 = vunpack.c.l.b16 %v4006
      %v4884 = vunpack.c.h.b16 %v4006
      %v4885 = vunpack.c.l.b16 %v4007
      %v4886 = vunpack.c.h.b16 %v4007
      %v4887 = vunpack.c.l.b16 %v4008
      %v4888 = vunpack.c.h.b16 %v4008
      %v4889 = vunpack.c.l.b16 %v4009
      %v4890 = vunpack.c.h.b16 %v4009
      %v4891 = vunpack.c.l.b16 %v4010
      %v4892 = vunpack.c.h.b16 %v4010
      %v4893 = vunpack.c.l.b16 %v4011
      %v4894 = vunpack.c.h.b16 %v4011
      %v4895 = vunpack.c.l.b16 %v4012
      %v4896 = vunpack.c.h.b16 %v4012
      %v4897 = vunpack.c.l.b16 %v4013
      %v4898 = vunpack.c.h.b16 %v4013
      %v4899 = vunpack.c.l.b16 %v4014
      %v4900 = vunpack.c.h.b16 %v4014
      %v4901 = vunpack.c.l.b16 %v4015
      %v4902 = vunpack.c.h.b16 %v4015
      %v4903 = vunpack.c.l.b16 %v4016
      %v4904 = vunpack.c.h.b16 %v4016
      %v4905 = vunpack.c.l.b16 %v4017
      %v4906 = vunpack.c.h.b16 %v4017
      %v4907 = vunpack.c.l.b16 %v4018
      %v4908 = vunpack.c.h.b16 %v4018
      %v4909 = vunpack.c.l.b16 %v4019
      %v4910 = vunpack.c.h.b16 %v4019
      %v4911 = vunpack.c.l.b16 %v4020
      %v4912 = vunpack.c.h.b16 %v4020
      %v4913 = vunpack.c.l.b16 %v4021
      %v4914 = vunpack.c.h.b16 %v4021
      %v4915 = vunpack.c.l.b16 %v4022
      %v4916 = vunpack.c.h.b16 %v4022
      %v4917 = vunpack.c.l.b16 %v4023
      %v4918 = vunpack.c.h.b16 %v4023
      %v4919 = vunpack.c.l.b16 %v4024
      %v4920 = vunpack.c.h.b16 %v4024
      %v4921 = vunpack.c.l.b16 %v4025
      %v4922 = vunpack.c.h.b16 %v4025
      %v4923 = vunpack.c.l.b16 %v4026
      %v4924 = vunpack.c.h.b16 %v4026
      %v4925 = vunpack.c.l.b16 %v4027
      %v4926 = vunpack.c.h.b16 %v4027
      %v4927 = vunpack.c.l.b16 %v4028
      %v4928 = vunpack.c.h.b16 %v4028
      %v4929 = vunpack.c.l.b16 %v4029
      %v4930 = vunpack.c.h.b16 %v4029
      %v4931 = vunpack.c.l.b16 %v4030
      %v4932 = vunpack.c.h.b16 %v4030
      %v4933 = vunpack.c.l.b16 %v4031
      %v4934 = vunpack.c.h.b16 %v4031
      %v4935 = vunpack.c.l.b16 %v4032
      %v4936 = vunpack.c.h.b16 %v4032
      %v4937 = vunpack.c.l.b16 %v4033
      %v4938 = vunpack.c.h.b16 %v4033
      %v4939 = vunpack.c.l.b16 %v4034
      %v4940 = vunpack.c.h.b16 %v4034
      %v4941 = vunpack.c.l.b16 %v4035
      %v4942 = vunpack.c.h.b16 %v4035
      %v4943 = vunpack.c.l.b16 %v4036
      %v4944 = vunpack.c.h.b16 %v4036
      %v4945 = vunpack.c.l.b16 %v4037
      %v4946 = vunpack.c.h.b16 %v4037
      %v4947 = vunpack.c.l.b16 %v4038
      %v4948 = vunpack.c.h.b16 %v4038
      %v4949 = vunpack.c.l.b16 %v4039
      %v4950 = vunpack.c.h.b16 %v4039
      %v4951 = vunpack.c.l.b16 %v4040
      %v4952 = vunpack.c.h.b16 %v4040
      %v4953 = vunpack.c.l.b16 %v4041
      %v4954 = vunpack.c.h.b16 %v4041
      %v4955 = vunpack.c.l.b16 %v4042
      %v4956 = vunpack.c.h.b16 %v4042
      %v4957 = vunpack.c.l.b16 %v4043
      %v4958 = vunpack.c.h.b16 %v4043
      %v4959 = vunpack.c.l.b16 %v4044
      %v4960 = vunpack.c.h.b16 %v4044
      %v4961 = vunpack.c.l.b16 %v4045
      %v4962 = vunpack.c.h.b16 %v4045
      %v4963 = vunpack.c.l.b16 %v4046
      %v4964 = vunpack.c.h.b16 %v4046
      %v4965 = vunpack.c.l.b16 %v4047
      %v4966 = vunpack.c.h.b16 %v4047
      %v4967 = vunpack.c.l.b16 %v4048
      %v4968 = vunpack.c.h.b16 %v4048
      %v4969 = vunpack.c.l.b16 %v4049
      %v4970 = vunpack.c.h.b16 %v4049
      %v4971 = vunpack.c.l.b16 %v4050
      %v4972 = vunpack.c.h.b16 %v4050
      %v4973 = vunpack.c.l.b16 %v4051
      %v4974 = vunpack.c.h.b16 %v4051
      %v4975 = vunpack.c.l.b16 %v4052
      %v4976 = vunpack.c.h.b16 %v4052
      %v4977 = vunpack.c.l.b16 %v4053
      %v4978 = vunpack.c.h.b16 %v4053
      %v4979 = vunpack.c.l.b16 %v4054
      %v4980 = vunpack.c.h.b16 %v4054
      %v4981 = vunpack.c.l.b16 %v4055
      %v4982 = vunpack.c.h.b16 %v4055
      %v4983 = vunpack.c.l.b16 %v4056
      %v4984 = vunpack.c.h.b16 %v4056
      %v4985 = vunpack.c.l.b16 %v4057
      %v4986 = vunpack.c.h.b16 %v4057
      %v4987 = vunpack.c.l.b16 %v4058
      %v4988 = vunpack.c.h.b16 %v4058
      %v4989 = vunpack.c.l.b16 %v4059
      %v4990 = vunpack.c.h.b16 %v4059
      %v4991 = vunpack.c.l.b16 %v4060
      %v4992 = vunpack.c.h.b16 %v4060
      %v4993 = vunpack.c.l.b16 %v4061
      %v4994 = vunpack.c.h.b16 %v4061
      %v4995 = vunpack.c.l.b16 %v4062
      %v4996 = vunpack.c.h.b16 %v4062
      %v4997 = vunpack.c.l.b16 %v4063
      %v4998 = vunpack.c.h.b16 %v4063
      %v4999 = vunpack.c.l.b16 %v4064
      %v5000 = vunpack.c.h.b16 %v4064
      %v5001 = vunpack.c.l.b16 %v4065
      %v5002 = vunpack.c.h.b16 %v4065
      %v5003 = vunpack.c.l.b16 %v4066
      %v5004 = vunpack.c.h.b16 %v4066
      %v5005 = vunpack.c.l.b16 %v4067
      %v5006 = vunpack.c.h.b16 %v4067
      %v5007 = vunpack.c.l.b16 %v4068
      %v5008 = vunpack.c.h.b16 %v4068
      %v5009 = vunpack.c.l.b16 %v4069
      %v5010 = vunpack.c.h.b16 %v4069
      %v5011 = vunpack.c.l.b16 %v4070
      %v5012 = vunpack.c.h.b16 %v4070
      %v5013 = vunpack.c.l.b16 %v4071
      %v5014 = vunpack.c.h.b16 %v4071
      %v5015 = vunpack.c.l.b16 %v4072
      %v5016 = vunpack.c.h.b16 %v4072
      %v5017 = vunpack.c.l.b16 %v4073
      %v5018 = vunpack.c.h.b16 %v4073
      %v5019 = vunpack.c.l.b16 %v4074
      %v5020 = vunpack.c.h.b16 %v4074
      %v5021 = vunpack.c.l.b16 %v4075
      %v5022 = vunpack.c.h.b16 %v4075
      %v5023 = vunpack.c.l.b16 %v4076
      %v5024 = vunpack.c.h.b16 %v4076
      %v5025 = vunpack.c.l.b16 %v4077
      %v5026 = vunpack.c.h.b16 %v4077
      %v5027 = vunpack.c.l.b16 %v4078
      %v5028 = vunpack.c.h.b16 %v4078
      %v5029 = vunpack.c.l.b16 %v4079
      %v5030 = vunpack.c.h.b16 %v4079
      %v5031 = vunpack.c.l.b16 %v4080
      %v5032 = vunpack.c.h.b16 %v4080
      %v5033 = vunpack.c.l.b16 %v4081
      %v5034 = vunpack.c.h.b16 %v4081
      %v5035 = vunpack.c.l.b16 %v4082
      %v5036 = vunpack.c.h.b16 %v4082
      %v5037 = vunpack.c.l.b16 %v4083
      %v5038 = vunpack.c.h.b16 %v4083
      %v5039 = vunpack.c.l.b16 %v4084
      %v5040 = vunpack.c.h.b16 %v4084
      %v5041 = vunpack.c.l.b16 %v4085
      %v5042 = vunpack.c.h.b16 %v4085
      %v5043 = vunpack.c.l.b16 %v4086
      %v5044 = vunpack.c.h.b16 %v4086
      %v5045 = vunpack.c.l.b16 %v4087
      %v5046 = vunpack.c.h.b16 %v4087
      %v5047 = vunpack.c.l.b16 %v4088
      %v5048 = vunpack.c.h.b16 %v4088
      %v5049 = vunpack.c.l.b16 %v4089
      %v5050 = vunpack.c.h.b16 %v4089
      %v5051 = vunpack.c.l.b16 %v4090
      %v5052 = vunpack.c.h.b16 %v4090
      %v5053 = vunpack.c.l.b16 %v4091
      %v5054 = vunpack.c.h.b16 %v4091
      %v5055 = vunpack.c.l.b16 %v4092
      %v5056 = vunpack.c.h.b16 %v4092
      %v5057 = vunpack.c.l.b16 %v4093
      %v5058 = vunpack.c.h.b16 %v4093
      %v5059 = vunpack.c.l.b16 %v4094
      %v5060 = vunpack.c.h.b16 %v4094
      %v5061 = vunpack.c.l.b16 %v4095
      %v5062 = vunpack.c.h.b16 %v4095
      %v5063 = vunpack.c.l.b16 %v4096
      %v5064 = vunpack.c.h.b16 %v4096
      %v5065 = vunpack.c.l.b16 %v4097
      %v5066 = vunpack.c.h.b16 %v4097
      %v5067 = vunpack.c.l.b16 %v4098
      %v5068 = vunpack.c.h.b16 %v4098
      %v5069 = vunpack.c.l.b16 %v4099
      %v5070 = vunpack.c.h.b16 %v4099
      %v5071 = vunpack.c.l.b16 %v4100
      %v5072 = vunpack.c.h.b16 %v4100
      %v5073 = vunpack.c.l.b16 %v4101
      %v5074 = vunpack.c.h.b16 %v4101
      %v5075 = vunpack.c.l.b16 %v4102
      %v5076 = vunpack.c.h.b16 %v4102
      %v5077 = vunpack.c.l.b16 %v4103
      %v5078 = vunpack.c.h.b16 %v4103
      %v5079 = vunpack.c.l.b16 %v4104
      %v5080 = vunpack.c.h.b16 %v4104
      %v5081 = vunpack.c.l.b16 %v4105
      %v5082 = vunpack.c.h.b16 %v4105
      %v5083 = vunpack.c.l.b16 %v4106
      %v5084 = vunpack.c.h.b16 %v4106
      %v5085 = vunpack.c.l.b16 %v4107
      %v5086 = vunpack.c.h.b16 %v4107
      %v5087 = vunpack.c.l.b16 %v4108
      %v5088 = vunpack.c.h.b16 %v4108
      %v5089 = vunpack.c.l.b16 %v4109
      %v5090 = vunpack.c.h.b16 %v4109
      %v5091 = vunpack.c.l.b16 %v4110
      %v5092 = vunpack.c.h.b16 %v4110
      %v5093 = vunpack.c.l.b16 %v4111
      %v5094 = vunpack.c.h.b16 %v4111
      %v5095 = vunpack.c.l.b16 %v4112
      %v5096 = vunpack.c.h.b16 %v4112
      %v5097 = vunpack.c.l.b16 %v4113
      %v5098 = vunpack.c.h.b16 %v4113
      %v5099 = vunpack.c.l.b16 %v4114
      %v5100 = vunpack.c.h.b16 %v4114
      %v5101 = vunpack.c.l.b16 %v4115
      %v5102 = vunpack.c.h.b16 %v4115
      %v5103 = vunpack.c.l.b16 %v4116
      %v5104 = vunpack.c.h.b16 %v4116
      %v5105 = vunpack.c.l.b16 %v4117
      %v5106 = vunpack.c.h.b16 %v4117
      %v5107 = vunpack.c.l.b16 %v4118
      %v5108 = vunpack.c.h.b16 %v4118
      %v5109 = vunpack.c.l.b16 %v4119
      %v5110 = vunpack.c.h.b16 %v4119
      %v5111 = vunpack.c.l.b16 %v4120
      %v5112 = vunpack.c.h.b16 %v4120
      %v5113 = vunpack.c.l.b16 %v4121
      %v5114 = vunpack.c.h.b16 %v4121
      %v5115 = vunpack.c.l.b16 %v4122
      %v5116 = vunpack.c.h.b16 %v4122
      %v5117 = vunpack.c.l.b16 %v4123
      %v5118 = vunpack.c.h.b16 %v4123
      %v5119 = vunpack.c.l.b16 %v4124
      %v5120 = vunpack.c.h.b16 %v4124
      %v5121 = vunpack.c.l.b16 %v4125
      %v5122 = vunpack.c.h.b16 %v4125
      %v5123 = vunpack.c.l.b16 %v4126
      %v5124 = vunpack.c.h.b16 %v4126
      %v5125 = vunpack.c.l.b16 %v4127
      %v5126 = vunpack.c.h.b16 %v4127
      %v5127 = vunpack.c.l.b16 %v4128
      %v5128 = vunpack.c.h.b16 %v4128
      %v5129 = vunpack.c.l.b16 %v4129
      %v5130 = vunpack.c.h.b16 %v4129
      %v5131 = vunpack.c.l.b16 %v4130
      %v5132 = vunpack.c.h.b16 %v4130
      %v5133 = vunpack.c.l.b16 %v4131
      %v5134 = vunpack.c.h.b16 %v4131
      %v5135 = vunpack.c.l.b16 %v4132
      %v5136 = vunpack.c.h.b16 %v4132
      %v5137 = vunpack.c.l.b16 %v4133
      %v5138 = vunpack.c.h.b16 %v4133
      %v5139 = vunpack.c.l.b16 %v4134
      %v5140 = vunpack.c.h.b16 %v4134
      %v5141 = vunpack.c.l.b16 %v4135
      %v5142 = vunpack.c.h.b16 %v4135
      %v5143 = vunpack.c.l.b16 %v4136
      %v5144 = vunpack.c.h.b16 %v4136
      %v5145 = vunpack.c.l.b16 %v4137
      %v5146 = vunpack.c.h.b16 %v4137
      %v5147 = vunpack.c.l.b16 %v4138
      %v5148 = vunpack.c.h.b16 %v4138
      %v5149 = vunpack.c.l.b16 %v4139
      %v5150 = vunpack.c.h.b16 %v4139
      %v5151 = vunpack.c.l.b16 %v4140
      %v5152 = vunpack.c.h.b16 %v4140
      %v5153 = vunpack.c.l.b16 %v4141
      %v5154 = vunpack.c.h.b16 %v4141
      %v5155 = vunpack.c.l.b16 %v4142
      %v5156 = vunpack.c.h.b16 %v4142
      %v5157 = vunpack.c.l.b16 %v4143
      %v5158 = vunpack.c.h.b16 %v4143
      %v5159 = vunpack.c.l.b16 %v4144
      %v5160 = vunpack.c.h.b16 %v4144
      %v5161 = vunpack.c.l.b16 %v4145
      %v5162 = vunpack.c.h.b16 %v4145
      %v5163 = vunpack.c.l.b16 %v4146
      %v5164 = vunpack.c.h.b16 %v4146
      %v5165 = vunpack.c.l.b16 %v4147
      %v5166 = vunpack.c.h.b16 %v4147
      %v5167 = vunpack.c.l.b16 %v4148
      %v5168 = vunpack.c.h.b16 %v4148
      %v5169 = vunpack.c.l.b16 %v4149
      %v5170 = vunpack.c.h.b16 %v4149
      %v5171 = vunpack.c.l.b16 %v4150
      %v5172 = vunpack.c.h.b16 %v4150
      %v5173 = vunpack.c.l.b16 %v4151
      %v5174 = vunpack.c.h.b16 %v4151
      %v5175 = vunpack.c.l.b16 %v4152
      %v5176 = vunpack.c.h.b16 %v4152
      %v5177 = vunpack.c.l.b16 %v4153
      %v5178 = vunpack.c.h.b16 %v4153
      %v5179 = vunpack.c.l.b16 %v4154
      %v5180 = vunpack.c.h.b16 %v4154
      %v5181 = vunpack.c.l.b16 %v4155
      %v5182 = vunpack.c.h.b16 %v4155
      %v5183 = vunpack.c.l.b16 %v4156
      %v5184 = vunpack.c.h.b16 %v4156
      %v5185 = vunpack.c.l.b16 %v4157
      %v5186 = vunpack.c.h.b16 %v4157
      %v5187 = vunpack.c.l.b16 %v4158
      %v5188 = vunpack.c.h.b16 %v4158
      %v5189 = vunpack.c.l.b16 %v4159
      %v5190 = vunpack.c.h.b16 %v4159
      %v5191 = vunpack.c.l.b16 %v4160
      %v5192 = vunpack.c.h.b16 %v4160
      %v5193 = vunpack.c.l.b16 %v4161
      %v5194 = vunpack.c.h.b16 %v4161
      %v5195 = vunpack.c.l.b16 %v4162
      %v5196 = vunpack.c.h.b16 %v4162
      %v5197 = vunpack.c.l.b16 %v4163
      %v5198 = vunpack.c.h.b16 %v4163
      %v5199 = vunpack.c.l.b16 %v4164
      %v5200 = vunpack.c.h.b16 %v4164
      %v5201 = vunpack.c.l.b16 %v4165
      %v5202 = vunpack.c.h.b16 %v4165
      %v5203 = vunpack.c.l.b16 %v4166
      %v5204 = vunpack.c.h.b16 %v4166
      %v5205 = vunpack.c.l.b16 %v4167
      %v5206 = vunpack.c.h.b16 %v4167
      %v5207 = vunpack.c.l.b16 %v4168
      %v5208 = vunpack.c.h.b16 %v4168
      %v5209 = vunpack.c.l.b16 %v4169
      %v5210 = vunpack.c.h.b16 %v4169
      %v5211 = vunpack.c.l.b16 %v4170
      %v5212 = vunpack.c.h.b16 %v4170
      %v5213 = vunpack.c.l.b16 %v4171
      %v5214 = vunpack.c.h.b16 %v4171
      %v5215 = vunpack.c.l.b16 %v4172
      %v5216 = vunpack.c.h.b16 %v4172
      %v5217 = vunpack.c.l.b16 %v4173
      %v5218 = vunpack.c.h.b16 %v4173
      %v5219 = vunpack.c.l.b16 %v4174
      %v5220 = vunpack.c.h.b16 %v4174
      %v5221 = vunpack.c.l.b16 %v4175
      %v5222 = vunpack.c.h.b16 %v4175
      %v5223 = vunpack.c.l.b16 %v4176
      %v5224 = vunpack.c.h.b16 %v4176
      %v5225 = vunpack.c.l.b16 %v4177
      %v5226 = vunpack.c.h.b16 %v4177
      %v5227 = vunpack.c.l.b16 %v4178
      %v5228 = vunpack.c.h.b16 %v4178
      %v5229 = vunpack.c.l.b16 %v4179
      %v5230 = vunpack.c.h.b16 %v4179
      %v5231 = vunpack.c.l.b16 %v4180
      %v5232 = vunpack.c.h.b16 %v4180
      %v5233 = vunpack.c.l.b16 %v4181
      %v5234 = vunpack.c.h.b16 %v4181
      %v5235 = vunpack.c.l.b16 %v4182
      %v5236 = vunpack.c.h.b16 %v4182
      %v5237 = vunpack.c.l.b16 %v4183
      %v5238 = vunpack.c.h.b16 %v4183
      %v5239 = vunpack.c.l.b16 %v4184
      %v5240 = vunpack.c.h.b16 %v4184
      %v5241 = vunpack.c.l.b16 %v4185
      %v5242 = vunpack.c.h.b16 %v4185
      %v5243 = vunpack.c.l.b16 %v4186
      %v5244 = vunpack.c.h.b16 %v4186
      %v5245 = vunpack.c.l.b16 %v4187
      %v5246 = vunpack.c.h.b16 %v4187
      %v5247 = vunpack.c.l.b16 %v4188
      %v5248 = vunpack.c.h.b16 %v4188
      %v5249 = vunpack.c.l.b16 %v4189
      %v5250 = vunpack.c.h.b16 %v4189
      %v5251 = vunpack.c.l.b16 %v4190
      %v5252 = vunpack.c.h.b16 %v4190
      %v5253 = vunpack.c.l.b16 %v4191
      %v5254 = vunpack.c.h.b16 %v4191
      %v5255 = vunpack.c.l.b16 %v4192
      %v5256 = vunpack.c.h.b16 %v4192
      %v5257 = vunpack.c.l.b16 %v4193
      %v5258 = vunpack.c.h.b16 %v4193
      %v5259 = vunpack.c.l.b16 %v4194
      %v5260 = vunpack.c.h.b16 %v4194
      %v5261 = vunpack.c.l.b16 %v4195
      %v5262 = vunpack.c.h.b16 %v4195
      %v5263 = vunpack.c.l.b16 %v4196
      %v5264 = vunpack.c.h.b16 %v4196
      %v5265 = vunpack.c.l.b16 %v4197
      %v5266 = vunpack.c.h.b16 %v4197
      %v5267 = vunpack.c.l.b16 %v4198
      %v5268 = vunpack.c.h.b16 %v4198
      %v5269 = vunpack.c.l.b16 %v4199
      %v5270 = vunpack.c.h.b16 %v4199
      %v5271 = vunpack.c.l.b16 %v4200
      %v5272 = vunpack.c.h.b16 %v4200
      %v5273 = vunpack.c.l.b16 %v4201
      %v5274 = vunpack.c.h.b16 %v4201
      %v5275 = vunpack.c.l.b16 %v4202
      %v5276 = vunpack.c.h.b16 %v4202
      %v5277 = vunpack.c.l.b16 %v4203
      %v5278 = vunpack.c.h.b16 %v4203
      %v5279 = vunpack.c.l.b16 %v4204
      %v5280 = vunpack.c.h.b16 %v4204
      %v5281 = vunpack.c.l.b16 %v4205
      %v5282 = vunpack.c.h.b16 %v4205
      %v5283 = vunpack.c.l.b16 %v4206
      %v5284 = vunpack.c.h.b16 %v4206
      %v5285 = vunpack.c.l.b16 %v4207
      %v5286 = vunpack.c.h.b16 %v4207
      %v5287 = vunpack.c.l.b16 %v4208
      %v5288 = vunpack.c.h.b16 %v4208
      %v5289 = vunpack.c.l.b16 %v4209
      %v5290 = vunpack.c.h.b16 %v4209
      %v5291 = vunpack.c.l.b16 %v4210
      %v5292 = vunpack.c.h.b16 %v4210
      %v5293 = vunpack.c.l.b16 %v4211
      %v5294 = vunpack.c.h.b16 %v4211
      %v5295 = vunpack.c.l.b16 %v4212
      %v5296 = vunpack.c.h.b16 %v4212
      %v5297 = vunpack.c.l.b16 %v4213
      %v5298 = vunpack.c.h.b16 %v4213
      %v5299 = vunpack.c.l.b16 %v4214
      %v5300 = vunpack.c.h.b16 %v4214
      %v5301 = vunpack.c.l.b16 %v4215
      %v5302 = vunpack.c.h.b16 %v4215
      %v5303 = vunpack.c.l.b16 %v4216
      %v5304 = vunpack.c.h.b16 %v4216
      %v5305 = vunpack.c.l.b16 %v4217
      %v5306 = vunpack.c.h.b16 %v4217
      %v5307 = vunpack.c.l.b16 %v4218
      %v5308 = vunpack.c.h.b16 %v4218
      %v5309 = vunpack.c.l.b16 %v4219
      %v5310 = vunpack.c.h.b16 %v4219
      %v5311 = vunpack.c.l.b16 %v4220
      %v5312 = vunpack.c.h.b16 %v4220
      %v5313 = vunpack.c.l.b16 %v4221
      %v5314 = vunpack.c.h.b16 %v4221
      %v5315 = vunpack.c.l.b16 %v4222
      %v5316 = vunpack.c.h.b16 %v4222
      %v5317 = vunpack.c.l.b16 %v4223
      %v5318 = vunpack.c.h.b16 %v4223
      %v5319 = vunpack.c.l.b16 %v4224
      %v5320 = vunpack.c.h.b16 %v4224
      %v5321 = vunpack.c.l.b16 %v4225
      %v5322 = vunpack.c.h.b16 %v4225
      %v5323 = vunpack.c.l.b16 %v4226
      %v5324 = vunpack.c.h.b16 %v4226
      %v5325 = vunpack.c.l.b16 %v4227
      %v5326 = vunpack.c.h.b16 %v4227
      %v5327 = vunpack.c.l.b16 %v4228
      %v5328 = vunpack.c.h.b16 %v4228
      %v5329 = vunpack.c.l.b16 %v4229
      %v5330 = vunpack.c.h.b16 %v4229
      %v5331 = vunpack.c.l.b16 %v4230
      %v5332 = vunpack.c.h.b16 %v4230
      %v5333 = vunpack.c.l.b16 %v4231
      %v5334 = vunpack.c.h.b16 %v4231
      %v5335 = vunpack.c.l.b16 %v4232
      %v5336 = vunpack.c.h.b16 %v4232
      %v5337 = vunpack.c.l.b16 %v4233
      %v5338 = vunpack.c.h.b16 %v4233
      %v5339 = vunpack.c.l.b16 %v4234
      %v5340 = vunpack.c.h.b16 %v4234
      %v5341 = vunpack.c.l.b16 %v4235
      %v5342 = vunpack.c.h.b16 %v4235
      %v5343 = vunpack.c.l.b16 %v4236
      %v5344 = vunpack.c.h.b16 %v4236
      %v5345 = vunpack.c.l.b16 %v4237
      %v5346 = vunpack.c.h.b16 %v4237
      %v5347 = vunpack.c.l.b16 %v4238
      %v5348 = vunpack.c.h.b16 %v4238
      %v5349 = vunpack.c.l.b16 %v4239
      %v5350 = vunpack.c.h.b16 %v4239
      %v5351 = vunpack.c.l.b16 %v4240
      %v5352 = vunpack.c.h.b16 %v4240
      %v5353 = vunpack.c.l.b16 %v4241
      %v5354 = vunpack.c.h.b16 %v4241
      %v5355 = vunpack.c.l.b16 %v4242
      %v5356 = vunpack.c.h.b16 %v4242
      %v5357 = vunpack.c.l.b16 %v4243
      %v5358 = vunpack.c.h.b16 %v4243
      %v5359 = vunpack.c.l.b16 %v4244
      %v5360 = vunpack.c.h.b16 %v4244
      %v5361 = vunpack.c.l.b16 %v4245
      %v5362 = vunpack.c.h.b16 %v4245
      %v5363 = vunpack.c.l.b16 %v4246
      %v5364 = vunpack.c.h.b16 %v4246
      %v5365 = vunpack.c.l.b16 %v4247
      %v5366 = vunpack.c.h.b16 %v4247
      %v5367 = vunpack.c.l.b16 %v4248
      %v5368 = vunpack.c.h.b16 %v4248
      %v5369 = vunpack.c.l.b16 %v4249
      %v5370 = vunpack.c.h.b16 %v4249
      %v5371 = vunpack.c.l.b16 %v4250
      %v5372 = vunpack.c.h.b16 %v4250
      %v5373 = vunpack.c.l.b16 %v4251
      %v5374 = vunpack.c.h.b16 %v4251
      %v5375 = vunpack.c.l.b16 %v4252
      %v5376 = vunpack.c.h.b16 %v4252
      %v5377 = vunpack.c.l.b16 %v4253
      %v5378 = vunpack.c.h.b16 %v4253
      %v5379 = vunpack.c.l.b16 %v4254
      %v5380 = vunpack.c.h.b16 %v4254
      %v5381 = vunpack.c.l.b16 %v4255
      %v5382 = vunpack.c.h.b16 %v4255
      %v5383 = vunpack.c.l.b16 %v4256
      %v5384 = vunpack.c.h.b16 %v4256
      %v5385 = vunpack.c.l.b16 %v4257
      %v5386 = vunpack.c.h.b16 %v4257
      %v5387 = vunpack.c.l.b16 %v4258
      %v5388 = vunpack.c.h.b16 %v4258
      %v5389 = vunpack.c.l.b16 %v4259
      %v5390 = vunpack.c.h.b16 %v4259
      %v5391 = vunpack.c.l.b16 %v4260
      %v5392 = vunpack.c.h.b16 %v4260
      %v5393 = vunpack.c.l.b16 %v4261
      %v5394 = vunpack.c.h.b16 %v4261
      %v5395 = vunpack.c.l.b16 %v4262
      %v5396 = vunpack.c.h.b16 %v4262
      %v5397 = vunpack.c.l.b16 %v4263
      %v5398 = vunpack.c.h.b16 %v4263
      %v5399 = vunpack.c.l.b16 %v4264
      %v5400 = vunpack.c.h.b16 %v4264
      %v5401 = vunpack.c.l.b16 %v4265
      %v5402 = vunpack.c.h.b16 %v4265
      %v5403 = vunpack.c.l.b16 %v4266
      %v5404 = vunpack.c.h.b16 %v4266
      %v5405 = vunpack.c.l.b16 %v4267
      %v5406 = vunpack.c.h.b16 %v4267
      %v5407 = vunpack.c.l.b16 %v4268
      %v5408 = vunpack.c.h.b16 %v4268
      %v5409 = vunpack.c.l.b16 %v4269
      %v5410 = vunpack.c.h.b16 %v4269
      %v5411 = vunpack.c.l.b16 %v4270
      %v5412 = vunpack.c.h.b16 %v4270
      %v5413 = vunpack.c.l.b16 %v4271
      %v5414 = vunpack.c.h.b16 %v4271
      %v5415 = vunpack.c.l.b16 %v4272
      %v5416 = vunpack.c.h.b16 %v4272
      %v5417 = vunpack.c.l.b16 %v4273
      %v5418 = vunpack.c.h.b16 %v4273
      %v5419 = vunpack.c.l.b16 %v4274
      %v5420 = vunpack.c.h.b16 %v4274
      %v5421 = vunpack.c.l.b16 %v4275
      %v5422 = vunpack.c.h.b16 %v4275
      %v5423 = vunpack.c.l.b16 %v4276
      %v5424 = vunpack.c.h.b16 %v4276
      %v5425 = vunpack.c.l.b16 %v4277
      %v5426 = vunpack.c.h.b16 %v4277
      %v5427 = vunpack.c.l.b16 %v4278
      %v5428 = vunpack.c.h.b16 %v4278
      %v5429 = vunpack.c.l.b16 %v4279
      %v5430 = vunpack.c.h.b16 %v4279
      %v5431 = vunpack.c.l.b16 %v4280
      %v5432 = vunpack.c.h.b16 %v4280
      %v5433 = vpack.c.b16 %v4677, %v4665
      %v5434 = vpack.c.b16 %v4678, %v4666
      %v5435 = vpack.c.b16 %v4679, %v4667
      %v5436 = vpack.c.b16 %v4680, %v4668
      %v5437 = vpack.c.b16 %v4681, %v4669
      %v5438 = vpack.c.b16 %v4682, %v4670
      %v5439 = vpack.c.b16 %v4683, %v4671
      %v5440 = vpack.c.b16 %v4684, %v4672
      %v5441 = vpack.c.b16 %v4685, %v4673
      %v5442 = vpack.c.b16 %v4686, %v4674
      %v5443 = vpack.c.b16 %v4687, %v4675
      %v5444 = vpack.c.b16 %v4688, %v4676
      %v5445 = vpack.c.b16 %v4701, %v4689
      %v5446 = vpack.c.b16 %v4702, %v4690
      %v5447 = vpack.c.b16 %v4703, %v4691
      %v5448 = vpack.c.b16 %v4704, %v4692
      %v5449 = vpack.c.b16 %v4705, %v4693
      %v5450 = vpack.c.b16 %v4706, %v4694
      %v5451 = vpack.c.b16 %v4707, %v4695
      %v5452 = vpack.c.b16 %v4708, %v4696
      %v5453 = vpack.c.b16 %v4709, %v4697
      %v5454 = vpack.c.b16 %v4710, %v4698
      %v5455 = vpack.c.b16 %v4711, %v4699
      %v5456 = vpack.c.b16 %v4712, %v4700
      %v5457 = vpack.c.b16 %v4725, %v4713
      %v5458 = vpack.c.b16 %v4726, %v4714
      %v5459 = vpack.c.b16 %v4727, %v4715
      %v5460 = vpack.c.b16 %v4728, %v4716
      %v5461 = vpack.c.b16 %v4729, %v4717
      %v5462 = vpack.c.b16 %v4730, %v4718
      %v5463 = vpack.c.b16 %v4731, %v4719
      %v5464 = vpack.c.b16 %v4732, %v4720
      %v5465 = vpack.c.b16 %v4733, %v4721
      %v5466 = vpack.c.b16 %v4734, %v4722
      %v5467 = vpack.c.b16 %v4735, %v4723
      %v5468 = vpack.c.b16 %v4736, %v4724
      %v5469 = vpack.c.b16 %v4749, %v4737
      %v5470 = vpack.c.b16 %v4750, %v4738
      %v5471 = vpack.c.b16 %v4751, %v4739
      %v5472 = vpack.c.b16 %v4752, %v4740
      %v5473 = vpack.c.b16 %v4753, %v4741
      %v5474 = vpack.c.b16 %v4754, %v4742
      %v5475 = vpack.c.b16 %v4755, %v4743
      %v5476 = vpack.c.b16 %v4756, %v4744
      %v5477 = vpack.c.b16 %v4757, %v4745
      %v5478 = vpack.c.b16 %v4758, %v4746
      %v5479 = vpack.c.b16 %v4759, %v4747
      %v5480 = vpack.c.b16 %v4760, %v4748
      %v5481 = vpack.c.b16 %v4773, %v4761
      %v5482 = vpack.c.b16 %v4774, %v4762
      %v5483 = vpack.c.b16 %v4775, %v4763
      %v5484 = vpack.c.b16 %v4776, %v4764
      %v5485 = vpack.c.b16 %v4777, %v4765
      %v5486 = vpack.c.b16 %v4778, %v4766
      %v5487 = vpack.c.b16 %v4779, %v4767
      %v5488 = vpack.c.b16 %v4780, %v4768
      %v5489 = vpack.c.b16 %v4781, %v4769
      %v5490 = vpack.c.b16 %v4782, %v4770
      %v5491 = vpack.c.b16 %v4783, %v4771
      %v5492 = vpack.c.b16 %v4784, %v4772
      %v5493 = vpack.c.b16 %v4797, %v4785
      %v5494 = vpack.c.b16 %v4798, %v4786
      %v5495 = vpack.c.b16 %v4799, %v4787
      %v5496 = vpack.c.b16 %v4800, %v4788
      %v5497 = vpack.c.b16 %v4801, %v4789
      %v5498 = vpack.c.b16 %v4802, %v4790
      %v5499 = vpack.c.b16 %v4803, %v4791
      %v5500 = vpack.c.b16 %v4804, %v4792
      %v5501 = vpack.c.b16 %v4805, %v4793
      %v5502 = vpack.c.b16 %v4806, %v4794
      %v5503 = vpack.c.b16 %v4807, %v4795
      %v5504 = vpack.c.b16 %v4808, %v4796
      %v5505 = vpack.c.b16 %v4821, %v4809
      %v5506 = vpack.c.b16 %v4822, %v4810
      %v5507 = vpack.c.b16 %v4823, %v4811
      %v5508 = vpack.c.b16 %v4824, %v4812
      %v5509 = vpack.c.b16 %v4825, %v4813
      %v5510 = vpack.c.b16 %v4826, %v4814
      %v5511 = vpack.c.b16 %v4827, %v4815
      %v5512 = vpack.c.b16 %v4828, %v4816
      %v5513 = vpack.c.b16 %v4829, %v4817
      %v5514 = vpack.c.b16 %v4830, %v4818
      %v5515 = vpack.c.b16 %v4831, %v4819
      %v5516 = vpack.c.b16 %v4832, %v4820
      %v5517 = vpack.c.b16 %v4845, %v4833
      %v5518 = vpack.c.b16 %v4846, %v4834
      %v5519 = vpack.c.b16 %v4847, %v4835
      %v5520 = vpack.c.b16 %v4848, %v4836
      %v5521 = vpack.c.b16 %v4849, %v4837
      %v5522 = vpack.c.b16 %v4850, %v4838
      %v5523 = vpack.c.b16 %v4851, %v4839
      %v5524 = vpack.c.b16 %v4852, %v4840
      %v5525 = vpack.c.b16 %v4853, %v4841
      %v5526 = vpack.c.b16 %v4854, %v4842
      %v5527 = vpack.c.b16 %v4855, %v4843
      %v5528 = vpack.c.b16 %v4856, %v4844
      %v5529 = vpack.c.b16 %v4869, %v4857
      %v5530 = vpack.c.b16 %v4870, %v4858
      %v5531 = vpack.c.b16 %v4871, %v4859
      %v5532 = vpack.c.b16 %v4872, %v4860
      %v5533 = vpack.c.b16 %v4873, %v4861
      %v5534 = vpack.c.b16 %v4874, %v4862
      %v5535 = vpack.c.b16 %v4875, %v4863
      %v5536 = vpack.c.b16 %v4876, %v4864
      %v5537 = vpack.c.b16 %v4877, %v4865
      %v5538 = vpack.c.b16 %v4878, %v4866
      %v5539 = vpack.c.b16 %v4879, %v4867
      %v5540 = vpack.c.b16 %v4880, %v4868
      %v5541 = vpack.c.b16 %v4893, %v4881
      %v5542 = vpack.c.b16 %v4894, %v4882
      %v5543 = vpack.c.b16 %v4895, %v4883
      %v5544 = vpack.c.b16 %v4896, %v4884
      %v5545 = vpack.c.b16 %v4897, %v4885
      %v5546 = vpack.c.b16 %v4898, %v4886
      %v5547 = vpack.c.b16 %v4899, %v4887
      %v5548 = vpack.c.b16 %v4900, %v4888
      %v5549 = vpack.c.b16 %v4901, %v4889
      %v5550 = vpack.c.b16 %v4902, %v4890
      %v5551 = vpack.c.b16 %v4903, %v4891
      %v5552 = vpack.c.b16 %v4904, %v4892
      %v5553 = vpack.c.b16 %v4917, %v4905
      %v5554 = vpack.c.b16 %v4918, %v4906
      %v5555 = vpack.c.b16 %v4919, %v4907
      %v5556 = vpack.c.b16 %v4920, %v4908
      %v5557 = vpack.c.b16 %v4921, %v4909
      %v5558 = vpack.c.b16 %v4922, %v4910
      %v5559 = vpack.c.b16 %v4923, %v4911
      %v5560 = vpack.c.b16 %v4924, %v4912
      %v5561 = vpack.c.b16 %v4925, %v4913
      %v5562 = vpack.c.b16 %v4926, %v4914
      %v5563 = vpack.c.b16 %v4927, %v4915
      %v5564 = vpack.c.b16 %v4928, %v4916
      %v5565 = vpack.c.b16 %v4941, %v4929
      %v5566 = vpack.c.b16 %v4942, %v4930
      %v5567 = vpack.c.b16 %v4943, %v4931
      %v5568 = vpack.c.b16 %v4944, %v4932
      %v5569 = vpack.c.b16 %v4945, %v4933
      %v5570 = vpack.c.b16 %v4946, %v4934
      %v5571 = vpack.c.b16 %v4947, %v4935
      %v5572 = vpack.c.b16 %v4948, %v4936
      %v5573 = vpack.c.b16 %v4949, %v4937
      %v5574 = vpack.c.b16 %v4950, %v4938
      %v5575 = vpack.c.b16 %v4951, %v4939
      %v5576 = vpack.c.b16 %v4952, %v4940
      %v5577 = vpack.c.b16 %v4965, %v4953
      %v5578 = vpack.c.b16 %v4966, %v4954
      %v5579 = vpack.c.b16 %v4967, %v4955
      %v5580 = vpack.c.b16 %v4968, %v4956
      %v5581 = vpack.c.b16 %v4969, %v4957
      %v5582 = vpack.c.b16 %v4970, %v4958
      %v5583 = vpack.c.b16 %v4971, %v4959
      %v5584 = vpack.c.b16 %v4972, %v4960
      %v5585 = vpack.c.b16 %v4973, %v4961
      %v5586 = vpack.c.b16 %v4974, %v4962
      %v5587 = vpack.c.b16 %v4975, %v4963
      %v5588 = vpack.c.b16 %v4976, %v4964
      %v5589 = vpack.c.b16 %v4989, %v4977
      %v5590 = vpack.c.b16 %v4990, %v4978
      %v5591 = vpack.c.b16 %v4991, %v4979
      %v5592 = vpack.c.b16 %v4992, %v4980
      %v5593 = vpack.c.b16 %v4993, %v4981
      %v5594 = vpack.c.b16 %v4994, %v4982
      %v5595 = vpack.c.b16 %v4995, %v4983
      %v5596 = vpack.c.b16 %v4996, %v4984
      %v5597 = vpack.c.b16 %v4997, %v4985
      %v5598 = vpack.c.b16 %v4998, %v4986
      %v5599 = vpack.c.b16 %v4999, %v4987
      %v5600 = vpack.c.b16 %v5000, %v4988
      %v5601 = vpack.c.b16 %v5013, %v5001
      %v5602 = vpack.c.b16 %v5014, %v5002
      %v5603 = vpack.c.b16 %v5015, %v5003
      %v5604 = vpack.c.b16 %v5016, %v5004
      %v5605 = vpack.c.b16 %v5017, %v5005
      %v5606 = vpack.c.b16 %v5018, %v5006
      %v5607 = vpack.c.b16 %v5019, %v5007
      %v5608 = vpack.c.b16 %v5020, %v5008
      %v5609 = vpack.c.b16 %v5021, %v5009
      %v5610 = vpack.c.b16 %v5022, %v5010
      %v5611 = vpack.c.b16 %v5023, %v5011
      %v5612 = vpack.c.b16 %v5024, %v5012
      %v5613 = vpack.c.b16 %v5037, %v5025
      %v5614 = vpack.c.b16 %v5038, %v5026
      %v5615 = vpack.c.b16 %v5039, %v5027
      %v5616 = vpack.c.b16 %v5040, %v5028
      %v5617 = vpack.c.b16 %v5041, %v5029
      %v5618 = vpack.c.b16 %v5042, %v5030
      %v5619 = vpack.c.b16 %v5043, %v5031
      %v5620 = vpack.c.b16 %v5044, %v5032
      %v5621 = vpack.c.b16 %v5045, %v5033
      %v5622 = vpack.c.b16 %v5046, %v5034
      %v5623 = vpack.c.b16 %v5047, %v5035
      %v5624 = vpack.c.b16 %v5048, %v5036
      %v5625 = vpack.c.b16 %v5061, %v5049
      %v5626 = vpack.c.b16 %v5062, %v5050
      %v5627 = vpack.c.b16 %v5063, %v5051
      %v5628 = vpack.c.b16 %v5064, %v5052
      %v5629 = vpack.c.b16 %v5065, %v5053
      %v5630 = vpack.c.b16 %v5066, %v5054
      %v5631 = vpack.c.b16 %v5067, %v5055
      %v5632 = vpack.c.b16 %v5068, %v5056
      %v5633 = vpack.c.b16 %v5069, %v5057
      %v5634 = vpack.c.b16 %v5070, %v5058
      %v5635 = vpack.c.b16 %v5071, %v5059
      %v5636 = vpack.c.b16 %v5072, %v5060
      %v5637 = vpack.c.b16 %v5085, %v5073
      %v5638 = vpack.c.b16 %v5086, %v5074
      %v5639 = vpack.c.b16 %v5087, %v5075
      %v5640 = vpack.c.b16 %v5088, %v5076
      %v5641 = vpack.c.b16 %v5089, %v5077
      %v5642 = vpack.c.b16 %v5090, %v5078
      %v5643 = vpack.c.b16 %v5091, %v5079
      %v5644 = vpack.c.b16 %v5092, %v5080
      %v5645 = vpack.c.b16 %v5093, %v5081
      %v5646 = vpack.c.b16 %v5094, %v5082
      %v5647 = vpack.c.b16 %v5095, %v5083
      %v5648 = vpack.c.b16 %v5096, %v5084
      %v5649 = vpack.c.b16 %v5109, %v5097
      %v5650 = vpack.c.b16 %v5110, %v5098
      %v5651 = vpack.c.b16 %v5111, %v5099
      %v5652 = vpack.c.b16 %v5112, %v5100
      %v5653 = vpack.c.b16 %v5113, %v5101
      %v5654 = vpack.c.b16 %v5114, %v5102
      %v5655 = vpack.c.b16 %v5115, %v5103
      %v5656 = vpack.c.b16 %v5116, %v5104
      %v5657 = vpack.c.b16 %v5117, %v5105
      %v5658 = vpack.c.b16 %v5118, %v5106
      %v5659 = vpack.c.b16 %v5119, %v5107
      %v5660 = vpack.c.b16 %v5120, %v5108
      %v5661 = vpack.c.b16 %v5133, %v5121
      %v5662 = vpack.c.b16 %v5134, %v5122
      %v5663 = vpack.c.b16 %v5135, %v5123
      %v5664 = vpack.c.b16 %v5136, %v5124
      %v5665 = vpack.c.b16 %v5137, %v5125
      %v5666 = vpack.c.b16 %v5138, %v5126
      %v5667 = vpack.c.b16 %v5139, %v5127
      %v5668 = vpack.c.b16 %v5140, %v5128
      %v5669 = vpack.c.b16 %v5141, %v5129
      %v5670 = vpack.c.b16 %v5142, %v5130
      %v5671 = vpack.c.b16 %v5143, %v5131
      %v5672 = vpack.c.b16 %v5144, %v5132
      %v5673 = vpack.c.b16 %v5157, %v5145
      %v5674 = vpack.c.b16 %v5158, %v5146
      %v5675 = vpack.c.b16 %v5159, %v5147
      %v5676 = vpack.c.b16 %v5160, %v5148
      %v5677 = vpack.c.b16 %v5161, %v5149
      %v5678 = vpack.c.b16 %v5162, %v5150
      %v5679 = vpack.c.b16 %v5163, %v5151
      %v5680 = vpack.c.b16 %v5164, %v5152
      %v5681 = vpack.c.b16 %v5165, %v5153
      %v5682 = vpack.c.b16 %v5166, %v5154
      %v5683 = vpack.c.b16 %v5167, %v5155
      %v5684 = vpack.c.b16 %v5168, %v5156
      %v5685 = vpack.c.b16 %v5181, %v5169
      %v5686 = vpack.c.b16 %v5182, %v5170
      %v5687 = vpack.c.b16 %v5183, %v5171
      %v5688 = vpack.c.b16 %v5184, %v5172
      %v5689 = vpack.c.b16 %v5185, %v5173
      %v5690 = vpack.c.b16 %v5186, %v5174
      %v5691 = vpack.c.b16 %v5187, %v5175
      %v5692 = vpack.c.b16 %v5188, %v5176
      %v5693 = vpack.c.b16 %v5189, %v5177
      %v5694 = vpack.c.b16 %v5190, %v5178
      %v5695 = vpack.c.b16 %v5191, %v5179
      %v5696 = vpack.c.b16 %v5192, %v5180
      %v5697 = vpack.c.b16 %v5205, %v5193
      %v5698 = vpack.c.b16 %v5206, %v5194
      %v5699 = vpack.c.b16 %v5207, %v5195
      %v5700 = vpack.c.b16 %v5208, %v5196
      %v5701 = vpack.c.b16 %v5209, %v5197
      %v5702 = vpack.c.b16 %v5210, %v5198
      %v5703 = vpack.c.b16 %v5211, %v5199
      %v5704 = vpack.c.b16 %v5212, %v5200
      %v5705 = vpack.c.b16 %v5213, %v5201
      %v5706 = vpack.c.b16 %v5214, %v5202
      %v5707 = vpack.c.b16 %v5215, %v5203
      %v5708 = vpack.c.b16 %v5216, %v5204
      %v5709 = vpack.c.b16 %v5229, %v5217
      %v5710 = vpack.c.b16 %v5230, %v5218
      %v5711 = vpack.c.b16 %v5231, %v5219
      %v5712 = vpack.c.b16 %v5232, %v5220
      %v5713 = vpack.c.b16 %v5233, %v5221
      %v5714 = vpack.c.b16 %v5234, %v5222
      %v5715 = vpack.c.b16 %v5235, %v5223
      %v5716 = vpack.c.b16 %v5236, %v5224
      %v5717 = vpack.c.b16 %v5237, %v5225
      %v5718 = vpack.c.b16 %v5238, %v5226
      %v5719 = vpack.c.b16 %v5239, %v5227
      %v5720 = vpack.c.b16 %v5240, %v5228
      %v5721 = vpack.c.b16 %v5253, %v5241
      %v5722 = vpack.c.b16 %v5254, %v5242
      %v5723 = vpack.c.b16 %v5255, %v5243
      %v5724 = vpack.c.b16 %v5256, %v5244
      %v5725 = vpack.c.b16 %v5257, %v5245
      %v5726 = vpack.c.b16 %v5258, %v5246
      %v5727 = vpack.c.b16 %v5259, %v5247
      %v5728 = vpack.c.b16 %v5260, %v5248
      %v5729 = vpack.c.b16 %v5261, %v5249
      %v5730 = vpack.c.b16 %v5262, %v5250
      %v5731 = vpack.c.b16 %v5263, %v5251
      %v5732 = vpack.c.b16 %v5264, %v5252
      %v5733 = vpack.c.b16 %v5277, %v5265
      %v5734 = vpack.c.b16 %v5278, %v5266
      %v5735 = vpack.c.b16 %v5279, %v5267
      %v5736 = vpack.c.b16 %v5280, %v5268
      %v5737 = vpack.c.b16 %v5281, %v5269
      %v5738 = vpack.c.b16 %v5282, %v5270
      %v5739 = vpack.c.b16 %v5283, %v5271
      %v5740 = vpack.c.b16 %v5284, %v5272
      %v5741 = vpack.c.b16 %v5285, %v5273
      %v5742 = vpack.c.b16 %v5286, %v5274
      %v5743 = vpack.c.b16 %v5287, %v5275
      %v5744 = vpack.c.b16 %v5288, %v5276
      %v5745 = vpack.c.b16 %v5301, %v5289
      %v5746 = vpack.c.b16 %v5302, %v5290
      %v5747 = vpack.c.b16 %v5303, %v5291
      %v5748 = vpack.c.b16 %v5304, %v5292
      %v5749 = vpack.c.b16 %v5305, %v5293
      %v5750 = vpack.c.b16 %v5306, %v5294
      %v5751 = vpack.c.b16 %v5307, %v5295
      %v5752 = vpack.c.b16 %v5308, %v5296
      %v5753 = vpack.c.b16 %v5309, %v5297
      %v5754 = vpack.c.b16 %v5310, %v5298
      %v5755 = vpack.c.b16 %v5311, %v5299
      %v5756 = vpack.c.b16 %v5312, %v5300
      %v5757 = vpack.c.b16 %v5325, %v5313
      %v5758 = vpack.c.b16 %v5326, %v5314
      %v5759 = vpack.c.b16 %v5327, %v5315
      %v5760 = vpack.c.b16 %v5328, %v5316
      %v5761 = vpack.c.b16 %v5329, %v5317
      %v5762 = vpack.c.b16 %v5330, %v5318
      %v5763 = vpack.c.b16 %v5331, %v5319
      %v5764 = vpack.c.b16 %v5332, %v5320
      %v5765 = vpack.c.b16 %v5333, %v5321
      %v5766 = vpack.c.b16 %v5334, %v5322
      %v5767 = vpack.c.b16 %v5335, %v5323
      %v5768 = vpack.c.b16 %v5336, %v5324
      %v5769 = vpack.c.b16 %v5349, %v5337
      %v5770 = vpack.c.b16 %v5350, %v5338
      %v5771 = vpack.c.b16 %v5351, %v5339
      %v5772 = vpack.c.b16 %v5352, %v5340
      %v5773 = vpack.c.b16 %v5353, %v5341
      %v5774 = vpack.c.b16 %v5354, %v5342
      %v5775 = vpack.c.b16 %v5355, %v5343
      %v5776 = vpack.c.b16 %v5356, %v5344
      %v5777 = vpack.c.b16 %v5357, %v5345
      %v5778 = vpack.c.b16 %v5358, %v5346
      %v5779 = vpack.c.b16 %v5359, %v5347
      %v5780 = vpack.c.b16 %v5360, %v5348
      %v5781 = vpack.c.b16 %v5373, %v5361
      %v5782 = vpack.c.b16 %v5374, %v5362
      %v5783 = vpack.c.b16 %v5375, %v5363
      %v5784 = vpack.c.b16 %v5376, %v5364
      %v5785 = vpack.c.b16 %v5377, %v5365
      %v5786 = vpack.c.b16 %v5378, %v5366
      %v5787 = vpack.c.b16 %v5379, %v5367
      %v5788 = vpack.c.b16 %v5380, %v5368
      %v5789 = vpack.c.b16 %v5381, %v5369
      %v5790 = vpack.c.b16 %v5382, %v5370
      %v5791 = vpack.c.b16 %v5383, %v5371
      %v5792 = vpack.c.b16 %v5384, %v5372
      %v5793 = vpack.c.b16 %v5397, %v5385
      %v5794 = vpack.c.b16 %v5398, %v5386
      %v5795 = vpack.c.b16 %v5399, %v5387
      %v5796 = vpack.c.b16 %v5400, %v5388
      %v5797 = vpack.c.b16 %v5401, %v5389
      %v5798 = vpack.c.b16 %v5402, %v5390
      %v5799 = vpack.c.b16 %v5403, %v5391
      %v5800 = vpack.c.b16 %v5404, %v5392
      %v5801 = vpack.c.b16 %v5405, %v5393
      %v5802 = vpack.c.b16 %v5406, %v5394
      %v5803 = vpack.c.b16 %v5407, %v5395
      %v5804 = vpack.c.b16 %v5408, %v5396
      %v5805 = vpack.c.b16 %v5421, %v5409
      %v5806 = vpack.c.b16 %v5422, %v5410
      %v5807 = vpack.c.b16 %v5423, %v5411
      %v5808 = vpack.c.b16 %v5424, %v5412
      %v5809 = vpack.c.b16 %v5425, %v5413
      %v5810 = vpack.c.b16 %v5426, %v5414
      %v5811 = vpack.c.b16 %v5427, %v5415
      %v5812 = vpack.c.b16 %v5428, %v5416
      %v5813 = vpack.c.b16 %v5429, %v5417
      %v5814 = vpack.c.b16 %v5430, %v5418
      %v5815 = vpack.c.b16 %v5431, %v5419
      %v5816 = vpack.c.b16 %v5432, %v5420
      %6201 = vmatprep.subr.bf16.mxu0 %v5434
      %6202 = vmatpush1.bf16.msra.mxu0 %v5433
      %6203 = vmatprep.subr.bf16.mxu0 %v5446
      %6204 = vmatpush1.bf16.msra.mxu0 %v5445
      %6205 = vmatprep.subr.bf16.mxu0 %v5458
      %6206 = vmatpush1.bf16.msra.mxu0 %v5457
      %6207 = vmatprep.subr.bf16.mxu0 %v5470
      %6208 = vmatpush1.bf16.msra.mxu0 %v5469
      %6209 = vmatprep.subr.bf16.mxu0 %v5482
      %6210 = vmatpush1.bf16.msra.mxu0 %v5481
      %6211 = vmatprep.subr.bf16.mxu0 %v5494
      %6212 = vmatpush1.bf16.msra.mxu0 %v5493
      %6213 = vmatprep.subr.bf16.mxu0 %v5506
      %6214 = vmatpush1.bf16.msra.mxu0 %v5505
      %6215 = vmatprep.subr.bf16.mxu0 %v5518
      %6216 = vmatpush1.bf16.msra.mxu0 %v5517
      %6217 = vmatprep.subr.bf16.mxu0 %v5530
      %6218 = vmatpush1.bf16.msra.mxu0 %v5529
      %6219 = vmatprep.subr.bf16.mxu0 %v5542
      %6220 = vmatpush1.bf16.msra.mxu0 %v5541
      %6221 = vmatprep.subr.bf16.mxu0 %v5554
      %6222 = vmatpush1.bf16.msra.mxu0 %v5553
      %6223 = vmatprep.subr.bf16.mxu0 %v5566
      %6224 = vmatpush1.bf16.msra.mxu0 %v5565
      %6225 = vmatprep.subr.bf16.mxu0 %v5578
      %6226 = vmatpush1.bf16.msra.mxu0 %v5577
      %6227 = vmatprep.subr.bf16.mxu0 %v5590
      %6228 = vmatpush1.bf16.msra.mxu0 %v5589
      %6229 = vmatprep.subr.bf16.mxu0 %v5602
      %6230 = vmatpush1.bf16.msra.mxu0 %v5601
      %6231 = vmatprep.subr.bf16.mxu0 %v5614
      %6232 = vmatpush1.bf16.msra.mxu0 %v5613
      %6233 = vmatprep.mubr.bf16.mxu0 %v3886
      %6234 = vmatmul.mubr.bf16.gmra.mrb[0].mxu0 %v3885
      %v6235 = vpop.f32.mrb[0].mxu0
      %v6236 = vadd.f32 0.0, %v6235
      %v6237 = vpop.f32.mrb[0].mxu0
      %v6238 = vadd.f32 0.0, %v6237
      %v6239 = vpop.f32.mrb[0].mxu0
      %v6240 = vadd.f32 0.0, %v6239
      %v6241 = vpop.f32.mrb[0].mxu0
      %v6242 = vadd.f32 0.0, %v6241
      %6243 = vmatprep.mubr.bf16.mxu0 %v3890
      %6244 = vmatmul.mubr.bf16.gmra.mrb[0].mxu0 %v3889
      %v6245 = vpop.f32.mrb[0].mxu0
      %v6246 = vadd.f32 0.0, %v6245
      %v6247 = vpop.f32.mrb[0].mxu0
      %v6248 = vadd.f32 0.0, %v6247
      %v6249 = vpop.f32.mrb[0].mxu0
      %v6250 = vadd.f32 0.0, %v6249
      %v6251 = vpop.f32.mrb[0].mxu0
      %v6252 = vadd.f32 0.0, %v6251
      %6253 = vmatprep.mubr.bf16.mxu0 %v3894
      %6254 = vmatmul.mubr.bf16.gmra.mrb[0].mxu0 %v3893
      %v6255 = vpop.f32.mrb[0].mxu0
      %v6256 = vadd.f32 0.0, %v6255
      %v6257 = vpop.f32.mrb[0].mxu0
      %v6258 = vadd.f32 0.0, %v6257
      %v6259 = vpop.f32.mrb[0].mxu0
      %v6260 = vadd.f32 0.0, %v6259
      %v6261 = vpop.f32.mrb[0].mxu0
      %v6262 = vadd.f32 0.0, %v6261
      %6263 = vdwg.mxu0
      %6264 = vmatprep.subr.bf16.mxu0 %v5626
      %6265 = vmatpush1.bf16.msra.mxu0 %v5625
      %6266 = vmatprep.subr.bf16.mxu0 %v5638
      %6267 = vmatpush1.bf16.msra.mxu0 %v5637
      %6268 = vmatprep.subr.bf16.mxu0 %v5650
      %6269 = vmatpush1.bf16.msra.mxu0 %v5649
      %6270 = vmatprep.subr.bf16.mxu0 %v5662
      %6271 = vmatpush1.bf16.msra.mxu0 %v5661
      %6272 = vmatprep.subr.bf16.mxu0 %v5674
      %6273 = vmatpush1.bf16.msra.mxu0 %v5673
      %6274 = vmatprep.subr.bf16.mxu0 %v5686
      %6275 = vmatpush1.bf16.msra.mxu0 %v5685
      %6276 = vmatprep.subr.bf16.mxu0 %v5698
      %6277 = vmatpush1.bf16.msra.mxu0 %v5697
      %6278 = vmatprep.subr.bf16.mxu0 %v5710
      %6279 = vmatpush1.bf16.msra.mxu0 %v5709
      %6280 = vmatprep.subr.bf16.mxu0 %v5722
      %6281 = vmatpush1.bf16.msra.mxu0 %v5721
      %6282 = vmatprep.subr.bf16.mxu0 %v5734
      %6283 = vmatpush1.bf16.msra.mxu0 %v5733
      %6284 = vmatprep.subr.bf16.mxu0 %v5746
      %6285 = vmatpush1.bf16.msra.mxu0 %v5745
      %6286 = vmatprep.subr.bf16.mxu0 %v5758
      %6287 = vmatpush1.bf16.msra.mxu0 %v5757
      %6288 = vmatprep.subr.bf16.mxu0 %v5770
      %6289 = vmatpush1.bf16.msra.mxu0 %v5769
      %6290 = vmatprep.subr.bf16.mxu0 %v5782
      %6291 = vmatpush1.bf16.msra.mxu0 %v5781
      %6292 = vmatprep.subr.bf16.mxu0 %v5794
      %6293 = vmatpush1.bf16.msra.mxu0 %v5793
      %6294 = vmatprep.subr.bf16.mxu0 %v5806
      %6295 = vmatpush1.bf16.msra.mxu0 %v5805
      %6296 = vmatprep.mubr.bf16.mxu0 %v3888
      %6297 = vmatmul.mubr.bf16.gmra.mrb[0].mxu0 %v3887
      %v6298 = vpop.f32.mrb[0].mxu0
      %v6299 = vadd.f32 %v6236, %v6298
      %v6300 = vpop.f32.mrb[0].mxu0
      %v6301 = vadd.f32 %v6238, %v6300
      %v6302 = vpop.f32.mrb[0].mxu0
      %v6303 = vadd.f32 %v6240, %v6302
      %v6304 = vpop.f32.mrb[0].mxu0
      %v6305 = vadd.f32 %v6242, %v6304
      %6306 = vmatprep.mubr.bf16.mxu0 %v3892
      %6307 = vmatmul.mubr.bf16.gmra.mrb[0].mxu0 %v3891
      %v6308 = vpop.f32.mrb[0].mxu0
      %v6309 = vadd.f32 %v6246, %v6308
      %v6310 = vpop.f32.mrb[0].mxu0
      %v6311 = vadd.f32 %v6248, %v6310
      %v6312 = vpop.f32.mrb[0].mxu0
      %v6313 = vadd.f32 %v6250, %v6312
      %v6314 = vpop.f32.mrb[0].mxu0
      %v6315 = vadd.f32 %v6252, %v6314
      %6316 = vmatprep.mubr.bf16.mxu0 %v3896
      %6317 = vmatmul.mubr.bf16.gmra.mrb[0].mxu0 %v3895
      %v6318 = vpop.f32.mrb[0].mxu0
      %v6319 = vadd.f32 %v6256, %v6318
      %v6320 = vpop.f32.mrb[0].mxu0
      %v6321 = vadd.f32 %v6258, %v6320
      %v6322 = vpop.f32.mrb[0].mxu0
      %v6323 = vadd.f32 %v6260, %v6322
      %v6324 = vpop.f32.mrb[0].mxu0
      %v6325 = vadd.f32 %v6262, %v6324
      %6326 = vdwg.mxu0
      %6327 = vmatprep.subr.bf16.mxu0 %v5436
      %6328 = vmatpush1.bf16.msra.mxu0 %v5435
      %6329 = vmatprep.subr.bf16.mxu0 %v5448
      %6330 = vmatpush1.bf16.msra.mxu0 %v5447
      %6331 = vmatprep.subr.bf16.mxu0 %v5460
      %6332 = vmatpush1.bf16.msra.mxu0 %v5459
      %6333 = vmatprep.subr.bf16.mxu0 %v5472
      %6334 = vmatpush1.bf16.msra.mxu0 %v5471
      %6335 = vmatprep.subr.bf16.mxu0 %v5484
      %6336 = vmatpush1.bf16.msra.mxu0 %v5483
      %6337 = vmatprep.subr.bf16.mxu0 %v5496
      %6338 = vmatpush1.bf16.msra.mxu0 %v5495
      %6339 = vmatprep.subr.bf16.mxu0 %v5508
      %6340 = vmatpush1.bf16.msra.mxu0 %v5507
      %6341 = vmatprep.subr.bf16.mxu0 %v5520
      %6342 = vmatpush1.bf16.msra.mxu0 %v5519
      %6343 = vmatprep.subr.bf16.mxu0 %v5532
      %6344 = vmatpush1.bf16.msra.mxu0 %v5531
      %6345 = vmatprep.subr.bf16.mxu0 %v5544
      %6346 = vmatpush1.bf16.msra.mxu0 %v5543
      %6347 = vmatprep.subr.bf16.mxu0 %v5556
      %6348 = vmatpush1.bf16.msra.mxu0 %v5555
      %6349 = vmatprep.subr.bf16.mxu0 %v5568
      %6350 = vmatpush1.bf16.msra.mxu0 %v5567
      %6351 = vmatprep.subr.bf16.mxu0 %v5580
      %6352 = vmatpush1.bf16.msra.mxu0 %v5579
      %6353 = vmatprep.subr.bf16.mxu0 %v5592
      %6354 = vmatpush1.bf16.msra.mxu0 %v5591
      %6355 = vmatprep.subr.bf16.mxu0 %v5604
      %6356 = vmatpush1.bf16.msra.mxu0 %v5603
      %6357 = vmatprep.subr.bf16.mxu0 %v5616
      %6358 = vmatpush1.bf16.msra.mxu0 %v5615
      %6359 = vmatprep.mubr.bf16.mxu0 %v3886
      %6360 = vmatmul.mubr.bf16.gmra.mrb[0].mxu0 %v3885
      %v6361 = vpop.f32.mrb[0].mxu0
      %v6362 = vadd.f32 0.0, %v6361
      %v6363 = vpop.f32.mrb[0].mxu0
      %v6364 = vadd.f32 0.0, %v6363
      %v6365 = vpop.f32.mrb[0].mxu0
      %v6366 = vadd.f32 0.0, %v6365
      %v6367 = vpop.f32.mrb[0].mxu0
      %v6368 = vadd.f32 0.0, %v6367
      %6369 = vmatprep.mubr.bf16.mxu0 %v3890
      %6370 = vmatmul.mubr.bf16.gmra.mrb[0].mxu0 %v3889
      %v6371 = vpop.f32.mrb[0].mxu0
      %v6372 = vadd.f32 0.0, %v6371
      %v6373 = vpop.f32.mrb[0].mxu0
      %v6374 = vadd.f32 0.0, %v6373
      %v6375 = vpop.f32.mrb[0].mxu0
      %v6376 = vadd.f32 0.0, %v6375
      %v6377 = vpop.f32.mrb[0].mxu0
      %v6378 = vadd.f32 0.0, %v6377
      %6379 = vmatprep.mubr.bf16.mxu0 %v3894
      %6380 = vmatmul.mubr.bf16.gmra.mrb[0].mxu0 %v3893
      %v6381 = vpop.f32.mrb[0].mxu0
      %v6382 = vadd.f32 0.0, %v6381
      %v6383 = vpop.f32.mrb[0].mxu0
      %v6384 = vadd.f32 0.0, %v6383
      %v6385 = vpop.f32.mrb[0].mxu0
      %v6386 = vadd.f32 0.0, %v6385
      %v6387 = vpop.f32.mrb[0].mxu0
      %v6388 = vadd.f32 0.0, %v6387
      %6389 = vdwg.mxu0
      %6390 = vmatprep.subr.bf16.mxu0 %v5628
      %6391 = vmatpush1.bf16.msra.mxu0 %v5627
      %6392 = vmatprep.subr.bf16.mxu0 %v5640
      %6393 = vmatpush1.bf16.msra.mxu0 %v5639
      %6394 = vmatprep.subr.bf16.mxu0 %v5652
      %6395 = vmatpush1.bf16.msra.mxu0 %v5651
      %6396 = vmatprep.subr.bf16.mxu0 %v5664
      %6397 = vmatpush1.bf16.msra.mxu0 %v5663
      %6398 = vmatprep.subr.bf16.mxu0 %v5676
      %6399 = vmatpush1.bf16.msra.mxu0 %v5675
      %6400 = vmatprep.subr.bf16.mxu0 %v5688
      %6401 = vmatpush1.bf16.msra.mxu0 %v5687
      %6402 = vmatprep.subr.bf16.mxu0 %v5700
      %6403 = vmatpush1.bf16.msra.mxu0 %v5699
      %6404 = vmatprep.subr.bf16.mxu0 %v5712
      %6405 = vmatpush1.bf16.msra.mxu0 %v5711
      %6406 = vmatprep.subr.bf16.mxu0 %v5724
      %6407 = vmatpush1.bf16.msra.mxu0 %v5723
      %6408 = vmatprep.subr.bf16.mxu0 %v5736
      %6409 = vmatpush1.bf16.msra.mxu0 %v5735
      %6410 = vmatprep.subr.bf16.mxu0 %v5748
      %6411 = vmatpush1.bf16.msra.mxu0 %v5747
      %6412 = vmatprep.subr.bf16.mxu0 %v5760
      %6413 = vmatpush1.bf16.msra.mxu0 %v5759
      %6414 = vmatprep.subr.bf16.mxu0 %v5772
      %6415 = vmatpush1.bf16.msra.mxu0 %v5771
      %6416 = vmatprep.subr.bf16.mxu0 %v5784
      %6417 = vmatpush1.bf16.msra.mxu0 %v5783
      %6418 = vmatprep.subr.bf16.mxu0 %v5796
      %6419 = vmatpush1.bf16.msra.mxu0 %v5795
      %6420 = vmatprep.subr.bf16.mxu0 %v5808
      %6421 = vmatpush1.bf16.msra.mxu0 %v5807
      %6422 = vmatprep.mubr.bf16.mxu0 %v3888
      %6423 = vmatmul.mubr.bf16.gmra.mrb[0].mxu0 %v3887
      %v6424 = vpop.f32.mrb[0].mxu0
      %v6425 = vadd.f32 %v6362, %v6424
      %v6426 = vpop.f32.mrb[0].mxu0
      %v6427 = vadd.f32 %v6364, %v6426
      %v6428 = vpop.f32.mrb[0].mxu0
      %v6429 = vadd.f32 %v6366, %v6428
      %v6430 = vpop.f32.mrb[0].mxu0
      %v6431 = vadd.f32 %v6368, %v6430
      %6432 = vmatprep.mubr.bf16.mxu0 %v3892
      %6433 = vmatmul.mubr.bf16.gmra.mrb[0].mxu0 %v3891
      %v6434 = vpop.f32.mrb[0].mxu0
      %v6435 = vadd.f32 %v6372, %v6434
      %v6436 = vpop.f32.mrb[0].mxu0
      %v6437 = vadd.f32 %v6374, %v6436
      %v6438 = vpop.f32.mrb[0].mxu0
      %v6439 = vadd.f32 %v6376, %v6438
      %v6440 = vpop.f32.mrb[0].mxu0
      %v6441 = vadd.f32 %v6378, %v6440
      %6442 = vmatprep.mubr.bf16.mxu0 %v3896
      %6443 = vmatmul.mubr.bf16.gmra.mrb[0].mxu0 %v3895
      %v6444 = vpop.f32.mrb[0].mxu0
      %v6445 = vadd.f32 %v6382, %v6444
      %v6446 = vpop.f32.mrb[0].mxu0
      %v6447 = vadd.f32 %v6384, %v6446
      %v6448 = vpop.f32.mrb[0].mxu0
      %v6449 = vadd.f32 %v6386, %v6448
      %v6450 = vpop.f32.mrb[0].mxu0
      %v6451 = vadd.f32 %v6388, %v6450
      %6452 = vdwg.mxu0
      %6453 = vmatprep.subr.bf16.mxu0 %v5438
      %6454 = vmatpush1.bf16.msra.mxu0 %v5437
      %6455 = vmatprep.subr.bf16.mxu0 %v5450
      %6456 = vmatpush1.bf16.msra.mxu0 %v5449
      %6457 = vmatprep.subr.bf16.mxu0 %v5462
      %6458 = vmatpush1.bf16.msra.mxu0 %v5461
      %6459 = vmatprep.subr.bf16.mxu0 %v5474
      %6460 = vmatpush1.bf16.msra.mxu0 %v5473
      %6461 = vmatprep.subr.bf16.mxu0 %v5486
      %6462 = vmatpush1.bf16.msra.mxu0 %v5485
      %6463 = vmatprep.subr.bf16.mxu0 %v5498
      %6464 = vmatpush1.bf16.msra.mxu0 %v5497
      %6465 = vmatprep.subr.bf16.mxu0 %v5510
      %6466 = vmatpush1.bf16.msra.mxu0 %v5509
      %6467 = vmatprep.subr.bf16.mxu0 %v5522
      %6468 = vmatpush1.bf16.msra.mxu0 %v5521
      %6469 = vmatprep.subr.bf16.mxu0 %v5534
      %6470 = vmatpush1.bf16.msra.mxu0 %v5533
      %6471 = vmatprep.subr.bf16.mxu0 %v5546
      %6472 = vmatpush1.bf16.msra.mxu0 %v5545
      %6473 = vmatprep.subr.bf16.mxu0 %v5558
      %6474 = vmatpush1.bf16.msra.mxu0 %v5557
      %6475 = vmatprep.subr.bf16.mxu0 %v5570
      %6476 = vmatpush1.bf16.msra.mxu0 %v5569
      %6477 = vmatprep.subr.bf16.mxu0 %v5582
      %6478 = vmatpush1.bf16.msra.mxu0 %v5581
      %6479 = vmatprep.subr.bf16.mxu0 %v5594
      %6480 = vmatpush1.bf16.msra.mxu0 %v5593
      %6481 = vmatprep.subr.bf16.mxu0 %v5606
      %6482 = vmatpush1.bf16.msra.mxu0 %v5605
      %6483 = vmatprep.subr.bf16.mxu0 %v5618
      %6484 = vmatpush1.bf16.msra.mxu0 %v5617
      %6485 = vmatprep.mubr.bf16.mxu0 %v3886
      %6486 = vmatmul.mubr.bf16.gmra.mrb[0].mxu0 %v3885
      %v6487 = vpop.f32.mrb[0].mxu0
      %v6488 = vadd.f32 0.0, %v6487
      %v6489 = vpop.f32.mrb[0].mxu0
      %v6490 = vadd.f32 0.0, %v6489
      %v6491 = vpop.f32.mrb[0].mxu0
      %v6492 = vadd.f32 0.0, %v6491
      %v6493 = vpop.f32.mrb[0].mxu0
      %v6494 = vadd.f32 0.0, %v6493
      %6495 = vmatprep.mubr.bf16.mxu0 %v3890
      %6496 = vmatmul.mubr.bf16.gmra.mrb[0].mxu0 %v3889
      %v6497 = vpop.f32.mrb[0].mxu0
      %v6498 = vadd.f32 0.0, %v6497
      %v6499 = vpop.f32.mrb[0].mxu0
      %v6500 = vadd.f32 0.0, %v6499
      %v6501 = vpop.f32.mrb[0].mxu0
      %v6502 = vadd.f32 0.0, %v6501
      %v6503 = vpop.f32.mrb[0].mxu0
      %v6504 = vadd.f32 0.0, %v6503
      %6505 = vmatprep.mubr.bf16.mxu0 %v3894
      %6506 = vmatmul.mubr.bf16.gmra.mrb[0].mxu0 %v3893
      %v6507 = vpop.f32.mrb[0].mxu0
      %v6508 = vadd.f32 0.0, %v6507
      %v6509 = vpop.f32.mrb[0].mxu0
      %v6510 = vadd.f32 0.0, %v6509
      %v6511 = vpop.f32.mrb[0].mxu0
      %v6512 = vadd.f32 0.0, %v6511
      %v6513 = vpop.f32.mrb[0].mxu0
      %v6514 = vadd.f32 0.0, %v6513
      %6515 = vdwg.mxu0
      %6516 = vmatprep.subr.bf16.mxu0 %v5630
      %6517 = vmatpush1.bf16.msra.mxu0 %v5629
      %6518 = vmatprep.subr.bf16.mxu0 %v5642
      %6519 = vmatpush1.bf16.msra.mxu0 %v5641
      %6520 = vmatprep.subr.bf16.mxu0 %v5654
      %6521 = vmatpush1.bf16.msra.mxu0 %v5653
      %6522 = vmatprep.subr.bf16.mxu0 %v5666
      %6523 = vmatpush1.bf16.msra.mxu0 %v5665
      %6524 = vmatprep.subr.bf16.mxu0 %v5678
      %6525 = vmatpush1.bf16.msra.mxu0 %v5677
      %6526 = vmatprep.subr.bf16.mxu0 %v5690
      %6527 = vmatpush1.bf16.msra.mxu0 %v5689
      %6528 = vmatprep.subr.bf16.mxu0 %v5702
      %6529 = vmatpush1.bf16.msra.mxu0 %v5701
      %6530 = vmatprep.subr.bf16.mxu0 %v5714
      %6531 = vmatpush1.bf16.msra.mxu0 %v5713
      %6532 = vmatprep.subr.bf16.mxu0 %v5726
      %6533 = vmatpush1.bf16.msra.mxu0 %v5725
      %6534 = vmatprep.subr.bf16.mxu0 %v5738
      %6535 = vmatpush1.bf16.msra.mxu0 %v5737
      %6536 = vmatprep.subr.bf16.mxu0 %v5750
      %6537 = vmatpush1.bf16.msra.mxu0 %v5749
      %6538 = vmatprep.subr.bf16.mxu0 %v5762
      %6539 = vmatpush1.bf16.msra.mxu0 %v5761
      %6540 = vmatprep.subr.bf16.mxu0 %v5774
      %6541 = vmatpush1.bf16.msra.mxu0 %v5773
      %6542 = vmatprep.subr.bf16.mxu0 %v5786
      %6543 = vmatpush1.bf16.msra.mxu0 %v5785
      %6544 = vmatprep.subr.bf16.mxu0 %v5798
      %6545 = vmatpush1.bf16.msra.mxu0 %v5797
      %6546 = vmatprep.subr.bf16.mxu0 %v5810
      %6547 = vmatpush1.bf16.msra.mxu0 %v5809
      %6548 = vmatprep.mubr.bf16.mxu0 %v3888
      %6549 = vmatmul.mubr.bf16.gmra.mrb[0].mxu0 %v3887
      %v6550 = vpop.f32.mrb[0].mxu0
      %v6551 = vadd.f32 %v6488, %v6550
      %v6552 = vpop.f32.mrb[0].mxu0
      %v6553 = vadd.f32 %v6490, %v6552
      %v6554 = vpop.f32.mrb[0].mxu0
      %v6555 = vadd.f32 %v6492, %v6554
      %v6556 = vpop.f32.mrb[0].mxu0
      %v6557 = vadd.f32 %v6494, %v6556
      %6558 = vmatprep.mubr.bf16.mxu0 %v3892
      %6559 = vmatmul.mubr.bf16.gmra.mrb[0].mxu0 %v3891
      %v6560 = vpop.f32.mrb[0].mxu0
      %v6561 = vadd.f32 %v6498, %v6560
      %v6562 = vpop.f32.mrb[0].mxu0
      %v6563 = vadd.f32 %v6500, %v6562
      %v6564 = vpop.f32.mrb[0].mxu0
      %v6565 = vadd.f32 %v6502, %v6564
      %v6566 = vpop.f32.mrb[0].mxu0
      %v6567 = vadd.f32 %v6504, %v6566
      %6568 = vmatprep.mubr.bf16.mxu0 %v3896
      %6569 = vmatmul.mubr.bf16.gmra.mrb[0].mxu0 %v3895
      %v6570 = vpop.f32.mrb[0].mxu0
      %v6571 = vadd.f32 %v6508, %v6570
      %v6572 = vpop.f32.mrb[0].mxu0
      %v6573 = vadd.f32 %v6510, %v6572
      %v6574 = vpop.f32.mrb[0].mxu0
      %v6575 = vadd.f32 %v6512, %v6574
      %v6576 = vpop.f32.mrb[0].mxu0
      %v6577 = vadd.f32 %v6514, %v6576
      %6578 = vdwg.mxu0
      %6579 = vmatprep.subr.bf16.mxu0 %v5440
      %6580 = vmatpush1.bf16.msra.mxu0 %v5439
      %6581 = vmatprep.subr.bf16.mxu0 %v5452
      %6582 = vmatpush1.bf16.msra.mxu0 %v5451
      %6583 = vmatprep.subr.bf16.mxu0 %v5464
      %6584 = vmatpush1.bf16.msra.mxu0 %v5463
      %6585 = vmatprep.subr.bf16.mxu0 %v5476
      %6586 = vmatpush1.bf16.msra.mxu0 %v5475
      %6587 = vmatprep.subr.bf16.mxu0 %v5488
      %6588 = vmatpush1.bf16.msra.mxu0 %v5487
      %6589 = vmatprep.subr.bf16.mxu0 %v5500
      %6590 = vmatpush1.bf16.msra.mxu0 %v5499
      %6591 = vmatprep.subr.bf16.mxu0 %v5512
      %6592 = vmatpush1.bf16.msra.mxu0 %v5511
      %6593 = vmatprep.subr.bf16.mxu0 %v5524
      %6594 = vmatpush1.bf16.msra.mxu0 %v5523
      %6595 = vmatprep.subr.bf16.mxu0 %v5536
      %6596 = vmatpush1.bf16.msra.mxu0 %v5535
      %6597 = vmatprep.subr.bf16.mxu0 %v5548
      %6598 = vmatpush1.bf16.msra.mxu0 %v5547
      %6599 = vmatprep.subr.bf16.mxu0 %v5560
      %6600 = vmatpush1.bf16.msra.mxu0 %v5559
      %6601 = vmatprep.subr.bf16.mxu0 %v5572
      %6602 = vmatpush1.bf16.msra.mxu0 %v5571
      %6603 = vmatprep.subr.bf16.mxu0 %v5584
      %6604 = vmatpush1.bf16.msra.mxu0 %v5583
      %6605 = vmatprep.subr.bf16.mxu0 %v5596
      %6606 = vmatpush1.bf16.msra.mxu0 %v5595
      %6607 = vmatprep.subr.bf16.mxu0 %v5608
      %6608 = vmatpush1.bf16.msra.mxu0 %v5607
      %6609 = vmatprep.subr.bf16.mxu0 %v5620
      %6610 = vmatpush1.bf16.msra.mxu0 %v5619
      %6611 = vmatprep.mubr.bf16.mxu0 %v3886
      %6612 = vmatmul.mubr.bf16.gmra.mrb[0].mxu0 %v3885
      %v6613 = vpop.f32.mrb[0].mxu0
      %v6614 = vadd.f32 0.0, %v6613
      %v6615 = vpop.f32.mrb[0].mxu0
      %v6616 = vadd.f32 0.0, %v6615
      %v6617 = vpop.f32.mrb[0].mxu0
      %v6618 = vadd.f32 0.0, %v6617
      %v6619 = vpop.f32.mrb[0].mxu0
      %v6620 = vadd.f32 0.0, %v6619
      %6621 = vmatprep.mubr.bf16.mxu0 %v3890
      %6622 = vmatmul.mubr.bf16.gmra.mrb[0].mxu0 %v3889
      %v6623 = vpop.f32.mrb[0].mxu0
      %v6624 = vadd.f32 0.0, %v6623
      %v6625 = vpop.f32.mrb[0].mxu0
      %v6626 = vadd.f32 0.0, %v6625
      %v6627 = vpop.f32.mrb[0].mxu0
      %v6628 = vadd.f32 0.0, %v6627
      %v6629 = vpop.f32.mrb[0].mxu0
      %v6630 = vadd.f32 0.0, %v6629
      %6631 = vmatprep.mubr.bf16.mxu0 %v3894
      %6632 = vmatmul.mubr.bf16.gmra.mrb[0].mxu0 %v3893
      %v6633 = vpop.f32.mrb[0].mxu0
      %v6634 = vadd.f32 0.0, %v6633
      %v6635 = vpop.f32.mrb[0].mxu0
      %v6636 = vadd.f32 0.0, %v6635
      %v6637 = vpop.f32.mrb[0].mxu0
      %v6638 = vadd.f32 0.0, %v6637
      %v6639 = vpop.f32.mrb[0].mxu0
      %v6640 = vadd.f32 0.0, %v6639
      %6641 = vdwg.mxu0
      %6642 = vmatprep.subr.bf16.mxu0 %v5632
      %6643 = vmatpush1.bf16.msra.mxu0 %v5631
      %6644 = vmatprep.subr.bf16.mxu0 %v5644
      %6645 = vmatpush1.bf16.msra.mxu0 %v5643
      %6646 = vmatprep.subr.bf16.mxu0 %v5656
      %6647 = vmatpush1.bf16.msra.mxu0 %v5655
      %6648 = vmatprep.subr.bf16.mxu0 %v5668
      %6649 = vmatpush1.bf16.msra.mxu0 %v5667
      %6650 = vmatprep.subr.bf16.mxu0 %v5680
      %6651 = vmatpush1.bf16.msra.mxu0 %v5679
      %6652 = vmatprep.subr.bf16.mxu0 %v5692
      %6653 = vmatpush1.bf16.msra.mxu0 %v5691
      %6654 = vmatprep.subr.bf16.mxu0 %v5704
      %6655 = vmatpush1.bf16.msra.mxu0 %v5703
      %6656 = vmatprep.subr.bf16.mxu0 %v5716
      %6657 = vmatpush1.bf16.msra.mxu0 %v5715
      %6658 = vmatprep.subr.bf16.mxu0 %v5728
      %6659 = vmatpush1.bf16.msra.mxu0 %v5727
      %6660 = vmatprep.subr.bf16.mxu0 %v5740
      %6661 = vmatpush1.bf16.msra.mxu0 %v5739
      %6662 = vmatprep.subr.bf16.mxu0 %v5752
      %6663 = vmatpush1.bf16.msra.mxu0 %v5751
      %6664 = vmatprep.subr.bf16.mxu0 %v5764
      %6665 = vmatpush1.bf16.msra.mxu0 %v5763
      %6666 = vmatprep.subr.bf16.mxu0 %v5776
      %6667 = vmatpush1.bf16.msra.mxu0 %v5775
      %6668 = vmatprep.subr.bf16.mxu0 %v5788
      %6669 = vmatpush1.bf16.msra.mxu0 %v5787
      %6670 = vmatprep.subr.bf16.mxu0 %v5800
      %6671 = vmatpush1.bf16.msra.mxu0 %v5799
      %6672 = vmatprep.subr.bf16.mxu0 %v5812
      %6673 = vmatpush1.bf16.msra.mxu0 %v5811
      %6674 = vmatprep.mubr.bf16.mxu0 %v3888
      %6675 = vmatmul.mubr.bf16.gmra.mrb[0].mxu0 %v3887
      %v6676 = vpop.f32.mrb[0].mxu0
      %v6677 = vadd.f32 %v6614, %v6676
      %v6678 = vpop.f32.mrb[0].mxu0
      %v6679 = vadd.f32 %v6616, %v6678
      %v6680 = vpop.f32.mrb[0].mxu0
      %v6681 = vadd.f32 %v6618, %v6680
      %v6682 = vpop.f32.mrb[0].mxu0
      %v6683 = vadd.f32 %v6620, %v6682
      %6684 = vmatprep.mubr.bf16.mxu0 %v3892
      %6685 = vmatmul.mubr.bf16.gmra.mrb[0].mxu0 %v3891
      %v6686 = vpop.f32.mrb[0].mxu0
      %v6687 = vadd.f32 %v6624, %v6686
      %v6688 = vpop.f32.mrb[0].mxu0
      %v6689 = vadd.f32 %v6626, %v6688
      %v6690 = vpop.f32.mrb[0].mxu0
      %v6691 = vadd.f32 %v6628, %v6690
      %v6692 = vpop.f32.mrb[0].mxu0
      %v6693 = vadd.f32 %v6630, %v6692
      %6694 = vmatprep.mubr.bf16.mxu0 %v3896
      %6695 = vmatmul.mubr.bf16.gmra.mrb[0].mxu0 %v3895
      %v6696 = vpop.f32.mrb[0].mxu0
      %v6697 = vadd.f32 %v6634, %v6696
      %v6698 = vpop.f32.mrb[0].mxu0
      %v6699 = vadd.f32 %v6636, %v6698
      %v6700 = vpop.f32.mrb[0].mxu0
      %v6701 = vadd.f32 %v6638, %v6700
      %v6702 = vpop.f32.mrb[0].mxu0
      %v6703 = vadd.f32 %v6640, %v6702
      %6704 = vdwg.mxu0
      %6705 = vmatprep.subr.bf16.mxu0 %v5442
      %6706 = vmatpush1.bf16.msra.mxu0 %v5441
      %6707 = vmatprep.subr.bf16.mxu0 %v5454
      %6708 = vmatpush1.bf16.msra.mxu0 %v5453
      %6709 = vmatprep.subr.bf16.mxu0 %v5466
      %6710 = vmatpush1.bf16.msra.mxu0 %v5465
      %6711 = vmatprep.subr.bf16.mxu0 %v5478
      %6712 = vmatpush1.bf16.msra.mxu0 %v5477
      %6713 = vmatprep.subr.bf16.mxu0 %v5490
      %6714 = vmatpush1.bf16.msra.mxu0 %v5489
      %6715 = vmatprep.subr.bf16.mxu0 %v5502
      %6716 = vmatpush1.bf16.msra.mxu0 %v5501
      %6717 = vmatprep.subr.bf16.mxu0 %v5514
      %6718 = vmatpush1.bf16.msra.mxu0 %v5513
      %6719 = vmatprep.subr.bf16.mxu0 %v5526
      %6720 = vmatpush1.bf16.msra.mxu0 %v5525
      %6721 = vmatprep.subr.bf16.mxu0 %v5538
      %6722 = vmatpush1.bf16.msra.mxu0 %v5537
      %6723 = vmatprep.subr.bf16.mxu0 %v5550
      %6724 = vmatpush1.bf16.msra.mxu0 %v5549
      %6725 = vmatprep.subr.bf16.mxu0 %v5562
      %6726 = vmatpush1.bf16.msra.mxu0 %v5561
      %6727 = vmatprep.subr.bf16.mxu0 %v5574
      %6728 = vmatpush1.bf16.msra.mxu0 %v5573
      %6729 = vmatprep.subr.bf16.mxu0 %v5586
      %6730 = vmatpush1.bf16.msra.mxu0 %v5585
      %6731 = vmatprep.subr.bf16.mxu0 %v5598
      %6732 = vmatpush1.bf16.msra.mxu0 %v5597
      %6733 = vmatprep.subr.bf16.mxu0 %v5610
      %6734 = vmatpush1.bf16.msra.mxu0 %v5609
      %6735 = vmatprep.subr.bf16.mxu0 %v5622
      %6736 = vmatpush1.bf16.msra.mxu0 %v5621
      %6737 = vmatprep.mubr.bf16.mxu0 %v3886
      %6738 = vmatmul.mubr.bf16.gmra.mrb[0].mxu0 %v3885
      %v6739 = vpop.f32.mrb[0].mxu0
      %v6740 = vadd.f32 0.0, %v6739
      %v6741 = vpop.f32.mrb[0].mxu0
      %v6742 = vadd.f32 0.0, %v6741
      %v6743 = vpop.f32.mrb[0].mxu0
      %v6744 = vadd.f32 0.0, %v6743
      %v6745 = vpop.f32.mrb[0].mxu0
      %v6746 = vadd.f32 0.0, %v6745
      %6747 = vmatprep.mubr.bf16.mxu0 %v3890
      %6748 = vmatmul.mubr.bf16.gmra.mrb[0].mxu0 %v3889
      %v6749 = vpop.f32.mrb[0].mxu0
      %v6750 = vadd.f32 0.0, %v6749
      %v6751 = vpop.f32.mrb[0].mxu0
      %v6752 = vadd.f32 0.0, %v6751
      %v6753 = vpop.f32.mrb[0].mxu0
      %v6754 = vadd.f32 0.0, %v6753
      %v6755 = vpop.f32.mrb[0].mxu0
      %v6756 = vadd.f32 0.0, %v6755
      %6757 = vmatprep.mubr.bf16.mxu0 %v3894
      %6758 = vmatmul.mubr.bf16.gmra.mrb[0].mxu0 %v3893
      %v6759 = vpop.f32.mrb[0].mxu0
      %v6760 = vadd.f32 0.0, %v6759
      %v6761 = vpop.f32.mrb[0].mxu0
      %v6762 = vadd.f32 0.0, %v6761
      %v6763 = vpop.f32.mrb[0].mxu0
      %v6764 = vadd.f32 0.0, %v6763
      %v6765 = vpop.f32.mrb[0].mxu0
      %v6766 = vadd.f32 0.0, %v6765
      %6767 = vdwg.mxu0
      %6768 = vmatprep.subr.bf16.mxu0 %v5634
      %6769 = vmatpush1.bf16.msra.mxu0 %v5633
      %6770 = vmatprep.subr.bf16.mxu0 %v5646
      %6771 = vmatpush1.bf16.msra.mxu0 %v5645
      %6772 = vmatprep.subr.bf16.mxu0 %v5658
      %6773 = vmatpush1.bf16.msra.mxu0 %v5657
      %6774 = vmatprep.subr.bf16.mxu0 %v5670
      %6775 = vmatpush1.bf16.msra.mxu0 %v5669
      %6776 = vmatprep.subr.bf16.mxu0 %v5682
      %6777 = vmatpush1.bf16.msra.mxu0 %v5681
      %6778 = vmatprep.subr.bf16.mxu0 %v5694
      %6779 = vmatpush1.bf16.msra.mxu0 %v5693
      %6780 = vmatprep.subr.bf16.mxu0 %v5706
      %6781 = vmatpush1.bf16.msra.mxu0 %v5705
      %6782 = vmatprep.subr.bf16.mxu0 %v5718
      %6783 = vmatpush1.bf16.msra.mxu0 %v5717
      %6784 = vmatprep.subr.bf16.mxu0 %v5730
      %6785 = vmatpush1.bf16.msra.mxu0 %v5729
      %6786 = vmatprep.subr.bf16.mxu0 %v5742
      %6787 = vmatpush1.bf16.msra.mxu0 %v5741
      %6788 = vmatprep.subr.bf16.mxu0 %v5754
      %6789 = vmatpush1.bf16.msra.mxu0 %v5753
      %6790 = vmatprep.subr.bf16.mxu0 %v5766
      %6791 = vmatpush1.bf16.msra.mxu0 %v5765
      %6792 = vmatprep.subr.bf16.mxu0 %v5778
      %6793 = vmatpush1.bf16.msra.mxu0 %v5777
      %6794 = vmatprep.subr.bf16.mxu0 %v5790
      %6795 = vmatpush1.bf16.msra.mxu0 %v5789
      %6796 = vmatprep.subr.bf16.mxu0 %v5802
      %6797 = vmatpush1.bf16.msra.mxu0 %v5801
      %6798 = vmatprep.subr.bf16.mxu0 %v5814
      %6799 = vmatpush1.bf16.msra.mxu0 %v5813
      %6800 = vmatprep.mubr.bf16.mxu0 %v3888
      %6801 = vmatmul.mubr.bf16.gmra.mrb[0].mxu0 %v3887
      %v6802 = vpop.f32.mrb[0].mxu0
      %v6803 = vadd.f32 %v6740, %v6802
      %v6804 = vpop.f32.mrb[0].mxu0
      %v6805 = vadd.f32 %v6742, %v6804
      %v6806 = vpop.f32.mrb[0].mxu0
      %v6807 = vadd.f32 %v6744, %v6806
      %v6808 = vpop.f32.mrb[0].mxu0
      %v6809 = vadd.f32 %v6746, %v6808
      %6810 = vmatprep.mubr.bf16.mxu0 %v3892
      %6811 = vmatmul.mubr.bf16.gmra.mrb[0].mxu0 %v3891
      %v6812 = vpop.f32.mrb[0].mxu0
      %v6813 = vadd.f32 %v6750, %v6812
      %v6814 = vpop.f32.mrb[0].mxu0
      %v6815 = vadd.f32 %v6752, %v6814
      %v6816 = vpop.f32.mrb[0].mxu0
      %v6817 = vadd.f32 %v6754, %v6816
      %v6818 = vpop.f32.mrb[0].mxu0
      %v6819 = vadd.f32 %v6756, %v6818
      %6820 = vmatprep.mubr.bf16.mxu0 %v3896
      %6821 = vmatmul.mubr.bf16.gmra.mrb[0].mxu0 %v3895
      %v6822 = vpop.f32.mrb[0].mxu0
      %v6823 = vadd.f32 %v6760, %v6822
      %v6824 = vpop.f32.mrb[0].mxu0
      %v6825 = vadd.f32 %v6762, %v6824
      %v6826 = vpop.f32.mrb[0].mxu0
      %v6827 = vadd.f32 %v6764, %v6826
      %v6828 = vpop.f32.mrb[0].mxu0
      %v6829 = vadd.f32 %v6766, %v6828
      %6830 = vdwg.mxu0
      %6831 = vmatprep.subr.bf16.mxu0 %v5444
      %6832 = vmatpush1.bf16.msra.mxu0 %v5443
      %6833 = vmatprep.subr.bf16.mxu0 %v5456
      %6834 = vmatpush1.bf16.msra.mxu0 %v5455
      %6835 = vmatprep.subr.bf16.mxu0 %v5468
      %6836 = vmatpush1.bf16.msra.mxu0 %v5467
      %6837 = vmatprep.subr.bf16.mxu0 %v5480
      %6838 = vmatpush1.bf16.msra.mxu0 %v5479
      %6839 = vmatprep.subr.bf16.mxu0 %v5492
      %6840 = vmatpush1.bf16.msra.mxu0 %v5491
      %6841 = vmatprep.subr.bf16.mxu0 %v5504
      %6842 = vmatpush1.bf16.msra.mxu0 %v5503
      %6843 = vmatprep.subr.bf16.mxu0 %v5516
      %6844 = vmatpush1.bf16.msra.mxu0 %v5515
      %6845 = vmatprep.subr.bf16.mxu0 %v5528
      %6846 = vmatpush1.bf16.msra.mxu0 %v5527
      %6847 = vmatprep.subr.bf16.mxu0 %v5540
      %6848 = vmatpush1.bf16.msra.mxu0 %v5539
      %6849 = vmatprep.subr.bf16.mxu0 %v5552
      %6850 = vmatpush1.bf16.msra.mxu0 %v5551
      %6851 = vmatprep.subr.bf16.mxu0 %v5564
      %6852 = vmatpush1.bf16.msra.mxu0 %v5563
      %6853 = vmatprep.subr.bf16.mxu0 %v5576
      %6854 = vmatpush1.bf16.msra.mxu0 %v5575
      %6855 = vmatprep.subr.bf16.mxu0 %v5588
      %6856 = vmatpush1.bf16.msra.mxu0 %v5587
      %6857 = vmatprep.subr.bf16.mxu0 %v5600
      %6858 = vmatpush1.bf16.msra.mxu0 %v5599
      %6859 = vmatprep.subr.bf16.mxu0 %v5612
      %6860 = vmatpush1.bf16.msra.mxu0 %v5611
      %6861 = vmatprep.subr.bf16.mxu0 %v5624
      %6862 = vmatpush1.bf16.msra.mxu0 %v5623
      %6863 = vmatprep.mubr.bf16.mxu0 %v3886
      %6864 = vmatmul.mubr.bf16.gmra.mrb[0].mxu0 %v3885
      %v6865 = vpop.f32.mrb[0].mxu0
      %v6866 = vadd.f32 0.0, %v6865
      %v6867 = vpop.f32.mrb[0].mxu0
      %v6868 = vadd.f32 0.0, %v6867
      %v6869 = vpop.f32.mrb[0].mxu0
      %v6870 = vadd.f32 0.0, %v6869
      %v6871 = vpop.f32.mrb[0].mxu0
      %v6872 = vadd.f32 0.0, %v6871
      %6873 = vmatprep.mubr.bf16.mxu0 %v3890
      %6874 = vmatmul.mubr.bf16.gmra.mrb[0].mxu0 %v3889
      %v6875 = vpop.f32.mrb[0].mxu0
      %v6876 = vadd.f32 0.0, %v6875
      %v6877 = vpop.f32.mrb[0].mxu0
      %v6878 = vadd.f32 0.0, %v6877
      %v6879 = vpop.f32.mrb[0].mxu0
      %v6880 = vadd.f32 0.0, %v6879
      %v6881 = vpop.f32.mrb[0].mxu0
      %v6882 = vadd.f32 0.0, %v6881
      %6883 = vmatprep.mubr.bf16.mxu0 %v3894
      %6884 = vmatmul.mubr.bf16.gmra.mrb[0].mxu0 %v3893
      %v6885 = vpop.f32.mrb[0].mxu0
      %v6886 = vadd.f32 0.0, %v6885
      %v6887 = vpop.f32.mrb[0].mxu0
      %v6888 = vadd.f32 0.0, %v6887
      %v6889 = vpop.f32.mrb[0].mxu0
      %v6890 = vadd.f32 0.0, %v6889
      %v6891 = vpop.f32.mrb[0].mxu0
      %v6892 = vadd.f32 0.0, %v6891
      %6893 = vdwg.mxu0
      %6894 = vmatprep.subr.bf16.mxu0 %v5636
      %6895 = vmatpush1.bf16.msra.mxu0 %v5635
      %6896 = vmatprep.subr.bf16.mxu0 %v5648
      %6897 = vmatpush1.bf16.msra.mxu0 %v5647
      %6898 = vmatprep.subr.bf16.mxu0 %v5660
      %6899 = vmatpush1.bf16.msra.mxu0 %v5659
      %6900 = vmatprep.subr.bf16.mxu0 %v5672
      %6901 = vmatpush1.bf16.msra.mxu0 %v5671
      %6902 = vmatprep.subr.bf16.mxu0 %v5684
      %6903 = vmatpush1.bf16.msra.mxu0 %v5683
      %6904 = vmatprep.subr.bf16.mxu0 %v5696
      %6905 = vmatpush1.bf16.msra.mxu0 %v5695
      %6906 = vmatprep.subr.bf16.mxu0 %v5708
      %6907 = vmatpush1.bf16.msra.mxu0 %v5707
      %6908 = vmatprep.subr.bf16.mxu0 %v5720
      %6909 = vmatpush1.bf16.msra.mxu0 %v5719
      %6910 = vmatprep.subr.bf16.mxu0 %v5732
      %6911 = vmatpush1.bf16.msra.mxu0 %v5731
      %6912 = vmatprep.subr.bf16.mxu0 %v5744
      %6913 = vmatpush1.bf16.msra.mxu0 %v5743
      %6914 = vmatprep.subr.bf16.mxu0 %v5756
      %6915 = vmatpush1.bf16.msra.mxu0 %v5755
      %6916 = vmatprep.subr.bf16.mxu0 %v5768
      %6917 = vmatpush1.bf16.msra.mxu0 %v5767
      %6918 = vmatprep.subr.bf16.mxu0 %v5780
      %6919 = vmatpush1.bf16.msra.mxu0 %v5779
      %6920 = vmatprep.subr.bf16.mxu0 %v5792
      %6921 = vmatpush1.bf16.msra.mxu0 %v5791
      %6922 = vmatprep.subr.bf16.mxu0 %v5804
      %6923 = vmatpush1.bf16.msra.mxu0 %v5803
      %6924 = vmatprep.subr.bf16.mxu0 %v5816
      %6925 = vmatpush1.bf16.msra.mxu0 %v5815
      %6926 = vmatprep.mubr.bf16.mxu0 %v3888
      %6927 = vmatmul.mubr.bf16.gmra.mrb[0].mxu0 %v3887
      %v6928 = vpop.f32.mrb[0].mxu0
      %v6929 = vadd.f32 %v6866, %v6928
      %v6930 = vpop.f32.mrb[0].mxu0
      %v6931 = vadd.f32 %v6868, %v6930
      %v6932 = vpop.f32.mrb[0].mxu0
      %v6933 = vadd.f32 %v6870, %v6932
      %v6934 = vpop.f32.mrb[0].mxu0
      %v6935 = vadd.f32 %v6872, %v6934
      %6936 = vmatprep.mubr.bf16.mxu0 %v3892
      %6937 = vmatmul.mubr.bf16.gmra.mrb[0].mxu0 %v3891
      %v6938 = vpop.f32.mrb[0].mxu0
      %v6939 = vadd.f32 %v6876, %v6938
      %v6940 = vpop.f32.mrb[0].mxu0
      %v6941 = vadd.f32 %v6878, %v6940
      %v6942 = vpop.f32.mrb[0].mxu0
      %v6943 = vadd.f32 %v6880, %v6942
      %v6944 = vpop.f32.mrb[0].mxu0
      %v6945 = vadd.f32 %v6882, %v6944
      %6946 = vmatprep.mubr.bf16.mxu0 %v3896
      %6947 = vmatmul.mubr.bf16.gmra.mrb[0].mxu0 %v3895
      %v6948 = vpop.f32.mrb[0].mxu0
      %v6949 = vadd.f32 %v6886, %v6948
      %v6950 = vpop.f32.mrb[0].mxu0
      %v6951 = vadd.f32 %v6888, %v6950
      %v6952 = vpop.f32.mrb[0].mxu0
      %v6953 = vadd.f32 %v6890, %v6952
      %v6954 = vpop.f32.mrb[0].mxu0
      %v6955 = vadd.f32 %v6892, %v6954
      %6956 = vdwg.mxu0
      %v6981 = vrot.slane %v6299, 7
      %v6982 = vrot.slane %v6301, 7
      %v6983 = vrot.slane %v6425, 7
      %v6984 = vrot.slane %v6427, 7
      %v6985 = vrot.slane %v6303, 7
      %v6986 = vsel %vm3549, %v6981, %v6985
      %v6987 = vrot.slane %v6305, 7
      %v6988 = vsel %vm3549, %v6982, %v6987
      %v6989 = vrot.slane %v6429, 7
      %v6990 = vsel %vm3549, %v6983, %v6989
      %v6991 = vrot.slane %v6431, 7
      %v6992 = vsel %vm3549, %v6984, %v6991
      %v6993 = vrot.slane %v6309, 7
      %v6994 = vsel %vm3549, %v6985, %v6993
      %v6995 = vrot.slane %v6311, 7
      %v6996 = vsel %vm3549, %v6987, %v6995
      %v6997 = vrot.slane %v6435, 7
      %v6998 = vsel %vm3549, %v6989, %v6997
      %v6999 = vrot.slane %v6437, 7
      %v7000 = vsel %vm3549, %v6991, %v6999
      %v7001 = vrot.slane %v6313, 7
      %v7002 = vsel %vm3549, %v6993, %v7001
      %v7003 = vrot.slane %v6315, 7
      %v7004 = vsel %vm3549, %v6995, %v7003
      %v7005 = vrot.slane %v6439, 7
      %v7006 = vsel %vm3549, %v6997, %v7005
      %v7007 = vrot.slane %v6441, 7
      %v7008 = vsel %vm3549, %v6999, %v7007
      %v7009 = vrot.slane %v6319, 7
      %v7010 = vsel %vm3549, %v7001, %v7009
      %v7011 = vrot.slane %v6321, 7
      %v7012 = vsel %vm3549, %v7003, %v7011
      %v7013 = vrot.slane %v6445, 7
      %v7014 = vsel %vm3549, %v7005, %v7013
      %v7015 = vrot.slane %v6447, 7
      %v7016 = vsel %vm3549, %v7007, %v7015
      %v7017 = vrot.slane %v6323, 7
      %v7018 = vsel %vm3549, %v7009, %v7017
      %v7019 = vrot.slane %v6325, 7
      %v7020 = vsel %vm3549, %v7011, %v7019
      %v7021 = vrot.slane %v6449, 7
      %v7022 = vsel %vm3549, %v7013, %v7021
      %v7023 = vrot.slane %v6451, 7
      %v7024 = vsel %vm3549, %v7015, %v7023
      %v7049 = vsel %vm3549, 0.0, %v6981
      %v7050 = vsel %vm3549, 0.0, %v6982
      %v7051 = vsel %vm3549, 0.0, %v6983
      %v7052 = vsel %vm3549, 0.0, %v6984
      %v7053 = vsel %vm461, %v7049, 0.0
      %v7054 = vsel %vm461, %v7050, 0.0
      %v7055 = vsel %vm461, %v7051, 0.0
      %v7056 = vsel %vm461, %v7052, 0.0
      %v7057 = vsel %vm462, %v6986, 0.0
      %v7058 = vsel %vm462, %v6988, 0.0
      %v7059 = vsel %vm462, %v6990, 0.0
      %v7060 = vsel %vm462, %v6992, 0.0
      %v7061 = vsel %vm461, %v6994, 0.0
      %v7062 = vsel %vm461, %v6996, 0.0
      %v7063 = vsel %vm461, %v6998, 0.0
      %v7064 = vsel %vm461, %v7000, 0.0
      %v7065 = vsel %vm462, %v7002, 0.0
      %v7066 = vsel %vm462, %v7004, 0.0
      %v7067 = vsel %vm462, %v7006, 0.0
      %v7068 = vsel %vm462, %v7008, 0.0
      %v7069 = vsel %vm461, %v7010, 0.0
      %v7070 = vsel %vm461, %v7012, 0.0
      %v7071 = vsel %vm461, %v7014, 0.0
      %v7072 = vsel %vm461, %v7016, 0.0
      %v7073 = vsel %vm462, %v7018, 0.0
      %v7074 = vsel %vm462, %v7020, 0.0
      %v7075 = vsel %vm462, %v7022, 0.0
      %v7076 = vsel %vm462, %v7024, 0.0
      %v7101 = vrot.slane %v6803, 1
      %v7102 = vrot.slane %v6807, 1
      %v7103 = vsel %vm3670, %v7101, %v7102
      %v7104 = vrot.slane %v6805, 1
      %v7105 = vrot.slane %v6809, 1
      %v7106 = vsel %vm3670, %v7104, %v7105
      %v7107 = vrot.slane %v6929, 1
      %v7108 = vrot.slane %v6933, 1
      %v7109 = vsel %vm3670, %v7107, %v7108
      %v7110 = vrot.slane %v6931, 1
      %v7111 = vrot.slane %v6935, 1
      %v7112 = vsel %vm3670, %v7110, %v7111
      %v7113 = vrot.slane %v6813, 1
      %v7114 = vsel %vm3670, %v7102, %v7113
      %v7115 = vrot.slane %v6815, 1
      %v7116 = vsel %vm3670, %v7105, %v7115
      %v7117 = vrot.slane %v6939, 1
      %v7118 = vsel %vm3670, %v7108, %v7117
      %v7119 = vrot.slane %v6941, 1
      %v7120 = vsel %vm3670, %v7111, %v7119
      %v7121 = vrot.slane %v6817, 1
      %v7122 = vsel %vm3670, %v7113, %v7121
      %v7123 = vrot.slane %v6819, 1
      %v7124 = vsel %vm3670, %v7115, %v7123
      %v7125 = vrot.slane %v6943, 1
      %v7126 = vsel %vm3670, %v7117, %v7125
      %v7127 = vrot.slane %v6945, 1
      %v7128 = vsel %vm3670, %v7119, %v7127
      %v7129 = vrot.slane %v6823, 1
      %v7130 = vsel %vm3670, %v7121, %v7129
      %v7131 = vrot.slane %v6825, 1
      %v7132 = vsel %vm3670, %v7123, %v7131
      %v7133 = vrot.slane %v6949, 1
      %v7134 = vsel %vm3670, %v7125, %v7133
      %v7135 = vrot.slane %v6951, 1
      %v7136 = vsel %vm3670, %v7127, %v7135
      %v7137 = vrot.slane %v6827, 1
      %v7138 = vsel %vm3670, %v7129, %v7137
      %v7139 = vrot.slane %v6829, 1
      %v7140 = vsel %vm3670, %v7131, %v7139
      %v7141 = vrot.slane %v6953, 1
      %v7142 = vsel %vm3670, %v7133, %v7141
      %v7143 = vrot.slane %v6955, 1
      %v7144 = vsel %vm3670, %v7135, %v7143
      %v7169 = vsel %vm3670, %v7137, 0.0
      %v7170 = vsel %vm3670, %v7139, 0.0
      %v7171 = vsel %vm3670, %v7141, 0.0
      %v7172 = vsel %vm3670, %v7143, 0.0
      %v7173 = vsel %vm463, %v7103, 0.0
      %v7174 = vsel %vm463, %v7106, 0.0
      %v7175 = vsel %vm463, %v7109, 0.0
      %v7176 = vsel %vm463, %v7112, 0.0
      %v7177 = vsel %vm464, %v7114, 0.0
      %v7178 = vsel %vm464, %v7116, 0.0
      %v7179 = vsel %vm464, %v7118, 0.0
      %v7180 = vsel %vm464, %v7120, 0.0
      %v7181 = vsel %vm463, %v7122, 0.0
      %v7182 = vsel %vm463, %v7124, 0.0
      %v7183 = vsel %vm463, %v7126, 0.0
      %v7184 = vsel %vm463, %v7128, 0.0
      %v7185 = vsel %vm464, %v7130, 0.0
      %v7186 = vsel %vm464, %v7132, 0.0
      %v7187 = vsel %vm464, %v7134, 0.0
      %v7188 = vsel %vm464, %v7136, 0.0
      %v7189 = vsel %vm463, %v7138, 0.0
      %v7190 = vsel %vm463, %v7140, 0.0
      %v7191 = vsel %vm463, %v7142, 0.0
      %v7192 = vsel %vm463, %v7144, 0.0
      %v7193 = vsel %vm464, %v7169, 0.0
      %v7194 = vsel %vm464, %v7170, 0.0
      %v7195 = vsel %vm464, %v7171, 0.0
      %v7196 = vsel %vm464, %v7172, 0.0
      %v7197 = vadd.f32 %v7053, %v6551
      %v7198 = vadd.f32 %v7054, %v6553
      %v7199 = vadd.f32 %v7055, %v6677
      %v7200 = vadd.f32 %v7056, %v6679
      %v7201 = vadd.f32 %v7057, %v6555
      %v7202 = vadd.f32 %v7058, %v6557
      %v7203 = vadd.f32 %v7059, %v6681
      %v7204 = vadd.f32 %v7060, %v6683
      %v7205 = vadd.f32 %v7061, %v6561
      %v7206 = vadd.f32 %v7062, %v6563
      %v7207 = vadd.f32 %v7063, %v6687
      %v7208 = vadd.f32 %v7064, %v6689
      %v7209 = vadd.f32 %v7065, %v6565
      %v7210 = vadd.f32 %v7066, %v6567
      %v7211 = vadd.f32 %v7067, %v6691
      %v7212 = vadd.f32 %v7068, %v6693
      %v7213 = vadd.f32 %v7069, %v6571
      %v7214 = vadd.f32 %v7070, %v6573
      %v7215 = vadd.f32 %v7071, %v6697
      %v7216 = vadd.f32 %v7072, %v6699
      %v7217 = vadd.f32 %v7073, %v6575
      %v7218 = vadd.f32 %v7074, %v6577
      %v7219 = vadd.f32 %v7075, %v6701
      %v7220 = vadd.f32 %v7076, %v6703
      %v7221 = vadd.f32 %v7197, %v7173
      %v7222 = vadd.f32 %v7198, %v7174
      %v7223 = vadd.f32 %v7199, %v7175
      %v7224 = vadd.f32 %v7200, %v7176
      %v7225 = vadd.f32 %v7201, %v7177
      %v7226 = vadd.f32 %v7202, %v7178
      %v7227 = vadd.f32 %v7203, %v7179
      %v7228 = vadd.f32 %v7204, %v7180
      %v7229 = vadd.f32 %v7205, %v7181
      %v7230 = vadd.f32 %v7206, %v7182
      %v7231 = vadd.f32 %v7207, %v7183
      %v7232 = vadd.f32 %v7208, %v7184
      %v7233 = vadd.f32 %v7209, %v7185
      %v7234 = vadd.f32 %v7210, %v7186
      %v7235 = vadd.f32 %v7211, %v7187
      %v7236 = vadd.f32 %v7212, %v7188
      %v7237 = vadd.f32 %v7213, %v7189
      %v7238 = vadd.f32 %v7214, %v7190
      %v7239 = vadd.f32 %v7215, %v7191
      %v7240 = vadd.f32 %v7216, %v7192
      %v7241 = vadd.f32 %v7217, %v7193
      %v7242 = vadd.f32 %v7218, %v7194
      %v7243 = vadd.f32 %v7219, %v7195
      %v7244 = vadd.f32 %v7220, %v7196
      %v7245 = vld [vmem:[%s4] sm:$0xf]
      %v7247 = vlaneseq
      %v7248 = vshrl.u32 %v7247, 7
      %v7249 = vsub.s32 0, %v7248
      %v7250 = vrot.slane %v7245, %v7249
      %v7251 = vlaneseq
      %v7252 = vshrl.u32 %v7251, 7
      %v7253 = vsub.s32 1, %v7252
      %v7254 = vrot.slane %v7245, %v7253
      %v7255 = vlaneseq
      %v7256 = vshrl.u32 %v7255, 7
      %v7257 = vsub.s32 2, %v7256
      %v7258 = vrot.slane %v7245, %v7257
      %v7259 = vlaneseq
      %v7260 = vshrl.u32 %v7259, 7
      %v7261 = vsub.s32 3, %v7260
      %v7262 = vrot.slane %v7245, %v7261
      %v7267 = vadd.f32 %v7221, %v7250
      %v7268 = vadd.f32 %v7222, %v7254
      %v7269 = vadd.f32 %v7223, %v7258
      %v7270 = vadd.f32 %v7224, %v7262
      %v7271 = vadd.f32 %v7225, %v7250
      %v7272 = vadd.f32 %v7226, %v7254
      %v7273 = vadd.f32 %v7227, %v7258
      %v7274 = vadd.f32 %v7228, %v7262
      %v7275 = vadd.f32 %v7229, %v7250
      %v7276 = vadd.f32 %v7230, %v7254
      %v7277 = vadd.f32 %v7231, %v7258
      %v7278 = vadd.f32 %v7232, %v7262
      %v7279 = vadd.f32 %v7233, %v7250
      %v7280 = vadd.f32 %v7234, %v7254
      %v7281 = vadd.f32 %v7235, %v7258
      %v7282 = vadd.f32 %v7236, %v7262
      %v7283 = vadd.f32 %v7237, %v7250
      %v7284 = vadd.f32 %v7238, %v7254
      %v7285 = vadd.f32 %v7239, %v7258
      %v7286 = vadd.f32 %v7240, %v7262
      %v7287 = vadd.f32 %v7241, %v7250
      %v7288 = vadd.f32 %v7242, %v7254
      %v7289 = vadd.f32 %v7243, %v7258
      %v7290 = vadd.f32 %v7244, %v7262
      %v7291 = vld [vmem:[%s5] sm:$0x77]
      %v7292 = vld [vmem:[%s5 + $0x8] sm:$0x77]
      %v7296 = vunpack.c.l.s4 1966171168
      %v7297 = vunpack.c.0.s8 %v7296
      %v7298 = vlaneseq
      %v7299 = vshrl.u32 %v7298, 7
      %v7300 = vsub.s32 %v7297, %v7299
      %v7301 = vrot.slane %v7291, %v7300
      %v7303 = vunpack.c.l.s4 1966171168
      %v7304 = vunpack.c.0.s8 %v7303
      %v7305 = vlaneseq
      %v7306 = vshrl.u32 %v7305, 7
      %v7307 = vsub.s32 %v7304, %v7306
      %v7308 = vrot.slane %v7292, %v7307
      %v7309 = vcombine.low %v7301, %v7308
      %v7310 = vcombine.high %v7301, %v7308
      %v7312 = vunpack.c.l.s4 1966171168
      %v7313 = vunpack.c.0.s8 %v7312
      %v7314 = vlaneseq
      %v7315 = vshrl.u32 %v7314, 7
      %v7316 = vsub.s32 %v7313, %v7315
      %v7317 = vrot.slane %v7309, %v7316
      %v7319 = vunpack.c.l.s4 1966171168
      %v7320 = vunpack.c.0.s8 %v7319
      %v7321 = vlaneseq
      %v7322 = vshrl.u32 %v7321, 7
      %v7323 = vsub.s32 %v7320, %v7322
      %v7324 = vrot.slane %v7310, %v7323
      %v7325 = vcombine.high %v7317, %v7317
      %v7326 = vlaneseq
      %v7327 = vshrl.u32 %v7326, 7
      %v7328 = vsub.s32 0, %v7327
      %v7329 = vrot.slane %v7317, %v7328
      %v7330 = vlaneseq
      %v7331 = vshrl.u32 %v7330, 7
      %v7332 = vsub.s32 1, %v7331
      %v7333 = vrot.slane %v7317, %v7332
      %v7334 = vlaneseq
      %v7335 = vshrl.u32 %v7334, 7
      %v7336 = vsub.s32 2, %v7335
      %v7337 = vrot.slane %v7317, %v7336
      %v7338 = vlaneseq
      %v7339 = vshrl.u32 %v7338, 7
      %v7340 = vsub.s32 3, %v7339
      %v7341 = vrot.slane %v7317, %v7340
      %v7342 = vlaneseq
      %v7343 = vshrl.u32 %v7342, 7
      %v7344 = vsub.s32 0, %v7343
      %v7345 = vrot.slane %v7324, %v7344
      %v7346 = vlaneseq
      %v7347 = vshrl.u32 %v7346, 7
      %v7348 = vsub.s32 1, %v7347
      %v7349 = vrot.slane %v7324, %v7348
      %v7350 = vlaneseq
      %v7351 = vshrl.u32 %v7350, 7
      %v7352 = vsub.s32 2, %v7351
      %v7353 = vrot.slane %v7324, %v7352
      %v7354 = vlaneseq
      %v7355 = vshrl.u32 %v7354, 7
      %v7356 = vsub.s32 3, %v7355
      %v7357 = vrot.slane %v7324, %v7356
      %v7358 = vlaneseq
      %v7359 = vshrl.u32 %v7358, 7
      %v7360 = vsub.s32 0, %v7359
      %v7361 = vrot.slane %v7325, %v7360
      %v7362 = vlaneseq
      %v7363 = vshrl.u32 %v7362, 7
      %v7364 = vsub.s32 1, %v7363
      %v7365 = vrot.slane %v7325, %v7364
      %v7366 = vlaneseq
      %v7367 = vshrl.u32 %v7366, 7
      %v7368 = vsub.s32 2, %v7367
      %v7369 = vrot.slane %v7325, %v7368
      %v7370 = vlaneseq
      %v7371 = vshrl.u32 %v7370, 7
      %v7372 = vsub.s32 3, %v7371
      %v7373 = vrot.slane %v7325, %v7372
      %v7386 = vadd.f32 %v7267, %v7329
      %v7387 = vadd.f32 %v7268, %v7333
      %v7388 = vadd.f32 %v7269, %v7337
      %v7389 = vadd.f32 %v7270, %v7341
      %v7390 = vadd.f32 %v7271, %v7329
      %v7391 = vadd.f32 %v7272, %v7333
      %v7392 = vadd.f32 %v7273, %v7337
      %v7393 = vadd.f32 %v7274, %v7341
      %v7394 = vadd.f32 %v7275, %v7345
      %v7395 = vadd.f32 %v7276, %v7349
      %v7396 = vadd.f32 %v7277, %v7353
      %v7397 = vadd.f32 %v7278, %v7357
      %v7398 = vadd.f32 %v7279, %v7345
      %v7399 = vadd.f32 %v7280, %v7349
      %v7400 = vadd.f32 %v7281, %v7353
      %v7401 = vadd.f32 %v7282, %v7357
      %v7402 = vadd.f32 %v7283, %v7361
      %v7403 = vadd.f32 %v7284, %v7365
      %v7404 = vadd.f32 %v7285, %v7369
      %v7405 = vadd.f32 %v7286, %v7373
      %v7406 = vadd.f32 %v7287, %v7361
      %v7407 = vadd.f32 %v7288, %v7365
      %v7408 = vadd.f32 %v7289, %v7369
      %v7409 = vadd.f32 %v7290, %v7373
      %v7410 = vadd.f32 %v7386, %v7390
      %v7411 = vrot.slane %v7410, 4
      %v7412 = vadd.f32 %v7410, %v7411
      %v7413 = vrot.slane %v7412, 2
      %v7414 = vadd.f32 %v7412, %v7413
      %v7415 = vrot.slane %v7414, 1
      %v7416 = vadd.f32 %v7414, %v7415
      %v7417 = vadd.f32 %v7387, %v7391
      %v7418 = vrot.slane %v7417, 4
      %v7419 = vadd.f32 %v7417, %v7418
      %v7420 = vrot.slane %v7419, 2
      %v7421 = vadd.f32 %v7419, %v7420
      %v7422 = vrot.slane %v7421, 1
      %v7423 = vadd.f32 %v7421, %v7422
      %v7424 = vadd.f32 %v7388, %v7392
      %v7425 = vrot.slane %v7424, 4
      %v7426 = vadd.f32 %v7424, %v7425
      %v7427 = vrot.slane %v7426, 2
      %v7428 = vadd.f32 %v7426, %v7427
      %v7429 = vrot.slane %v7428, 1
      %v7430 = vadd.f32 %v7428, %v7429
      %v7431 = vadd.f32 %v7389, %v7393
      %v7432 = vrot.slane %v7431, 4
      %v7433 = vadd.f32 %v7431, %v7432
      %v7434 = vrot.slane %v7433, 2
      %v7435 = vadd.f32 %v7433, %v7434
      %v7436 = vrot.slane %v7435, 1
      %v7437 = vadd.f32 %v7435, %v7436
      %v7438 = vadd.f32 %v7394, %v7398
      %v7439 = vrot.slane %v7438, 4
      %v7440 = vadd.f32 %v7438, %v7439
      %v7441 = vrot.slane %v7440, 2
      %v7442 = vadd.f32 %v7440, %v7441
      %v7443 = vrot.slane %v7442, 1
      %v7444 = vadd.f32 %v7442, %v7443
      %v7445 = vadd.f32 %v7395, %v7399
      %v7446 = vrot.slane %v7445, 4
      %v7447 = vadd.f32 %v7445, %v7446
      %v7448 = vrot.slane %v7447, 2
      %v7449 = vadd.f32 %v7447, %v7448
      %v7450 = vrot.slane %v7449, 1
      %v7451 = vadd.f32 %v7449, %v7450
      %v7452 = vadd.f32 %v7396, %v7400
      %v7453 = vrot.slane %v7452, 4
      %v7454 = vadd.f32 %v7452, %v7453
      %v7455 = vrot.slane %v7454, 2
      %v7456 = vadd.f32 %v7454, %v7455
      %v7457 = vrot.slane %v7456, 1
      %v7458 = vadd.f32 %v7456, %v7457
      %v7459 = vadd.f32 %v7397, %v7401
      %v7460 = vrot.slane %v7459, 4
      %v7461 = vadd.f32 %v7459, %v7460
      %v7462 = vrot.slane %v7461, 2
      %v7463 = vadd.f32 %v7461, %v7462
      %v7464 = vrot.slane %v7463, 1
      %v7465 = vadd.f32 %v7463, %v7464
      %v7466 = vadd.f32 %v7402, %v7406
      %v7467 = vrot.slane %v7466, 4
      %v7468 = vadd.f32 %v7466, %v7467
      %v7469 = vrot.slane %v7468, 2
      %v7470 = vadd.f32 %v7468, %v7469
      %v7471 = vrot.slane %v7470, 1
      %v7472 = vadd.f32 %v7470, %v7471
      %v7473 = vadd.f32 %v7403, %v7407
      %v7474 = vrot.slane %v7473, 4
      %v7475 = vadd.f32 %v7473, %v7474
      %v7476 = vrot.slane %v7475, 2
      %v7477 = vadd.f32 %v7475, %v7476
      %v7478 = vrot.slane %v7477, 1
      %v7479 = vadd.f32 %v7477, %v7478
      %v7480 = vadd.f32 %v7404, %v7408
      %v7481 = vrot.slane %v7480, 4
      %v7482 = vadd.f32 %v7480, %v7481
      %v7483 = vrot.slane %v7482, 2
      %v7484 = vadd.f32 %v7482, %v7483
      %v7485 = vrot.slane %v7484, 1
      %v7486 = vadd.f32 %v7484, %v7485
      %v7487 = vadd.f32 %v7405, %v7409
      %v7488 = vrot.slane %v7487, 4
      %v7489 = vadd.f32 %v7487, %v7488
      %v7490 = vrot.slane %v7489, 2
      %v7491 = vadd.f32 %v7489, %v7490
      %v7492 = vrot.slane %v7491, 1
      %v7493 = vadd.f32 %v7491, %v7492
      %v7494 = vld [vmem:[%s10] sm:$0xff]
      %v7495 = vld [vmem:[%s10 + $0x8] sm:$0xff]
      %v7496 = vld [vmem:[%s10 + $0x10] sm:$0xff]
      %v7497 = vld [vmem:[%s10 + $0x18] sm:$0xff]
      %v7498 = vld [vmem:[%s10 + $0x20] sm:$0xff]
      %v7499 = vld [vmem:[%s10 + $0x28] sm:$0xff]
      %v7500 = vld [vmem:[%s10 + $0x30] sm:$0xff]
      %v7501 = vld [vmem:[%s10 + $0x38] sm:$0xff]
      %v7502 = vld [vmem:[%s10 + $0x40] sm:$0xff]
      %v7503 = vld [vmem:[%s10 + $0x48] sm:$0xff]
      %v7504 = vld [vmem:[%s10 + $0x50] sm:$0xff]
      %v7505 = vld [vmem:[%s10 + $0x58] sm:$0xff]
      %v7506 = vld [vmem:[%s10 + $0x60] sm:$0xff]
      %v7507 = vld [vmem:[%s10 + $0x68] sm:$0xff]
      %v7508 = vld [vmem:[%s10 + $0x70] sm:$0xff]
      %v7509 = vld [vmem:[%s10 + $0x78] sm:$0xff]
      %v7510 = vld [vmem:[%s10 + $0x80] sm:$0xff]
      %v7511 = vld [vmem:[%s10 + $0x88] sm:$0xff]
      %v7512 = vld [vmem:[%s10 + $0x90] sm:$0xff]
      %v7513 = vld [vmem:[%s10 + $0x98] sm:$0xff]
      %v7514 = vld [vmem:[%s10 + $0xa0] sm:$0xff]
      %v7515 = vld [vmem:[%s10 + $0xa8] sm:$0xff]
      %v7516 = vld [vmem:[%s10 + $0xb0] sm:$0xff]
      %v7517 = vld [vmem:[%s10 + $0xb8] sm:$0xff]
      %v7518 = vld [vmem:[%s10 + $0xc0] sm:$0xff]
      %v7519 = vld [vmem:[%s10 + $0xc8] sm:$0xff]
      %v7520 = vld [vmem:[%s10 + $0xd0] sm:$0xff]
      %v7521 = vld [vmem:[%s10 + $0xd8] sm:$0xff]
      %v7522 = vld [vmem:[%s10 + $0xe0] sm:$0xff]
      %v7523 = vld [vmem:[%s10 + $0xe8] sm:$0xff]
      %v7524 = vld [vmem:[%s10 + $0xf0] sm:$0xff]
      %v7525 = vld [vmem:[%s10 + $0xf8] sm:$0xff]
      %v7526 = vld [vmem:[%s10 + $0x100] sm:$0xff]
      %v7527 = vld [vmem:[%s10 + $0x108] sm:$0xff]
      %v7528 = vld [vmem:[%s10 + $0x110] sm:$0xff]
      %v7529 = vld [vmem:[%s10 + $0x118] sm:$0xff]
      %v7530 = vld [vmem:[%s10 + $0x120] sm:$0xff]
      %v7531 = vld [vmem:[%s10 + $0x128] sm:$0xff]
      %v7532 = vld [vmem:[%s10 + $0x130] sm:$0xff]
      %v7533 = vld [vmem:[%s10 + $0x138] sm:$0xff]
      %v7534 = vld [vmem:[%s10 + $0x140] sm:$0xff]
      %v7535 = vld [vmem:[%s10 + $0x148] sm:$0xff]
      %v7536 = vld [vmem:[%s10 + $0x150] sm:$0xff]
      %v7537 = vld [vmem:[%s10 + $0x158] sm:$0xff]
      %v7538 = vld [vmem:[%s10 + $0x160] sm:$0xff]
      %v7539 = vld [vmem:[%s10 + $0x168] sm:$0xff]
      %v7540 = vld [vmem:[%s10 + $0x170] sm:$0xff]
      %v7541 = vld [vmem:[%s10 + $0x178] sm:$0xff]
      %v7542 = vld [vmem:[%s10 + $0x180] sm:$0xff]
      %v7543 = vld [vmem:[%s10 + $0x188] sm:$0xff]
      %v7544 = vld [vmem:[%s10 + $0x190] sm:$0xff]
      %v7545 = vld [vmem:[%s10 + $0x198] sm:$0xff]
      %v7546 = vld [vmem:[%s10 + $0x1a0] sm:$0xff]
      %v7547 = vld [vmem:[%s10 + $0x1a8] sm:$0xff]
      %v7548 = vld [vmem:[%s10 + $0x1b0] sm:$0xff]
      %v7549 = vld [vmem:[%s10 + $0x1b8] sm:$0xff]
      %v7550 = vld [vmem:[%s10 + $0x1c0] sm:$0xff]
      %v7551 = vld [vmem:[%s10 + $0x1c8] sm:$0xff]
      %v7552 = vld [vmem:[%s10 + $0x1d0] sm:$0xff]
      %v7553 = vld [vmem:[%s10 + $0x1d8] sm:$0xff]
      %v7554 = vld [vmem:[%s10 + $0x1e0] sm:$0xff]
      %v7555 = vld [vmem:[%s10 + $0x1e8] sm:$0xff]
      %v7556 = vld [vmem:[%s10 + $0x1f0] sm:$0xff]
      %v7557 = vld [vmem:[%s10 + $0x1f8] sm:$0xff]
      %vm7570 = vcmask 1041409
      %v7571 = vsel %vm7570, %v7444, %v7416
      %vm7572 = vcmask 1042434
      %v7573 = vsel %vm7572, %v7472, %v7571
      %v7574 = vsel %vm7570, %v7451, %v7423
      %v7575 = vsel %vm7572, %v7479, %v7574
      %v7576 = vsel %vm7570, %v7458, %v7430
      %v7577 = vsel %vm7572, %v7486, %v7576
      %v7578 = vsel %vm7570, %v7465, %v7437
      %v7579 = vsel %vm7572, %v7493, %v7578
      %7584 = vmatprep.subr.mxu0 0.0
      %7585 = vmatpush1.msra.mxu0 %v7494
      %7586 = vmatprep.subr.mxu0 0.0
      %7587 = vmatpush1.msra.mxu0 %v7495
      %7588 = vmatprep.subr.mxu0 0.0
      %7589 = vmatpush1.msra.mxu0 %v7496
      %7590 = vmatprep.subr.mxu0 0.0
      %7591 = vmatpush1.msra.mxu0 %v7497
      %7592 = vmatprep.subr.mxu0 0.0
      %7593 = vmatpush1.msra.mxu0 %v7498
      %7594 = vmatprep.subr.mxu0 0.0
      %7595 = vmatpush1.msra.mxu0 %v7499
      %7596 = vmatprep.subr.mxu0 0.0
      %7597 = vmatpush1.msra.mxu0 %v7500
      %7598 = vmatprep.subr.mxu0 0.0
      %7599 = vmatpush1.msra.mxu0 %v7501
      %7600 = vmatprep.subr.mxu0 0.0
      %7601 = vmatpush1.msra.mxu0 %v7502
      %7602 = vmatprep.subr.mxu0 0.0
      %7603 = vmatpush1.msra.mxu0 %v7503
      %7604 = vmatprep.subr.mxu0 0.0
      %7605 = vmatpush1.msra.mxu0 %v7504
      %7606 = vmatprep.subr.mxu0 0.0
      %7607 = vmatpush1.msra.mxu0 %v7505
      %7608 = vmatprep.subr.mxu0 0.0
      %7609 = vmatpush1.msra.mxu0 %v7506
      %7610 = vmatprep.subr.mxu0 0.0
      %7611 = vmatpush1.msra.mxu0 %v7507
      %7612 = vmatprep.subr.mxu0 0.0
      %7613 = vmatpush1.msra.mxu0 %v7508
      %7614 = vmatprep.subr.mxu0 0.0
      %7615 = vmatpush1.msra.mxu0 %v7509
      %7616 = vmatprep.subr.mxu0 0.0
      %7617 = vmatpush1.msra.mxu0 %v7510
      %7618 = vmatprep.subr.mxu0 0.0
      %7619 = vmatpush1.msra.mxu0 %v7511
      %7620 = vmatprep.subr.mxu0 0.0
      %7621 = vmatpush1.msra.mxu0 %v7512
      %7622 = vmatprep.subr.mxu0 0.0
      %7623 = vmatpush1.msra.mxu0 %v7513
      %7624 = vmatprep.subr.mxu0 0.0
      %7625 = vmatpush1.msra.mxu0 %v7514
      %7626 = vmatprep.subr.mxu0 0.0
      %7627 = vmatpush1.msra.mxu0 %v7515
      %7628 = vmatprep.subr.mxu0 0.0
      %7629 = vmatpush1.msra.mxu0 %v7516
      %7630 = vmatprep.subr.mxu0 0.0
      %7631 = vmatpush1.msra.mxu0 %v7517
      %7632 = vmatprep.subr.mxu0 0.0
      %7633 = vmatpush1.msra.mxu0 %v7518
      %7634 = vmatprep.subr.mxu0 0.0
      %7635 = vmatpush1.msra.mxu0 %v7519
      %7636 = vmatprep.subr.mxu0 0.0
      %7637 = vmatpush1.msra.mxu0 %v7520
      %7638 = vmatprep.subr.mxu0 0.0
      %7639 = vmatpush1.msra.mxu0 %v7521
      %7640 = vmatprep.subr.mxu0 0.0
      %7641 = vmatpush1.msra.mxu0 %v7522
      %7642 = vmatprep.subr.mxu0 0.0
      %7643 = vmatpush1.msra.mxu0 %v7523
      %7644 = vmatprep.subr.mxu0 0.0
      %7645 = vmatpush1.msra.mxu0 %v7524
      %7646 = vmatprep.subr.mxu0 0.0
      %7647 = vmatpush1.msra.mxu0 %v7525
      %7648 = vmatprep.mubr.f32.mxu0 %v7575
      %7649 = vmatmul.mubr.f32.gmra.mrb[0].mxu0 %v7573
      %v7650 = vpop.f32.mrb[0].mxu0
      %v7651 = vadd.f32 0.0, %v7650
      %v7652 = vpop.f32.mrb[0].mxu0
      %7653 = vdwg.mxu0
      %7654 = vmatprep.subr.mxu0 0.0
      %7655 = vmatpush1.msra.mxu0 %v7526
      %7656 = vmatprep.subr.mxu0 0.0
      %7657 = vmatpush1.msra.mxu0 %v7527
      %7658 = vmatprep.subr.mxu0 0.0
      %7659 = vmatpush1.msra.mxu0 %v7528
      %7660 = vmatprep.subr.mxu0 0.0
      %7661 = vmatpush1.msra.mxu0 %v7529
      %7662 = vmatprep.subr.mxu0 0.0
      %7663 = vmatpush1.msra.mxu0 %v7530
      %7664 = vmatprep.subr.mxu0 0.0
      %7665 = vmatpush1.msra.mxu0 %v7531
      %7666 = vmatprep.subr.mxu0 0.0
      %7667 = vmatpush1.msra.mxu0 %v7532
      %7668 = vmatprep.subr.mxu0 0.0
      %7669 = vmatpush1.msra.mxu0 %v7533
      %7670 = vmatprep.subr.mxu0 0.0
      %7671 = vmatpush1.msra.mxu0 %v7534
      %7672 = vmatprep.subr.mxu0 0.0
      %7673 = vmatpush1.msra.mxu0 %v7535
      %7674 = vmatprep.subr.mxu0 0.0
      %7675 = vmatpush1.msra.mxu0 %v7536
      %7676 = vmatprep.subr.mxu0 0.0
      %7677 = vmatpush1.msra.mxu0 %v7537
      %7678 = vmatprep.subr.mxu0 0.0
      %7679 = vmatpush1.msra.mxu0 %v7538
      %7680 = vmatprep.subr.mxu0 0.0
      %7681 = vmatpush1.msra.mxu0 %v7539
      %7682 = vmatprep.subr.mxu0 0.0
      %7683 = vmatpush1.msra.mxu0 %v7540
      %7684 = vmatprep.subr.mxu0 0.0
      %7685 = vmatpush1.msra.mxu0 %v7541
      %7686 = vmatprep.subr.mxu0 0.0
      %7687 = vmatpush1.msra.mxu0 %v7542
      %7688 = vmatprep.subr.mxu0 0.0
      %7689 = vmatpush1.msra.mxu0 %v7543
      %7690 = vmatprep.subr.mxu0 0.0
      %7691 = vmatpush1.msra.mxu0 %v7544
      %7692 = vmatprep.subr.mxu0 0.0
      %7693 = vmatpush1.msra.mxu0 %v7545
      %7694 = vmatprep.subr.mxu0 0.0
      %7695 = vmatpush1.msra.mxu0 %v7546
      %7696 = vmatprep.subr.mxu0 0.0
      %7697 = vmatpush1.msra.mxu0 %v7547
      %7698 = vmatprep.subr.mxu0 0.0
      %7699 = vmatpush1.msra.mxu0 %v7548
      %7700 = vmatprep.subr.mxu0 0.0
      %7701 = vmatpush1.msra.mxu0 %v7549
      %7702 = vmatprep.subr.mxu0 0.0
      %7703 = vmatpush1.msra.mxu0 %v7550
      %7704 = vmatprep.subr.mxu0 0.0
      %7705 = vmatpush1.msra.mxu0 %v7551
      %7706 = vmatprep.subr.mxu0 0.0
      %7707 = vmatpush1.msra.mxu0 %v7552
      %7708 = vmatprep.subr.mxu0 0.0
      %7709 = vmatpush1.msra.mxu0 %v7553
      %7710 = vmatprep.subr.mxu0 0.0
      %7711 = vmatpush1.msra.mxu0 %v7554
      %7712 = vmatprep.subr.mxu0 0.0
      %7713 = vmatpush1.msra.mxu0 %v7555
      %7714 = vmatprep.subr.mxu0 0.0
      %7715 = vmatpush1.msra.mxu0 %v7556
      %7716 = vmatprep.subr.mxu0 0.0
      %7717 = vmatpush1.msra.mxu0 %v7557
      %7718 = vmatprep.mubr.f32.mxu0 %v7579
      %7719 = vmatmul.mubr.f32.gmra.mrb[0].mxu0 %v7577
      %v7720 = vpop.f32.mrb[0].mxu0
      %v7721 = vadd.f32 %v7651, %v7720
      %v7722 = vpop.f32.mrb[0].mxu0
      %7723 = vdwg.mxu0
      %v7724 = vmul.f32 %v7721, 0.00390625
      %v7725 = vld [vmem:[%s6] sm:$0xff]
      %v7726 = vld [vmem:[%s6 + $0x8] sm:$0xff]
      %v7727 = vld [vmem:[%s6 + $0x10] sm:$0xff]
      %v7728 = vld [vmem:[%s6 + $0x18] sm:$0xff]
      %v7729 = vld [vmem:[%s7] sm:$0x1]
      %v7731 = vlaneseq
      %v7732 = vshrl.u32 %v7731, 7
      %v7733 = vsub.s32 0, %v7732
      %v7734 = vrot.slane %v7729, %v7733
      %vm7736 = vcmask 261120
      %v7738 = vsel %vm7736, %v7724, 0
      %7740 = vmatprep.subr.mxu0 0.0
      %7741 = vmatpush1.msra.mxu0 %v7725
      %7742 = vmatprep.subr.mxu0 0.0
      %7743 = vmatpush1.msra.mxu0 %v7726
      %7744 = vmatprep.subr.mxu0 0.0
      %7745 = vmatpush1.msra.mxu0 %v7727
      %7746 = vmatprep.subr.mxu0 0.0
      %7747 = vmatpush1.msra.mxu0 %v7728
      %7748 = vmatprep.subr.mxu0 0.0
      %7749 = vmatpush1.msra.mxu0 0.0
      %7750 = vmatprep.subr.mxu0 0.0
      %7751 = vmatpush1.msra.mxu0 0.0
      %7752 = vmatprep.subr.mxu0 0.0
      %7753 = vmatpush1.msra.mxu0 0.0
      %7754 = vmatprep.subr.mxu0 0.0
      %7755 = vmatpush1.msra.mxu0 0.0
      %7756 = vmatprep.subr.mxu0 0.0
      %7757 = vmatpush1.msra.mxu0 0.0
      %7758 = vmatprep.subr.mxu0 0.0
      %7759 = vmatpush1.msra.mxu0 0.0
      %7760 = vmatprep.subr.mxu0 0.0
      %7761 = vmatpush1.msra.mxu0 0.0
      %7762 = vmatprep.subr.mxu0 0.0
      %7763 = vmatpush1.msra.mxu0 0.0
      %7764 = vmatprep.subr.mxu0 0.0
      %7765 = vmatpush1.msra.mxu0 0.0
      %7766 = vmatprep.subr.mxu0 0.0
      %7767 = vmatpush1.msra.mxu0 0.0
      %7768 = vmatprep.subr.mxu0 0.0
      %7769 = vmatpush1.msra.mxu0 0.0
      %7770 = vmatprep.subr.mxu0 0.0
      %7771 = vmatpush1.msra.mxu0 0.0
      %7772 = vmatprep.subr.mxu0 0.0
      %7773 = vmatpush1.msra.mxu0 0.0
      %7774 = vmatprep.subr.mxu0 0.0
      %7775 = vmatpush1.msra.mxu0 0.0
      %7776 = vmatprep.subr.mxu0 0.0
      %7777 = vmatpush1.msra.mxu0 0.0
      %7778 = vmatprep.subr.mxu0 0.0
      %7779 = vmatpush1.msra.mxu0 0.0
      %7780 = vmatprep.subr.mxu0 0.0
      %7781 = vmatpush1.msra.mxu0 0.0
      %7782 = vmatprep.subr.mxu0 0.0
      %7783 = vmatpush1.msra.mxu0 0.0
      %7784 = vmatprep.subr.mxu0 0.0
      %7785 = vmatpush1.msra.mxu0 0.0
      %7786 = vmatprep.subr.mxu0 0.0
      %7787 = vmatpush1.msra.mxu0 0.0
      %7788 = vmatprep.subr.mxu0 0.0
      %7789 = vmatpush1.msra.mxu0 0.0
      %7790 = vmatprep.subr.mxu0 0.0
      %7791 = vmatpush1.msra.mxu0 0.0
      %7792 = vmatprep.subr.mxu0 0.0
      %7793 = vmatpush1.msra.mxu0 0.0
      %7794 = vmatprep.subr.mxu0 0.0
      %7795 = vmatpush1.msra.mxu0 0.0
      %7796 = vmatprep.subr.mxu0 0.0
      %7797 = vmatpush1.msra.mxu0 0.0
      %7798 = vmatprep.subr.mxu0 0.0
      %7799 = vmatpush1.msra.mxu0 0.0
      %7800 = vmatprep.subr.mxu0 0.0
      %7801 = vmatpush1.msra.mxu0 0.0
      %7802 = vmatprep.subr.mxu0 0.0
      %7803 = vmatpush1.msra.mxu0 0.0
      %7804 = vmatprep.mubr.f32.mxu0 0.0
      %7805 = vmatmul.mubr.f32.gmra.mrb[0].mxu0 %v7738
      %v7806 = vpop.f32.mrb[0].mxu0
      %v7807 = vadd.f32 %v7734, %v7806
      %v7808 = vpop.f32.mrb[0].mxu0
      %7809 = vdwg.mxu0
      %v7810 = vmax.f32 %v7807, 0.0
      %v7811 = vld [vmem:[%s8] sm:$0xff]
      %v7812 = vld [vmem:[%s9] sm:$0x1]
      %v7814 = vlaneseq
      %v7815 = vshrl.u32 %v7814, 7
      %v7816 = vsub.s32 0, %v7815
      %v7817 = vrot.slane %v7812, %v7816
      %vm7819 = vcmask 64512
      %v7821 = vsel %vm7819, %v7810, 0
      %7823 = vmatprep.subr.mxu0 0.0
      %7824 = vmatpush1.msra.mxu0 %v7811
      %7825 = vmatprep.subr.mxu0 0.0
      %7826 = vmatpush1.msra.mxu0 0.0
      %7827 = vmatprep.subr.mxu0 0.0
      %7828 = vmatpush1.msra.mxu0 0.0
      %7829 = vmatprep.subr.mxu0 0.0
      %7830 = vmatpush1.msra.mxu0 0.0
      %7831 = vmatprep.subr.mxu0 0.0
      %7832 = vmatpush1.msra.mxu0 0.0
      %7833 = vmatprep.subr.mxu0 0.0
      %7834 = vmatpush1.msra.mxu0 0.0
      %7835 = vmatprep.subr.mxu0 0.0
      %7836 = vmatpush1.msra.mxu0 0.0
      %7837 = vmatprep.subr.mxu0 0.0
      %7838 = vmatpush1.msra.mxu0 0.0
      %7839 = vmatprep.subr.mxu0 0.0
      %7840 = vmatpush1.msra.mxu0 0.0
      %7841 = vmatprep.subr.mxu0 0.0
      %7842 = vmatpush1.msra.mxu0 0.0
      %7843 = vmatprep.subr.mxu0 0.0
      %7844 = vmatpush1.msra.mxu0 0.0
      %7845 = vmatprep.subr.mxu0 0.0
      %7846 = vmatpush1.msra.mxu0 0.0
      %7847 = vmatprep.subr.mxu0 0.0
      %7848 = vmatpush1.msra.mxu0 0.0
      %7849 = vmatprep.subr.mxu0 0.0
      %7850 = vmatpush1.msra.mxu0 0.0
      %7851 = vmatprep.subr.mxu0 0.0
      %7852 = vmatpush1.msra.mxu0 0.0
      %7853 = vmatprep.subr.mxu0 0.0
      %7854 = vmatpush1.msra.mxu0 0.0
      %7855 = vmatprep.subr.mxu0 0.0
      %7856 = vmatpush1.msra.mxu0 0.0
      %7857 = vmatprep.subr.mxu0 0.0
      %7858 = vmatpush1.msra.mxu0 0.0
      %7859 = vmatprep.subr.mxu0 0.0
      %7860 = vmatpush1.msra.mxu0 0.0
      %7861 = vmatprep.subr.mxu0 0.0
      %7862 = vmatpush1.msra.mxu0 0.0
      %7863 = vmatprep.subr.mxu0 0.0
      %7864 = vmatpush1.msra.mxu0 0.0
      %7865 = vmatprep.subr.mxu0 0.0
      %7866 = vmatpush1.msra.mxu0 0.0
      %7867 = vmatprep.subr.mxu0 0.0
      %7868 = vmatpush1.msra.mxu0 0.0
      %7869 = vmatprep.subr.mxu0 0.0
      %7870 = vmatpush1.msra.mxu0 0.0
      %7871 = vmatprep.subr.mxu0 0.0
      %7872 = vmatpush1.msra.mxu0 0.0
      %7873 = vmatprep.subr.mxu0 0.0
      %7874 = vmatpush1.msra.mxu0 0.0
      %7875 = vmatprep.subr.mxu0 0.0
      %7876 = vmatpush1.msra.mxu0 0.0
      %7877 = vmatprep.subr.mxu0 0.0
      %7878 = vmatpush1.msra.mxu0 0.0
      %7879 = vmatprep.subr.mxu0 0.0
      %7880 = vmatpush1.msra.mxu0 0.0
      %7881 = vmatprep.subr.mxu0 0.0
      %7882 = vmatpush1.msra.mxu0 0.0
      %7883 = vmatprep.subr.mxu0 0.0
      %7884 = vmatpush1.msra.mxu0 0.0
      %7885 = vmatprep.subr.mxu0 0.0
      %7886 = vmatpush1.msra.mxu0 0.0
      %7887 = vmatprep.mubr.f32.mxu0 0.0
      %7888 = vmatmul.mubr.f32.gmra.mrb[0].mxu0 %v7821
      %v7889 = vpop.f32.mrb[0].mxu0
      %v7890 = vadd.f32 %v7817, %v7889
      %v7891 = vpop.f32.mrb[0].mxu0
      %7892 = vdwg.mxu0
      %v7893 = vxor.u32 %v7890, 2147483648
      %v7894 = vmul.f32 %v7893, 1.442695
      %v7895 = vpow.pop %v7894
      %v7896 = vadd.f32 %v7895, 1.0
      %v7897 = vrcp.pop %v7896
      %v7898 = vmul.f32 1.0, %v7897
      %v7899 = vld [vmem:[%s11] sm:$0xff]
      %v7900 = vld [vmem:[%s11 + $0x8] sm:$0xff]
      %v7901 = vld [vmem:[%s11 + $0x10] sm:$0xff]
      %v7902 = vld [vmem:[%s11 + $0x18] sm:$0xff]
      %v7903 = vld [vmem:[%s11 + $0x20] sm:$0xff]
      %v7904 = vld [vmem:[%s11 + $0x28] sm:$0xff]
      %v7905 = vld [vmem:[%s11 + $0x30] sm:$0xff]
      %v7906 = vld [vmem:[%s11 + $0x38] sm:$0xff]
      %v7907 = vld [vmem:[%s11 + $0x40] sm:$0xff]
      %v7908 = vld [vmem:[%s11 + $0x48] sm:$0xff]
      %v7909 = vld [vmem:[%s11 + $0x50] sm:$0xff]
      %v7910 = vld [vmem:[%s11 + $0x58] sm:$0xff]
      %v7911 = vld [vmem:[%s11 + $0x60] sm:$0xff]
      %v7912 = vld [vmem:[%s11 + $0x68] sm:$0xff]
      %v7913 = vld [vmem:[%s11 + $0x70] sm:$0xff]
      %v7914 = vld [vmem:[%s11 + $0x78] sm:$0xff]
      %v7916 = vsel %vm7736, %v7898, 0
      %7918 = vmatprep.subr.mxu0 %v7900
      %7919 = vmatpush1.msra.mxu0 %v7899
      %7920 = vmatprep.subr.mxu0 %v7904
      %7921 = vmatpush1.msra.mxu0 %v7903
      %7922 = vmatprep.subr.mxu0 %v7908
      %7923 = vmatpush1.msra.mxu0 %v7907
      %7924 = vmatprep.subr.mxu0 %v7912
      %7925 = vmatpush1.msra.mxu0 %v7911
      %7926 = vmatprep.subr.mxu0 0.0
      %7927 = vmatpush1.msra.mxu0 0.0
      %7928 = vmatprep.subr.mxu0 0.0
      %7929 = vmatpush1.msra.mxu0 0.0
      %7930 = vmatprep.subr.mxu0 0.0
      %7931 = vmatpush1.msra.mxu0 0.0
      %7932 = vmatprep.subr.mxu0 0.0
      %7933 = vmatpush1.msra.mxu0 0.0
      %7934 = vmatprep.subr.mxu0 0.0
      %7935 = vmatpush1.msra.mxu0 0.0
      %7936 = vmatprep.subr.mxu0 0.0
      %7937 = vmatpush1.msra.mxu0 0.0
      %7938 = vmatprep.subr.mxu0 0.0
      %7939 = vmatpush1.msra.mxu0 0.0
      %7940 = vmatprep.subr.mxu0 0.0
      %7941 = vmatpush1.msra.mxu0 0.0
      %7942 = vmatprep.subr.mxu0 0.0
      %7943 = vmatpush1.msra.mxu0 0.0
      %7944 = vmatprep.subr.mxu0 0.0
      %7945 = vmatpush1.msra.mxu0 0.0
      %7946 = vmatprep.subr.mxu0 0.0
      %7947 = vmatpush1.msra.mxu0 0.0
      %7948 = vmatprep.subr.mxu0 0.0
      %7949 = vmatpush1.msra.mxu0 0.0
      %7950 = vmatprep.subr.mxu0 0.0
      %7951 = vmatpush1.msra.mxu0 0.0
      %7952 = vmatprep.subr.mxu0 0.0
      %7953 = vmatpush1.msra.mxu0 0.0
      %7954 = vmatprep.subr.mxu0 0.0
      %7955 = vmatpush1.msra.mxu0 0.0
      %7956 = vmatprep.subr.mxu0 0.0
      %7957 = vmatpush1.msra.mxu0 0.0
      %7958 = vmatprep.subr.mxu0 0.0
      %7959 = vmatpush1.msra.mxu0 0.0
      %7960 = vmatprep.subr.mxu0 0.0
      %7961 = vmatpush1.msra.mxu0 0.0
      %7962 = vmatprep.subr.mxu0 0.0
      %7963 = vmatpush1.msra.mxu0 0.0
      %7964 = vmatprep.subr.mxu0 0.0
      %7965 = vmatpush1.msra.mxu0 0.0
      %7966 = vmatprep.subr.mxu0 0.0
      %7967 = vmatpush1.msra.mxu0 0.0
      %7968 = vmatprep.subr.mxu0 0.0
      %7969 = vmatpush1.msra.mxu0 0.0
      %7970 = vmatprep.subr.mxu0 0.0
      %7971 = vmatpush1.msra.mxu0 0.0
      %7972 = vmatprep.subr.mxu0 0.0
      %7973 = vmatpush1.msra.mxu0 0.0
      %7974 = vmatprep.subr.mxu0 0.0
      %7975 = vmatpush1.msra.mxu0 0.0
      %7976 = vmatprep.subr.mxu0 0.0
      %7977 = vmatpush1.msra.mxu0 0.0
      %7978 = vmatprep.subr.mxu0 0.0
      %7979 = vmatpush1.msra.mxu0 0.0
      %7980 = vmatprep.subr.mxu0 0.0
      %7981 = vmatpush1.msra.mxu0 0.0
      %7982 = vmatprep.mubr.f32.mxu0 0.0
      %7983 = vmatmul.mubr.f32.gmra.mrb[0].mxu0 %v7916
      %v7984 = vpop.f32.mrb[0].mxu0
      %v7985 = vadd.f32 0.0, %v7984
      %v7986 = vpop.f32.mrb[0].mxu0
      %v7987 = vadd.f32 0.0, %v7986
      %7988 = vdwg.mxu0
      %7989 = vmatprep.subr.mxu0 %v7902
      %7990 = vmatpush1.msra.mxu0 %v7901
      %7991 = vmatprep.subr.mxu0 %v7906
      %7992 = vmatpush1.msra.mxu0 %v7905
      %7993 = vmatprep.subr.mxu0 %v7910
      %7994 = vmatpush1.msra.mxu0 %v7909
      %7995 = vmatprep.subr.mxu0 %v7914
      %7996 = vmatpush1.msra.mxu0 %v7913
      %7997 = vmatprep.subr.mxu0 0.0
      %7998 = vmatpush1.msra.mxu0 0.0
      %7999 = vmatprep.subr.mxu0 0.0
      %8000 = vmatpush1.msra.mxu0 0.0
      %8001 = vmatprep.subr.mxu0 0.0
      %8002 = vmatpush1.msra.mxu0 0.0
      %8003 = vmatprep.subr.mxu0 0.0
      %8004 = vmatpush1.msra.mxu0 0.0
      %8005 = vmatprep.subr.mxu0 0.0
      %8006 = vmatpush1.msra.mxu0 0.0
      %8007 = vmatprep.subr.mxu0 0.0
      %8008 = vmatpush1.msra.mxu0 0.0
      %8009 = vmatprep.subr.mxu0 0.0
      %8010 = vmatpush1.msra.mxu0 0.0
      %8011 = vmatprep.subr.mxu0 0.0
      %8012 = vmatpush1.msra.mxu0 0.0
      %8013 = vmatprep.subr.mxu0 0.0
      %8014 = vmatpush1.msra.mxu0 0.0
      %8015 = vmatprep.subr.mxu0 0.0
      %8016 = vmatpush1.msra.mxu0 0.0
      %8017 = vmatprep.subr.mxu0 0.0
      %8018 = vmatpush1.msra.mxu0 0.0
      %8019 = vmatprep.subr.mxu0 0.0
      %8020 = vmatpush1.msra.mxu0 0.0
      %8021 = vmatprep.subr.mxu0 0.0
      %8022 = vmatpush1.msra.mxu0 0.0
      %8023 = vmatprep.subr.mxu0 0.0
      %8024 = vmatpush1.msra.mxu0 0.0
      %8025 = vmatprep.subr.mxu0 0.0
      %8026 = vmatpush1.msra.mxu0 0.0
      %8027 = vmatprep.subr.mxu0 0.0
      %8028 = vmatpush1.msra.mxu0 0.0
      %8029 = vmatprep.subr.mxu0 0.0
      %8030 = vmatpush1.msra.mxu0 0.0
      %8031 = vmatprep.subr.mxu0 0.0
      %8032 = vmatpush1.msra.mxu0 0.0
      %8033 = vmatprep.subr.mxu0 0.0
      %8034 = vmatpush1.msra.mxu0 0.0
      %8035 = vmatprep.subr.mxu0 0.0
      %8036 = vmatpush1.msra.mxu0 0.0
      %8037 = vmatprep.subr.mxu0 0.0
      %8038 = vmatpush1.msra.mxu0 0.0
      %8039 = vmatprep.subr.mxu0 0.0
      %8040 = vmatpush1.msra.mxu0 0.0
      %8041 = vmatprep.subr.mxu0 0.0
      %8042 = vmatpush1.msra.mxu0 0.0
      %8043 = vmatprep.subr.mxu0 0.0
      %8044 = vmatpush1.msra.mxu0 0.0
      %8045 = vmatprep.subr.mxu0 0.0
      %8046 = vmatpush1.msra.mxu0 0.0
      %8047 = vmatprep.subr.mxu0 0.0
      %8048 = vmatpush1.msra.mxu0 0.0
      %8049 = vmatprep.subr.mxu0 0.0
      %8050 = vmatpush1.msra.mxu0 0.0
      %8051 = vmatprep.subr.mxu0 0.0
      %8052 = vmatpush1.msra.mxu0 0.0
      %8053 = vmatprep.mubr.f32.mxu0 0.0
      %8054 = vmatmul.mubr.f32.gmra.mrb[0].mxu0 %v7916
      %v8055 = vpop.f32.mrb[0].mxu0
      %v8056 = vadd.f32 0.0, %v8055
      %v8057 = vpop.f32.mrb[0].mxu0
      %v8058 = vadd.f32 0.0, %v8057
      %8059 = vdwg.mxu0
      %v8064 = vcombine.low %v7985, %v7987
      %v8065 = vcombine.low %v8056, %v8058
      %v8067 = vunpack.c.l.s4 1966171168
      %v8068 = vunpack.c.0.s8 %v8067
      %v8069 = vlaneseq
      %v8070 = vshrl.u32 %v8069, 7
      %v8071 = vsub.s32 %v8068, %v8070
      %v8072 = vrot.slane %v8064, %v8071
      %v8074 = vunpack.c.l.s4 1966171168
      %v8075 = vunpack.c.0.s8 %v8074
      %v8076 = vlaneseq
      %v8077 = vshrl.u32 %v8076, 7
      %v8078 = vsub.s32 %v8075, %v8077
      %v8079 = vrot.slane %v8065, %v8078
      %v8080 = vcombine.low %v8072, %v8079
      %v8081 = vcombine.high %v8072, %v8079
      %v8083 = vunpack.c.l.s4 1966171168
      %v8084 = vunpack.c.0.s8 %v8083
      %v8085 = vlaneseq
      %v8086 = vshrl.u32 %v8085, 7
      %v8087 = vsub.s32 %v8084, %v8086
      %v8088 = vrot.slane %v8080, %v8087
      %v8090 = vunpack.c.l.s4 1966171168
      %v8091 = vunpack.c.0.s8 %v8090
      %v8092 = vlaneseq
      %v8093 = vshrl.u32 %v8092, 7
      %v8094 = vsub.s32 %v8091, %v8093
      %v8095 = vrot.slane %v8081, %v8094
      %v8096 = vcombine.high %v8088, %v8088
      %v8097 = vlaneseq
      %v8098 = vshrl.u32 %v8097, 7
      %v8099 = vsub.s32 0, %v8098
      %v8100 = vrot.slane %v8088, %v8099
      %v8101 = vlaneseq
      %v8102 = vshrl.u32 %v8101, 7
      %v8103 = vsub.s32 1, %v8102
      %v8104 = vrot.slane %v8088, %v8103
      %v8105 = vlaneseq
      %v8106 = vshrl.u32 %v8105, 7
      %v8107 = vsub.s32 2, %v8106
      %v8108 = vrot.slane %v8088, %v8107
      %v8109 = vlaneseq
      %v8110 = vshrl.u32 %v8109, 7
      %v8111 = vsub.s32 3, %v8110
      %v8112 = vrot.slane %v8088, %v8111
      %v8113 = vlaneseq
      %v8114 = vshrl.u32 %v8113, 7
      %v8115 = vsub.s32 0, %v8114
      %v8116 = vrot.slane %v8095, %v8115
      %v8117 = vlaneseq
      %v8118 = vshrl.u32 %v8117, 7
      %v8119 = vsub.s32 1, %v8118
      %v8120 = vrot.slane %v8095, %v8119
      %v8121 = vlaneseq
      %v8122 = vshrl.u32 %v8121, 7
      %v8123 = vsub.s32 2, %v8122
      %v8124 = vrot.slane %v8095, %v8123
      %v8125 = vlaneseq
      %v8126 = vshrl.u32 %v8125, 7
      %v8127 = vsub.s32 3, %v8126
      %v8128 = vrot.slane %v8095, %v8127
      %v8129 = vlaneseq
      %v8130 = vshrl.u32 %v8129, 7
      %v8131 = vsub.s32 0, %v8130
      %v8132 = vrot.slane %v8096, %v8131
      %v8133 = vlaneseq
      %v8134 = vshrl.u32 %v8133, 7
      %v8135 = vsub.s32 1, %v8134
      %v8136 = vrot.slane %v8096, %v8135
      %v8137 = vlaneseq
      %v8138 = vshrl.u32 %v8137, 7
      %v8139 = vsub.s32 2, %v8138
      %v8140 = vrot.slane %v8096, %v8139
      %v8141 = vlaneseq
      %v8142 = vshrl.u32 %v8141, 7
      %v8143 = vsub.s32 3, %v8142
      %v8144 = vrot.slane %v8096, %v8143
      %v8157 = vmul.f32 %v7386, %v8100
      %v8158 = vmul.f32 %v7387, %v8104
      %v8159 = vmul.f32 %v7388, %v8108
      %v8160 = vmul.f32 %v7389, %v8112
      %v8161 = vmul.f32 %v7390, %v8100
      %v8162 = vmul.f32 %v7391, %v8104
      %v8163 = vmul.f32 %v7392, %v8108
      %v8164 = vmul.f32 %v7393, %v8112
      %v8165 = vmul.f32 %v7394, %v8116
      %v8166 = vmul.f32 %v7395, %v8120
      %v8167 = vmul.f32 %v7396, %v8124
      %v8168 = vmul.f32 %v7397, %v8128
      %v8169 = vmul.f32 %v7398, %v8116
      %v8170 = vmul.f32 %v7399, %v8120
      %v8171 = vmul.f32 %v7400, %v8124
      %v8172 = vmul.f32 %v7401, %v8128
      %v8173 = vmul.f32 %v7402, %v8132
      %v8174 = vmul.f32 %v7403, %v8136
      %v8175 = vmul.f32 %v7404, %v8140
      %v8176 = vmul.f32 %v7405, %v8144
      %v8177 = vmul.f32 %v7406, %v8132
      %v8178 = vmul.f32 %v7407, %v8136
      %v8179 = vmul.f32 %v7408, %v8140
      %v8180 = vmul.f32 %v7409, %v8144
      %v8181 = vadd.f32 %v8157, %v422
      %v8182 = vadd.f32 %v8158, %v423
      %v8183 = vadd.f32 %v8159, %v424
      %v8184 = vadd.f32 %v8160, %v425
      %v8185 = vadd.f32 %v8161, %v426
      %v8186 = vadd.f32 %v8162, %v427
      %v8187 = vadd.f32 %v8163, %v428
      %v8188 = vadd.f32 %v8164, %v429
      %v8189 = vadd.f32 %v8165, %v430
      %v8190 = vadd.f32 %v8166, %v431
      %v8191 = vadd.f32 %v8167, %v432
      %v8192 = vadd.f32 %v8168, %v433
      %v8193 = vadd.f32 %v8169, %v434
      %v8194 = vadd.f32 %v8170, %v435
      %v8195 = vadd.f32 %v8171, %v436
      %v8196 = vadd.f32 %v8172, %v437
      %v8197 = vadd.f32 %v8173, %v438
      %v8198 = vadd.f32 %v8174, %v439
      %v8199 = vadd.f32 %v8175, %v440
      %v8200 = vadd.f32 %v8176, %v441
      %v8201 = vadd.f32 %v8177, %v442
      %v8202 = vadd.f32 %v8178, %v443
      %v8203 = vadd.f32 %v8179, %v444
      %v8204 = vadd.f32 %v8180, %v445
      %8205 = vst [vmem:[%s420] sm:$0xff] %v8181
      %8206 = vst [vmem:[%s420 + $0x8] sm:$0xff] %v8182
      %8207 = vst [vmem:[%s420 + $0x10] sm:$0xff] %v8183
      %8208 = vst [vmem:[%s420 + $0x18] sm:$0xff] %v8184
      %8209 = vst [vmem:[%s420 + $0x20] sm:$0xff] %v8185
      %8210 = vst [vmem:[%s420 + $0x28] sm:$0xff] %v8186
      %8211 = vst [vmem:[%s420 + $0x30] sm:$0xff] %v8187
      %8212 = vst [vmem:[%s420 + $0x38] sm:$0xff] %v8188
      %8213 = vst [vmem:[%s420 + $0x40] sm:$0xff] %v8189
      %8214 = vst [vmem:[%s420 + $0x48] sm:$0xff] %v8190
      %8215 = vst [vmem:[%s420 + $0x50] sm:$0xff] %v8191
      %8216 = vst [vmem:[%s420 + $0x58] sm:$0xff] %v8192
      %8217 = vst [vmem:[%s420 + $0x60] sm:$0xff] %v8193
      %8218 = vst [vmem:[%s420 + $0x68] sm:$0xff] %v8194
      %8219 = vst [vmem:[%s420 + $0x70] sm:$0xff] %v8195
      %8220 = vst [vmem:[%s420 + $0x78] sm:$0xff] %v8196
      %8221 = vst [vmem:[%s420 + $0x80] sm:$0xff] %v8197
      %8222 = vst [vmem:[%s420 + $0x88] sm:$0xff] %v8198
      %8223 = vst [vmem:[%s420 + $0x90] sm:$0xff] %v8199
      %8224 = vst [vmem:[%s420 + $0x98] sm:$0xff] %v8200
      %8225 = vst [vmem:[%s420 + $0xa0] sm:$0xff] %v8201
      %8226 = vst [vmem:[%s420 + $0xa8] sm:$0xff] %v8202
      %8227 = vst [vmem:[%s420 + $0xb0] sm:$0xff] %v8203
      %8228 = vst [vmem:[%s420 + $0xb8] sm:$0xff] %v8204
      %s8229 = smul.u32 3, %s23
      %p8230 = scmp.lt.s32.totalorder %s8229, 5
      %s8231 = scalar_select %p8230, %s8229, 5
      %s8232 = smul.addr %s8231, 8
      %s8233 = smul.addr %s8232, 8
      %s8234 = scalar_lea.vmem %s12, %s8233
      // Predicated region
      $region69: #{layer_forward.1} parent=67 // pred_check
        %p8235 = pneg %p298
      $region70: #{layer_forward.1} parent=67 // pred_check_branch
        %8237 = sbr.rel (%p8235) target = $region72
      $region71: #{layer_forward.1} parent=67 // pred_region
        %s8238 = smul.u32 3, %s23
      $region72: #{layer_forward.1} parent=67 // pred_fallthru
        _
    $region68: #{layer_forward.1} parent=5 // pred_fallthru
      _
    %p8239 = scmp.le.s32.totalorder 2, %s18
    // Predicated region
    $region73: #{layer_forward.1} parent=5 // pred_check
      %p8240 = pneg %p8239
    $region74: #{layer_forward.1} parent=5 // pred_check_branch
      %8242 = sbr.rel (%p8240) target = $region76
    $region75: #{layer_forward.1} parent=5 // pred_region
      %s8243 = ssub.s32 %s18, 2
      // Predicated region
      $region77: #{layer_forward.1} parent=75 // pred_check
        %p8244 = pneg %p304
      $region78: #{layer_forward.1} parent=75 // pred_check_branch
        %8246 = sbr.rel (%p8244) target = $region80
      $region79: #{layer_forward.1} parent=75 // pred_region
        %s8247 = smul.u32 3, %s24
        %p8248 = scmp.lt.s32.totalorder %s8247, 5
        %s8249 = scalar_select %p8248, %s8247, 5
        %s8250 = smul.addr %s8249, 8
        %s8251 = smul.addr %s8250, 8
        %s8252 = scalar_lea.vmem %s12, %s8251
      $region80: #{layer_forward.1} parent=75 // pred_fallthru
        _
    $region76: #{layer_forward.1} parent=5 // pred_fallthru
      _
  $region6: #{layer_forward.1} parent=0 // loop_footer
    %s22 = sadd.s32 1, %s18
  $region7: #{layer_forward.1} parent=0 // loop_footer_branch
    %17 = sbr.rel target = $region3
  $region8: #{layer_forward.1} parent=0 // loop_exit
    _

</llo_original>
